<compile_context>
chip_gen: v5e
topology: v5e:2x2
jax: 0.10.0
libtpu: 0.0.40
codegen_flags: <defaults>
</compile_context>

<pallas_src>
import functools

import jax
import jax.numpy as jnp
from jax.experimental import pallas as pl
from jax.experimental.pallas import tpu as pltpu


# ---------------------------------------------------------------------------
# Fused im2col 3x3 convolution (NHWC, 'same' padding, stride 1)
# ---------------------------------------------------------------------------

def _conv3x3_kernel(xp_ref, w_ref, b_ref, o_ref, *, relu):
    """One batch element: 9 shifted (HW, Cin)@(Cin, Cout) matmuls, f32 acc."""
    h, wd, cout = o_ref.shape[1], o_ref.shape[2], o_ref.shape[3]
    cin = xp_ref.shape[3]
    acc = jnp.zeros((h * wd, cout), jnp.float32)
    for idx in range(9):                      # static unroll over the 3x3 taps
        ky, kx = idx // 3, idx % 3
        patch = xp_ref[0, ky:ky + h, kx:kx + wd, :]            # (h, wd, cin)
        a = patch.reshape(h * wd, cin).astype(jnp.bfloat16)    # lane dim kept
        acc = acc + jnp.dot(a, w_ref[idx], preferred_element_type=jnp.float32)
    acc = acc + b_ref[...]
    if relu:
        acc = jnp.maximum(acc, 0.0)
    o_ref[0] = acc.reshape(h, wd, cout).astype(o_ref.dtype)


def conv3x3_nhwc(x, w, bias, relu):
    """x: (B, H, W, Cin), w: (Cout, Cin, 3, 3) [torch layout], bias: (Cout,)."""
    b, h, wd, cin = x.shape
    cout = w.shape[0]
    xp = jnp.pad(x, ((0, 0), (1, 1), (1, 1), (0, 0)))
    # w9[ky*3+kx] = w[:, :, ky, kx].T  -> (Cin, Cout); bf16 for the MXU
    w9 = jnp.transpose(w, (2, 3, 1, 0)).reshape(9, cin, cout).astype(jnp.bfloat16)
    kernel = functools.partial(_conv3x3_kernel, relu=relu)
    return pl.pallas_call(
        kernel,
        out_shape=jax.ShapeDtypeStruct((b, h, wd, cout), jnp.float32),
        grid=(b,),
        in_specs=[
            pl.BlockSpec((1, h + 2, wd + 2, cin), lambda i: (i, 0, 0, 0)),
            pl.BlockSpec((9, cin, cout), lambda i: (0, 0, 0)),
            pl.BlockSpec((1, cout), lambda i: (0, 0)),
        ],
        out_specs=pl.BlockSpec((1, h, wd, cout), lambda i: (i, 0, 0, 0)),
        compiler_params=pltpu.CompilerParams(dimension_semantics=("parallel",)),
    )(xp, w9, bias.reshape(1, cout))


# ---------------------------------------------------------------------------
# Plain matmul(+bias) — used for the final 1x1 conv over NHWC pixels
# ---------------------------------------------------------------------------

def _matmul_bias_kernel(a_ref, w_ref, b_ref, o_ref, *, relu):
    a = a_ref[...].astype(jnp.bfloat16)
    acc = jnp.dot(a, w_ref[...], preferred_element_type=jnp.float32) + b_ref[...]
    if relu:
        acc = jnp.maximum(acc, 0.0)
    o_ref[...] = acc.astype(o_ref.dtype)


def matmul_bias(a, w, bias, relu):
    """a: (M, K) f32, w: (K, N), bias: (N,) -> (M, N) f32."""
    M, K = a.shape
    N = w.shape[1]
    # Fat row tiles (K, N are tiny); cap tm so the grid keeps >=2 blocks when
    # possible (two v7x TensorCores) and never collapses to one giant block.
    tm = min(M, 256)
    grid = (pl.cdiv(M, tm),)
    kernel = functools.partial(_matmul_bias_kernel, relu=relu)
    return pl.pallas_call(
        kernel,
        out_shape=jax.ShapeDtypeStruct((M, N), jnp.float32),
        grid=grid,
        in_specs=[
            pl.BlockSpec((tm, K), lambda i: (i, 0)),
            pl.BlockSpec((K, N), lambda i: (0, 0)),
            pl.BlockSpec((1, N), lambda i: (0, 0)),
        ],
        out_specs=pl.BlockSpec((tm, N), lambda i: (i, 0)),
        compiler_params=pltpu.CompilerParams(dimension_semantics=("parallel",)),
    )(a, w.astype(jnp.bfloat16), bias.reshape(1, N))


# ---------------------------------------------------------------------------
# Fused fg/bg/cg masks + context = prob @ f   (one kernel, gridded over batch)
# ---------------------------------------------------------------------------

def _prob_ctx_kernel(thr_ref, smap_ref, f_ref, ctx_ref):
    t = thr_ref[0]
    s = jax.nn.sigmoid(smap_ref[0])                      # (1, HW) lane-dense
    p = s - t
    fg = jnp.clip(p, 0.0, 1.0)
    bg = jnp.clip(-p, 0.0, 1.0)
    cg = t - jnp.abs(p)                                  # torch applies no clip
    prob = jnp.concatenate([fg, bg, cg], axis=0)         # (3, HW)
    ctx_ref[0] = jnp.dot(prob.astype(jnp.bfloat16),
                         f_ref[0].astype(jnp.bfloat16),
                         preferred_element_type=jnp.float32)      # (3, C)


def prob_context(smap_flat, f, threshold):
    """smap_flat: (B, 1, HW), f: (B, HW, C), threshold: (1,) -> (B, 3, C)."""
    b, _, hw = smap_flat.shape
    c = f.shape[2]
    return pl.pallas_call(
        _prob_ctx_kernel,
        out_shape=jax.ShapeDtypeStruct((b, 3, c), jnp.float32),
        grid=(b,),
        in_specs=[
            pl.BlockSpec(memory_space=pltpu.MemorySpace.SMEM),
            pl.BlockSpec((1, 1, hw), lambda i: (i, 0, 0)),
            pl.BlockSpec((1, hw, c), lambda i: (i, 0, 0)),
        ],
        out_specs=pl.BlockSpec((1, 3, c), lambda i: (i, 0, 0)),
        compiler_params=pltpu.CompilerParams(dimension_semantics=("parallel",)),
    )(threshold, smap_flat, f)


# ---------------------------------------------------------------------------
# Fused key/value 1x1-conv chains + attention over the 3 context vectors
# ---------------------------------------------------------------------------

def _kv_attn_kernel(q_ref, ctx_ref, w1_ref, b1_ref, w2_ref, b2_ref, o_ref, *,
                    scale):
    """One batch element. HW stays in the lane dim; output is (ch, HW)."""
    ctx = ctx_ref[0].astype(jnp.bfloat16)                # (3, Cin)

    def mlp(idx):                                        # 0 = key, 1 = value
        h1 = jnp.dot(ctx, w1_ref[idx], preferred_element_type=jnp.float32)
        h1 = jnp.maximum(h1 + b1_ref[idx:idx + 1, :], 0.0)
        h2 = jnp.dot(h1.astype(jnp.bfloat16), w2_ref[idx],
                     preferred_element_type=jnp.float32)
        return jnp.maximum(h2 + b2_ref[idx:idx + 1, :], 0.0)      # (3, ch)

    k = mlp(0)
    v = mlp(1)

    q = q_ref[0].astype(jnp.bfloat16)                    # (HW, ch)
    # s[i, p] = sum_c k[i, c] * q[p, c]   -> (3, HW)
    s = jax.lax.dot_general(k.astype(jnp.bfloat16), q,
                            (((1,), (1,)), ((), ())),
                            preferred_element_type=jnp.float32) * scale
    # 3-way softmax, unrolled over the context rows (all ops lane-dense)
    s0, s1, s2 = s[0:1, :], s[1:2, :], s[2:3, :]
    m = jnp.maximum(jnp.maximum(s0, s1), s2)
    e0 = jnp.exp(s0 - m)
    e1 = jnp.exp(s1 - m)
    e2 = jnp.exp(s2 - m)
    inv = pl.reciprocal(e0 + e1 + e2, approx=True)
    p = jnp.concatenate([e0 * inv, e1 * inv, e2 * inv], axis=0)   # (3, HW)
    # out = v^T @ p -> (ch, HW), lane-dense store
    o_ref[0] = jnp.dot(v.T.astype(jnp.bfloat16), p.astype(jnp.bfloat16),
                       preferred_element_type=jnp.float32)


def kv_attention(query, context, w1, b1, w2, b2, scale):
    """query: (B, HW, ch), context: (B, 3, Cin) -> (B, ch, HW)."""
    b, hw, ch = query.shape
    cin = context.shape[2]
    kernel = functools.partial(_kv_attn_kernel, scale=scale)
    return pl.pallas_call(
        kernel,
        out_shape=jax.ShapeDtypeStruct((b, ch, hw), jnp.float32),
        grid=(b,),
        in_specs=[
            pl.BlockSpec((1, hw, ch), lambda i: (i, 0, 0)),
            pl.BlockSpec((1, 3, cin), lambda i: (i, 0, 0)),
            pl.BlockSpec((2, cin, ch), lambda i: (0, 0, 0)),
            pl.BlockSpec((2, ch), lambda i: (0, 0)),
            pl.BlockSpec((2, ch, ch), lambda i: (0, 0, 0)),
            pl.BlockSpec((2, ch), lambda i: (0, 0)),
        ],
        out_specs=pl.BlockSpec((1, ch, hw), lambda i: (i, 0, 0)),
        compiler_params=pltpu.CompilerParams(dimension_semantics=("parallel",)),
    )(query, context, w1, b1, w2, b2)


# ---------------------------------------------------------------------------
# SICA_DWT forward (lmap_in=False path, ctx=3)
# ---------------------------------------------------------------------------

def sica_dwt_forward(params, x, smap):
    b, c, h, w = x.shape
    channel = params["q2_w"].shape[0]
    hw = h * w

    # bilinear resize of smap to x's spatial size (align_corners=False)
    smap_r = jax.image.resize(smap, (b, smap.shape[1], h, w), method="bilinear")
    smap_flat = smap_r.astype(jnp.float32).reshape(b, 1, hw)     # lane-dense

    # torch: f = x.view(b, h*w, -1) — raw view of the contiguous NCHW tensor
    f = x.reshape(b, hw, c)

    # fused fg/bg/cg + context bmm -> (B, 3, C); prob never hits HBM
    context = prob_context(smap_flat, f, params["threshold"])

    # conv path runs entirely in NHWC (single boundary transpose of x)
    x_nhwc = jnp.transpose(x, (0, 2, 3, 1))

    q = conv3x3_nhwc(x_nhwc, params["q1_w"], params["q1_b"], relu=True)
    q = conv3x3_nhwc(q, params["q2_w"], params["q2_b"], relu=True)  # (B,H,W,ch)
    query = q.reshape(b, hw, channel)                               # free reshape

    # fused key/value chains + attention, lane-dense output (B, ch, HW)
    w1 = jnp.stack([params["k1_w"].reshape(channel, c).T,
                    params["v1_w"].reshape(channel, c).T]).astype(jnp.bfloat16)
    w2 = jnp.stack([params["k2_w"].reshape(channel, channel).T,
                    params["v2_w"].reshape(channel, channel).T]).astype(jnp.bfloat16)
    b1 = jnp.stack([params["k1_b"], params["v1_b"]])
    b2 = jnp.stack([params["k2_b"], params["v2_b"]])
    att = kv_attention(query, context, w1, b1, w2, b2,
                       scale=channel ** (-0.5))                     # (B, ch, HW)

    # (B, ch, HW) == torch's NCHW context2; one tiny relayout to NHWC
    context2 = jnp.transpose(att, (0, 2, 1)).reshape(b, h, w, channel)
    context2 = conv3x3_nhwc(context2, params["o1_w"], params["o1_b"], relu=True)

    xcat = jnp.concatenate([x_nhwc, context2], axis=-1)             # (B,H,W,C+ch)
    xo = conv3x3_nhwc(xcat, params["o2_w"], params["o2_b"], relu=True)
    xo = conv3x3_nhwc(xo, params["o3_w"], params["o3_b"], relu=True)

    # conv_out4: 1x1 conv (no relu, matching the repo's conv() default)
    wo4 = params["o4_w"].reshape(3, channel).T                      # (ch, 3)
    out = matmul_bias(xo.reshape(b * hw, channel), wo4, params["o4_b"],
                      relu=False)
    out = out.reshape(b, h, w, 3)

    # back to NCHW at the module boundary
    return jnp.transpose(xo, (0, 3, 1, 2)), jnp.transpose(out, (0, 3, 1, 2))


# ---------------------------------------------------------------------------
# Deterministic parameter init (synthetic; BN folded into bias)
# ---------------------------------------------------------------------------

def init_params(key, in_channel, channel):
    shapes = {
        "q1_w": (channel, in_channel, 3, 3),
        "q2_w": (channel, channel, 3, 3),
        "k1_w": (channel, in_channel, 1, 1),
        "k2_w": (channel, channel, 1, 1),
        "v1_w": (channel, in_channel, 1, 1),
        "v2_w": (channel, channel, 1, 1),
        "o1_w": (channel, channel, 3, 3),
        "o2_w": (channel, in_channel + channel, 3, 3),
        "o3_w": (channel, channel, 3, 3),
        "o4_w": (3, channel, 1, 1),
    }
    params = {}
    keys = jax.random.split(key, 2 * len(shapes))
    for i, (name, shp) in enumerate(sorted(shapes.items())):
        params[name] = 0.1 * jax.random.normal(keys[2 * i], shp, jnp.float32)
        bname = name[:-2] + "_b"
        params[bname] = 0.05 * jax.random.normal(keys[2 * i + 1], (shp[0],),
                                                 jnp.float32)
    params["threshold"] = jnp.array([0.5], dtype=jnp.float32)
    # TODO(synk): lmap_in=True branch (ctx=5, lthreshold) not exercised here.
    return params


# ---------------------------------------------------------------------------
# Demo
# ---------------------------------------------------------------------------

if __name__ == "__main__":
    in_channel, channel = 4, 8
    B, H, W = 2, 16, 16

    key = jax.random.PRNGKey(0)
    k_param, k_x, k_s = jax.random.split(key, 3)
    params = init_params(k_param, in_channel, channel)

    x = jax.random.normal(k_x, (B, in_channel, H, W), jnp.float32)
    smap = jax.random.normal(k_s, (B, 1, 8, 8), jnp.float32)   # resized inside

    fwd = jax.jit(sica_dwt_forward)
    x_feat, out = fwd(params, x, smap)
    jax.block_until_ready((x_feat, out))

    assert x_feat.shape == (B, channel, H, W)
    assert out.shape == (B, 3, H, W)
    print("KERNEL_OK")
</pallas_src>

<mosaic_0001>
module attributes {stable_mosaic.version = 11 : i64} {
  func.func @_conv3x3_kernel(%arg0: i32, %arg1: memref<1x18x18x4xf32, #tpu.memory_space<vmem>>, %arg2: memref<9x4x8xbf16, #tpu.memory_space<vmem>>, %arg3: memref<1x8xf32, #tpu.memory_space<vmem>>, %arg4: memref<1x16x16x8xf32, #tpu.memory_space<vmem>>) attributes {dimension_semantics = [#tpu.dimension_semantics<parallel>], iteration_bounds = array<i64: 2>, scalar_prefetch = 0 : i64, scratch_operands = 0 : i64, tpu.core_type = #tpu.core_type<tc>, window_params = [{transform_indices = @transform_0, window_bounds = array<i64: 1, 18, 18, 4>}, {pipeline_mode = #tpu.pipeline_mode<synchronous>, transform_indices = @transform_1, window_bounds = array<i64: 9, 4, 8>}, {pipeline_mode = #tpu.pipeline_mode<synchronous>, transform_indices = @transform_2, window_bounds = array<i64: 1, 8>}, {transform_indices = @transform_3, window_bounds = array<i64: 1, 16, 16, 8>}]} {
    %cst = arith.constant 0.000000e+00 : f32
    %0 = vector.broadcast %cst : f32 to vector<256x8xf32>
    %c0 = arith.constant 0 : index
    %c0_0 = arith.constant 0 : index
    %c0_1 = arith.constant 0 : index
    %c0_2 = arith.constant 0 : index
    %1 = vector.load %arg1[%c0, %c0_0, %c0_1, %c0_2] : memref<1x18x18x4xf32, #tpu.memory_space<vmem>>, vector<1x16x16x4xf32>
    %2 = vector.shape_cast %1 : vector<1x16x16x4xf32> to vector<16x16x4xf32>
    %3 = vector.shape_cast %2 : vector<16x16x4xf32> to vector<256x4xf32>
    %4 = arith.truncf %3 : vector<256x4xf32> to vector<256x4xbf16>
    %c0_3 = arith.constant 0 : index
    %c0_4 = arith.constant 0 : index
    %c0_5 = arith.constant 0 : index
    %5 = vector.load %arg2[%c0_3, %c0_4, %c0_5] : memref<9x4x8xbf16, #tpu.memory_space<vmem>>, vector<1x4x8xbf16>
    %6 = vector.shape_cast %5 : vector<1x4x8xbf16> to vector<4x8xbf16>
    %cst_6 = arith.constant dense<0.000000e+00> : vector<256x8xf32>
    %7 = tpu.matmul %4, %6, %cst_6 {dimension_numbers = #tpu.dot_dimension_numbers<[1], [0], [0], [1], [0, 0, 1, 1], [], []>} : vector<256x4xbf16>, vector<4x8xbf16>, vector<256x8xf32> -> vector<256x8xf32>
    %8 = arith.addf %0, %7 : vector<256x8xf32>
    %c0_7 = arith.constant 0 : index
    %c0_8 = arith.constant 0 : index
    %c1 = arith.constant 1 : index
    %c0_9 = arith.constant 0 : index
    %9 = vector.load %arg1[%c0_7, %c0_8, %c1, %c0_9] : memref<1x18x18x4xf32, #tpu.memory_space<vmem>>, vector<1x16x16x4xf32>
    %10 = vector.shape_cast %9 : vector<1x16x16x4xf32> to vector<16x16x4xf32>
    %11 = vector.shape_cast %10 : vector<16x16x4xf32> to vector<256x4xf32>
    %12 = arith.truncf %11 : vector<256x4xf32> to vector<256x4xbf16>
    %c1_10 = arith.constant 1 : index
    %c0_11 = arith.constant 0 : index
    %c0_12 = arith.constant 0 : index
    %13 = vector.load %arg2[%c1_10, %c0_11, %c0_12] : memref<9x4x8xbf16, #tpu.memory_space<vmem>>, vector<1x4x8xbf16>
    %14 = vector.shape_cast %13 : vector<1x4x8xbf16> to vector<4x8xbf16>
    %cst_13 = arith.constant dense<0.000000e+00> : vector<256x8xf32>
    %15 = tpu.matmul %12, %14, %cst_13 {dimension_numbers = #tpu.dot_dimension_numbers<[1], [0], [0], [1], [0, 0, 1, 1], [], []>} : vector<256x4xbf16>, vector<4x8xbf16>, vector<256x8xf32> -> vector<256x8xf32>
    %16 = arith.addf %8, %15 : vector<256x8xf32>
    %c0_14 = arith.constant 0 : index
    %c0_15 = arith.constant 0 : index
    %c2 = arith.constant 2 : index
    %c0_16 = arith.constant 0 : index
    %17 = vector.load %arg1[%c0_14, %c0_15, %c2, %c0_16] : memref<1x18x18x4xf32, #tpu.memory_space<vmem>>, vector<1x16x16x4xf32>
    %18 = vector.shape_cast %17 : vector<1x16x16x4xf32> to vector<16x16x4xf32>
    %19 = vector.shape_cast %18 : vector<16x16x4xf32> to vector<256x4xf32>
    %20 = arith.truncf %19 : vector<256x4xf32> to vector<256x4xbf16>
    %c2_17 = arith.constant 2 : index
    %c0_18 = arith.constant 0 : index
    %c0_19 = arith.constant 0 : index
    %21 = vector.load %arg2[%c2_17, %c0_18, %c0_19] : memref<9x4x8xbf16, #tpu.memory_space<vmem>>, vector<1x4x8xbf16>
    %22 = vector.shape_cast %21 : vector<1x4x8xbf16> to vector<4x8xbf16>
    %cst_20 = arith.constant dense<0.000000e+00> : vector<256x8xf32>
    %23 = tpu.matmul %20, %22, %cst_20 {dimension_numbers = #tpu.dot_dimension_numbers<[1], [0], [0], [1], [0, 0, 1, 1], [], []>} : vector<256x4xbf16>, vector<4x8xbf16>, vector<256x8xf32> -> vector<256x8xf32>
    %24 = arith.addf %16, %23 : vector<256x8xf32>
    %c0_21 = arith.constant 0 : index
    %c1_22 = arith.constant 1 : index
    %c0_23 = arith.constant 0 : index
    %c0_24 = arith.constant 0 : index
    %25 = vector.load %arg1[%c0_21, %c1_22, %c0_23, %c0_24] : memref<1x18x18x4xf32, #tpu.memory_space<vmem>>, vector<1x16x16x4xf32>
    %26 = vector.shape_cast %25 : vector<1x16x16x4xf32> to vector<16x16x4xf32>
    %27 = vector.shape_cast %26 : vector<16x16x4xf32> to vector<256x4xf32>
    %28 = arith.truncf %27 : vector<256x4xf32> to vector<256x4xbf16>
    %c3 = arith.constant 3 : index
    %c0_25 = arith.constant 0 : index
    %c0_26 = arith.constant 0 : index
    %29 = vector.load %arg2[%c3, %c0_25, %c0_26] : memref<9x4x8xbf16, #tpu.memory_space<vmem>>, vector<1x4x8xbf16>
    %30 = vector.shape_cast %29 : vector<1x4x8xbf16> to vector<4x8xbf16>
    %cst_27 = arith.constant dense<0.000000e+00> : vector<256x8xf32>
    %31 = tpu.matmul %28, %30, %cst_27 {dimension_numbers = #tpu.dot_dimension_numbers<[1], [0], [0], [1], [0, 0, 1, 1], [], []>} : vector<256x4xbf16>, vector<4x8xbf16>, vector<256x8xf32> -> vector<256x8xf32>
    %32 = arith.addf %24, %31 : vector<256x8xf32>
    %c0_28 = arith.constant 0 : index
    %c1_29 = arith.constant 1 : index
    %c1_30 = arith.constant 1 : index
    %c0_31 = arith.constant 0 : index
    %33 = vector.load %arg1[%c0_28, %c1_29, %c1_30, %c0_31] : memref<1x18x18x4xf32, #tpu.memory_space<vmem>>, vector<1x16x16x4xf32>
    %34 = vector.shape_cast %33 : vector<1x16x16x4xf32> to vector<16x16x4xf32>
    %35 = vector.shape_cast %34 : vector<16x16x4xf32> to vector<256x4xf32>
    %36 = arith.truncf %35 : vector<256x4xf32> to vector<256x4xbf16>
    %c4 = arith.constant 4 : index
    %c0_32 = arith.constant 0 : index
    %c0_33 = arith.constant 0 : index
    %37 = vector.load %arg2[%c4, %c0_32, %c0_33] : memref<9x4x8xbf16, #tpu.memory_space<vmem>>, vector<1x4x8xbf16>
    %38 = vector.shape_cast %37 : vector<1x4x8xbf16> to vector<4x8xbf16>
    %cst_34 = arith.constant dense<0.000000e+00> : vector<256x8xf32>
    %39 = tpu.matmul %36, %38, %cst_34 {dimension_numbers = #tpu.dot_dimension_numbers<[1], [0], [0], [1], [0, 0, 1, 1], [], []>} : vector<256x4xbf16>, vector<4x8xbf16>, vector<256x8xf32> -> vector<256x8xf32>
    %40 = arith.addf %32, %39 : vector<256x8xf32>
    %c0_35 = arith.constant 0 : index
    %c1_36 = arith.constant 1 : index
    %c2_37 = arith.constant 2 : index
    %c0_38 = arith.constant 0 : index
    %41 = vector.load %arg1[%c0_35, %c1_36, %c2_37, %c0_38] : memref<1x18x18x4xf32, #tpu.memory_space<vmem>>, vector<1x16x16x4xf32>
    %42 = vector.shape_cast %41 : vector<1x16x16x4xf32> to vector<16x16x4xf32>
    %43 = vector.shape_cast %42 : vector<16x16x4xf32> to vector<256x4xf32>
    %44 = arith.truncf %43 : vector<256x4xf32> to vector<256x4xbf16>
    %c5 = arith.constant 5 : index
    %c0_39 = arith.constant 0 : index
    %c0_40 = arith.constant 0 : index
    %45 = vector.load %arg2[%c5, %c0_39, %c0_40] : memref<9x4x8xbf16, #tpu.memory_space<vmem>>, vector<1x4x8xbf16>
    %46 = vector.shape_cast %45 : vector<1x4x8xbf16> to vector<4x8xbf16>
    %cst_41 = arith.constant dense<0.000000e+00> : vector<256x8xf32>
    %47 = tpu.matmul %44, %46, %cst_41 {dimension_numbers = #tpu.dot_dimension_numbers<[1], [0], [0], [1], [0, 0, 1, 1], [], []>} : vector<256x4xbf16>, vector<4x8xbf16>, vector<256x8xf32> -> vector<256x8xf32>
    %48 = arith.addf %40, %47 : vector<256x8xf32>
    %c0_42 = arith.constant 0 : index
    %c2_43 = arith.constant 2 : index
    %c0_44 = arith.constant 0 : index
    %c0_45 = arith.constant 0 : index
    %49 = vector.load %arg1[%c0_42, %c2_43, %c0_44, %c0_45] : memref<1x18x18x4xf32, #tpu.memory_space<vmem>>, vector<1x16x16x4xf32>
    %50 = vector.shape_cast %49 : vector<1x16x16x4xf32> to vector<16x16x4xf32>
    %51 = vector.shape_cast %50 : vector<16x16x4xf32> to vector<256x4xf32>
    %52 = arith.truncf %51 : vector<256x4xf32> to vector<256x4xbf16>
    %c6 = arith.constant 6 : index
    %c0_46 = arith.constant 0 : index
    %c0_47 = arith.constant 0 : index
    %53 = vector.load %arg2[%c6, %c0_46, %c0_47] : memref<9x4x8xbf16, #tpu.memory_space<vmem>>, vector<1x4x8xbf16>
    %54 = vector.shape_cast %53 : vector<1x4x8xbf16> to vector<4x8xbf16>
    %cst_48 = arith.constant dense<0.000000e+00> : vector<256x8xf32>
    %55 = tpu.matmul %52, %54, %cst_48 {dimension_numbers = #tpu.dot_dimension_numbers<[1], [0], [0], [1], [0, 0, 1, 1], [], []>} : vector<256x4xbf16>, vector<4x8xbf16>, vector<256x8xf32> -> vector<256x8xf32>
    %56 = arith.addf %48, %55 : vector<256x8xf32>
    %c0_49 = arith.constant 0 : index
    %c2_50 = arith.constant 2 : index
    %c1_51 = arith.constant 1 : index
    %c0_52 = arith.constant 0 : index
    %57 = vector.load %arg1[%c0_49, %c2_50, %c1_51, %c0_52] : memref<1x18x18x4xf32, #tpu.memory_space<vmem>>, vector<1x16x16x4xf32>
    %58 = vector.shape_cast %57 : vector<1x16x16x4xf32> to vector<16x16x4xf32>
    %59 = vector.shape_cast %58 : vector<16x16x4xf32> to vector<256x4xf32>
    %60 = arith.truncf %59 : vector<256x4xf32> to vector<256x4xbf16>
    %c7 = arith.constant 7 : index
    %c0_53 = arith.constant 0 : index
    %c0_54 = arith.constant 0 : index
    %61 = vector.load %arg2[%c7, %c0_53, %c0_54] : memref<9x4x8xbf16, #tpu.memory_space<vmem>>, vector<1x4x8xbf16>
    %62 = vector.shape_cast %61 : vector<1x4x8xbf16> to vector<4x8xbf16>
    %cst_55 = arith.constant dense<0.000000e+00> : vector<256x8xf32>
    %63 = tpu.matmul %60, %62, %cst_55 {dimension_numbers = #tpu.dot_dimension_numbers<[1], [0], [0], [1], [0, 0, 1, 1], [], []>} : vector<256x4xbf16>, vector<4x8xbf16>, vector<256x8xf32> -> vector<256x8xf32>
    %64 = arith.addf %56, %63 : vector<256x8xf32>
    %c0_56 = arith.constant 0 : index
    %c2_57 = arith.constant 2 : index
    %c2_58 = arith.constant 2 : index
    %c0_59 = arith.constant 0 : index
    %65 = vector.load %arg1[%c0_56, %c2_57, %c2_58, %c0_59] : memref<1x18x18x4xf32, #tpu.memory_space<vmem>>, vector<1x16x16x4xf32>
    %66 = vector.shape_cast %65 : vector<1x16x16x4xf32> to vector<16x16x4xf32>
    %67 = vector.shape_cast %66 : vector<16x16x4xf32> to vector<256x4xf32>
    %68 = arith.truncf %67 : vector<256x4xf32> to vector<256x4xbf16>
    %c8 = arith.constant 8 : index
    %c0_60 = arith.constant 0 : index
    %c0_61 = arith.constant 0 : index
    %69 = vector.load %arg2[%c8, %c0_60, %c0_61] : memref<9x4x8xbf16, #tpu.memory_space<vmem>>, vector<1x4x8xbf16>
    %70 = vector.shape_cast %69 : vector<1x4x8xbf16> to vector<4x8xbf16>
    %cst_62 = arith.constant dense<0.000000e+00> : vector<256x8xf32>
    %71 = tpu.matmul %68, %70, %cst_62 {dimension_numbers = #tpu.dot_dimension_numbers<[1], [0], [0], [1], [0, 0, 1, 1], [], []>} : vector<256x4xbf16>, vector<4x8xbf16>, vector<256x8xf32> -> vector<256x8xf32>
    %72 = arith.addf %64, %71 : vector<256x8xf32>
    %c0_63 = arith.constant 0 : index
    %c0_64 = arith.constant 0 : index
    %73 = vector.load %arg3[%c0_63, %c0_64] : memref<1x8xf32, #tpu.memory_space<vmem>>, vector<1x8xf32>
    %74 = vector.broadcast %73 : vector<1x8xf32> to vector<256x8xf32>
    %75 = arith.addf %72, %74 : vector<256x8xf32>
    %cst_65 = arith.constant 0.000000e+00 : f32
    %76 = vector.broadcast %cst_65 : f32 to vector<256x8xf32>
    %77 = arith.maximumf %75, %76 : vector<256x8xf32>
    %78 = vector.shape_cast %77 : vector<256x8xf32> to vector<16x16x8xf32>
    %c0_66 = arith.constant 0 : index
    %c0_67 = arith.constant 0 : index
    %c0_68 = arith.constant 0 : index
    %c0_69 = arith.constant 0 : index
    %79 = vector.load %arg4[%c0_66, %c0_67, %c0_68, %c0_69] : memref<1x16x16x8xf32, #tpu.memory_space<vmem>>, vector<1x16x16x8xf32>
    %80 = vector.shape_cast %79 : vector<1x16x16x8xf32> to vector<16x16x8xf32>
    %81 = vector.shape_cast %78 : vector<16x16x8xf32> to vector<1x16x16x8xf32>
    tpu.vector_store %arg4[%c0_66, %c0_67, %c0_68, %c0_69], %81 {strides = array<i32>} : memref<1x16x16x8xf32, #tpu.memory_space<vmem>>, vector<1x16x16x8xf32>,
    return
  }
  func.func @transform_0(%arg0: i32) -> (i32, i32, i32, i32) {
    %c0_i32 = arith.constant 0 : i32
    %c0_i32_0 = arith.constant 0 : i32
    %c0_i32_1 = arith.constant 0 : i32
    %c0_i32_2 = arith.constant 0 : i32
    return %arg0, %c0_i32, %c0_i32_0, %c0_i32_1 : i32, i32, i32, i32
  }
  func.func @transform_1(%arg0: i32) -> (i32, i32, i32) {
    %c0_i32 = arith.constant 0 : i32
    %c0_i32_0 = arith.constant 0 : i32
    %c0_i32_1 = arith.constant 0 : i32
    %c0_i32_2 = arith.constant 0 : i32
    return %c0_i32, %c0_i32_0, %c0_i32_1 : i32, i32, i32
  }
  func.func @transform_2(%arg0: i32) -> (i32, i32) {
    %c0_i32 = arith.constant 0 : i32
    %c0_i32_0 = arith.constant 0 : i32
    %c0_i32_1 = arith.constant 0 : i32
    return %c0_i32, %c0_i32_0 : i32, i32
  }
  func.func @transform_3(%arg0: i32) -> (i32, i32, i32, i32) {
    %c0_i32 = arith.constant 0 : i32
    %c0_i32_0 = arith.constant 0 : i32
    %c0_i32_1 = arith.constant 0 : i32
    %c0_i32_2 = arith.constant 0 : i32
    return %arg0, %c0_i32, %c0_i32_0, %c0_i32_1 : i32, i32, i32, i32
  }
}

module attributes {stable_mosaic.version = 11 : i64} {
  func.func @_conv3x3_kernel(%arg0: i32, %arg1: memref<1x18x18x8xf32, #tpu.memory_space<vmem>>, %arg2: memref<9x8x8xbf16, #tpu.memory_space<vmem>>, %arg3: memref<1x8xf32, #tpu.memory_space<vmem>>, %arg4: memref<1x16x16x8xf32, #tpu.memory_space<vmem>>) attributes {dimension_semantics = [#tpu.dimension_semantics<parallel>], iteration_bounds = array<i64: 2>, scalar_prefetch = 0 : i64, scratch_operands = 0 : i64, tpu.core_type = #tpu.core_type<tc>, window_params = [{transform_indices = @transform_0, window_bounds = array<i64: 1, 18, 18, 8>}, {pipeline_mode = #tpu.pipeline_mode<synchronous>, transform_indices = @transform_1, window_bounds = array<i64: 9, 8, 8>}, {pipeline_mode = #tpu.pipeline_mode<synchronous>, transform_indices = @transform_2, window_bounds = array<i64: 1, 8>}, {transform_indices = @transform_3, window_bounds = array<i64: 1, 16, 16, 8>}]} {
    %cst = arith.constant 0.000000e+00 : f32
    %0 = vector.broadcast %cst : f32 to vector<256x8xf32>
    %c0 = arith.constant 0 : index
    %c0_0 = arith.constant 0 : index
    %c0_1 = arith.constant 0 : index
    %c0_2 = arith.constant 0 : index
    %1 = vector.load %arg1[%c0, %c0_0, %c0_1, %c0_2] : memref<1x18x18x8xf32, #tpu.memory_space<vmem>>, vector<1x16x16x8xf32>
    %2 = vector.shape_cast %1 : vector<1x16x16x8xf32> to vector<16x16x8xf32>
    %3 = vector.shape_cast %2 : vector<16x16x8xf32> to vector<256x8xf32>
    %4 = arith.truncf %3 : vector<256x8xf32> to vector<256x8xbf16>
    %c0_3 = arith.constant 0 : index
    %c0_4 = arith.constant 0 : index
    %c0_5 = arith.constant 0 : index
    %5 = vector.load %arg2[%c0_3, %c0_4, %c0_5] : memref<9x8x8xbf16, #tpu.memory_space<vmem>>, vector<1x8x8xbf16>
    %6 = vector.shape_cast %5 : vector<1x8x8xbf16> to vector<8x8xbf16>
    %cst_6 = arith.constant dense<0.000000e+00> : vector<256x8xf32>
    %7 = tpu.matmul %4, %6, %cst_6 {dimension_numbers = #tpu.dot_dimension_numbers<[1], [0], [0], [1], [0, 0, 1, 1], [], []>} : vector<256x8xbf16>, vector<8x8xbf16>, vector<256x8xf32> -> vector<256x8xf32>
    %8 = arith.addf %0, %7 : vector<256x8xf32>
    %c0_7 = arith.constant 0 : index
    %c0_8 = arith.constant 0 : index
    %c1 = arith.constant 1 : index
    %c0_9 = arith.constant 0 : index
    %9 = vector.load %arg1[%c0_7, %c0_8, %c1, %c0_9] : memref<1x18x18x8xf32, #tpu.memory_space<vmem>>, vector<1x16x16x8xf32>
    %10 = vector.shape_cast %9 : vector<1x16x16x8xf32> to vector<16x16x8xf32>
    %11 = vector.shape_cast %10 : vector<16x16x8xf32> to vector<256x8xf32>
    %12 = arith.truncf %11 : vector<256x8xf32> to vector<256x8xbf16>
    %c1_10 = arith.constant 1 : index
    %c0_11 = arith.constant 0 : index
    %c0_12 = arith.constant 0 : index
    %13 = vector.load %arg2[%c1_10, %c0_11, %c0_12] : memref<9x8x8xbf16, #tpu.memory_space<vmem>>, vector<1x8x8xbf16>
    %14 = vector.shape_cast %13 : vector<1x8x8xbf16> to vector<8x8xbf16>
    %cst_13 = arith.constant dense<0.000000e+00> : vector<256x8xf32>
    %15 = tpu.matmul %12, %14, %cst_13 {dimension_numbers = #tpu.dot_dimension_numbers<[1], [0], [0], [1], [0, 0, 1, 1], [], []>} : vector<256x8xbf16>, vector<8x8xbf16>, vector<256x8xf32> -> vector<256x8xf32>
    %16 = arith.addf %8, %15 : vector<256x8xf32>
    %c0_14 = arith.constant 0 : index
    %c0_15 = arith.constant 0 : index
    %c2 = arith.constant 2 : index
    %c0_16 = arith.constant 0 : index
    %17 = vector.load %arg1[%c0_14, %c0_15, %c2, %c0_16] : memref<1x18x18x8xf32, #tpu.memory_space<vmem>>, vector<1x16x16x8xf32>
    %18 = vector.shape_cast %17 : vector<1x16x16x8xf32> to vector<16x16x8xf32>
    %19 = vector.shape_cast %18 : vector<16x16x8xf32> to vector<256x8xf32>
    %20 = arith.truncf %19 : vector<256x8xf32> to vector<256x8xbf16>
    %c2_17 = arith.constant 2 : index
    %c0_18 = arith.constant 0 : index
    %c0_19 = arith.constant 0 : index
    %21 = vector.load %arg2[%c2_17, %c0_18, %c0_19] : memref<9x8x8xbf16, #tpu.memory_space<vmem>>, vector<1x8x8xbf16>
    %22 = vector.shape_cast %21 : vector<1x8x8xbf16> to vector<8x8xbf16>
    %cst_20 = arith.constant dense<0.000000e+00> : vector<256x8xf32>
    %23 = tpu.matmul %20, %22, %cst_20 {dimension_numbers = #tpu.dot_dimension_numbers<[1], [0], [0], [1], [0, 0, 1, 1], [], []>} : vector<256x8xbf16>, vector<8x8xbf16>, vector<256x8xf32> -> vector<256x8xf32>
    %24 = arith.addf %16, %23 : vector<256x8xf32>
    %c0_21 = arith.constant 0 : index
    %c1_22 = arith.constant 1 : index
    %c0_23 = arith.constant 0 : index
    %c0_24 = arith.constant 0 : index
    %25 = vector.load %arg1[%c0_21, %c1_22, %c0_23, %c0_24] : memref<1x18x18x8xf32, #tpu.memory_space<vmem>>, vector<1x16x16x8xf32>
    %26 = vector.shape_cast %25 : vector<1x16x16x8xf32> to vector<16x16x8xf32>
    %27 = vector.shape_cast %26 : vector<16x16x8xf32> to vector<256x8xf32>
    %28 = arith.truncf %27 : vector<256x8xf32> to vector<256x8xbf16>
    %c3 = arith.constant 3 : index
    %c0_25 = arith.constant 0 : index
    %c0_26 = arith.constant 0 : index
    %29 = vector.load %arg2[%c3, %c0_25, %c0_26] : memref<9x8x8xbf16, #tpu.memory_space<vmem>>, vector<1x8x8xbf16>
    %30 = vector.shape_cast %29 : vector<1x8x8xbf16> to vector<8x8xbf16>
    %cst_27 = arith.constant dense<0.000000e+00> : vector<256x8xf32>
    %31 = tpu.matmul %28, %30, %cst_27 {dimension_numbers = #tpu.dot_dimension_numbers<[1], [0], [0], [1], [0, 0, 1, 1], [], []>} : vector<256x8xbf16>, vector<8x8xbf16>, vector<256x8xf32> -> vector<256x8xf32>
    %32 = arith.addf %24, %31 : vector<256x8xf32>
    %c0_28 = arith.constant 0 : index
    %c1_29 = arith.constant 1 : index
    %c1_30 = arith.constant 1 : index
    %c0_31 = arith.constant 0 : index
    %33 = vector.load %arg1[%c0_28, %c1_29, %c1_30, %c0_31] : memref<1x18x18x8xf32, #tpu.memory_space<vmem>>, vector<1x16x16x8xf32>
    %34 = vector.shape_cast %33 : vector<1x16x16x8xf32> to vector<16x16x8xf32>
    %35 = vector.shape_cast %34 : vector<16x16x8xf32> to vector<256x8xf32>
    %36 = arith.truncf %35 : vector<256x8xf32> to vector<256x8xbf16>
    %c4 = arith.constant 4 : index
    %c0_32 = arith.constant 0 : index
    %c0_33 = arith.constant 0 : index
    %37 = vector.load %arg2[%c4, %c0_32, %c0_33] : memref<9x8x8xbf16, #tpu.memory_space<vmem>>, vector<1x8x8xbf16>
    %38 = vector.shape_cast %37 : vector<1x8x8xbf16> to vector<8x8xbf16>
    %cst_34 = arith.constant dense<0.000000e+00> : vector<256x8xf32>
    %39 = tpu.matmul %36, %38, %cst_34 {dimension_numbers = #tpu.dot_dimension_numbers<[1], [0], [0], [1], [0, 0, 1, 1], [], []>} : vector<256x8xbf16>, vector<8x8xbf16>, vector<256x8xf32> -> vector<256x8xf32>
    %40 = arith.addf %32, %39 : vector<256x8xf32>
    %c0_35 = arith.constant 0 : index
    %c1_36 = arith.constant 1 : index
    %c2_37 = arith.constant 2 : index
    %c0_38 = arith.constant 0 : index
    %41 = vector.load %arg1[%c0_35, %c1_36, %c2_37, %c0_38] : memref<1x18x18x8xf32, #tpu.memory_space<vmem>>, vector<1x16x16x8xf32>
    %42 = vector.shape_cast %41 : vector<1x16x16x8xf32> to vector<16x16x8xf32>
    %43 = vector.shape_cast %42 : vector<16x16x8xf32> to vector<256x8xf32>
    %44 = arith.truncf %43 : vector<256x8xf32> to vector<256x8xbf16>
    %c5 = arith.constant 5 : index
    %c0_39 = arith.constant 0 : index
    %c0_40 = arith.constant 0 : index
    %45 = vector.load %arg2[%c5, %c0_39, %c0_40] : memref<9x8x8xbf16, #tpu.memory_space<vmem>>, vector<1x8x8xbf16>
    %46 = vector.shape_cast %45 : vector<1x8x8xbf16> to vector<8x8xbf16>
    %cst_41 = arith.constant dense<0.000000e+00> : vector<256x8xf32>
    %47 = tpu.matmul %44, %46, %cst_41 {dimension_numbers = #tpu.dot_dimension_numbers<[1], [0], [0], [1], [0, 0, 1, 1], [], []>} : vector<256x8xbf16>, vector<8x8xbf16>, vector<256x8xf32> -> vector<256x8xf32>
    %48 = arith.addf %40, %47 : vector<256x8xf32>
    %c0_42 = arith.constant 0 : index
    %c2_43 = arith.constant 2 : index
    %c0_44 = arith.constant 0 : index
    %c0_45 = arith.constant 0 : index
    %49 = vector.load %arg1[%c0_42, %c2_43, %c0_44, %c0_45] : memref<1x18x18x8xf32, #tpu.memory_space<vmem>>, vector<1x16x16x8xf32>
    %50 = vector.shape_cast %49 : vector<1x16x16x8xf32> to vector<16x16x8xf32>
    %51 = vector.shape_cast %50 : vector<16x16x8xf32> to vector<256x8xf32>
    %52 = arith.truncf %51 : vector<256x8xf32> to vector<256x8xbf16>
    %c6 = arith.constant 6 : index
    %c0_46 = arith.constant 0 : index
    %c0_47 = arith.constant 0 : index
    %53 = vector.load %arg2[%c6, %c0_46, %c0_47] : memref<9x8x8xbf16, #tpu.memory_space<vmem>>, vector<1x8x8xbf16>
    %54 = vector.shape_cast %53 : vector<1x8x8xbf16> to vector<8x8xbf16>
    %cst_48 = arith.constant dense<0.000000e+00> : vector<256x8xf32>
    %55 = tpu.matmul %52, %54, %cst_48 {dimension_numbers = #tpu.dot_dimension_numbers<[1], [0], [0], [1], [0, 0, 1, 1], [], []>} : vector<256x8xbf16>, vector<8x8xbf16>, vector<256x8xf32> -> vector<256x8xf32>
    %56 = arith.addf %48, %55 : vector<256x8xf32>
    %c0_49 = arith.constant 0 : index
    %c2_50 = arith.constant 2 : index
    %c1_51 = arith.constant 1 : index
    %c0_52 = arith.constant 0 : index
    %57 = vector.load %arg1[%c0_49, %c2_50, %c1_51, %c0_52] : memref<1x18x18x8xf32, #tpu.memory_space<vmem>>, vector<1x16x16x8xf32>
    %58 = vector.shape_cast %57 : vector<1x16x16x8xf32> to vector<16x16x8xf32>
    %59 = vector.shape_cast %58 : vector<16x16x8xf32> to vector<256x8xf32>
    %60 = arith.truncf %59 : vector<256x8xf32> to vector<256x8xbf16>
    %c7 = arith.constant 7 : index
    %c0_53 = arith.constant 0 : index
    %c0_54 = arith.constant 0 : index
    %61 = vector.load %arg2[%c7, %c0_53, %c0_54] : memref<9x8x8xbf16, #tpu.memory_space<vmem>>, vector<1x8x8xbf16>
    %62 = vector.shape_cast %61 : vector<1x8x8xbf16> to vector<8x8xbf16>
    %cst_55 = arith.constant dense<0.000000e+00> : vector<256x8xf32>
    %63 = tpu.matmul %60, %62, %cst_55 {dimension_numbers = #tpu.dot_dimension_numbers<[1], [0], [0], [1], [0, 0, 1, 1], [], []>} : vector<256x8xbf16>, vector<8x8xbf16>, vector<256x8xf32> -> vector<256x8xf32>
    %64 = arith.addf %56, %63 : vector<256x8xf32>
    %c0_56 = arith.constant 0 : index
    %c2_57 = arith.constant 2 : index
    %c2_58 = arith.constant 2 : index
    %c0_59 = arith.constant 0 : index
    %65 = vector.load %arg1[%c0_56, %c2_57, %c2_58, %c0_59] : memref<1x18x18x8xf32, #tpu.memory_space<vmem>>, vector<1x16x16x8xf32>
    %66 = vector.shape_cast %65 : vector<1x16x16x8xf32> to vector<16x16x8xf32>
    %67 = vector.shape_cast %66 : vector<16x16x8xf32> to vector<256x8xf32>
    %68 = arith.truncf %67 : vector<256x8xf32> to vector<256x8xbf16>
    %c8 = arith.constant 8 : index
    %c0_60 = arith.constant 0 : index
    %c0_61 = arith.constant 0 : index
    %69 = vector.load %arg2[%c8, %c0_60, %c0_61] : memref<9x8x8xbf16, #tpu.memory_space<vmem>>, vector<1x8x8xbf16>
    %70 = vector.shape_cast %69 : vector<1x8x8xbf16> to vector<8x8xbf16>
    %cst_62 = arith.constant dense<0.000000e+00> : vector<256x8xf32>
    %71 = tpu.matmul %68, %70, %cst_62 {dimension_numbers = #tpu.dot_dimension_numbers<[1], [0], [0], [1], [0, 0, 1, 1], [], []>} : vector<256x8xbf16>, vector<8x8xbf16>, vector<256x8xf32> -> vector<256x8xf32>
    %72 = arith.addf %64, %71 : vector<256x8xf32>
    %c0_63 = arith.constant 0 : index
    %c0_64 = arith.constant 0 : index
    %73 = vector.load %arg3[%c0_63, %c0_64] : memref<1x8xf32, #tpu.memory_space<vmem>>, vector<1x8xf32>
    %74 = vector.broadcast %73 : vector<1x8xf32> to vector<256x8xf32>
    %75 = arith.addf %72, %74 : vector<256x8xf32>
    %cst_65 = arith.constant 0.000000e+00 : f32
    %76 = vector.broadcast %cst_65 : f32 to vector<256x8xf32>
    %77 = arith.maximumf %75, %76 : vector<256x8xf32>
    %78 = vector.shape_cast %77 : vector<256x8xf32> to vector<16x16x8xf32>
    %c0_66 = arith.constant 0 : index
    %c0_67 = arith.constant 0 : index
    %c0_68 = arith.constant 0 : index
    %c0_69 = arith.constant 0 : index
    %79 = vector.load %arg4[%c0_66, %c0_67, %c0_68, %c0_69] : memref<1x16x16x8xf32, #tpu.memory_space<vmem>>, vector<1x16x16x8xf32>
    %80 = vector.shape_cast %79 : vector<1x16x16x8xf32> to vector<16x16x8xf32>
    %81 = vector.shape_cast %78 : vector<16x16x8xf32> to vector<1x16x16x8xf32>
    tpu.vector_store %arg4[%c0_66, %c0_67, %c0_68, %c0_69], %81 {strides = array<i32>} : memref<1x16x16x8xf32, #tpu.memory_space<vmem>>, vector<1x16x16x8xf32>,
    return
  }
  func.func @transform_0(%arg0: i32) -> (i32, i32, i32, i32) {
    %c0_i32 = arith.constant 0 : i32
    %c0_i32_0 = arith.constant 0 : i32
    %c0_i32_1 = arith.constant 0 : i32
    %c0_i32_2 = arith.constant 0 : i32
    return %arg0, %c0_i32, %c0_i32_0, %c0_i32_1 : i32, i32, i32, i32
  }
  func.func @transform_1(%arg0: i32) -> (i32, i32, i32) {
    %c0_i32 = arith.constant 0 : i32
    %c0_i32_0 = arith.constant 0 : i32
    %c0_i32_1 = arith.constant 0 : i32
    %c0_i32_2 = arith.constant 0 : i32
    return %c0_i32, %c0_i32_0, %c0_i32_1 : i32, i32, i32
  }
  func.func @transform_2(%arg0: i32) -> (i32, i32) {
    %c0_i32 = arith.constant 0 : i32
    %c0_i32_0 = arith.constant 0 : i32
    %c0_i32_1 = arith.constant 0 : i32
    return %c0_i32, %c0_i32_0 : i32, i32
  }
  func.func @transform_3(%arg0: i32) -> (i32, i32, i32, i32) {
    %c0_i32 = arith.constant 0 : i32
    %c0_i32_0 = arith.constant 0 : i32
    %c0_i32_1 = arith.constant 0 : i32
    %c0_i32_2 = arith.constant 0 : i32
    return %arg0, %c0_i32, %c0_i32_0, %c0_i32_1 : i32, i32, i32, i32
  }
}

module attributes {stable_mosaic.version = 11 : i64} {
  func.func @_prob_ctx_kernel(%arg0: i32, %arg1: memref<1xf32, #tpu.memory_space<smem>>, %arg2: memref<1x1x256xf32, #tpu.memory_space<vmem>>, %arg3: memref<1x256x4xf32, #tpu.memory_space<vmem>>, %arg4: memref<1x3x4xf32, #tpu.memory_space<vmem>>) attributes {dimension_semantics = [#tpu.dimension_semantics<parallel>], iteration_bounds = array<i64: 2>, scalar_prefetch = 0 : i64, scratch_operands = 0 : i64, tpu.core_type = #tpu.core_type<tc>, window_params = [{transform_indices = @transform_0, window_bounds = array<i64: 1>}, {transform_indices = @transform_1, window_bounds = array<i64: 1, 1, 256>}, {transform_indices = @transform_2, window_bounds = array<i64: 1, 256, 4>}, {transform_indices = @transform_3, window_bounds = array<i64: 1, 3, 4>}]} {
    %c0 = arith.constant 0 : index
    %0 = memref.load %arg1[%c0] : memref<1xf32, #tpu.memory_space<smem>>
    %c0_0 = arith.constant 0 : index
    %c0_1 = arith.constant 0 : index
    %c0_2 = arith.constant 0 : index
    %1 = vector.load %arg2[%c0_0, %c0_1, %c0_2] : memref<1x1x256xf32, #tpu.memory_space<vmem>>, vector<1x1x256xf32>
    %2 = vector.shape_cast %1 : vector<1x1x256xf32> to vector<1x256xf32>
    %3 = arith.negf %2 : vector<1x256xf32>
    %4 = math.exp %3 : vector<1x256xf32>
    %cst = arith.constant 1.000000e+00 : f32
    %5 = vector.broadcast %cst : f32 to vector<1x256xf32>
    %6 = arith.addf %5, %4 : vector<1x256xf32>
    %7 = arith.divf %5, %6 : vector<1x256xf32>
    %8 = vector.broadcast %0 : f32 to vector<1x256xf32>
    %9 = arith.subf %7, %8 : vector<1x256xf32>
    %cst_3 = arith.constant 0.000000e+00 : f32
    %cst_4 = arith.constant 1.000000e+00 : f32
    %10 = vector.broadcast %cst_3 : f32 to vector<1x256xf32>
    %11 = arith.maximumf %10, %9 : vector<1x256xf32>
    %12 = vector.broadcast %cst_4 : f32 to vector<1x256xf32>
    %13 = arith.minimumf %12, %11 : vector<1x256xf32>
    %cst_5 = arith.constant 0.000000e+00 : f32
    %14 = vector.broadcast %cst_5 : f32 to vector<1x256xf32>
    %15 = arith.subf %14, %9 : vector<1x256xf32>
    %cst_6 = arith.constant 0.000000e+00 : f32
    %cst_7 = arith.constant 1.000000e+00 : f32
    %16 = vector.broadcast %cst_6 : f32 to vector<1x256xf32>
    %17 = arith.maximumf %16, %15 : vector<1x256xf32>
    %18 = vector.broadcast %cst_7 : f32 to vector<1x256xf32>
    %19 = arith.minimumf %18, %17 : vector<1x256xf32>
    %20 = math.absf %9 : vector<1x256xf32>
    %21 = vector.broadcast %0 : f32 to vector<1x256xf32>
    %22 = arith.subf %21, %20 : vector<1x256xf32>
    %23 = tpu.concatenate %13, %19, %22 in 0 : vector<1x256xf32>, vector<1x256xf32>, vector<1x256xf32> -> vector<3x256xf32>
    %24 = arith.truncf %23 : vector<3x256xf32> to vector<3x256xbf16>
    %c0_8 = arith.constant 0 : index
    %c0_9 = arith.constant 0 : index
    %c0_10 = arith.constant 0 : index
    %25 = vector.load %arg3[%c0_8, %c0_9, %c0_10] : memref<1x256x4xf32, #tpu.memory_space<vmem>>, vector<1x256x4xf32>
    %26 = vector.shape_cast %25 : vector<1x256x4xf32> to vector<256x4xf32>
    %27 = arith.truncf %26 : vector<256x4xf32> to vector<256x4xbf16>
    %cst_11 = arith.constant dense<0.000000e+00> : vector<3x4xf32>
    %28 = tpu.matmul %24, %27, %cst_11 {dimension_numbers = #tpu.dot_dimension_numbers<[1], [0], [0], [1], [0, 0, 1, 1], [], []>} : vector<3x256xbf16>, vector<256x4xbf16>, vector<3x4xf32> -> vector<3x4xf32>
    %c0_12 = arith.constant 0 : index
    %c0_13 = arith.constant 0 : index
    %c0_14 = arith.constant 0 : index
    %29 = vector.load %arg4[%c0_12, %c0_13, %c0_14] : memref<1x3x4xf32, #tpu.memory_space<vmem>>, vector<1x3x4xf32>
    %30 = vector.shape_cast %29 : vector<1x3x4xf32> to vector<3x4xf32>
    %31 = vector.shape_cast %28 : vector<3x4xf32> to vector<1x3x4xf32>
    tpu.vector_store %arg4[%c0_12, %c0_13, %c0_14], %31 {strides = array<i32>} : memref<1x3x4xf32, #tpu.memory_space<vmem>>, vector<1x3x4xf32>,
    return
  }
  func.func @transform_0(%arg0: i32) -> i32 {
    %c0_i32 = arith.constant 0 : i32
    %c0_i32_0 = arith.constant 0 : i32
    return %c0_i32 : i32
  }
  func.func @transform_1(%arg0: i32) -> (i32, i32, i32) {
    %c0_i32 = arith.constant 0 : i32
    %c0_i32_0 = arith.constant 0 : i32
    %c0_i32_1 = arith.constant 0 : i32
    return %arg0, %c0_i32, %c0_i32_0 : i32, i32, i32
  }
  func.func @transform_2(%arg0: i32) -> (i32, i32, i32) {
    %c0_i32 = arith.constant 0 : i32
    %c0_i32_0 = arith.constant 0 : i32
    %c0_i32_1 = arith.constant 0 : i32
    return %arg0, %c0_i32, %c0_i32_0 : i32, i32, i32
  }
  func.func @transform_3(%arg0: i32) -> (i32, i32, i32) {
    %c0_i32 = arith.constant 0 : i32
    %c0_i32_0 = arith.constant 0 : i32
    %c0_i32_1 = arith.constant 0 : i32
    return %arg0, %c0_i32, %c0_i32_0 : i32, i32, i32
  }
}

module attributes {stable_mosaic.version = 11 : i64} {
  func.func @_kv_attn_kernel(%arg0: i32, %arg1: memref<1x256x8xf32, #tpu.memory_space<vmem>>, %arg2: memref<1x3x4xf32, #tpu.memory_space<vmem>>, %arg3: memref<2x4x8xbf16, #tpu.memory_space<vmem>>, %arg4: memref<2x8xf32, #tpu.memory_space<vmem>>, %arg5: memref<2x8x8xbf16, #tpu.memory_space<vmem>>, %arg6: memref<2x8xf32, #tpu.memory_space<vmem>>, %arg7: memref<1x8x256xf32, #tpu.memory_space<vmem>>) attributes {dimension_semantics = [#tpu.dimension_semantics<parallel>], iteration_bounds = array<i64: 2>, scalar_prefetch = 0 : i64, scratch_operands = 0 : i64, tpu.core_type = #tpu.core_type<tc>, window_params = [{transform_indices = @transform_0, window_bounds = array<i64: 1, 256, 8>}, {transform_indices = @transform_1, window_bounds = array<i64: 1, 3, 4>}, {pipeline_mode = #tpu.pipeline_mode<synchronous>, transform_indices = @transform_2, window_bounds = array<i64: 2, 4, 8>}, {pipeline_mode = #tpu.pipeline_mode<synchronous>, transform_indices = @transform_3, window_bounds = array<i64: 2, 8>}, {pipeline_mode = #tpu.pipeline_mode<synchronous>, transform_indices = @transform_4, window_bounds = array<i64: 2, 8, 8>}, {pipeline_mode = #tpu.pipeline_mode<synchronous>, transform_indices = @transform_5, window_bounds = array<i64: 2, 8>}, {transform_indices = @transform_6, window_bounds = array<i64: 1, 8, 256>}]} {
    %c0 = arith.constant 0 : index
    %c0_0 = arith.constant 0 : index
    %c0_1 = arith.constant 0 : index
    %0 = vector.load %arg2[%c0, %c0_0, %c0_1] : memref<1x3x4xf32, #tpu.memory_space<vmem>>, vector<1x3x4xf32>
    %1 = vector.shape_cast %0 : vector<1x3x4xf32> to vector<3x4xf32>
    %2 = arith.truncf %1 : vector<3x4xf32> to vector<3x4xbf16>
    %c0_2 = arith.constant 0 : index
    %c0_3 = arith.constant 0 : index
    %c0_4 = arith.constant 0 : index
    %3 = vector.load %arg3[%c0_2, %c0_3, %c0_4] : memref<2x4x8xbf16, #tpu.memory_space<vmem>>, vector<1x4x8xbf16>
    %4 = vector.shape_cast %3 : vector<1x4x8xbf16> to vector<4x8xbf16>
    %cst = arith.constant dense<0.000000e+00> : vector<3x8xf32>
    %5 = tpu.matmul %2, %4, %cst {dimension_numbers = #tpu.dot_dimension_numbers<[1], [0], [0], [1], [0, 0, 1, 1], [], []>} : vector<3x4xbf16>, vector<4x8xbf16>, vector<3x8xf32> -> vector<3x8xf32>
    %c0_5 = arith.constant 0 : index
    %c0_6 = arith.constant 0 : index
    %6 = vector.load %arg4[%c0_5, %c0_6] : memref<2x8xf32, #tpu.memory_space<vmem>>, vector<1x8xf32>
    %7 = vector.broadcast %6 : vector<1x8xf32> to vector<3x8xf32>
    %8 = arith.addf %5, %7 : vector<3x8xf32>
    %cst_7 = arith.constant 0.000000e+00 : f32
    %9 = vector.broadcast %cst_7 : f32 to vector<3x8xf32>
    %10 = arith.maximumf %8, %9 : vector<3x8xf32>
    %11 = arith.truncf %10 : vector<3x8xf32> to vector<3x8xbf16>
    %c0_8 = arith.constant 0 : index
    %c0_9 = arith.constant 0 : index
    %c0_10 = arith.constant 0 : index
    %12 = vector.load %arg5[%c0_8, %c0_9, %c0_10] : memref<2x8x8xbf16, #tpu.memory_space<vmem>>, vector<1x8x8xbf16>
    %13 = vector.shape_cast %12 : vector<1x8x8xbf16> to vector<8x8xbf16>
    %cst_11 = arith.constant dense<0.000000e+00> : vector<3x8xf32>
    %14 = tpu.matmul %11, %13, %cst_11 {dimension_numbers = #tpu.dot_dimension_numbers<[1], [0], [0], [1], [0, 0, 1, 1], [], []>} : vector<3x8xbf16>, vector<8x8xbf16>, vector<3x8xf32> -> vector<3x8xf32>
    %c0_12 = arith.constant 0 : index
    %c0_13 = arith.constant 0 : index
    %15 = vector.load %arg6[%c0_12, %c0_13] : memref<2x8xf32, #tpu.memory_space<vmem>>, vector<1x8xf32>
    %16 = vector.broadcast %15 : vector<1x8xf32> to vector<3x8xf32>
    %17 = arith.addf %14, %16 : vector<3x8xf32>
    %cst_14 = arith.constant 0.000000e+00 : f32
    %18 = vector.broadcast %cst_14 : f32 to vector<3x8xf32>
    %19 = arith.maximumf %17, %18 : vector<3x8xf32>
    %c1 = arith.constant 1 : index
    %c0_15 = arith.constant 0 : index
    %c0_16 = arith.constant 0 : index
    %20 = vector.load %arg3[%c1, %c0_15, %c0_16] : memref<2x4x8xbf16, #tpu.memory_space<vmem>>, vector<1x4x8xbf16>
    %21 = vector.shape_cast %20 : vector<1x4x8xbf16> to vector<4x8xbf16>
    %cst_17 = arith.constant dense<0.000000e+00> : vector<3x8xf32>
    %22 = tpu.matmul %2, %21, %cst_17 {dimension_numbers = #tpu.dot_dimension_numbers<[1], [0], [0], [1], [0, 0, 1, 1], [], []>} : vector<3x4xbf16>, vector<4x8xbf16>, vector<3x8xf32> -> vector<3x8xf32>
    %c1_18 = arith.constant 1 : index
    %c0_19 = arith.constant 0 : index
    %23 = vector.load %arg4[%c1_18, %c0_19] : memref<2x8xf32, #tpu.memory_space<vmem>>, vector<1x8xf32>
    %24 = vector.broadcast %23 : vector<1x8xf32> to vector<3x8xf32>
    %25 = arith.addf %22, %24 : vector<3x8xf32>
    %cst_20 = arith.constant 0.000000e+00 : f32
    %26 = vector.broadcast %cst_20 : f32 to vector<3x8xf32>
    %27 = arith.maximumf %25, %26 : vector<3x8xf32>
    %28 = arith.truncf %27 : vector<3x8xf32> to vector<3x8xbf16>
    %c1_21 = arith.constant 1 : index
    %c0_22 = arith.constant 0 : index
    %c0_23 = arith.constant 0 : index
    %29 = vector.load %arg5[%c1_21, %c0_22, %c0_23] : memref<2x8x8xbf16, #tpu.memory_space<vmem>>, vector<1x8x8xbf16>
    %30 = vector.shape_cast %29 : vector<1x8x8xbf16> to vector<8x8xbf16>
    %cst_24 = arith.constant dense<0.000000e+00> : vector<3x8xf32>
    %31 = tpu.matmul %28, %30, %cst_24 {dimension_numbers = #tpu.dot_dimension_numbers<[1], [0], [0], [1], [0, 0, 1, 1], [], []>} : vector<3x8xbf16>, vector<8x8xbf16>, vector<3x8xf32> -> vector<3x8xf32>
    %c1_25 = arith.constant 1 : index
    %c0_26 = arith.constant 0 : index
    %32 = vector.load %arg6[%c1_25, %c0_26] : memref<2x8xf32, #tpu.memory_space<vmem>>, vector<1x8xf32>
    %33 = vector.broadcast %32 : vector<1x8xf32> to vector<3x8xf32>
    %34 = arith.addf %31, %33 : vector<3x8xf32>
    %cst_27 = arith.constant 0.000000e+00 : f32
    %35 = vector.broadcast %cst_27 : f32 to vector<3x8xf32>
    %36 = arith.maximumf %34, %35 : vector<3x8xf32>
    %c0_28 = arith.constant 0 : index
    %c0_29 = arith.constant 0 : index
    %c0_30 = arith.constant 0 : index
    %37 = vector.load %arg1[%c0_28, %c0_29, %c0_30] : memref<1x256x8xf32, #tpu.memory_space<vmem>>, vector<1x256x8xf32>
    %38 = vector.shape_cast %37 : vector<1x256x8xf32> to vector<256x8xf32>
    %39 = arith.truncf %38 : vector<256x8xf32> to vector<256x8xbf16>
    %40 = arith.truncf %19 : vector<3x8xf32> to vector<3x8xbf16>
    %cst_31 = arith.constant dense<0.000000e+00> : vector<3x256xf32>
    %41 = tpu.matmul %40, %39, %cst_31 {dimension_numbers = #tpu.dot_dimension_numbers<[1], [1], [0], [0], [0, 0, 1, 0], [], []>} : vector<3x8xbf16>, vector<256x8xbf16>, vector<3x256xf32> -> vector<3x256xf32>
    %cst_32 = arith.constant 0.353553385 : f32
    %42 = vector.broadcast %cst_32 : f32 to vector<3x256xf32>
    %43 = arith.mulf %41, %42 : vector<3x256xf32>
    %44 = vector.extract_strided_slice %43 {offsets = [0, 0], sizes = [1, 256], strides = [1, 1]} : vector<3x256xf32> to vector<1x256xf32>
    %45 = vector.extract_strided_slice %43 {offsets = [1, 0], sizes = [1, 256], strides = [1, 1]} : vector<3x256xf32> to vector<1x256xf32>
    %46 = vector.extract_strided_slice %43 {offsets = [2, 0], sizes = [1, 256], strides = [1, 1]} : vector<3x256xf32> to vector<1x256xf32>
    %47 = arith.maximumf %44, %45 : vector<1x256xf32>
    %48 = arith.maximumf %47, %46 : vector<1x256xf32>
    %49 = arith.subf %44, %48 : vector<1x256xf32>
    %50 = math.exp %49 : vector<1x256xf32>
    %51 = arith.subf %45, %48 : vector<1x256xf32>
    %52 = math.exp %51 : vector<1x256xf32>
    %53 = arith.subf %46, %48 : vector<1x256xf32>
    %54 = math.exp %53 : vector<1x256xf32>
    %55 = arith.addf %50, %52 : vector<1x256xf32>
    %56 = arith.addf %55, %54 : vector<1x256xf32>
    %57 = tpu.reciprocal %56 {approx = true} : vector<1x256xf32> -> vector<1x256xf32>
    %58 = arith.mulf %50, %57 : vector<1x256xf32>
    %59 = arith.mulf %52, %57 : vector<1x256xf32>
    %60 = arith.mulf %54, %57 : vector<1x256xf32>
    %61 = tpu.concatenate %58, %59, %60 in 0 : vector<1x256xf32>, vector<1x256xf32>, vector<1x256xf32> -> vector<3x256xf32>
    %62 = tpu.transpose %36, [1, 0] : vector<3x8xf32> -> vector<8x3xf32>
    %63 = arith.truncf %62 : vector<8x3xf32> to vector<8x3xbf16>
    %64 = arith.truncf %61 : vector<3x256xf32> to vector<3x256xbf16>
    %cst_33 = arith.constant dense<0.000000e+00> : vector<8x256xf32>
    %65 = tpu.matmul %63, %64, %cst_33 {dimension_numbers = #tpu.dot_dimension_numbers<[1], [0], [0], [1], [0, 0, 1, 1], [], []>} : vector<8x3xbf16>, vector<3x256xbf16>, vector<8x256xf32> -> vector<8x256xf32>
    %c0_34 = arith.constant 0 : index
    %c0_35 = arith.constant 0 : index
    %c0_36 = arith.constant 0 : index
    %66 = vector.load %arg7[%c0_34, %c0_35, %c0_36] : memref<1x8x256xf32, #tpu.memory_space<vmem>>, vector<1x8x256xf32>
    %67 = vector.shape_cast %66 : vector<1x8x256xf32> to vector<8x256xf32>
    %68 = vector.shape_cast %65 : vector<8x256xf32> to vector<1x8x256xf32>
    tpu.vector_store %arg7[%c0_34, %c0_35, %c0_36], %68 {strides = array<i32>} : memref<1x8x256xf32, #tpu.memory_space<vmem>>, vector<1x8x256xf32>,
    return
  }
  func.func @transform_0(%arg0: i32) -> (i32, i32, i32) {
    %c0_i32 = arith.constant 0 : i32
    %c0_i32_0 = arith.constant 0 : i32
    %c0_i32_1 = arith.constant 0 : i32
    return %arg0, %c0_i32, %c0_i32_0 : i32, i32, i32
  }
  func.func @transform_1(%arg0: i32) -> (i32, i32, i32) {
    %c0_i32 = arith.constant 0 : i32
    %c0_i32_0 = arith.constant 0 : i32
    %c0_i32_1 = arith.constant 0 : i32
    return %arg0, %c0_i32, %c0_i32_0 : i32, i32, i32
  }
  func.func @transform_2(%arg0: i32) -> (i32, i32, i32) {
    %c0_i32 = arith.constant 0 : i32
    %c0_i32_0 = arith.constant 0 : i32
    %c0_i32_1 = arith.constant 0 : i32
    %c0_i32_2 = arith.constant 0 : i32
    return %c0_i32, %c0_i32_0, %c0_i32_1 : i32, i32, i32
  }
  func.func @transform_3(%arg0: i32) -> (i32, i32) {
    %c0_i32 = arith.constant 0 : i32
    %c0_i32_0 = arith.constant 0 : i32
    %c0_i32_1 = arith.constant 0 : i32
    return %c0_i32, %c0_i32_0 : i32, i32
  }
  func.func @transform_4(%arg0: i32) -> (i32, i32, i32) {
    %c0_i32 = arith.constant 0 : i32
    %c0_i32_0 = arith.constant 0 : i32
    %c0_i32_1 = arith.constant 0 : i32
    %c0_i32_2 = arith.constant 0 : i32
    return %c0_i32, %c0_i32_0, %c0_i32_1 : i32, i32, i32
  }
  func.func @transform_5(%arg0: i32) -> (i32, i32) {
    %c0_i32 = arith.constant 0 : i32
    %c0_i32_0 = arith.constant 0 : i32
    %c0_i32_1 = arith.constant 0 : i32
    return %c0_i32, %c0_i32_0 : i32, i32
  }
  func.func @transform_6(%arg0: i32) -> (i32, i32, i32) {
    %c0_i32 = arith.constant 0 : i32
    %c0_i32_0 = arith.constant 0 : i32
    %c0_i32_1 = arith.constant 0 : i32
    return %arg0, %c0_i32, %c0_i32_0 : i32, i32, i32
  }
}

module attributes {stable_mosaic.version = 11 : i64} {
  func.func @_conv3x3_kernel(%arg0: i32, %arg1: memref<1x18x18x12xf32, #tpu.memory_space<vmem>>, %arg2: memref<9x12x8xbf16, #tpu.memory_space<vmem>>, %arg3: memref<1x8xf32, #tpu.memory_space<vmem>>, %arg4: memref<1x16x16x8xf32, #tpu.memory_space<vmem>>) attributes {dimension_semantics = [#tpu.dimension_semantics<parallel>], iteration_bounds = array<i64: 2>, scalar_prefetch = 0 : i64, scratch_operands = 0 : i64, tpu.core_type = #tpu.core_type<tc>, window_params = [{transform_indices = @transform_0, window_bounds = array<i64: 1, 18, 18, 12>}, {pipeline_mode = #tpu.pipeline_mode<synchronous>, transform_indices = @transform_1, window_bounds = array<i64: 9, 12, 8>}, {pipeline_mode = #tpu.pipeline_mode<synchronous>, transform_indices = @transform_2, window_bounds = array<i64: 1, 8>}, {transform_indices = @transform_3, window_bounds = array<i64: 1, 16, 16, 8>}]} {
    %cst = arith.constant 0.000000e+00 : f32
    %0 = vector.broadcast %cst : f32 to vector<256x8xf32>
    %c0 = arith.constant 0 : index
    %c0_0 = arith.constant 0 : index
    %c0_1 = arith.constant 0 : index
    %c0_2 = arith.constant 0 : index
    %1 = vector.load %arg1[%c0, %c0_0, %c0_1, %c0_2] : memref<1x18x18x12xf32, #tpu.memory_space<vmem>>, vector<1x16x16x12xf32>
    %2 = vector.shape_cast %1 : vector<1x16x16x12xf32> to vector<16x16x12xf32>
    %3 = vector.shape_cast %2 : vector<16x16x12xf32> to vector<256x12xf32>
    %4 = arith.truncf %3 : vector<256x12xf32> to vector<256x12xbf16>
    %c0_3 = arith.constant 0 : index
    %c0_4 = arith.constant 0 : index
    %c0_5 = arith.constant 0 : index
    %5 = vector.load %arg2[%c0_3, %c0_4, %c0_5] : memref<9x12x8xbf16, #tpu.memory_space<vmem>>, vector<1x12x8xbf16>
    %6 = vector.shape_cast %5 : vector<1x12x8xbf16> to vector<12x8xbf16>
    %cst_6 = arith.constant dense<0.000000e+00> : vector<256x8xf32>
    %7 = tpu.matmul %4, %6, %cst_6 {dimension_numbers = #tpu.dot_dimension_numbers<[1], [0], [0], [1], [0, 0, 1, 1], [], []>} : vector<256x12xbf16>, vector<12x8xbf16>, vector<256x8xf32> -> vector<256x8xf32>
    %8 = arith.addf %0, %7 : vector<256x8xf32>
    %c0_7 = arith.constant 0 : index
    %c0_8 = arith.constant 0 : index
    %c1 = arith.constant 1 : index
    %c0_9 = arith.constant 0 : index
    %9 = vector.load %arg1[%c0_7, %c0_8, %c1, %c0_9] : memref<1x18x18x12xf32, #tpu.memory_space<vmem>>, vector<1x16x16x12xf32>
    %10 = vector.shape_cast %9 : vector<1x16x16x12xf32> to vector<16x16x12xf32>
    %11 = vector.shape_cast %10 : vector<16x16x12xf32> to vector<256x12xf32>
    %12 = arith.truncf %11 : vector<256x12xf32> to vector<256x12xbf16>
    %c1_10 = arith.constant 1 : index
    %c0_11 = arith.constant 0 : index
    %c0_12 = arith.constant 0 : index
    %13 = vector.load %arg2[%c1_10, %c0_11, %c0_12] : memref<9x12x8xbf16, #tpu.memory_space<vmem>>, vector<1x12x8xbf16>
    %14 = vector.shape_cast %13 : vector<1x12x8xbf16> to vector<12x8xbf16>
    %cst_13 = arith.constant dense<0.000000e+00> : vector<256x8xf32>
    %15 = tpu.matmul %12, %14, %cst_13 {dimension_numbers = #tpu.dot_dimension_numbers<[1], [0], [0], [1], [0, 0, 1, 1], [], []>} : vector<256x12xbf16>, vector<12x8xbf16>, vector<256x8xf32> -> vector<256x8xf32>
    %16 = arith.addf %8, %15 : vector<256x8xf32>
    %c0_14 = arith.constant 0 : index
    %c0_15 = arith.constant 0 : index
    %c2 = arith.constant 2 : index
    %c0_16 = arith.constant 0 : index
    %17 = vector.load %arg1[%c0_14, %c0_15, %c2, %c0_16] : memref<1x18x18x12xf32, #tpu.memory_space<vmem>>, vector<1x16x16x12xf32>
    %18 = vector.shape_cast %17 : vector<1x16x16x12xf32> to vector<16x16x12xf32>
    %19 = vector.shape_cast %18 : vector<16x16x12xf32> to vector<256x12xf32>
    %20 = arith.truncf %19 : vector<256x12xf32> to vector<256x12xbf16>
    %c2_17 = arith.constant 2 : index
    %c0_18 = arith.constant 0 : index
    %c0_19 = arith.constant 0 : index
    %21 = vector.load %arg2[%c2_17, %c0_18, %c0_19] : memref<9x12x8xbf16, #tpu.memory_space<vmem>>, vector<1x12x8xbf16>
    %22 = vector.shape_cast %21 : vector<1x12x8xbf16> to vector<12x8xbf16>
    %cst_20 = arith.constant dense<0.000000e+00> : vector<256x8xf32>
    %23 = tpu.matmul %20, %22, %cst_20 {dimension_numbers = #tpu.dot_dimension_numbers<[1], [0], [0], [1], [0, 0, 1, 1], [], []>} : vector<256x12xbf16>, vector<12x8xbf16>, vector<256x8xf32> -> vector<256x8xf32>
    %24 = arith.addf %16, %23 : vector<256x8xf32>
    %c0_21 = arith.constant 0 : index
    %c1_22 = arith.constant 1 : index
    %c0_23 = arith.constant 0 : index
    %c0_24 = arith.constant 0 : index
    %25 = vector.load %arg1[%c0_21, %c1_22, %c0_23, %c0_24] : memref<1x18x18x12xf32, #tpu.memory_space<vmem>>, vector<1x16x16x12xf32>
    %26 = vector.shape_cast %25 : vector<1x16x16x12xf32> to vector<16x16x12xf32>
    %27 = vector.shape_cast %26 : vector<16x16x12xf32> to vector<256x12xf32>
    %28 = arith.truncf %27 : vector<256x12xf32> to vector<256x12xbf16>
    %c3 = arith.constant 3 : index
    %c0_25 = arith.constant 0 : index
    %c0_26 = arith.constant 0 : index
    %29 = vector.load %arg2[%c3, %c0_25, %c0_26] : memref<9x12x8xbf16, #tpu.memory_space<vmem>>, vector<1x12x8xbf16>
    %30 = vector.shape_cast %29 : vector<1x12x8xbf16> to vector<12x8xbf16>
    %cst_27 = arith.constant dense<0.000000e+00> : vector<256x8xf32>
    %31 = tpu.matmul %28, %30, %cst_27 {dimension_numbers = #tpu.dot_dimension_numbers<[1], [0], [0], [1], [0, 0, 1, 1], [], []>} : vector<256x12xbf16>, vector<12x8xbf16>, vector<256x8xf32> -> vector<256x8xf32>
    %32 = arith.addf %24, %31 : vector<256x8xf32>
    %c0_28 = arith.constant 0 : index
    %c1_29 = arith.constant 1 : index
    %c1_30 = arith.constant 1 : index
    %c0_31 = arith.constant 0 : index
    %33 = vector.load %arg1[%c0_28, %c1_29, %c1_30, %c0_31] : memref<1x18x18x12xf32, #tpu.memory_space<vmem>>, vector<1x16x16x12xf32>
    %34 = vector.shape_cast %33 : vector<1x16x16x12xf32> to vector<16x16x12xf32>
    %35 = vector.shape_cast %34 : vector<16x16x12xf32> to vector<256x12xf32>
    %36 = arith.truncf %35 : vector<256x12xf32> to vector<256x12xbf16>
    %c4 = arith.constant 4 : index
    %c0_32 = arith.constant 0 : index
    %c0_33 = arith.constant 0 : index
    %37 = vector.load %arg2[%c4, %c0_32, %c0_33] : memref<9x12x8xbf16, #tpu.memory_space<vmem>>, vector<1x12x8xbf16>
    %38 = vector.shape_cast %37 : vector<1x12x8xbf16> to vector<12x8xbf16>
    %cst_34 = arith.constant dense<0.000000e+00> : vector<256x8xf32>
    %39 = tpu.matmul %36, %38, %cst_34 {dimension_numbers = #tpu.dot_dimension_numbers<[1], [0], [0], [1], [0, 0, 1, 1], [], []>} : vector<256x12xbf16>, vector<12x8xbf16>, vector<256x8xf32> -> vector<256x8xf32>
    %40 = arith.addf %32, %39 : vector<256x8xf32>
    %c0_35 = arith.constant 0 : index
    %c1_36 = arith.constant 1 : index
    %c2_37 = arith.constant 2 : index
    %c0_38 = arith.constant 0 : index
    %41 = vector.load %arg1[%c0_35, %c1_36, %c2_37, %c0_38] : memref<1x18x18x12xf32, #tpu.memory_space<vmem>>, vector<1x16x16x12xf32>
    %42 = vector.shape_cast %41 : vector<1x16x16x12xf32> to vector<16x16x12xf32>
    %43 = vector.shape_cast %42 : vector<16x16x12xf32> to vector<256x12xf32>
    %44 = arith.truncf %43 : vector<256x12xf32> to vector<256x12xbf16>
    %c5 = arith.constant 5 : index
    %c0_39 = arith.constant 0 : index
    %c0_40 = arith.constant 0 : index
    %45 = vector.load %arg2[%c5, %c0_39, %c0_40] : memref<9x12x8xbf16, #tpu.memory_space<vmem>>, vector<1x12x8xbf16>
    %46 = vector.shape_cast %45 : vector<1x12x8xbf16> to vector<12x8xbf16>
    %cst_41 = arith.constant dense<0.000000e+00> : vector<256x8xf32>
    %47 = tpu.matmul %44, %46, %cst_41 {dimension_numbers = #tpu.dot_dimension_numbers<[1], [0], [0], [1], [0, 0, 1, 1], [], []>} : vector<256x12xbf16>, vector<12x8xbf16>, vector<256x8xf32> -> vector<256x8xf32>
    %48 = arith.addf %40, %47 : vector<256x8xf32>
    %c0_42 = arith.constant 0 : index
    %c2_43 = arith.constant 2 : index
    %c0_44 = arith.constant 0 : index
    %c0_45 = arith.constant 0 : index
    %49 = vector.load %arg1[%c0_42, %c2_43, %c0_44, %c0_45] : memref<1x18x18x12xf32, #tpu.memory_space<vmem>>, vector<1x16x16x12xf32>
    %50 = vector.shape_cast %49 : vector<1x16x16x12xf32> to vector<16x16x12xf32>
    %51 = vector.shape_cast %50 : vector<16x16x12xf32> to vector<256x12xf32>
    %52 = arith.truncf %51 : vector<256x12xf32> to vector<256x12xbf16>
    %c6 = arith.constant 6 : index
    %c0_46 = arith.constant 0 : index
    %c0_47 = arith.constant 0 : index
    %53 = vector.load %arg2[%c6, %c0_46, %c0_47] : memref<9x12x8xbf16, #tpu.memory_space<vmem>>, vector<1x12x8xbf16>
    %54 = vector.shape_cast %53 : vector<1x12x8xbf16> to vector<12x8xbf16>
    %cst_48 = arith.constant dense<0.000000e+00> : vector<256x8xf32>
    %55 = tpu.matmul %52, %54, %cst_48 {dimension_numbers = #tpu.dot_dimension_numbers<[1], [0], [0], [1], [0, 0, 1, 1], [], []>} : vector<256x12xbf16>, vector<12x8xbf16>, vector<256x8xf32> -> vector<256x8xf32>
    %56 = arith.addf %48, %55 : vector<256x8xf32>
    %c0_49 = arith.constant 0 : index
    %c2_50 = arith.constant 2 : index
    %c1_51 = arith.constant 1 : index
    %c0_52 = arith.constant 0 : index
    %57 = vector.load %arg1[%c0_49, %c2_50, %c1_51, %c0_52] : memref<1x18x18x12xf32, #tpu.memory_space<vmem>>, vector<1x16x16x12xf32>
    %58 = vector.shape_cast %57 : vector<1x16x16x12xf32> to vector<16x16x12xf32>
    %59 = vector.shape_cast %58 : vector<16x16x12xf32> to vector<256x12xf32>
    %60 = arith.truncf %59 : vector<256x12xf32> to vector<256x12xbf16>
    %c7 = arith.constant 7 : index
    %c0_53 = arith.constant 0 : index
    %c0_54 = arith.constant 0 : index
    %61 = vector.load %arg2[%c7, %c0_53, %c0_54] : memref<9x12x8xbf16, #tpu.memory_space<vmem>>, vector<1x12x8xbf16>
    %62 = vector.shape_cast %61 : vector<1x12x8xbf16> to vector<12x8xbf16>
    %cst_55 = arith.constant dense<0.000000e+00> : vector<256x8xf32>
    %63 = tpu.matmul %60, %62, %cst_55 {dimension_numbers = #tpu.dot_dimension_numbers<[1], [0], [0], [1], [0, 0, 1, 1], [], []>} : vector<256x12xbf16>, vector<12x8xbf16>, vector<256x8xf32> -> vector<256x8xf32>
    %64 = arith.addf %56, %63 : vector<256x8xf32>
    %c0_56 = arith.constant 0 : index
    %c2_57 = arith.constant 2 : index
    %c2_58 = arith.constant 2 : index
    %c0_59 = arith.constant 0 : index
    %65 = vector.load %arg1[%c0_56, %c2_57, %c2_58, %c0_59] : memref<1x18x18x12xf32, #tpu.memory_space<vmem>>, vector<1x16x16x12xf32>
    %66 = vector.shape_cast %65 : vector<1x16x16x12xf32> to vector<16x16x12xf32>
    %67 = vector.shape_cast %66 : vector<16x16x12xf32> to vector<256x12xf32>
    %68 = arith.truncf %67 : vector<256x12xf32> to vector<256x12xbf16>
    %c8 = arith.constant 8 : index
    %c0_60 = arith.constant 0 : index
    %c0_61 = arith.constant 0 : index
    %69 = vector.load %arg2[%c8, %c0_60, %c0_61] : memref<9x12x8xbf16, #tpu.memory_space<vmem>>, vector<1x12x8xbf16>
    %70 = vector.shape_cast %69 : vector<1x12x8xbf16> to vector<12x8xbf16>
    %cst_62 = arith.constant dense<0.000000e+00> : vector<256x8xf32>
    %71 = tpu.matmul %68, %70, %cst_62 {dimension_numbers = #tpu.dot_dimension_numbers<[1], [0], [0], [1], [0, 0, 1, 1], [], []>} : vector<256x12xbf16>, vector<12x8xbf16>, vector<256x8xf32> -> vector<256x8xf32>
    %72 = arith.addf %64, %71 : vector<256x8xf32>
    %c0_63 = arith.constant 0 : index
    %c0_64 = arith.constant 0 : index
    %73 = vector.load %arg3[%c0_63, %c0_64] : memref<1x8xf32, #tpu.memory_space<vmem>>, vector<1x8xf32>
    %74 = vector.broadcast %73 : vector<1x8xf32> to vector<256x8xf32>
    %75 = arith.addf %72, %74 : vector<256x8xf32>
    %cst_65 = arith.constant 0.000000e+00 : f32
    %76 = vector.broadcast %cst_65 : f32 to vector<256x8xf32>
    %77 = arith.maximumf %75, %76 : vector<256x8xf32>
    %78 = vector.shape_cast %77 : vector<256x8xf32> to vector<16x16x8xf32>
    %c0_66 = arith.constant 0 : index
    %c0_67 = arith.constant 0 : index
    %c0_68 = arith.constant 0 : index
    %c0_69 = arith.constant 0 : index
    %79 = vector.load %arg4[%c0_66, %c0_67, %c0_68, %c0_69] : memref<1x16x16x8xf32, #tpu.memory_space<vmem>>, vector<1x16x16x8xf32>
    %80 = vector.shape_cast %79 : vector<1x16x16x8xf32> to vector<16x16x8xf32>
    %81 = vector.shape_cast %78 : vector<16x16x8xf32> to vector<1x16x16x8xf32>
    tpu.vector_store %arg4[%c0_66, %c0_67, %c0_68, %c0_69], %81 {strides = array<i32>} : memref<1x16x16x8xf32, #tpu.memory_space<vmem>>, vector<1x16x16x8xf32>,
    return
  }
  func.func @transform_0(%arg0: i32) -> (i32, i32, i32, i32) {
    %c0_i32 = arith.constant 0 : i32
    %c0_i32_0 = arith.constant 0 : i32
    %c0_i32_1 = arith.constant 0 : i32
    %c0_i32_2 = arith.constant 0 : i32
    return %arg0, %c0_i32, %c0_i32_0, %c0_i32_1 : i32, i32, i32, i32
  }
  func.func @transform_1(%arg0: i32) -> (i32, i32, i32) {
    %c0_i32 = arith.constant 0 : i32
    %c0_i32_0 = arith.constant 0 : i32
    %c0_i32_1 = arith.constant 0 : i32
    %c0_i32_2 = arith.constant 0 : i32
    return %c0_i32, %c0_i32_0, %c0_i32_1 : i32, i32, i32
  }
  func.func @transform_2(%arg0: i32) -> (i32, i32) {
    %c0_i32 = arith.constant 0 : i32
    %c0_i32_0 = arith.constant 0 : i32
    %c0_i32_1 = arith.constant 0 : i32
    return %c0_i32, %c0_i32_0 : i32, i32
  }
  func.func @transform_3(%arg0: i32) -> (i32, i32, i32, i32) {
    %c0_i32 = arith.constant 0 : i32
    %c0_i32_0 = arith.constant 0 : i32
    %c0_i32_1 = arith.constant 0 : i32
    %c0_i32_2 = arith.constant 0 : i32
    return %arg0, %c0_i32, %c0_i32_0, %c0_i32_1 : i32, i32, i32, i32
  }
}

module attributes {stable_mosaic.version = 11 : i64} {
  func.func @_matmul_bias_kernel(%arg0: i32, %arg1: memref<256x8xf32, #tpu.memory_space<vmem>>, %arg2: memref<8x3xbf16, #tpu.memory_space<vmem>>, %arg3: memref<1x3xf32, #tpu.memory_space<vmem>>, %arg4: memref<256x3xf32, #tpu.memory_space<vmem>>) attributes {dimension_semantics = [#tpu.dimension_semantics<parallel>], iteration_bounds = array<i64: 2>, scalar_prefetch = 0 : i64, scratch_operands = 0 : i64, tpu.core_type = #tpu.core_type<tc>, window_params = [{transform_indices = @transform_0, window_bounds = array<i64: 256, 8>}, {pipeline_mode = #tpu.pipeline_mode<synchronous>, transform_indices = @transform_1, window_bounds = array<i64: 8, 3>}, {pipeline_mode = #tpu.pipeline_mode<synchronous>, transform_indices = @transform_2, window_bounds = array<i64: 1, 3>}, {transform_indices = @transform_3, window_bounds = array<i64: 256, 3>}]} {
    %c0 = arith.constant 0 : index
    %c0_0 = arith.constant 0 : index
    %0 = vector.load %arg1[%c0, %c0_0] : memref<256x8xf32, #tpu.memory_space<vmem>>, vector<256x8xf32>
    %1 = arith.truncf %0 : vector<256x8xf32> to vector<256x8xbf16>
    %c0_1 = arith.constant 0 : index
    %c0_2 = arith.constant 0 : index
    %2 = vector.load %arg2[%c0_1, %c0_2] : memref<8x3xbf16, #tpu.memory_space<vmem>>, vector<8x3xbf16>
    %cst = arith.constant dense<0.000000e+00> : vector<256x3xf32>
    %3 = tpu.matmul %1, %2, %cst {dimension_numbers = #tpu.dot_dimension_numbers<[1], [0], [0], [1], [0, 0, 1, 1], [], []>} : vector<256x8xbf16>, vector<8x3xbf16>, vector<256x3xf32> -> vector<256x3xf32>
    %c0_3 = arith.constant 0 : index
    %c0_4 = arith.constant 0 : index
    %4 = vector.load %arg3[%c0_3, %c0_4] : memref<1x3xf32, #tpu.memory_space<vmem>>, vector<1x3xf32>
    %5 = vector.broadcast %4 : vector<1x3xf32> to vector<256x3xf32>
    %6 = arith.addf %3, %5 : vector<256x3xf32>
    %c0_5 = arith.constant 0 : index
    %c0_6 = arith.constant 0 : index
    %7 = vector.load %arg4[%c0_5, %c0_6] : memref<256x3xf32, #tpu.memory_space<vmem>>, vector<256x3xf32>
    tpu.vector_store %arg4[%c0_5, %c0_6], %6 {strides = array<i32>} : memref<256x3xf32, #tpu.memory_space<vmem>>, vector<256x3xf32>,
    return
  }
  func.func @transform_0(%arg0: i32) -> (i32, i32) {
    %c0_i32 = arith.constant 0 : i32
    %c0_i32_0 = arith.constant 0 : i32
    return %arg0, %c0_i32 : i32, i32
  }
  func.func @transform_1(%arg0: i32) -> (i32, i32) {
    %c0_i32 = arith.constant 0 : i32
    %c0_i32_0 = arith.constant 0 : i32
    %c0_i32_1 = arith.constant 0 : i32
    return %c0_i32, %c0_i32_0 : i32, i32
  }
  func.func @transform_2(%arg0: i32) -> (i32, i32) {
    %c0_i32 = arith.constant 0 : i32
    %c0_i32_0 = arith.constant 0 : i32
    %c0_i32_1 = arith.constant 0 : i32
    return %c0_i32, %c0_i32_0 : i32, i32
  }
  func.func @transform_3(%arg0: i32) -> (i32, i32) {
    %c0_i32 = arith.constant 0 : i32
    %c0_i32_0 = arith.constant 0 : i32
    return %arg0, %c0_i32 : i32, i32
  }
}

</mosaic_0001>

<llo_original>
// kernel: sica_dwt_forward.8
$region0: #{sica_dwt_forward.8}
  #allocation0 [shape = 'u32[]', space=smem, size = 0x4, offset = 0x4, fixed_abs, tag = 'smem constant byte address 0x4 - core index']
  #allocation1 [shape = 'u32[72,128]{1,0:T(1,128)}', space=vmem, size = 0x9000, scoped, tag = 'internal scratch']
  #allocation2 [shape = 'f32[1]{0:T(128)S(6)}', space=smem, size = 0x200, scoped, tag = 'scoped memory for sica_dwt_forward.8']
  %s0 = inlined_call_operand.<no memory space> [shape: f32[1], index: 0, kind: input, shape index: {}]
  %s1 = inlined_call_operand.vmem [shape: f32[2,1,256], index: 1, kind: input, shape index: {}]
  %s2 = inlined_call_operand.vmem [shape: f32[2,256,4], index: 2, kind: input, shape index: {}]
  %s3 = inlined_call_operand.vmem [shape: f32[2,3,4], index: 3, kind: output, shape index: {}]
  %s4 = sld [smem:[#allocation0]]
  $region45: #{sica_dwt_forward.8} parent=0
    _
  %s6 = ssub.s32 1, %s4
  %s7 = scalar_select 0, %s6, %s4
  %8 = sst [smem:[#allocation2]] %s0
  loop: start=0, step=1, limit=4
  $region2: #{sica_dwt_forward.8} parent=0 // loop_pre_header
    _
  $region3: #{sica_dwt_forward.8} parent=0 // loop_header
    %s10 = sphi 0, %s14
    %p11 = scmp.ge.s32.totalorder %s10, 4
    %s18 = sphi 0, %s18
    %s20 = sphi 0, %s18
    %s21 = sphi 0, %s20
    %s35 = sphi 0, %s21
    %s41 = sphi 0, %s43
    %s44 = sphi 0, %s41
    %s45 = sphi 0, %s44
    %s61 = sphi 0, %s45
    %s67 = sphi 0, %s69
    %s70 = sphi 0, %s67
    %s71 = sphi 0, %s70
    %s87 = sphi 0, %s71
    %s93 = sphi 0, %s95
    %s96 = sphi 0, %s93
    %s97 = sphi 0, %s96
    %s113 = sphi 0, %s97
  $region4: #{sica_dwt_forward.8} parent=0 // loop_header_branch
    %13 = sbr.rel (%p11) target = $region8
  $region5: #{sica_dwt_forward.8} parent=0 // loop_body
    %s15 = ssub.s32 %s10, 1
    %s16 = ssub.s32 %s10, 2
    %s17 = sadd.s32 %s10, 1
    %s19 = sadd.s32 %s18, 1
    %p22 = scmp.eq.s32.totalorder %s10, 1
    %p23 = scmp.ne.s32.totalorder %s18, %s20
    %p24 = scmp.eq.s32.totalorder %s10, 0
    %p25 = por %p23, %p24
    %p26 = scmp.ne.s32.totalorder %s18, %s20
    %p27 = scmp.eq.s32.totalorder %s15, 1
    %p28 = por %p26, %p27
    %p29 = scmp.ne.s32.totalorder %s20, %s21
    %p30 = scmp.eq.s32.totalorder %s15, 0
    %p31 = por %p29, %p30
    %p32 = scmp.ne.s32.totalorder %s20, %s21
    %p33 = scmp.eq.s32.totalorder %s16, 1
    %p34 = por %p32, %p33
    %p36 = scmp.ne.s32.totalorder %s21, %s35
    %p37 = scmp.eq.s32.totalorder %s16, 0
    %p38 = por %p36, %p37
    %s39 = ssub.s32 %s10, %s17
    %p40 = scmp.eq.s32.totalorder %s39, 0
    %s42 = sadd.s32 %s41, 1
    %s43 = scalar_select %p40, %s41, %s42
    %p46 = pneg %p40
    %p47 = scmp.eq.s32.totalorder %s10, 1
    %p48 = por %p46, %p47
    %p49 = scmp.ne.s32.totalorder %s41, %s44
    %p50 = scmp.eq.s32.totalorder %s10, 0
    %p51 = por %p49, %p50
    %p52 = scmp.ne.s32.totalorder %s41, %s44
    %p53 = scmp.eq.s32.totalorder %s15, 1
    %p54 = por %p52, %p53
    %p55 = scmp.ne.s32.totalorder %s44, %s45
    %p56 = scmp.eq.s32.totalorder %s15, 0
    %p57 = por %p55, %p56
    %p58 = scmp.ne.s32.totalorder %s44, %s45
    %p59 = scmp.eq.s32.totalorder %s16, 1
    %p60 = por %p58, %p59
    %p62 = scmp.ne.s32.totalorder %s45, %s61
    %p63 = scmp.eq.s32.totalorder %s16, 0
    %p64 = por %p62, %p63
    %s65 = ssub.s32 %s10, %s17
    %p66 = scmp.eq.s32.totalorder %s65, 0
    %s68 = sadd.s32 %s67, 1
    %s69 = scalar_select %p66, %s67, %s68
    %p72 = pneg %p66
    %p73 = scmp.eq.s32.totalorder %s10, 1
    %p74 = por %p72, %p73
    %p75 = scmp.ne.s32.totalorder %s67, %s70
    %p76 = scmp.eq.s32.totalorder %s10, 0
    %p77 = por %p75, %p76
    %p78 = scmp.ne.s32.totalorder %s67, %s70
    %p79 = scmp.eq.s32.totalorder %s15, 1
    %p80 = por %p78, %p79
    %p81 = scmp.ne.s32.totalorder %s70, %s71
    %p82 = scmp.eq.s32.totalorder %s15, 0
    %p83 = por %p81, %p82
    %p84 = scmp.ne.s32.totalorder %s70, %s71
    %p85 = scmp.eq.s32.totalorder %s16, 1
    %p86 = por %p84, %p85
    %p88 = scmp.ne.s32.totalorder %s71, %s87
    %p89 = scmp.eq.s32.totalorder %s16, 0
    %p90 = por %p88, %p89
    %s91 = ssub.s32 %s10, %s17
    %p92 = scmp.eq.s32.totalorder %s91, 0
    %s94 = sadd.s32 %s93, 1
    %s95 = scalar_select %p92, %s93, %s94
    %p98 = pneg %p92
    %p99 = scmp.eq.s32.totalorder %s10, 1
    %p100 = por %p98, %p99
    %p101 = scmp.ne.s32.totalorder %s93, %s96
    %p102 = scmp.eq.s32.totalorder %s10, 0
    %p103 = por %p101, %p102
    %p104 = scmp.ne.s32.totalorder %s93, %s96
    %p105 = scmp.eq.s32.totalorder %s15, 1
    %p106 = por %p104, %p105
    %p107 = scmp.ne.s32.totalorder %s96, %s97
    %p108 = scmp.eq.s32.totalorder %s15, 0
    %p109 = por %p107, %p108
    %p110 = scmp.ne.s32.totalorder %s96, %s97
    %p111 = scmp.eq.s32.totalorder %s16, 1
    %p112 = por %p110, %p111
    %p114 = scmp.ne.s32.totalorder %s97, %s113
    %p115 = scmp.eq.s32.totalorder %s16, 0
    %p116 = por %p114, %p115
    %p117 = scmp.le.s32.totalorder 1, %s10
    %p118 = scmp.lt.s32.totalorder %s10, 3
    %p119 = pnand %p117, %p118
    %p120 = pneg %p119
    // Predicated region
    $region9: #{sica_dwt_forward.8} parent=5 // pred_check
      _
    $region10: #{sica_dwt_forward.8} parent=5 // pred_check_branch
      %122 = sbr.rel (%p119) target = $region12
    $region11: #{sica_dwt_forward.8} parent=5 // pred_region
      %s123 = ssub.s32 %s10, 1
      // Predicated region
      $region13: #{sica_dwt_forward.8} parent=11 // pred_check
        %p124 = pneg %p31
      $region14: #{sica_dwt_forward.8} parent=11 // pred_check_branch
        %126 = sbr.rel (%p124) target = $region16
      $region15: #{sica_dwt_forward.8} parent=11 // pred_region
        _
      $region16: #{sica_dwt_forward.8} parent=11 // pred_fallthru
        _
    $region12: #{sica_dwt_forward.8} parent=5 // pred_fallthru
      _
    %p127 = scmp.lt.s32.totalorder %s10, 2
    // Predicated region
    $region17: #{sica_dwt_forward.8} parent=5 // pred_check
      %p128 = pneg %p127
    $region18: #{sica_dwt_forward.8} parent=5 // pred_check_branch
      %130 = sbr.rel (%p128) target = $region20
    $region19: #{sica_dwt_forward.8} parent=5 // pred_region
      // Predicated region
      $region21: #{sica_dwt_forward.8} parent=19 // pred_check
        %p131 = pneg %p51
      $region22: #{sica_dwt_forward.8} parent=19 // pred_check_branch
        %133 = sbr.rel (%p131) target = $region24
      $region23: #{sica_dwt_forward.8} parent=19 // pred_region
        %p134 = scmp.lt.s32.totalorder %s10, 1
        %s135 = scalar_select %p134, %s10, 1
        %s136 = smul.addr %s135, 2
        %s137 = scalar_lea.vmem %s1, %s136
      $region24: #{sica_dwt_forward.8} parent=19 // pred_fallthru
        _
      // Predicated region
      $region25: #{sica_dwt_forward.8} parent=19 // pred_check
        %p138 = pneg %p77
      $region26: #{sica_dwt_forward.8} parent=19 // pred_check_branch
        %140 = sbr.rel (%p138) target = $region28
      $region27: #{sica_dwt_forward.8} parent=19 // pred_region
        %p141 = scmp.lt.s32.totalorder %s10, 1
        %s142 = scalar_select %p141, %s10, 1
        %s143 = smul.addr %s142, 32
        %s144 = smul.addr %s143, 8
        %s145 = scalar_lea.vmem %s2, %s144
      $region28: #{sica_dwt_forward.8} parent=19 // pred_fallthru
        _
    $region20: #{sica_dwt_forward.8} parent=5 // pred_fallthru
      _
    %p146 = scmp.le.s32.totalorder 1, %s10
    %p147 = scmp.lt.s32.totalorder %s10, 3
    %p148 = pnand %p146, %p147
    %p149 = pneg %p148
    // Predicated region
    $region29: #{sica_dwt_forward.8} parent=5 // pred_check
      _
    $region30: #{sica_dwt_forward.8} parent=5 // pred_check_branch
      %151 = sbr.rel (%p148) target = $region32
    $region31: #{sica_dwt_forward.8} parent=5 // pred_region
      %s152 = ssub.s32 %s10, 1
      %p153 = pneg %p31
      %p154 = pneg %p28
      %p155 = scmp.lt.s32.totalorder %s15, 1
      %s156 = scalar_select %p155, %s15, 1
      %s157 = smul.addr %s156, 2
      %s158 = scalar_lea.vmem %s1, %s157
      %p159 = pneg %p57
      %p160 = pneg %p54
      %p161 = scmp.lt.s32.totalorder %s15, 1
      %s162 = scalar_select %p161, %s15, 1
      %s163 = smul.addr %s162, 32
      %s164 = smul.addr %s163, 8
      %s165 = scalar_lea.vmem %s2, %s164
      %p166 = pneg %p83
      %p167 = pneg %p80
      %p168 = pneg %p109
      %p169 = pneg %p106
      %p170 = scmp.lt.s32.totalorder %s15, 1
      %s171 = scalar_select %p170, %s15, 1
      %s172 = smul.addr %s171, 4
      %s173 = scalar_lea.vmem %s3, %s172
      %p174 = scmp.lt.s32.totalorder %s15, 1
      %s175 = scalar_select %p174, %s15, 1
      %s176 = smul.addr %s175, 2
      %s177 = scalar_lea.vmem %s1, %s176
      %p178 = scmp.lt.s32.totalorder %s15, 1
      %s179 = scalar_select %p178, %s15, 1
      %s180 = smul.addr %s179, 32
      %s181 = smul.addr %s180, 8
      %s182 = scalar_lea.vmem %s2, %s181
      %p183 = scmp.lt.s32.totalorder %s15, 1
      %s184 = scalar_select %p183, %s15, 1
      %s185 = smul.addr %s184, 4
      %s186 = scalar_lea.vmem %s3, %s185
      %s187 = sld [smem:[#allocation2]]
      %v188 = vld [vmem:[%s177] sm:$0x3]
      %v189 = vxor.u32 %v188, 2147483648
      %v190 = vmul.f32 %v189, 1.442695
      %v191 = vpow.pop %v190
      %v192 = vadd.f32 %v191, 1.0
      %v193 = vrcp.pop %v192
      %v194 = vmul.f32 %v192, %v193
      %v195 = vsub.f32 1.0, %v194
      %v196 = vmul.f32 %v193, %v195
      %v197 = vadd.f32 %v193, %v196
      %vm198 = vweird.f32 %v192
      %vm199 = vweird.f32 %v193
      %vm200 = vmor %vm198, %vm199
      %v201 = vsel %vm200, %v193, %v197
      %v202 = vand.u32 2147483647, %v192
      %vm203 = vcmp.eq.f32.partialorder %v202, 8.507059e+37
      %v204 = vand.u32 %v192, 2147483648
      %v205 = vor.u32 1.1754944e-38, %v204
      %v206 = vsel %vm203, %v205, %v201
      %v207 = vmul.f32 1.0, %v206
      %v208 = vstv %s187
      %v209 = vsub.f32 %v207, %v208
      %v210 = vmax.f32 %v209, 0.0
      %v211 = vmin.f32 %v210, 1.0
      %v212 = vsub.f32 0.0, %v209
      %v213 = vmax.f32 %v212, 0.0
      %v214 = vmin.f32 %v213, 1.0
      %v215 = vand.u32 2147483647, %v209
      %v216 = vsub.f32 %v208, %v215
      %v218 = vperm.slane %v211, 0
      %v219 = vperm.slane %v211, 1
      %v223 = vperm.slane %v214, 0
      %v224 = vperm.slane %v214, 1
      %v228 = vperm.slane %v216, 0
      %v229 = vperm.slane %v216, 1
      %vm232 = vcmask 1040384
      %v233 = vsel %vm232, %v218, %v223
      %v234 = vsel %vm232, %v219, %v224
      %vm235 = vcmask 1041408
      %v236 = vsel %vm235, %v233, %v228
      %v237 = vsel %vm235, %v234, %v229
      %v238 = vpack.c.bf16 %v236, %v236
      %v239 = vpack.c.bf16 %v237, %v237
      %v240 = vld [vmem:[%s182] sm:$0xff]
      %v241 = vld [vmem:[%s182 + $0x8] sm:$0xff]
      %v242 = vld [vmem:[%s182 + $0x10] sm:$0xff]
      %v243 = vld [vmem:[%s182 + $0x18] sm:$0xff]
      %v244 = vld [vmem:[%s182 + $0x20] sm:$0xff]
      %v245 = vld [vmem:[%s182 + $0x28] sm:$0xff]
      %v246 = vld [vmem:[%s182 + $0x30] sm:$0xff]
      %v247 = vld [vmem:[%s182 + $0x38] sm:$0xff]
      %v248 = vld [vmem:[%s182 + $0x40] sm:$0xff]
      %v249 = vld [vmem:[%s182 + $0x48] sm:$0xff]
      %v250 = vld [vmem:[%s182 + $0x50] sm:$0xff]
      %v251 = vld [vmem:[%s182 + $0x58] sm:$0xff]
      %v252 = vld [vmem:[%s182 + $0x60] sm:$0xff]
      %v253 = vld [vmem:[%s182 + $0x68] sm:$0xff]
      %v254 = vld [vmem:[%s182 + $0x70] sm:$0xff]
      %v255 = vld [vmem:[%s182 + $0x78] sm:$0xff]
      %v256 = vld [vmem:[%s182 + $0x80] sm:$0xff]
      %v257 = vld [vmem:[%s182 + $0x88] sm:$0xff]
      %v258 = vld [vmem:[%s182 + $0x90] sm:$0xff]
      %v259 = vld [vmem:[%s182 + $0x98] sm:$0xff]
      %v260 = vld [vmem:[%s182 + $0xa0] sm:$0xff]
      %v261 = vld [vmem:[%s182 + $0xa8] sm:$0xff]
      %v262 = vld [vmem:[%s182 + $0xb0] sm:$0xff]
      %v263 = vld [vmem:[%s182 + $0xb8] sm:$0xff]
      %v264 = vld [vmem:[%s182 + $0xc0] sm:$0xff]
      %v265 = vld [vmem:[%s182 + $0xc8] sm:$0xff]
      %v266 = vld [vmem:[%s182 + $0xd0] sm:$0xff]
      %v267 = vld [vmem:[%s182 + $0xd8] sm:$0xff]
      %v268 = vld [vmem:[%s182 + $0xe0] sm:$0xff]
      %v269 = vld [vmem:[%s182 + $0xe8] sm:$0xff]
      %v270 = vld [vmem:[%s182 + $0xf0] sm:$0xff]
      %v271 = vld [vmem:[%s182 + $0xf8] sm:$0xff]
      %v272 = vpack.c.bf16 %v241, %v240
      %v273 = vpack.c.bf16 %v243, %v242
      %v274 = vpack.c.bf16 %v245, %v244
      %v275 = vpack.c.bf16 %v247, %v246
      %v276 = vpack.c.bf16 %v249, %v248
      %v277 = vpack.c.bf16 %v251, %v250
      %v278 = vpack.c.bf16 %v253, %v252
      %v279 = vpack.c.bf16 %v255, %v254
      %v280 = vpack.c.bf16 %v257, %v256
      %v281 = vpack.c.bf16 %v259, %v258
      %v282 = vpack.c.bf16 %v261, %v260
      %v283 = vpack.c.bf16 %v263, %v262
      %v284 = vpack.c.bf16 %v265, %v264
      %v285 = vpack.c.bf16 %v267, %v266
      %v286 = vpack.c.bf16 %v269, %v268
      %v287 = vpack.c.bf16 %v271, %v270
      %288 = vmatpush.bf16.msra.mxu0 %v279
      %289 = vmatpush.bf16.msra.mxu0 %v278
      %290 = vmatpush.bf16.msra.mxu0 %v277
      %291 = vmatpush.bf16.msra.mxu0 %v276
      %292 = vmatpush.bf16.msra.mxu0 %v275
      %293 = vmatpush.bf16.msra.mxu0 %v274
      %294 = vmatpush.bf16.msra.mxu0 %v273
      %295 = vmatpush.bf16.msra.mxu0 %v272
      %296 = vmatmul.bf16.gmra.mxu0 %v238
      %v297 = vpop.f32.mrf.mxu0
      %v298 = vadd.f32 0.0, %v297
      %v299 = vpop.f32.mrf.mxu0
      %300 = vdwg.mxu0
      %301 = vmatpush.bf16.msra.mxu0 %v287
      %302 = vmatpush.bf16.msra.mxu0 %v286
      %303 = vmatpush.bf16.msra.mxu0 %v285
      %304 = vmatpush.bf16.msra.mxu0 %v284
      %305 = vmatpush.bf16.msra.mxu0 %v283
      %306 = vmatpush.bf16.msra.mxu0 %v282
      %307 = vmatpush.bf16.msra.mxu0 %v281
      %308 = vmatpush.bf16.msra.mxu0 %v280
      %309 = vmatmul.bf16.gmra.mxu0 %v239
      %v310 = vpop.f32.mrf.mxu0
      %v311 = vadd.f32 %v298, %v310
      %v312 = vpop.f32.mrf.mxu0
      %313 = vdwg.mxu0
      %vm314 = vcmask 26624
      %315 = vst.msk [vmem:[%s186] sm:$0x7] %vm314, %v311
      %p316 = scmp.lt.s32.totalorder %s15, 1
      %s317 = scalar_select %p316, %s15, 1
      %s318 = smul.addr %s317, 4
      %s319 = scalar_lea.vmem %s3, %s318
      // Predicated region
      $region33: #{sica_dwt_forward.8} parent=31 // pred_check
        %p320 = pneg %p106
      $region34: #{sica_dwt_forward.8} parent=31 // pred_check_branch
        %322 = sbr.rel (%p320) target = $region36
      $region35: #{sica_dwt_forward.8} parent=31 // pred_region
        _
      $region36: #{sica_dwt_forward.8} parent=31 // pred_fallthru
        _
    $region32: #{sica_dwt_forward.8} parent=5 // pred_fallthru
      _
    %p323 = scmp.le.s32.totalorder 2, %s10
    // Predicated region
    $region37: #{sica_dwt_forward.8} parent=5 // pred_check
      %p324 = pneg %p323
    $region38: #{sica_dwt_forward.8} parent=5 // pred_check_branch
      %326 = sbr.rel (%p324) target = $region40
    $region39: #{sica_dwt_forward.8} parent=5 // pred_region
      %s327 = ssub.s32 %s10, 2
      // Predicated region
      $region41: #{sica_dwt_forward.8} parent=39 // pred_check
        %p328 = pneg %p112
      $region42: #{sica_dwt_forward.8} parent=39 // pred_check_branch
        %330 = sbr.rel (%p328) target = $region44
      $region43: #{sica_dwt_forward.8} parent=39 // pred_region
        %p331 = scmp.lt.s32.totalorder %s16, 1
        %s332 = scalar_select %p331, %s16, 1
        %s333 = smul.addr %s332, 4
        %s334 = scalar_lea.vmem %s3, %s333
      $region44: #{sica_dwt_forward.8} parent=39 // pred_fallthru
        _
    $region40: #{sica_dwt_forward.8} parent=5 // pred_fallthru
      _
  $region6: #{sica_dwt_forward.8} parent=0 // loop_footer
    %s14 = sadd.s32 1, %s10
  $region7: #{sica_dwt_forward.8} parent=0 // loop_footer_branch
    %9 = sbr.rel target = $region3
  $region8: #{sica_dwt_forward.8} parent=0 // loop_exit
    _

// kernel: sica_dwt_forward.9
$region0: #{sica_dwt_forward.9}
  #allocation0 [shape = 'u32[]', space=smem, size = 0x4, offset = 0x4, fixed_abs, tag = 'smem constant byte address 0x4 - core index']
  #allocation1 [shape = 'u32[72,128]{1,0:T(1,128)}', space=vmem, size = 0x9000, scoped, tag = 'internal scratch']
  %s0 = inlined_call_operand.vmem [shape: f32[2,18,18,4], index: 0, kind: input, shape index: {}]
  %s1 = inlined_call_operand.vmem [shape: bf16[9,4,8], index: 1, kind: input, shape index: {}]
  %s2 = inlined_call_operand.vmem [shape: f32[1,8], index: 2, kind: input, shape index: {}]
  %s3 = inlined_call_operand.vmem [shape: f32[2,16,16,8], index: 3, kind: output, shape index: {}]
  %s4 = sld [smem:[#allocation0]]
  $region45: #{sica_dwt_forward.9} parent=0
    _
  %s6 = ssub.s32 1, %s4
  %s7 = scalar_select 0, %s6, %s4
  loop: start=0, step=1, limit=4
  $region2: #{sica_dwt_forward.9} parent=0 // loop_pre_header
    _
  $region3: #{sica_dwt_forward.9} parent=0 // loop_header
    %s9 = sphi 0, %s13
    %p10 = scmp.ge.s32.totalorder %s9, 4
    %s19 = sphi 0, %s21
    %s22 = sphi 0, %s19
    %s23 = sphi 0, %s22
    %s39 = sphi 0, %s23
    %s43 = sphi 0, %s43
    %s45 = sphi 0, %s43
    %s46 = sphi 0, %s45
    %s60 = sphi 0, %s46
    %s64 = sphi 0, %s64
    %s66 = sphi 0, %s64
    %s67 = sphi 0, %s66
    %s81 = sphi 0, %s67
    %s87 = sphi 0, %s89
    %s90 = sphi 0, %s87
    %s91 = sphi 0, %s90
    %s107 = sphi 0, %s91
  $region4: #{sica_dwt_forward.9} parent=0 // loop_header_branch
    %12 = sbr.rel (%p10) target = $region8
  $region5: #{sica_dwt_forward.9} parent=0 // loop_body
    %s14 = ssub.s32 %s9, 1
    %s15 = ssub.s32 %s9, 2
    %s16 = sadd.s32 %s9, 1
    %s17 = ssub.s32 %s9, %s16
    %p18 = scmp.eq.s32.totalorder %s17, 0
    %s20 = sadd.s32 %s19, 1
    %s21 = scalar_select %p18, %s19, %s20
    %p24 = pneg %p18
    %p25 = scmp.eq.s32.totalorder %s9, 1
    %p26 = por %p24, %p25
    %p27 = scmp.ne.s32.totalorder %s19, %s22
    %p28 = scmp.eq.s32.totalorder %s9, 0
    %p29 = por %p27, %p28
    %p30 = scmp.ne.s32.totalorder %s19, %s22
    %p31 = scmp.eq.s32.totalorder %s14, 1
    %p32 = por %p30, %p31
    %p33 = scmp.ne.s32.totalorder %s22, %s23
    %p34 = scmp.eq.s32.totalorder %s14, 0
    %p35 = por %p33, %p34
    %p36 = scmp.ne.s32.totalorder %s22, %s23
    %p37 = scmp.eq.s32.totalorder %s15, 1
    %p38 = por %p36, %p37
    %p40 = scmp.ne.s32.totalorder %s23, %s39
    %p41 = scmp.eq.s32.totalorder %s15, 0
    %p42 = por %p40, %p41
    %s44 = sadd.s32 %s43, 1
    %p47 = scmp.eq.s32.totalorder %s9, 1
    %p48 = scmp.ne.s32.totalorder %s43, %s45
    %p49 = scmp.eq.s32.totalorder %s9, 0
    %p50 = por %p48, %p49
    %p51 = scmp.ne.s32.totalorder %s43, %s45
    %p52 = scmp.eq.s32.totalorder %s14, 1
    %p53 = por %p51, %p52
    %p54 = scmp.ne.s32.totalorder %s45, %s46
    %p55 = scmp.eq.s32.totalorder %s14, 0
    %p56 = por %p54, %p55
    %p57 = scmp.ne.s32.totalorder %s45, %s46
    %p58 = scmp.eq.s32.totalorder %s15, 1
    %p59 = por %p57, %p58
    %p61 = scmp.ne.s32.totalorder %s46, %s60
    %p62 = scmp.eq.s32.totalorder %s15, 0
    %p63 = por %p61, %p62
    %s65 = sadd.s32 %s64, 1
    %p68 = scmp.eq.s32.totalorder %s9, 1
    %p69 = scmp.ne.s32.totalorder %s64, %s66
    %p70 = scmp.eq.s32.totalorder %s9, 0
    %p71 = por %p69, %p70
    %p72 = scmp.ne.s32.totalorder %s64, %s66
    %p73 = scmp.eq.s32.totalorder %s14, 1
    %p74 = por %p72, %p73
    %p75 = scmp.ne.s32.totalorder %s66, %s67
    %p76 = scmp.eq.s32.totalorder %s14, 0
    %p77 = por %p75, %p76
    %p78 = scmp.ne.s32.totalorder %s66, %s67
    %p79 = scmp.eq.s32.totalorder %s15, 1
    %p80 = por %p78, %p79
    %p82 = scmp.ne.s32.totalorder %s67, %s81
    %p83 = scmp.eq.s32.totalorder %s15, 0
    %p84 = por %p82, %p83
    %s85 = ssub.s32 %s9, %s16
    %p86 = scmp.eq.s32.totalorder %s85, 0
    %s88 = sadd.s32 %s87, 1
    %s89 = scalar_select %p86, %s87, %s88
    %p92 = pneg %p86
    %p93 = scmp.eq.s32.totalorder %s9, 1
    %p94 = por %p92, %p93
    %p95 = scmp.ne.s32.totalorder %s87, %s90
    %p96 = scmp.eq.s32.totalorder %s9, 0
    %p97 = por %p95, %p96
    %p98 = scmp.ne.s32.totalorder %s87, %s90
    %p99 = scmp.eq.s32.totalorder %s14, 1
    %p100 = por %p98, %p99
    %p101 = scmp.ne.s32.totalorder %s90, %s91
    %p102 = scmp.eq.s32.totalorder %s14, 0
    %p103 = por %p101, %p102
    %p104 = scmp.ne.s32.totalorder %s90, %s91
    %p105 = scmp.eq.s32.totalorder %s15, 1
    %p106 = por %p104, %p105
    %p108 = scmp.ne.s32.totalorder %s91, %s107
    %p109 = scmp.eq.s32.totalorder %s15, 0
    %p110 = por %p108, %p109
    %p111 = scmp.le.s32.totalorder 1, %s9
    %p112 = scmp.lt.s32.totalorder %s9, 3
    %p113 = pnand %p111, %p112
    %p114 = pneg %p113
    // Predicated region
    $region9: #{sica_dwt_forward.9} parent=5 // pred_check
      _
    $region10: #{sica_dwt_forward.9} parent=5 // pred_check_branch
      %116 = sbr.rel (%p113) target = $region12
    $region11: #{sica_dwt_forward.9} parent=5 // pred_region
      %s117 = ssub.s32 %s9, 1
      // Predicated region
      $region13: #{sica_dwt_forward.9} parent=11 // pred_check
        %p118 = pneg %p56
      $region14: #{sica_dwt_forward.9} parent=11 // pred_check_branch
        %120 = sbr.rel (%p118) target = $region16
      $region15: #{sica_dwt_forward.9} parent=11 // pred_region
        _
      $region16: #{sica_dwt_forward.9} parent=11 // pred_fallthru
        _
      // Predicated region
      $region17: #{sica_dwt_forward.9} parent=11 // pred_check
        %p121 = pneg %p77
      $region18: #{sica_dwt_forward.9} parent=11 // pred_check_branch
        %123 = sbr.rel (%p121) target = $region20
      $region19: #{sica_dwt_forward.9} parent=11 // pred_region
        _
      $region20: #{sica_dwt_forward.9} parent=11 // pred_fallthru
        _
    $region12: #{sica_dwt_forward.9} parent=5 // pred_fallthru
      _
    %p124 = scmp.lt.s32.totalorder %s9, 2
    // Predicated region
    $region21: #{sica_dwt_forward.9} parent=5 // pred_check
      %p125 = pneg %p124
    $region22: #{sica_dwt_forward.9} parent=5 // pred_check_branch
      %127 = sbr.rel (%p125) target = $region24
    $region23: #{sica_dwt_forward.9} parent=5 // pred_region
      // Predicated region
      $region25: #{sica_dwt_forward.9} parent=23 // pred_check
        %p128 = pneg %p29
      $region26: #{sica_dwt_forward.9} parent=23 // pred_check_branch
        %130 = sbr.rel (%p128) target = $region28
      $region27: #{sica_dwt_forward.9} parent=23 // pred_region
        %p131 = scmp.lt.s32.totalorder %s9, 1
        %s132 = scalar_select %p131, %s9, 1
        %s133 = smul.addr %s132, 54
        %s134 = smul.addr %s133, 8
        %s135 = scalar_lea.vmem %s0, %s134
      $region28: #{sica_dwt_forward.9} parent=23 // pred_fallthru
        _
    $region24: #{sica_dwt_forward.9} parent=5 // pred_fallthru
      _
    %p136 = scmp.le.s32.totalorder 1, %s9
    %p137 = scmp.lt.s32.totalorder %s9, 3
    %p138 = pnand %p136, %p137
    %p139 = pneg %p138
    // Predicated region
    $region29: #{sica_dwt_forward.9} parent=5 // pred_check
      _
    $region30: #{sica_dwt_forward.9} parent=5 // pred_check_branch
      %141 = sbr.rel (%p138) target = $region32
    $region31: #{sica_dwt_forward.9} parent=5 // pred_region
      %s142 = ssub.s32 %s9, 1
      %p143 = scmp.lt.s32.totalorder %s14, 1
      %s144 = scalar_select %p143, %s14, 1
      %s145 = smul.addr %s144, 54
      %s146 = smul.addr %s145, 8
      %s147 = scalar_lea.vmem %s0, %s146
      %p148 = pneg %p35
      %p149 = pneg %p32
      %p150 = pneg %p56
      %p151 = pneg %p53
      %p152 = pneg %p77
      %p153 = pneg %p74
      %p154 = pneg %p103
      %p155 = pneg %p100
      %p156 = scmp.lt.s32.totalorder %s14, 1
      %s157 = scalar_select %p156, %s14, 1
      %s158 = smul.addr %s157, 32
      %s159 = smul.addr %s158, 8
      %s160 = scalar_lea.vmem %s3, %s159
      %p161 = scmp.lt.s32.totalorder %s14, 1
      %s162 = scalar_select %p161, %s14, 1
      %s163 = smul.addr %s162, 54
      %s164 = smul.addr %s163, 8
      %s165 = scalar_lea.vmem %s0, %s164
      %p166 = scmp.lt.s32.totalorder %s14, 1
      %s167 = scalar_select %p166, %s14, 1
      %s168 = smul.addr %s167, 32
      %s169 = smul.addr %s168, 8
      %s170 = scalar_lea.vmem %s3, %s169
      %v172 = vld [vmem:[%s165] sm:$0xff]
      %v173 = vld [vmem:[%s165 + $0x8] sm:$0xff]
      %v174 = vld [vmem:[%s165 + $0x18] sm:$0xff]
      %v175 = vld [vmem:[%s165 + $0x20] sm:$0xff]
      %v176 = vld [vmem:[%s165 + $0x30] sm:$0xff]
      %v177 = vld [vmem:[%s165 + $0x38] sm:$0xff]
      %v178 = vld [vmem:[%s165 + $0x48] sm:$0xff]
      %v179 = vld [vmem:[%s165 + $0x50] sm:$0xff]
      %v180 = vld [vmem:[%s165 + $0x60] sm:$0xff]
      %v181 = vld [vmem:[%s165 + $0x68] sm:$0xff]
      %v182 = vld [vmem:[%s165 + $0x78] sm:$0xff]
      %v183 = vld [vmem:[%s165 + $0x80] sm:$0xff]
      %v184 = vld [vmem:[%s165 + $0x90] sm:$0xff]
      %v185 = vld [vmem:[%s165 + $0x98] sm:$0xff]
      %v186 = vld [vmem:[%s165 + $0xa8] sm:$0xff]
      %v187 = vld [vmem:[%s165 + $0xb0] sm:$0xff]
      %v188 = vld [vmem:[%s165 + $0xc0] sm:$0xff]
      %v189 = vld [vmem:[%s165 + $0xc8] sm:$0xff]
      %v190 = vld [vmem:[%s165 + $0xd8] sm:$0xff]
      %v191 = vld [vmem:[%s165 + $0xe0] sm:$0xff]
      %v192 = vld [vmem:[%s165 + $0xf0] sm:$0xff]
      %v193 = vld [vmem:[%s165 + $0xf8] sm:$0xff]
      %v194 = vld [vmem:[%s165 + $0x108] sm:$0xff]
      %v195 = vld [vmem:[%s165 + $0x110] sm:$0xff]
      %v196 = vld [vmem:[%s165 + $0x120] sm:$0xff]
      %v197 = vld [vmem:[%s165 + $0x128] sm:$0xff]
      %v198 = vld [vmem:[%s165 + $0x138] sm:$0xff]
      %v199 = vld [vmem:[%s165 + $0x140] sm:$0xff]
      %v200 = vld [vmem:[%s165 + $0x150] sm:$0xff]
      %v201 = vld [vmem:[%s165 + $0x158] sm:$0xff]
      %v202 = vld [vmem:[%s165 + $0x168] sm:$0xff]
      %v203 = vld [vmem:[%s165 + $0x170] sm:$0xff]
      %v204 = vpack.c.bf16 %v173, %v172
      %v205 = vpack.c.bf16 %v175, %v174
      %v206 = vpack.c.bf16 %v177, %v176
      %v207 = vpack.c.bf16 %v179, %v178
      %v208 = vpack.c.bf16 %v181, %v180
      %v209 = vpack.c.bf16 %v183, %v182
      %v210 = vpack.c.bf16 %v185, %v184
      %v211 = vpack.c.bf16 %v187, %v186
      %v212 = vpack.c.bf16 %v189, %v188
      %v213 = vpack.c.bf16 %v191, %v190
      %v214 = vpack.c.bf16 %v193, %v192
      %v215 = vpack.c.bf16 %v195, %v194
      %v216 = vpack.c.bf16 %v197, %v196
      %v217 = vpack.c.bf16 %v199, %v198
      %v218 = vpack.c.bf16 %v201, %v200
      %v219 = vpack.c.bf16 %v203, %v202
      %v220 = vld [vmem:[%s1] sm:$0x3]
      %v221 = vld [vmem:[%s165 + $0x1] sm:$0xff]
      %v222 = vld [vmem:[%s165 + $0x9] sm:$0xff]
      %v223 = vld [vmem:[%s165 + $0x19] sm:$0xff]
      %v224 = vld [vmem:[%s165 + $0x21] sm:$0xff]
      %v225 = vld [vmem:[%s165 + $0x31] sm:$0xff]
      %v226 = vld [vmem:[%s165 + $0x39] sm:$0xff]
      %v227 = vld [vmem:[%s165 + $0x49] sm:$0xff]
      %v228 = vld [vmem:[%s165 + $0x51] sm:$0xff]
      %v229 = vld [vmem:[%s165 + $0x61] sm:$0xff]
      %v230 = vld [vmem:[%s165 + $0x69] sm:$0xff]
      %v231 = vld [vmem:[%s165 + $0x79] sm:$0xff]
      %v232 = vld [vmem:[%s165 + $0x81] sm:$0xff]
      %v233 = vld [vmem:[%s165 + $0x91] sm:$0xff]
      %v234 = vld [vmem:[%s165 + $0x99] sm:$0xff]
      %v235 = vld [vmem:[%s165 + $0xa9] sm:$0xff]
      %v236 = vld [vmem:[%s165 + $0xb1] sm:$0xff]
      %v237 = vld [vmem:[%s165 + $0xc1] sm:$0xff]
      %v238 = vld [vmem:[%s165 + $0xc9] sm:$0xff]
      %v239 = vld [vmem:[%s165 + $0xd9] sm:$0xff]
      %v240 = vld [vmem:[%s165 + $0xe1] sm:$0xff]
      %v241 = vld [vmem:[%s165 + $0xf1] sm:$0xff]
      %v242 = vld [vmem:[%s165 + $0xf9] sm:$0xff]
      %v243 = vld [vmem:[%s165 + $0x109] sm:$0xff]
      %v244 = vld [vmem:[%s165 + $0x111] sm:$0xff]
      %v245 = vld [vmem:[%s165 + $0x121] sm:$0xff]
      %v246 = vld [vmem:[%s165 + $0x129] sm:$0xff]
      %v247 = vld [vmem:[%s165 + $0x139] sm:$0xff]
      %v248 = vld [vmem:[%s165 + $0x141] sm:$0xff]
      %v249 = vld [vmem:[%s165 + $0x151] sm:$0xff]
      %v250 = vld [vmem:[%s165 + $0x159] sm:$0xff]
      %v251 = vld [vmem:[%s165 + $0x169] sm:$0xff]
      %v252 = vld [vmem:[%s165 + $0x171] sm:$0xff]
      %v253 = vpack.c.bf16 %v222, %v221
      %v254 = vpack.c.bf16 %v224, %v223
      %v255 = vpack.c.bf16 %v226, %v225
      %v256 = vpack.c.bf16 %v228, %v227
      %v257 = vpack.c.bf16 %v230, %v229
      %v258 = vpack.c.bf16 %v232, %v231
      %v259 = vpack.c.bf16 %v234, %v233
      %v260 = vpack.c.bf16 %v236, %v235
      %v261 = vpack.c.bf16 %v238, %v237
      %v262 = vpack.c.bf16 %v240, %v239
      %v263 = vpack.c.bf16 %v242, %v241
      %v264 = vpack.c.bf16 %v244, %v243
      %v265 = vpack.c.bf16 %v246, %v245
      %v266 = vpack.c.bf16 %v248, %v247
      %v267 = vpack.c.bf16 %v250, %v249
      %v268 = vpack.c.bf16 %v252, %v251
      %s269 = scalar_lea.vmem %s1, 2
      %v270 = vld [vmem:[%s269] sm:$0x3]
      %vm271 = vcmask 31744
      %v273 = vsel %vm271, %v253, 0
      %v276 = vsel %vm271, %v254, 0
      %v279 = vsel %vm271, %v255, 0
      %v282 = vsel %vm271, %v256, 0
      %v285 = vsel %vm271, %v257, 0
      %v288 = vsel %vm271, %v258, 0
      %v291 = vsel %vm271, %v259, 0
      %v294 = vsel %vm271, %v260, 0
      %v297 = vsel %vm271, %v261, 0
      %v300 = vsel %vm271, %v262, 0
      %v303 = vsel %vm271, %v263, 0
      %v306 = vsel %vm271, %v264, 0
      %v309 = vsel %vm271, %v265, 0
      %v312 = vsel %vm271, %v266, 0
      %v315 = vsel %vm271, %v267, 0
      %v318 = vsel %vm271, %v268, 0
      %vm320 = vcmask 1041408
      %v322 = vsel %vm320, %v270, 0
      %324 = vmatpush.bf16.msra.mxu0 0
      %325 = vmatpush.bf16.msra.mxu0 0
      %326 = vmatpush.bf16.msra.mxu0 0
      %327 = vmatpush.bf16.msra.mxu0 0
      %328 = vmatpush.bf16.msra.mxu0 0
      %329 = vmatpush.bf16.msra.mxu0 0
      %330 = vmatpush.bf16.msra.mxu0 0
      %331 = vmatpush.bf16.msra.mxu0 %v322
      %332 = vmatmul.bf16.gmra.mxu0 %v273
      %v333 = vpop.f32.mrf.mxu0
      %v334 = vadd.f32 0.0, %v333
      %v335 = vpop.f32.mrf.mxu0
      %v336 = vadd.f32 0.0, %v335
      %337 = vmatmul.bf16.gmra.mxu0 %v276
      %v338 = vpop.f32.mrf.mxu0
      %v339 = vadd.f32 0.0, %v338
      %v340 = vpop.f32.mrf.mxu0
      %v341 = vadd.f32 0.0, %v340
      %342 = vmatmul.bf16.gmra.mxu0 %v279
      %v343 = vpop.f32.mrf.mxu0
      %v344 = vadd.f32 0.0, %v343
      %v345 = vpop.f32.mrf.mxu0
      %v346 = vadd.f32 0.0, %v345
      %347 = vmatmul.bf16.gmra.mxu0 %v282
      %v348 = vpop.f32.mrf.mxu0
      %v349 = vadd.f32 0.0, %v348
      %v350 = vpop.f32.mrf.mxu0
      %v351 = vadd.f32 0.0, %v350
      %352 = vmatmul.bf16.gmra.mxu0 %v285
      %v353 = vpop.f32.mrf.mxu0
      %v354 = vadd.f32 0.0, %v353
      %v355 = vpop.f32.mrf.mxu0
      %v356 = vadd.f32 0.0, %v355
      %357 = vmatmul.bf16.gmra.mxu0 %v288
      %v358 = vpop.f32.mrf.mxu0
      %v359 = vadd.f32 0.0, %v358
      %v360 = vpop.f32.mrf.mxu0
      %v361 = vadd.f32 0.0, %v360
      %362 = vmatmul.bf16.gmra.mxu0 %v291
      %v363 = vpop.f32.mrf.mxu0
      %v364 = vadd.f32 0.0, %v363
      %v365 = vpop.f32.mrf.mxu0
      %v366 = vadd.f32 0.0, %v365
      %367 = vmatmul.bf16.gmra.mxu0 %v294
      %v368 = vpop.f32.mrf.mxu0
      %v369 = vadd.f32 0.0, %v368
      %v370 = vpop.f32.mrf.mxu0
      %v371 = vadd.f32 0.0, %v370
      %372 = vmatmul.bf16.gmra.mxu0 %v297
      %v373 = vpop.f32.mrf.mxu0
      %v374 = vadd.f32 0.0, %v373
      %v375 = vpop.f32.mrf.mxu0
      %v376 = vadd.f32 0.0, %v375
      %377 = vmatmul.bf16.gmra.mxu0 %v300
      %v378 = vpop.f32.mrf.mxu0
      %v379 = vadd.f32 0.0, %v378
      %v380 = vpop.f32.mrf.mxu0
      %v381 = vadd.f32 0.0, %v380
      %382 = vmatmul.bf16.gmra.mxu0 %v303
      %v383 = vpop.f32.mrf.mxu0
      %v384 = vadd.f32 0.0, %v383
      %v385 = vpop.f32.mrf.mxu0
      %v386 = vadd.f32 0.0, %v385
      %387 = vmatmul.bf16.gmra.mxu0 %v306
      %v388 = vpop.f32.mrf.mxu0
      %v389 = vadd.f32 0.0, %v388
      %v390 = vpop.f32.mrf.mxu0
      %v391 = vadd.f32 0.0, %v390
      %392 = vmatmul.bf16.gmra.mxu0 %v309
      %v393 = vpop.f32.mrf.mxu0
      %v394 = vadd.f32 0.0, %v393
      %v395 = vpop.f32.mrf.mxu0
      %v396 = vadd.f32 0.0, %v395
      %397 = vmatmul.bf16.gmra.mxu0 %v312
      %v398 = vpop.f32.mrf.mxu0
      %v399 = vadd.f32 0.0, %v398
      %v400 = vpop.f32.mrf.mxu0
      %v401 = vadd.f32 0.0, %v400
      %402 = vmatmul.bf16.gmra.mxu0 %v315
      %v403 = vpop.f32.mrf.mxu0
      %v404 = vadd.f32 0.0, %v403
      %v405 = vpop.f32.mrf.mxu0
      %v406 = vadd.f32 0.0, %v405
      %407 = vmatmul.bf16.gmra.mxu0 %v318
      %v408 = vpop.f32.mrf.mxu0
      %v409 = vadd.f32 0.0, %v408
      %v410 = vpop.f32.mrf.mxu0
      %v411 = vadd.f32 0.0, %v410
      %412 = vdwg.mxu0
      %v414 = vsel %vm271, %v204, 0
      %v417 = vsel %vm271, %v205, 0
      %v420 = vsel %vm271, %v206, 0
      %v423 = vsel %vm271, %v207, 0
      %v426 = vsel %vm271, %v208, 0
      %v429 = vsel %vm271, %v209, 0
      %v432 = vsel %vm271, %v210, 0
      %v435 = vsel %vm271, %v211, 0
      %v438 = vsel %vm271, %v212, 0
      %v441 = vsel %vm271, %v213, 0
      %v444 = vsel %vm271, %v214, 0
      %v447 = vsel %vm271, %v215, 0
      %v450 = vsel %vm271, %v216, 0
      %v453 = vsel %vm271, %v217, 0
      %v456 = vsel %vm271, %v218, 0
      %v459 = vsel %vm271, %v219, 0
      %v462 = vsel %vm320, %v220, 0
      %464 = vmatpush.bf16.msra.mxu0 0
      %465 = vmatpush.bf16.msra.mxu0 0
      %466 = vmatpush.bf16.msra.mxu0 0
      %467 = vmatpush.bf16.msra.mxu0 0
      %468 = vmatpush.bf16.msra.mxu0 0
      %469 = vmatpush.bf16.msra.mxu0 0
      %470 = vmatpush.bf16.msra.mxu0 0
      %471 = vmatpush.bf16.msra.mxu0 %v462
      %472 = vmatmul.bf16.gmra.mxu0 %v414
      %v473 = vpop.f32.mrf.mxu0
      %v474 = vadd.f32 %v334, %v473
      %v475 = vpop.f32.mrf.mxu0
      %v476 = vadd.f32 %v336, %v475
      %477 = vmatmul.bf16.gmra.mxu0 %v417
      %v478 = vpop.f32.mrf.mxu0
      %v479 = vadd.f32 %v339, %v478
      %v480 = vpop.f32.mrf.mxu0
      %v481 = vadd.f32 %v341, %v480
      %482 = vmatmul.bf16.gmra.mxu0 %v420
      %v483 = vpop.f32.mrf.mxu0
      %v484 = vadd.f32 %v344, %v483
      %v485 = vpop.f32.mrf.mxu0
      %v486 = vadd.f32 %v346, %v485
      %487 = vmatmul.bf16.gmra.mxu0 %v423
      %v488 = vpop.f32.mrf.mxu0
      %v489 = vadd.f32 %v349, %v488
      %v490 = vpop.f32.mrf.mxu0
      %v491 = vadd.f32 %v351, %v490
      %492 = vmatmul.bf16.gmra.mxu0 %v426
      %v493 = vpop.f32.mrf.mxu0
      %v494 = vadd.f32 %v354, %v493
      %v495 = vpop.f32.mrf.mxu0
      %v496 = vadd.f32 %v356, %v495
      %497 = vmatmul.bf16.gmra.mxu0 %v429
      %v498 = vpop.f32.mrf.mxu0
      %v499 = vadd.f32 %v359, %v498
      %v500 = vpop.f32.mrf.mxu0
      %v501 = vadd.f32 %v361, %v500
      %502 = vmatmul.bf16.gmra.mxu0 %v432
      %v503 = vpop.f32.mrf.mxu0
      %v504 = vadd.f32 %v364, %v503
      %v505 = vpop.f32.mrf.mxu0
      %v506 = vadd.f32 %v366, %v505
      %507 = vmatmul.bf16.gmra.mxu0 %v435
      %v508 = vpop.f32.mrf.mxu0
      %v509 = vadd.f32 %v369, %v508
      %v510 = vpop.f32.mrf.mxu0
      %v511 = vadd.f32 %v371, %v510
      %512 = vmatmul.bf16.gmra.mxu0 %v438
      %v513 = vpop.f32.mrf.mxu0
      %v514 = vadd.f32 %v374, %v513
      %v515 = vpop.f32.mrf.mxu0
      %v516 = vadd.f32 %v376, %v515
      %517 = vmatmul.bf16.gmra.mxu0 %v441
      %v518 = vpop.f32.mrf.mxu0
      %v519 = vadd.f32 %v379, %v518
      %v520 = vpop.f32.mrf.mxu0
      %v521 = vadd.f32 %v381, %v520
      %522 = vmatmul.bf16.gmra.mxu0 %v444
      %v523 = vpop.f32.mrf.mxu0
      %v524 = vadd.f32 %v384, %v523
      %v525 = vpop.f32.mrf.mxu0
      %v526 = vadd.f32 %v386, %v525
      %527 = vmatmul.bf16.gmra.mxu0 %v447
      %v528 = vpop.f32.mrf.mxu0
      %v529 = vadd.f32 %v389, %v528
      %v530 = vpop.f32.mrf.mxu0
      %v531 = vadd.f32 %v391, %v530
      %532 = vmatmul.bf16.gmra.mxu0 %v450
      %v533 = vpop.f32.mrf.mxu0
      %v534 = vadd.f32 %v394, %v533
      %v535 = vpop.f32.mrf.mxu0
      %v536 = vadd.f32 %v396, %v535
      %537 = vmatmul.bf16.gmra.mxu0 %v453
      %v538 = vpop.f32.mrf.mxu0
      %v539 = vadd.f32 %v399, %v538
      %v540 = vpop.f32.mrf.mxu0
      %v541 = vadd.f32 %v401, %v540
      %542 = vmatmul.bf16.gmra.mxu0 %v456
      %v543 = vpop.f32.mrf.mxu0
      %v544 = vadd.f32 %v404, %v543
      %v545 = vpop.f32.mrf.mxu0
      %v546 = vadd.f32 %v406, %v545
      %547 = vmatmul.bf16.gmra.mxu0 %v459
      %v548 = vpop.f32.mrf.mxu0
      %v549 = vadd.f32 %v409, %v548
      %v550 = vpop.f32.mrf.mxu0
      %v551 = vadd.f32 %v411, %v550
      %552 = vdwg.mxu0
      %v553 = vld [vmem:[%s165 + $0x2] sm:$0xff]
      %v554 = vld [vmem:[%s165 + $0xa] sm:$0xff]
      %v555 = vld [vmem:[%s165 + $0x1a] sm:$0xff]
      %v556 = vld [vmem:[%s165 + $0x22] sm:$0xff]
      %v557 = vld [vmem:[%s165 + $0x32] sm:$0xff]
      %v558 = vld [vmem:[%s165 + $0x3a] sm:$0xff]
      %v559 = vld [vmem:[%s165 + $0x4a] sm:$0xff]
      %v560 = vld [vmem:[%s165 + $0x52] sm:$0xff]
      %v561 = vld [vmem:[%s165 + $0x62] sm:$0xff]
      %v562 = vld [vmem:[%s165 + $0x6a] sm:$0xff]
      %v563 = vld [vmem:[%s165 + $0x7a] sm:$0xff]
      %v564 = vld [vmem:[%s165 + $0x82] sm:$0xff]
      %v565 = vld [vmem:[%s165 + $0x92] sm:$0xff]
      %v566 = vld [vmem:[%s165 + $0x9a] sm:$0xff]
      %v567 = vld [vmem:[%s165 + $0xaa] sm:$0xff]
      %v568 = vld [vmem:[%s165 + $0xb2] sm:$0xff]
      %v569 = vld [vmem:[%s165 + $0xc2] sm:$0xff]
      %v570 = vld [vmem:[%s165 + $0xca] sm:$0xff]
      %v571 = vld [vmem:[%s165 + $0xda] sm:$0xff]
      %v572 = vld [vmem:[%s165 + $0xe2] sm:$0xff]
      %v573 = vld [vmem:[%s165 + $0xf2] sm:$0xff]
      %v574 = vld [vmem:[%s165 + $0xfa] sm:$0xff]
      %v575 = vld [vmem:[%s165 + $0x10a] sm:$0xff]
      %v576 = vld [vmem:[%s165 + $0x112] sm:$0xff]
      %v577 = vld [vmem:[%s165 + $0x122] sm:$0xff]
      %v578 = vld [vmem:[%s165 + $0x12a] sm:$0xff]
      %v579 = vld [vmem:[%s165 + $0x13a] sm:$0xff]
      %v580 = vld [vmem:[%s165 + $0x142] sm:$0xff]
      %v581 = vld [vmem:[%s165 + $0x152] sm:$0xff]
      %v582 = vld [vmem:[%s165 + $0x15a] sm:$0xff]
      %v583 = vld [vmem:[%s165 + $0x16a] sm:$0xff]
      %v584 = vld [vmem:[%s165 + $0x172] sm:$0xff]
      %v585 = vpack.c.bf16 %v554, %v553
      %v586 = vpack.c.bf16 %v556, %v555
      %v587 = vpack.c.bf16 %v558, %v557
      %v588 = vpack.c.bf16 %v560, %v559
      %v589 = vpack.c.bf16 %v562, %v561
      %v590 = vpack.c.bf16 %v564, %v563
      %v591 = vpack.c.bf16 %v566, %v565
      %v592 = vpack.c.bf16 %v568, %v567
      %v593 = vpack.c.bf16 %v570, %v569
      %v594 = vpack.c.bf16 %v572, %v571
      %v595 = vpack.c.bf16 %v574, %v573
      %v596 = vpack.c.bf16 %v576, %v575
      %v597 = vpack.c.bf16 %v578, %v577
      %v598 = vpack.c.bf16 %v580, %v579
      %v599 = vpack.c.bf16 %v582, %v581
      %v600 = vpack.c.bf16 %v584, %v583
      %s601 = scalar_lea.vmem %s1, 4
      %v602 = vld [vmem:[%s601] sm:$0x3]
      %v604 = vsel %vm271, %v585, 0
      %v607 = vsel %vm271, %v586, 0
      %v610 = vsel %vm271, %v587, 0
      %v613 = vsel %vm271, %v588, 0
      %v616 = vsel %vm271, %v589, 0
      %v619 = vsel %vm271, %v590, 0
      %v622 = vsel %vm271, %v591, 0
      %v625 = vsel %vm271, %v592, 0
      %v628 = vsel %vm271, %v593, 0
      %v631 = vsel %vm271, %v594, 0
      %v634 = vsel %vm271, %v595, 0
      %v637 = vsel %vm271, %v596, 0
      %v640 = vsel %vm271, %v597, 0
      %v643 = vsel %vm271, %v598, 0
      %v646 = vsel %vm271, %v599, 0
      %v649 = vsel %vm271, %v600, 0
      %v652 = vsel %vm320, %v602, 0
      %654 = vmatpush.bf16.msra.mxu0 0
      %655 = vmatpush.bf16.msra.mxu0 0
      %656 = vmatpush.bf16.msra.mxu0 0
      %657 = vmatpush.bf16.msra.mxu0 0
      %658 = vmatpush.bf16.msra.mxu0 0
      %659 = vmatpush.bf16.msra.mxu0 0
      %660 = vmatpush.bf16.msra.mxu0 0
      %661 = vmatpush.bf16.msra.mxu0 %v652
      %662 = vmatmul.bf16.gmra.mxu0 %v604
      %v663 = vpop.f32.mrf.mxu0
      %v664 = vadd.f32 0.0, %v663
      %v665 = vpop.f32.mrf.mxu0
      %v666 = vadd.f32 0.0, %v665
      %667 = vmatmul.bf16.gmra.mxu0 %v607
      %v668 = vpop.f32.mrf.mxu0
      %v669 = vadd.f32 0.0, %v668
      %v670 = vpop.f32.mrf.mxu0
      %v671 = vadd.f32 0.0, %v670
      %672 = vmatmul.bf16.gmra.mxu0 %v610
      %v673 = vpop.f32.mrf.mxu0
      %v674 = vadd.f32 0.0, %v673
      %v675 = vpop.f32.mrf.mxu0
      %v676 = vadd.f32 0.0, %v675
      %677 = vmatmul.bf16.gmra.mxu0 %v613
      %v678 = vpop.f32.mrf.mxu0
      %v679 = vadd.f32 0.0, %v678
      %v680 = vpop.f32.mrf.mxu0
      %v681 = vadd.f32 0.0, %v680
      %682 = vmatmul.bf16.gmra.mxu0 %v616
      %v683 = vpop.f32.mrf.mxu0
      %v684 = vadd.f32 0.0, %v683
      %v685 = vpop.f32.mrf.mxu0
      %v686 = vadd.f32 0.0, %v685
      %687 = vmatmul.bf16.gmra.mxu0 %v619
      %v688 = vpop.f32.mrf.mxu0
      %v689 = vadd.f32 0.0, %v688
      %v690 = vpop.f32.mrf.mxu0
      %v691 = vadd.f32 0.0, %v690
      %692 = vmatmul.bf16.gmra.mxu0 %v622
      %v693 = vpop.f32.mrf.mxu0
      %v694 = vadd.f32 0.0, %v693
      %v695 = vpop.f32.mrf.mxu0
      %v696 = vadd.f32 0.0, %v695
      %697 = vmatmul.bf16.gmra.mxu0 %v625
      %v698 = vpop.f32.mrf.mxu0
      %v699 = vadd.f32 0.0, %v698
      %v700 = vpop.f32.mrf.mxu0
      %v701 = vadd.f32 0.0, %v700
      %702 = vmatmul.bf16.gmra.mxu0 %v628
      %v703 = vpop.f32.mrf.mxu0
      %v704 = vadd.f32 0.0, %v703
      %v705 = vpop.f32.mrf.mxu0
      %v706 = vadd.f32 0.0, %v705
      %707 = vmatmul.bf16.gmra.mxu0 %v631
      %v708 = vpop.f32.mrf.mxu0
      %v709 = vadd.f32 0.0, %v708
      %v710 = vpop.f32.mrf.mxu0
      %v711 = vadd.f32 0.0, %v710
      %712 = vmatmul.bf16.gmra.mxu0 %v634
      %v713 = vpop.f32.mrf.mxu0
      %v714 = vadd.f32 0.0, %v713
      %v715 = vpop.f32.mrf.mxu0
      %v716 = vadd.f32 0.0, %v715
      %717 = vmatmul.bf16.gmra.mxu0 %v637
      %v718 = vpop.f32.mrf.mxu0
      %v719 = vadd.f32 0.0, %v718
      %v720 = vpop.f32.mrf.mxu0
      %v721 = vadd.f32 0.0, %v720
      %722 = vmatmul.bf16.gmra.mxu0 %v640
      %v723 = vpop.f32.mrf.mxu0
      %v724 = vadd.f32 0.0, %v723
      %v725 = vpop.f32.mrf.mxu0
      %v726 = vadd.f32 0.0, %v725
      %727 = vmatmul.bf16.gmra.mxu0 %v643
      %v728 = vpop.f32.mrf.mxu0
      %v729 = vadd.f32 0.0, %v728
      %v730 = vpop.f32.mrf.mxu0
      %v731 = vadd.f32 0.0, %v730
      %732 = vmatmul.bf16.gmra.mxu0 %v646
      %v733 = vpop.f32.mrf.mxu0
      %v734 = vadd.f32 0.0, %v733
      %v735 = vpop.f32.mrf.mxu0
      %v736 = vadd.f32 0.0, %v735
      %737 = vmatmul.bf16.gmra.mxu0 %v649
      %v738 = vpop.f32.mrf.mxu0
      %v739 = vadd.f32 0.0, %v738
      %v740 = vpop.f32.mrf.mxu0
      %v741 = vadd.f32 0.0, %v740
      %742 = vdwg.mxu0
      %v743 = vadd.f32 %v474, %v664
      %v744 = vadd.f32 %v476, %v666
      %v745 = vadd.f32 %v479, %v669
      %v746 = vadd.f32 %v481, %v671
      %v747 = vadd.f32 %v484, %v674
      %v748 = vadd.f32 %v486, %v676
      %v749 = vadd.f32 %v489, %v679
      %v750 = vadd.f32 %v491, %v681
      %v751 = vadd.f32 %v494, %v684
      %v752 = vadd.f32 %v496, %v686
      %v753 = vadd.f32 %v499, %v689
      %v754 = vadd.f32 %v501, %v691
      %v755 = vadd.f32 %v504, %v694
      %v756 = vadd.f32 %v506, %v696
      %v757 = vadd.f32 %v509, %v699
      %v758 = vadd.f32 %v511, %v701
      %v759 = vadd.f32 %v514, %v704
      %v760 = vadd.f32 %v516, %v706
      %v761 = vadd.f32 %v519, %v709
      %v762 = vadd.f32 %v521, %v711
      %v763 = vadd.f32 %v524, %v714
      %v764 = vadd.f32 %v526, %v716
      %v765 = vadd.f32 %v529, %v719
      %v766 = vadd.f32 %v531, %v721
      %v767 = vadd.f32 %v534, %v724
      %v768 = vadd.f32 %v536, %v726
      %v769 = vadd.f32 %v539, %v729
      %v770 = vadd.f32 %v541, %v731
      %v771 = vadd.f32 %v544, %v734
      %v772 = vadd.f32 %v546, %v736
      %v773 = vadd.f32 %v549, %v739
      %v774 = vadd.f32 %v551, %v741
      %s775 = scalar_lea.vmem %s165, 24
      %v776 = vld [vmem:[%s775] sm:$0xff]
      %v777 = vld [vmem:[%s775 + $0x8] sm:$0xff]
      %v778 = vld [vmem:[%s775 + $0x18] sm:$0xff]
      %v779 = vld [vmem:[%s775 + $0x20] sm:$0xff]
      %v780 = vld [vmem:[%s775 + $0x30] sm:$0xff]
      %v781 = vld [vmem:[%s775 + $0x38] sm:$0xff]
      %v782 = vld [vmem:[%s775 + $0x48] sm:$0xff]
      %v783 = vld [vmem:[%s775 + $0x50] sm:$0xff]
      %v784 = vld [vmem:[%s775 + $0x60] sm:$0xff]
      %v785 = vld [vmem:[%s775 + $0x68] sm:$0xff]
      %v786 = vld [vmem:[%s775 + $0x78] sm:$0xff]
      %v787 = vld [vmem:[%s775 + $0x80] sm:$0xff]
      %v788 = vld [vmem:[%s775 + $0x90] sm:$0xff]
      %v789 = vld [vmem:[%s775 + $0x98] sm:$0xff]
      %v790 = vld [vmem:[%s775 + $0xa8] sm:$0xff]
      %v791 = vld [vmem:[%s775 + $0xb0] sm:$0xff]
      %v792 = vld [vmem:[%s775 + $0xc0] sm:$0xff]
      %v793 = vld [vmem:[%s775 + $0xc8] sm:$0xff]
      %v794 = vld [vmem:[%s775 + $0xd8] sm:$0xff]
      %v795 = vld [vmem:[%s775 + $0xe0] sm:$0xff]
      %v796 = vld [vmem:[%s775 + $0xf0] sm:$0xff]
      %v797 = vld [vmem:[%s775 + $0xf8] sm:$0xff]
      %v798 = vld [vmem:[%s775 + $0x108] sm:$0xff]
      %v799 = vld [vmem:[%s775 + $0x110] sm:$0xff]
      %v800 = vld [vmem:[%s775 + $0x120] sm:$0xff]
      %v801 = vld [vmem:[%s775 + $0x128] sm:$0xff]
      %v802 = vld [vmem:[%s775 + $0x138] sm:$0xff]
      %v803 = vld [vmem:[%s775 + $0x140] sm:$0xff]
      %v804 = vld [vmem:[%s775 + $0x150] sm:$0xff]
      %v805 = vld [vmem:[%s775 + $0x158] sm:$0xff]
      %v806 = vld [vmem:[%s775 + $0x168] sm:$0xff]
      %v807 = vld [vmem:[%s775 + $0x170] sm:$0xff]
      %v808 = vpack.c.bf16 %v777, %v776
      %v809 = vpack.c.bf16 %v779, %v778
      %v810 = vpack.c.bf16 %v781, %v780
      %v811 = vpack.c.bf16 %v783, %v782
      %v812 = vpack.c.bf16 %v785, %v784
      %v813 = vpack.c.bf16 %v787, %v786
      %v814 = vpack.c.bf16 %v789, %v788
      %v815 = vpack.c.bf16 %v791, %v790
      %v816 = vpack.c.bf16 %v793, %v792
      %v817 = vpack.c.bf16 %v795, %v794
      %v818 = vpack.c.bf16 %v797, %v796
      %v819 = vpack.c.bf16 %v799, %v798
      %v820 = vpack.c.bf16 %v801, %v800
      %v821 = vpack.c.bf16 %v803, %v802
      %v822 = vpack.c.bf16 %v805, %v804
      %v823 = vpack.c.bf16 %v807, %v806
      %s824 = scalar_lea.vmem %s1, 6
      %v825 = vld [vmem:[%s824] sm:$0x3]
      %v827 = vsel %vm271, %v808, 0
      %v830 = vsel %vm271, %v809, 0
      %v833 = vsel %vm271, %v810, 0
      %v836 = vsel %vm271, %v811, 0
      %v839 = vsel %vm271, %v812, 0
      %v842 = vsel %vm271, %v813, 0
      %v845 = vsel %vm271, %v814, 0
      %v848 = vsel %vm271, %v815, 0
      %v851 = vsel %vm271, %v816, 0
      %v854 = vsel %vm271, %v817, 0
      %v857 = vsel %vm271, %v818, 0
      %v860 = vsel %vm271, %v819, 0
      %v863 = vsel %vm271, %v820, 0
      %v866 = vsel %vm271, %v821, 0
      %v869 = vsel %vm271, %v822, 0
      %v872 = vsel %vm271, %v823, 0
      %v875 = vsel %vm320, %v825, 0
      %877 = vmatpush.bf16.msra.mxu0 0
      %878 = vmatpush.bf16.msra.mxu0 0
      %879 = vmatpush.bf16.msra.mxu0 0
      %880 = vmatpush.bf16.msra.mxu0 0
      %881 = vmatpush.bf16.msra.mxu0 0
      %882 = vmatpush.bf16.msra.mxu0 0
      %883 = vmatpush.bf16.msra.mxu0 0
      %884 = vmatpush.bf16.msra.mxu0 %v875
      %885 = vmatmul.bf16.gmra.mxu0 %v827
      %v886 = vpop.f32.mrf.mxu0
      %v887 = vadd.f32 0.0, %v886
      %v888 = vpop.f32.mrf.mxu0
      %v889 = vadd.f32 0.0, %v888
      %890 = vmatmul.bf16.gmra.mxu0 %v830
      %v891 = vpop.f32.mrf.mxu0
      %v892 = vadd.f32 0.0, %v891
      %v893 = vpop.f32.mrf.mxu0
      %v894 = vadd.f32 0.0, %v893
      %895 = vmatmul.bf16.gmra.mxu0 %v833
      %v896 = vpop.f32.mrf.mxu0
      %v897 = vadd.f32 0.0, %v896
      %v898 = vpop.f32.mrf.mxu0
      %v899 = vadd.f32 0.0, %v898
      %900 = vmatmul.bf16.gmra.mxu0 %v836
      %v901 = vpop.f32.mrf.mxu0
      %v902 = vadd.f32 0.0, %v901
      %v903 = vpop.f32.mrf.mxu0
      %v904 = vadd.f32 0.0, %v903
      %905 = vmatmul.bf16.gmra.mxu0 %v839
      %v906 = vpop.f32.mrf.mxu0
      %v907 = vadd.f32 0.0, %v906
      %v908 = vpop.f32.mrf.mxu0
      %v909 = vadd.f32 0.0, %v908
      %910 = vmatmul.bf16.gmra.mxu0 %v842
      %v911 = vpop.f32.mrf.mxu0
      %v912 = vadd.f32 0.0, %v911
      %v913 = vpop.f32.mrf.mxu0
      %v914 = vadd.f32 0.0, %v913
      %915 = vmatmul.bf16.gmra.mxu0 %v845
      %v916 = vpop.f32.mrf.mxu0
      %v917 = vadd.f32 0.0, %v916
      %v918 = vpop.f32.mrf.mxu0
      %v919 = vadd.f32 0.0, %v918
      %920 = vmatmul.bf16.gmra.mxu0 %v848
      %v921 = vpop.f32.mrf.mxu0
      %v922 = vadd.f32 0.0, %v921
      %v923 = vpop.f32.mrf.mxu0
      %v924 = vadd.f32 0.0, %v923
      %925 = vmatmul.bf16.gmra.mxu0 %v851
      %v926 = vpop.f32.mrf.mxu0
      %v927 = vadd.f32 0.0, %v926
      %v928 = vpop.f32.mrf.mxu0
      %v929 = vadd.f32 0.0, %v928
      %930 = vmatmul.bf16.gmra.mxu0 %v854
      %v931 = vpop.f32.mrf.mxu0
      %v932 = vadd.f32 0.0, %v931
      %v933 = vpop.f32.mrf.mxu0
      %v934 = vadd.f32 0.0, %v933
      %935 = vmatmul.bf16.gmra.mxu0 %v857
      %v936 = vpop.f32.mrf.mxu0
      %v937 = vadd.f32 0.0, %v936
      %v938 = vpop.f32.mrf.mxu0
      %v939 = vadd.f32 0.0, %v938
      %940 = vmatmul.bf16.gmra.mxu0 %v860
      %v941 = vpop.f32.mrf.mxu0
      %v942 = vadd.f32 0.0, %v941
      %v943 = vpop.f32.mrf.mxu0
      %v944 = vadd.f32 0.0, %v943
      %945 = vmatmul.bf16.gmra.mxu0 %v863
      %v946 = vpop.f32.mrf.mxu0
      %v947 = vadd.f32 0.0, %v946
      %v948 = vpop.f32.mrf.mxu0
      %v949 = vadd.f32 0.0, %v948
      %950 = vmatmul.bf16.gmra.mxu0 %v866
      %v951 = vpop.f32.mrf.mxu0
      %v952 = vadd.f32 0.0, %v951
      %v953 = vpop.f32.mrf.mxu0
      %v954 = vadd.f32 0.0, %v953
      %955 = vmatmul.bf16.gmra.mxu0 %v869
      %v956 = vpop.f32.mrf.mxu0
      %v957 = vadd.f32 0.0, %v956
      %v958 = vpop.f32.mrf.mxu0
      %v959 = vadd.f32 0.0, %v958
      %960 = vmatmul.bf16.gmra.mxu0 %v872
      %v961 = vpop.f32.mrf.mxu0
      %v962 = vadd.f32 0.0, %v961
      %v963 = vpop.f32.mrf.mxu0
      %v964 = vadd.f32 0.0, %v963
      %965 = vdwg.mxu0
      %v966 = vadd.f32 %v743, %v887
      %v967 = vadd.f32 %v744, %v889
      %v968 = vadd.f32 %v745, %v892
      %v969 = vadd.f32 %v746, %v894
      %v970 = vadd.f32 %v747, %v897
      %v971 = vadd.f32 %v748, %v899
      %v972 = vadd.f32 %v749, %v902
      %v973 = vadd.f32 %v750, %v904
      %v974 = vadd.f32 %v751, %v907
      %v975 = vadd.f32 %v752, %v909
      %v976 = vadd.f32 %v753, %v912
      %v977 = vadd.f32 %v754, %v914
      %v978 = vadd.f32 %v755, %v917
      %v979 = vadd.f32 %v756, %v919
      %v980 = vadd.f32 %v757, %v922
      %v981 = vadd.f32 %v758, %v924
      %v982 = vadd.f32 %v759, %v927
      %v983 = vadd.f32 %v760, %v929
      %v984 = vadd.f32 %v761, %v932
      %v985 = vadd.f32 %v762, %v934
      %v986 = vadd.f32 %v763, %v937
      %v987 = vadd.f32 %v764, %v939
      %v988 = vadd.f32 %v765, %v942
      %v989 = vadd.f32 %v766, %v944
      %v990 = vadd.f32 %v767, %v947
      %v991 = vadd.f32 %v768, %v949
      %v992 = vadd.f32 %v769, %v952
      %v993 = vadd.f32 %v770, %v954
      %v994 = vadd.f32 %v771, %v957
      %v995 = vadd.f32 %v772, %v959
      %v996 = vadd.f32 %v773, %v962
      %v997 = vadd.f32 %v774, %v964
      %v998 = vld [vmem:[%s775 + $0x1] sm:$0xff]
      %v999 = vld [vmem:[%s775 + $0x9] sm:$0xff]
      %v1000 = vld [vmem:[%s775 + $0x19] sm:$0xff]
      %v1001 = vld [vmem:[%s775 + $0x21] sm:$0xff]
      %v1002 = vld [vmem:[%s775 + $0x31] sm:$0xff]
      %v1003 = vld [vmem:[%s775 + $0x39] sm:$0xff]
      %v1004 = vld [vmem:[%s775 + $0x49] sm:$0xff]
      %v1005 = vld [vmem:[%s775 + $0x51] sm:$0xff]
      %v1006 = vld [vmem:[%s775 + $0x61] sm:$0xff]
      %v1007 = vld [vmem:[%s775 + $0x69] sm:$0xff]
      %v1008 = vld [vmem:[%s775 + $0x79] sm:$0xff]
      %v1009 = vld [vmem:[%s775 + $0x81] sm:$0xff]
      %v1010 = vld [vmem:[%s775 + $0x91] sm:$0xff]
      %v1011 = vld [vmem:[%s775 + $0x99] sm:$0xff]
      %v1012 = vld [vmem:[%s775 + $0xa9] sm:$0xff]
      %v1013 = vld [vmem:[%s775 + $0xb1] sm:$0xff]
      %v1014 = vld [vmem:[%s775 + $0xc1] sm:$0xff]
      %v1015 = vld [vmem:[%s775 + $0xc9] sm:$0xff]
      %v1016 = vld [vmem:[%s775 + $0xd9] sm:$0xff]
      %v1017 = vld [vmem:[%s775 + $0xe1] sm:$0xff]
      %v1018 = vld [vmem:[%s775 + $0xf1] sm:$0xff]
      %v1019 = vld [vmem:[%s775 + $0xf9] sm:$0xff]
      %v1020 = vld [vmem:[%s775 + $0x109] sm:$0xff]
      %v1021 = vld [vmem:[%s775 + $0x111] sm:$0xff]
      %v1022 = vld [vmem:[%s775 + $0x121] sm:$0xff]
      %v1023 = vld [vmem:[%s775 + $0x129] sm:$0xff]
      %v1024 = vld [vmem:[%s775 + $0x139] sm:$0xff]
      %v1025 = vld [vmem:[%s775 + $0x141] sm:$0xff]
      %v1026 = vld [vmem:[%s775 + $0x151] sm:$0xff]
      %v1027 = vld [vmem:[%s775 + $0x159] sm:$0xff]
      %v1028 = vld [vmem:[%s775 + $0x169] sm:$0xff]
      %v1029 = vld [vmem:[%s775 + $0x171] sm:$0xff]
      %v1030 = vpack.c.bf16 %v999, %v998
      %v1031 = vpack.c.bf16 %v1001, %v1000
      %v1032 = vpack.c.bf16 %v1003, %v1002
      %v1033 = vpack.c.bf16 %v1005, %v1004
      %v1034 = vpack.c.bf16 %v1007, %v1006
      %v1035 = vpack.c.bf16 %v1009, %v1008
      %v1036 = vpack.c.bf16 %v1011, %v1010
      %v1037 = vpack.c.bf16 %v1013, %v1012
      %v1038 = vpack.c.bf16 %v1015, %v1014
      %v1039 = vpack.c.bf16 %v1017, %v1016
      %v1040 = vpack.c.bf16 %v1019, %v1018
      %v1041 = vpack.c.bf16 %v1021, %v1020
      %v1042 = vpack.c.bf16 %v1023, %v1022
      %v1043 = vpack.c.bf16 %v1025, %v1024
      %v1044 = vpack.c.bf16 %v1027, %v1026
      %v1045 = vpack.c.bf16 %v1029, %v1028
      %s1046 = scalar_lea.vmem %s1, 8
      %v1047 = vld [vmem:[%s1046] sm:$0x3]
      %v1049 = vsel %vm271, %v1030, 0
      %v1052 = vsel %vm271, %v1031, 0
      %v1055 = vsel %vm271, %v1032, 0
      %v1058 = vsel %vm271, %v1033, 0
      %v1061 = vsel %vm271, %v1034, 0
      %v1064 = vsel %vm271, %v1035, 0
      %v1067 = vsel %vm271, %v1036, 0
      %v1070 = vsel %vm271, %v1037, 0
      %v1073 = vsel %vm271, %v1038, 0
      %v1076 = vsel %vm271, %v1039, 0
      %v1079 = vsel %vm271, %v1040, 0
      %v1082 = vsel %vm271, %v1041, 0
      %v1085 = vsel %vm271, %v1042, 0
      %v1088 = vsel %vm271, %v1043, 0
      %v1091 = vsel %vm271, %v1044, 0
      %v1094 = vsel %vm271, %v1045, 0
      %v1097 = vsel %vm320, %v1047, 0
      %1099 = vmatpush.bf16.msra.mxu0 0
      %1100 = vmatpush.bf16.msra.mxu0 0
      %1101 = vmatpush.bf16.msra.mxu0 0
      %1102 = vmatpush.bf16.msra.mxu0 0
      %1103 = vmatpush.bf16.msra.mxu0 0
      %1104 = vmatpush.bf16.msra.mxu0 0
      %1105 = vmatpush.bf16.msra.mxu0 0
      %1106 = vmatpush.bf16.msra.mxu0 %v1097
      %1107 = vmatmul.bf16.gmra.mxu0 %v1049
      %v1108 = vpop.f32.mrf.mxu0
      %v1109 = vadd.f32 0.0, %v1108
      %v1110 = vpop.f32.mrf.mxu0
      %v1111 = vadd.f32 0.0, %v1110
      %1112 = vmatmul.bf16.gmra.mxu0 %v1052
      %v1113 = vpop.f32.mrf.mxu0
      %v1114 = vadd.f32 0.0, %v1113
      %v1115 = vpop.f32.mrf.mxu0
      %v1116 = vadd.f32 0.0, %v1115
      %1117 = vmatmul.bf16.gmra.mxu0 %v1055
      %v1118 = vpop.f32.mrf.mxu0
      %v1119 = vadd.f32 0.0, %v1118
      %v1120 = vpop.f32.mrf.mxu0
      %v1121 = vadd.f32 0.0, %v1120
      %1122 = vmatmul.bf16.gmra.mxu0 %v1058
      %v1123 = vpop.f32.mrf.mxu0
      %v1124 = vadd.f32 0.0, %v1123
      %v1125 = vpop.f32.mrf.mxu0
      %v1126 = vadd.f32 0.0, %v1125
      %1127 = vmatmul.bf16.gmra.mxu0 %v1061
      %v1128 = vpop.f32.mrf.mxu0
      %v1129 = vadd.f32 0.0, %v1128
      %v1130 = vpop.f32.mrf.mxu0
      %v1131 = vadd.f32 0.0, %v1130
      %1132 = vmatmul.bf16.gmra.mxu0 %v1064
      %v1133 = vpop.f32.mrf.mxu0
      %v1134 = vadd.f32 0.0, %v1133
      %v1135 = vpop.f32.mrf.mxu0
      %v1136 = vadd.f32 0.0, %v1135
      %1137 = vmatmul.bf16.gmra.mxu0 %v1067
      %v1138 = vpop.f32.mrf.mxu0
      %v1139 = vadd.f32 0.0, %v1138
      %v1140 = vpop.f32.mrf.mxu0
      %v1141 = vadd.f32 0.0, %v1140
      %1142 = vmatmul.bf16.gmra.mxu0 %v1070
      %v1143 = vpop.f32.mrf.mxu0
      %v1144 = vadd.f32 0.0, %v1143
      %v1145 = vpop.f32.mrf.mxu0
      %v1146 = vadd.f32 0.0, %v1145
      %1147 = vmatmul.bf16.gmra.mxu0 %v1073
      %v1148 = vpop.f32.mrf.mxu0
      %v1149 = vadd.f32 0.0, %v1148
      %v1150 = vpop.f32.mrf.mxu0
      %v1151 = vadd.f32 0.0, %v1150
      %1152 = vmatmul.bf16.gmra.mxu0 %v1076
      %v1153 = vpop.f32.mrf.mxu0
      %v1154 = vadd.f32 0.0, %v1153
      %v1155 = vpop.f32.mrf.mxu0
      %v1156 = vadd.f32 0.0, %v1155
      %1157 = vmatmul.bf16.gmra.mxu0 %v1079
      %v1158 = vpop.f32.mrf.mxu0
      %v1159 = vadd.f32 0.0, %v1158
      %v1160 = vpop.f32.mrf.mxu0
      %v1161 = vadd.f32 0.0, %v1160
      %1162 = vmatmul.bf16.gmra.mxu0 %v1082
      %v1163 = vpop.f32.mrf.mxu0
      %v1164 = vadd.f32 0.0, %v1163
      %v1165 = vpop.f32.mrf.mxu0
      %v1166 = vadd.f32 0.0, %v1165
      %1167 = vmatmul.bf16.gmra.mxu0 %v1085
      %v1168 = vpop.f32.mrf.mxu0
      %v1169 = vadd.f32 0.0, %v1168
      %v1170 = vpop.f32.mrf.mxu0
      %v1171 = vadd.f32 0.0, %v1170
      %1172 = vmatmul.bf16.gmra.mxu0 %v1088
      %v1173 = vpop.f32.mrf.mxu0
      %v1174 = vadd.f32 0.0, %v1173
      %v1175 = vpop.f32.mrf.mxu0
      %v1176 = vadd.f32 0.0, %v1175
      %1177 = vmatmul.bf16.gmra.mxu0 %v1091
      %v1178 = vpop.f32.mrf.mxu0
      %v1179 = vadd.f32 0.0, %v1178
      %v1180 = vpop.f32.mrf.mxu0
      %v1181 = vadd.f32 0.0, %v1180
      %1182 = vmatmul.bf16.gmra.mxu0 %v1094
      %v1183 = vpop.f32.mrf.mxu0
      %v1184 = vadd.f32 0.0, %v1183
      %v1185 = vpop.f32.mrf.mxu0
      %v1186 = vadd.f32 0.0, %v1185
      %1187 = vdwg.mxu0
      %v1188 = vadd.f32 %v966, %v1109
      %v1189 = vadd.f32 %v967, %v1111
      %v1190 = vadd.f32 %v968, %v1114
      %v1191 = vadd.f32 %v969, %v1116
      %v1192 = vadd.f32 %v970, %v1119
      %v1193 = vadd.f32 %v971, %v1121
      %v1194 = vadd.f32 %v972, %v1124
      %v1195 = vadd.f32 %v973, %v1126
      %v1196 = vadd.f32 %v974, %v1129
      %v1197 = vadd.f32 %v975, %v1131
      %v1198 = vadd.f32 %v976, %v1134
      %v1199 = vadd.f32 %v977, %v1136
      %v1200 = vadd.f32 %v978, %v1139
      %v1201 = vadd.f32 %v979, %v1141
      %v1202 = vadd.f32 %v980, %v1144
      %v1203 = vadd.f32 %v981, %v1146
      %v1204 = vadd.f32 %v982, %v1149
      %v1205 = vadd.f32 %v983, %v1151
      %v1206 = vadd.f32 %v984, %v1154
      %v1207 = vadd.f32 %v985, %v1156
      %v1208 = vadd.f32 %v986, %v1159
      %v1209 = vadd.f32 %v987, %v1161
      %v1210 = vadd.f32 %v988, %v1164
      %v1211 = vadd.f32 %v989, %v1166
      %v1212 = vadd.f32 %v990, %v1169
      %v1213 = vadd.f32 %v991, %v1171
      %v1214 = vadd.f32 %v992, %v1174
      %v1215 = vadd.f32 %v993, %v1176
      %v1216 = vadd.f32 %v994, %v1179
      %v1217 = vadd.f32 %v995, %v1181
      %v1218 = vadd.f32 %v996, %v1184
      %v1219 = vadd.f32 %v997, %v1186
      %v1220 = vld [vmem:[%s775 + $0x2] sm:$0xff]
      %v1221 = vld [vmem:[%s775 + $0xa] sm:$0xff]
      %v1222 = vld [vmem:[%s775 + $0x1a] sm:$0xff]
      %v1223 = vld [vmem:[%s775 + $0x22] sm:$0xff]
      %v1224 = vld [vmem:[%s775 + $0x32] sm:$0xff]
      %v1225 = vld [vmem:[%s775 + $0x3a] sm:$0xff]
      %v1226 = vld [vmem:[%s775 + $0x4a] sm:$0xff]
      %v1227 = vld [vmem:[%s775 + $0x52] sm:$0xff]
      %v1228 = vld [vmem:[%s775 + $0x62] sm:$0xff]
      %v1229 = vld [vmem:[%s775 + $0x6a] sm:$0xff]
      %v1230 = vld [vmem:[%s775 + $0x7a] sm:$0xff]
      %v1231 = vld [vmem:[%s775 + $0x82] sm:$0xff]
      %v1232 = vld [vmem:[%s775 + $0x92] sm:$0xff]
      %v1233 = vld [vmem:[%s775 + $0x9a] sm:$0xff]
      %v1234 = vld [vmem:[%s775 + $0xaa] sm:$0xff]
      %v1235 = vld [vmem:[%s775 + $0xb2] sm:$0xff]
      %v1236 = vld [vmem:[%s775 + $0xc2] sm:$0xff]
      %v1237 = vld [vmem:[%s775 + $0xca] sm:$0xff]
      %v1238 = vld [vmem:[%s775 + $0xda] sm:$0xff]
      %v1239 = vld [vmem:[%s775 + $0xe2] sm:$0xff]
      %v1240 = vld [vmem:[%s775 + $0xf2] sm:$0xff]
      %v1241 = vld [vmem:[%s775 + $0xfa] sm:$0xff]
      %v1242 = vld [vmem:[%s775 + $0x10a] sm:$0xff]
      %v1243 = vld [vmem:[%s775 + $0x112] sm:$0xff]
      %v1244 = vld [vmem:[%s775 + $0x122] sm:$0xff]
      %v1245 = vld [vmem:[%s775 + $0x12a] sm:$0xff]
      %v1246 = vld [vmem:[%s775 + $0x13a] sm:$0xff]
      %v1247 = vld [vmem:[%s775 + $0x142] sm:$0xff]
      %v1248 = vld [vmem:[%s775 + $0x152] sm:$0xff]
      %v1249 = vld [vmem:[%s775 + $0x15a] sm:$0xff]
      %v1250 = vld [vmem:[%s775 + $0x16a] sm:$0xff]
      %v1251 = vld [vmem:[%s775 + $0x172] sm:$0xff]
      %v1252 = vpack.c.bf16 %v1221, %v1220
      %v1253 = vpack.c.bf16 %v1223, %v1222
      %v1254 = vpack.c.bf16 %v1225, %v1224
      %v1255 = vpack.c.bf16 %v1227, %v1226
      %v1256 = vpack.c.bf16 %v1229, %v1228
      %v1257 = vpack.c.bf16 %v1231, %v1230
      %v1258 = vpack.c.bf16 %v1233, %v1232
      %v1259 = vpack.c.bf16 %v1235, %v1234
      %v1260 = vpack.c.bf16 %v1237, %v1236
      %v1261 = vpack.c.bf16 %v1239, %v1238
      %v1262 = vpack.c.bf16 %v1241, %v1240
      %v1263 = vpack.c.bf16 %v1243, %v1242
      %v1264 = vpack.c.bf16 %v1245, %v1244
      %v1265 = vpack.c.bf16 %v1247, %v1246
      %v1266 = vpack.c.bf16 %v1249, %v1248
      %v1267 = vpack.c.bf16 %v1251, %v1250
      %s1268 = scalar_lea.vmem %s1, 10
      %v1269 = vld [vmem:[%s1268] sm:$0x3]
      %v1271 = vsel %vm271, %v1252, 0
      %v1274 = vsel %vm271, %v1253, 0
      %v1277 = vsel %vm271, %v1254, 0
      %v1280 = vsel %vm271, %v1255, 0
      %v1283 = vsel %vm271, %v1256, 0
      %v1286 = vsel %vm271, %v1257, 0
      %v1289 = vsel %vm271, %v1258, 0
      %v1292 = vsel %vm271, %v1259, 0
      %v1295 = vsel %vm271, %v1260, 0
      %v1298 = vsel %vm271, %v1261, 0
      %v1301 = vsel %vm271, %v1262, 0
      %v1304 = vsel %vm271, %v1263, 0
      %v1307 = vsel %vm271, %v1264, 0
      %v1310 = vsel %vm271, %v1265, 0
      %v1313 = vsel %vm271, %v1266, 0
      %v1316 = vsel %vm271, %v1267, 0
      %v1319 = vsel %vm320, %v1269, 0
      %1321 = vmatpush.bf16.msra.mxu0 0
      %1322 = vmatpush.bf16.msra.mxu0 0
      %1323 = vmatpush.bf16.msra.mxu0 0
      %1324 = vmatpush.bf16.msra.mxu0 0
      %1325 = vmatpush.bf16.msra.mxu0 0
      %1326 = vmatpush.bf16.msra.mxu0 0
      %1327 = vmatpush.bf16.msra.mxu0 0
      %1328 = vmatpush.bf16.msra.mxu0 %v1319
      %1329 = vmatmul.bf16.gmra.mxu0 %v1271
      %v1330 = vpop.f32.mrf.mxu0
      %v1331 = vadd.f32 0.0, %v1330
      %v1332 = vpop.f32.mrf.mxu0
      %v1333 = vadd.f32 0.0, %v1332
      %1334 = vmatmul.bf16.gmra.mxu0 %v1274
      %v1335 = vpop.f32.mrf.mxu0
      %v1336 = vadd.f32 0.0, %v1335
      %v1337 = vpop.f32.mrf.mxu0
      %v1338 = vadd.f32 0.0, %v1337
      %1339 = vmatmul.bf16.gmra.mxu0 %v1277
      %v1340 = vpop.f32.mrf.mxu0
      %v1341 = vadd.f32 0.0, %v1340
      %v1342 = vpop.f32.mrf.mxu0
      %v1343 = vadd.f32 0.0, %v1342
      %1344 = vmatmul.bf16.gmra.mxu0 %v1280
      %v1345 = vpop.f32.mrf.mxu0
      %v1346 = vadd.f32 0.0, %v1345
      %v1347 = vpop.f32.mrf.mxu0
      %v1348 = vadd.f32 0.0, %v1347
      %1349 = vmatmul.bf16.gmra.mxu0 %v1283
      %v1350 = vpop.f32.mrf.mxu0
      %v1351 = vadd.f32 0.0, %v1350
      %v1352 = vpop.f32.mrf.mxu0
      %v1353 = vadd.f32 0.0, %v1352
      %1354 = vmatmul.bf16.gmra.mxu0 %v1286
      %v1355 = vpop.f32.mrf.mxu0
      %v1356 = vadd.f32 0.0, %v1355
      %v1357 = vpop.f32.mrf.mxu0
      %v1358 = vadd.f32 0.0, %v1357
      %1359 = vmatmul.bf16.gmra.mxu0 %v1289
      %v1360 = vpop.f32.mrf.mxu0
      %v1361 = vadd.f32 0.0, %v1360
      %v1362 = vpop.f32.mrf.mxu0
      %v1363 = vadd.f32 0.0, %v1362
      %1364 = vmatmul.bf16.gmra.mxu0 %v1292
      %v1365 = vpop.f32.mrf.mxu0
      %v1366 = vadd.f32 0.0, %v1365
      %v1367 = vpop.f32.mrf.mxu0
      %v1368 = vadd.f32 0.0, %v1367
      %1369 = vmatmul.bf16.gmra.mxu0 %v1295
      %v1370 = vpop.f32.mrf.mxu0
      %v1371 = vadd.f32 0.0, %v1370
      %v1372 = vpop.f32.mrf.mxu0
      %v1373 = vadd.f32 0.0, %v1372
      %1374 = vmatmul.bf16.gmra.mxu0 %v1298
      %v1375 = vpop.f32.mrf.mxu0
      %v1376 = vadd.f32 0.0, %v1375
      %v1377 = vpop.f32.mrf.mxu0
      %v1378 = vadd.f32 0.0, %v1377
      %1379 = vmatmul.bf16.gmra.mxu0 %v1301
      %v1380 = vpop.f32.mrf.mxu0
      %v1381 = vadd.f32 0.0, %v1380
      %v1382 = vpop.f32.mrf.mxu0
      %v1383 = vadd.f32 0.0, %v1382
      %1384 = vmatmul.bf16.gmra.mxu0 %v1304
      %v1385 = vpop.f32.mrf.mxu0
      %v1386 = vadd.f32 0.0, %v1385
      %v1387 = vpop.f32.mrf.mxu0
      %v1388 = vadd.f32 0.0, %v1387
      %1389 = vmatmul.bf16.gmra.mxu0 %v1307
      %v1390 = vpop.f32.mrf.mxu0
      %v1391 = vadd.f32 0.0, %v1390
      %v1392 = vpop.f32.mrf.mxu0
      %v1393 = vadd.f32 0.0, %v1392
      %1394 = vmatmul.bf16.gmra.mxu0 %v1310
      %v1395 = vpop.f32.mrf.mxu0
      %v1396 = vadd.f32 0.0, %v1395
      %v1397 = vpop.f32.mrf.mxu0
      %v1398 = vadd.f32 0.0, %v1397
      %1399 = vmatmul.bf16.gmra.mxu0 %v1313
      %v1400 = vpop.f32.mrf.mxu0
      %v1401 = vadd.f32 0.0, %v1400
      %v1402 = vpop.f32.mrf.mxu0
      %v1403 = vadd.f32 0.0, %v1402
      %1404 = vmatmul.bf16.gmra.mxu0 %v1316
      %v1405 = vpop.f32.mrf.mxu0
      %v1406 = vadd.f32 0.0, %v1405
      %v1407 = vpop.f32.mrf.mxu0
      %v1408 = vadd.f32 0.0, %v1407
      %1409 = vdwg.mxu0
      %v1410 = vadd.f32 %v1188, %v1331
      %v1411 = vadd.f32 %v1189, %v1333
      %v1412 = vadd.f32 %v1190, %v1336
      %v1413 = vadd.f32 %v1191, %v1338
      %v1414 = vadd.f32 %v1192, %v1341
      %v1415 = vadd.f32 %v1193, %v1343
      %v1416 = vadd.f32 %v1194, %v1346
      %v1417 = vadd.f32 %v1195, %v1348
      %v1418 = vadd.f32 %v1196, %v1351
      %v1419 = vadd.f32 %v1197, %v1353
      %v1420 = vadd.f32 %v1198, %v1356
      %v1421 = vadd.f32 %v1199, %v1358
      %v1422 = vadd.f32 %v1200, %v1361
      %v1423 = vadd.f32 %v1201, %v1363
      %v1424 = vadd.f32 %v1202, %v1366
      %v1425 = vadd.f32 %v1203, %v1368
      %v1426 = vadd.f32 %v1204, %v1371
      %v1427 = vadd.f32 %v1205, %v1373
      %v1428 = vadd.f32 %v1206, %v1376
      %v1429 = vadd.f32 %v1207, %v1378
      %v1430 = vadd.f32 %v1208, %v1381
      %v1431 = vadd.f32 %v1209, %v1383
      %v1432 = vadd.f32 %v1210, %v1386
      %v1433 = vadd.f32 %v1211, %v1388
      %v1434 = vadd.f32 %v1212, %v1391
      %v1435 = vadd.f32 %v1213, %v1393
      %v1436 = vadd.f32 %v1214, %v1396
      %v1437 = vadd.f32 %v1215, %v1398
      %v1438 = vadd.f32 %v1216, %v1401
      %v1439 = vadd.f32 %v1217, %v1403
      %v1440 = vadd.f32 %v1218, %v1406
      %v1441 = vadd.f32 %v1219, %v1408
      %s1442 = scalar_lea.vmem %s165, 48
      %v1443 = vld [vmem:[%s1442] sm:$0xff]
      %v1444 = vld [vmem:[%s1442 + $0x8] sm:$0xff]
      %v1445 = vld [vmem:[%s1442 + $0x18] sm:$0xff]
      %v1446 = vld [vmem:[%s1442 + $0x20] sm:$0xff]
      %v1447 = vld [vmem:[%s1442 + $0x30] sm:$0xff]
      %v1448 = vld [vmem:[%s1442 + $0x38] sm:$0xff]
      %v1449 = vld [vmem:[%s1442 + $0x48] sm:$0xff]
      %v1450 = vld [vmem:[%s1442 + $0x50] sm:$0xff]
      %v1451 = vld [vmem:[%s1442 + $0x60] sm:$0xff]
      %v1452 = vld [vmem:[%s1442 + $0x68] sm:$0xff]
      %v1453 = vld [vmem:[%s1442 + $0x78] sm:$0xff]
      %v1454 = vld [vmem:[%s1442 + $0x80] sm:$0xff]
      %v1455 = vld [vmem:[%s1442 + $0x90] sm:$0xff]
      %v1456 = vld [vmem:[%s1442 + $0x98] sm:$0xff]
      %v1457 = vld [vmem:[%s1442 + $0xa8] sm:$0xff]
      %v1458 = vld [vmem:[%s1442 + $0xb0] sm:$0xff]
      %v1459 = vld [vmem:[%s1442 + $0xc0] sm:$0xff]
      %v1460 = vld [vmem:[%s1442 + $0xc8] sm:$0xff]
      %v1461 = vld [vmem:[%s1442 + $0xd8] sm:$0xff]
      %v1462 = vld [vmem:[%s1442 + $0xe0] sm:$0xff]
      %v1463 = vld [vmem:[%s1442 + $0xf0] sm:$0xff]
      %v1464 = vld [vmem:[%s1442 + $0xf8] sm:$0xff]
      %v1465 = vld [vmem:[%s1442 + $0x108] sm:$0xff]
      %v1466 = vld [vmem:[%s1442 + $0x110] sm:$0xff]
      %v1467 = vld [vmem:[%s1442 + $0x120] sm:$0xff]
      %v1468 = vld [vmem:[%s1442 + $0x128] sm:$0xff]
      %v1469 = vld [vmem:[%s1442 + $0x138] sm:$0xff]
      %v1470 = vld [vmem:[%s1442 + $0x140] sm:$0xff]
      %v1471 = vld [vmem:[%s1442 + $0x150] sm:$0xff]
      %v1472 = vld [vmem:[%s1442 + $0x158] sm:$0xff]
      %v1473 = vld [vmem:[%s1442 + $0x168] sm:$0xff]
      %v1474 = vld [vmem:[%s1442 + $0x170] sm:$0xff]
      %v1475 = vpack.c.bf16 %v1444, %v1443
      %v1476 = vpack.c.bf16 %v1446, %v1445
      %v1477 = vpack.c.bf16 %v1448, %v1447
      %v1478 = vpack.c.bf16 %v1450, %v1449
      %v1479 = vpack.c.bf16 %v1452, %v1451
      %v1480 = vpack.c.bf16 %v1454, %v1453
      %v1481 = vpack.c.bf16 %v1456, %v1455
      %v1482 = vpack.c.bf16 %v1458, %v1457
      %v1483 = vpack.c.bf16 %v1460, %v1459
      %v1484 = vpack.c.bf16 %v1462, %v1461
      %v1485 = vpack.c.bf16 %v1464, %v1463
      %v1486 = vpack.c.bf16 %v1466, %v1465
      %v1487 = vpack.c.bf16 %v1468, %v1467
      %v1488 = vpack.c.bf16 %v1470, %v1469
      %v1489 = vpack.c.bf16 %v1472, %v1471
      %v1490 = vpack.c.bf16 %v1474, %v1473
      %s1491 = scalar_lea.vmem %s1, 12
      %v1492 = vld [vmem:[%s1491] sm:$0x3]
      %v1494 = vsel %vm271, %v1475, 0
      %v1497 = vsel %vm271, %v1476, 0
      %v1500 = vsel %vm271, %v1477, 0
      %v1503 = vsel %vm271, %v1478, 0
      %v1506 = vsel %vm271, %v1479, 0
      %v1509 = vsel %vm271, %v1480, 0
      %v1512 = vsel %vm271, %v1481, 0
      %v1515 = vsel %vm271, %v1482, 0
      %v1518 = vsel %vm271, %v1483, 0
      %v1521 = vsel %vm271, %v1484, 0
      %v1524 = vsel %vm271, %v1485, 0
      %v1527 = vsel %vm271, %v1486, 0
      %v1530 = vsel %vm271, %v1487, 0
      %v1533 = vsel %vm271, %v1488, 0
      %v1536 = vsel %vm271, %v1489, 0
      %v1539 = vsel %vm271, %v1490, 0
      %v1542 = vsel %vm320, %v1492, 0
      %1544 = vmatpush.bf16.msra.mxu0 0
      %1545 = vmatpush.bf16.msra.mxu0 0
      %1546 = vmatpush.bf16.msra.mxu0 0
      %1547 = vmatpush.bf16.msra.mxu0 0
      %1548 = vmatpush.bf16.msra.mxu0 0
      %1549 = vmatpush.bf16.msra.mxu0 0
      %1550 = vmatpush.bf16.msra.mxu0 0
      %1551 = vmatpush.bf16.msra.mxu0 %v1542
      %1552 = vmatmul.bf16.gmra.mxu0 %v1494
      %v1553 = vpop.f32.mrf.mxu0
      %v1554 = vadd.f32 0.0, %v1553
      %v1555 = vpop.f32.mrf.mxu0
      %v1556 = vadd.f32 0.0, %v1555
      %1557 = vmatmul.bf16.gmra.mxu0 %v1497
      %v1558 = vpop.f32.mrf.mxu0
      %v1559 = vadd.f32 0.0, %v1558
      %v1560 = vpop.f32.mrf.mxu0
      %v1561 = vadd.f32 0.0, %v1560
      %1562 = vmatmul.bf16.gmra.mxu0 %v1500
      %v1563 = vpop.f32.mrf.mxu0
      %v1564 = vadd.f32 0.0, %v1563
      %v1565 = vpop.f32.mrf.mxu0
      %v1566 = vadd.f32 0.0, %v1565
      %1567 = vmatmul.bf16.gmra.mxu0 %v1503
      %v1568 = vpop.f32.mrf.mxu0
      %v1569 = vadd.f32 0.0, %v1568
      %v1570 = vpop.f32.mrf.mxu0
      %v1571 = vadd.f32 0.0, %v1570
      %1572 = vmatmul.bf16.gmra.mxu0 %v1506
      %v1573 = vpop.f32.mrf.mxu0
      %v1574 = vadd.f32 0.0, %v1573
      %v1575 = vpop.f32.mrf.mxu0
      %v1576 = vadd.f32 0.0, %v1575
      %1577 = vmatmul.bf16.gmra.mxu0 %v1509
      %v1578 = vpop.f32.mrf.mxu0
      %v1579 = vadd.f32 0.0, %v1578
      %v1580 = vpop.f32.mrf.mxu0
      %v1581 = vadd.f32 0.0, %v1580
      %1582 = vmatmul.bf16.gmra.mxu0 %v1512
      %v1583 = vpop.f32.mrf.mxu0
      %v1584 = vadd.f32 0.0, %v1583
      %v1585 = vpop.f32.mrf.mxu0
      %v1586 = vadd.f32 0.0, %v1585
      %1587 = vmatmul.bf16.gmra.mxu0 %v1515
      %v1588 = vpop.f32.mrf.mxu0
      %v1589 = vadd.f32 0.0, %v1588
      %v1590 = vpop.f32.mrf.mxu0
      %v1591 = vadd.f32 0.0, %v1590
      %1592 = vmatmul.bf16.gmra.mxu0 %v1518
      %v1593 = vpop.f32.mrf.mxu0
      %v1594 = vadd.f32 0.0, %v1593
      %v1595 = vpop.f32.mrf.mxu0
      %v1596 = vadd.f32 0.0, %v1595
      %1597 = vmatmul.bf16.gmra.mxu0 %v1521
      %v1598 = vpop.f32.mrf.mxu0
      %v1599 = vadd.f32 0.0, %v1598
      %v1600 = vpop.f32.mrf.mxu0
      %v1601 = vadd.f32 0.0, %v1600
      %1602 = vmatmul.bf16.gmra.mxu0 %v1524
      %v1603 = vpop.f32.mrf.mxu0
      %v1604 = vadd.f32 0.0, %v1603
      %v1605 = vpop.f32.mrf.mxu0
      %v1606 = vadd.f32 0.0, %v1605
      %1607 = vmatmul.bf16.gmra.mxu0 %v1527
      %v1608 = vpop.f32.mrf.mxu0
      %v1609 = vadd.f32 0.0, %v1608
      %v1610 = vpop.f32.mrf.mxu0
      %v1611 = vadd.f32 0.0, %v1610
      %1612 = vmatmul.bf16.gmra.mxu0 %v1530
      %v1613 = vpop.f32.mrf.mxu0
      %v1614 = vadd.f32 0.0, %v1613
      %v1615 = vpop.f32.mrf.mxu0
      %v1616 = vadd.f32 0.0, %v1615
      %1617 = vmatmul.bf16.gmra.mxu0 %v1533
      %v1618 = vpop.f32.mrf.mxu0
      %v1619 = vadd.f32 0.0, %v1618
      %v1620 = vpop.f32.mrf.mxu0
      %v1621 = vadd.f32 0.0, %v1620
      %1622 = vmatmul.bf16.gmra.mxu0 %v1536
      %v1623 = vpop.f32.mrf.mxu0
      %v1624 = vadd.f32 0.0, %v1623
      %v1625 = vpop.f32.mrf.mxu0
      %v1626 = vadd.f32 0.0, %v1625
      %1627 = vmatmul.bf16.gmra.mxu0 %v1539
      %v1628 = vpop.f32.mrf.mxu0
      %v1629 = vadd.f32 0.0, %v1628
      %v1630 = vpop.f32.mrf.mxu0
      %v1631 = vadd.f32 0.0, %v1630
      %1632 = vdwg.mxu0
      %v1633 = vadd.f32 %v1410, %v1554
      %v1634 = vadd.f32 %v1411, %v1556
      %v1635 = vadd.f32 %v1412, %v1559
      %v1636 = vadd.f32 %v1413, %v1561
      %v1637 = vadd.f32 %v1414, %v1564
      %v1638 = vadd.f32 %v1415, %v1566
      %v1639 = vadd.f32 %v1416, %v1569
      %v1640 = vadd.f32 %v1417, %v1571
      %v1641 = vadd.f32 %v1418, %v1574
      %v1642 = vadd.f32 %v1419, %v1576
      %v1643 = vadd.f32 %v1420, %v1579
      %v1644 = vadd.f32 %v1421, %v1581
      %v1645 = vadd.f32 %v1422, %v1584
      %v1646 = vadd.f32 %v1423, %v1586
      %v1647 = vadd.f32 %v1424, %v1589
      %v1648 = vadd.f32 %v1425, %v1591
      %v1649 = vadd.f32 %v1426, %v1594
      %v1650 = vadd.f32 %v1427, %v1596
      %v1651 = vadd.f32 %v1428, %v1599
      %v1652 = vadd.f32 %v1429, %v1601
      %v1653 = vadd.f32 %v1430, %v1604
      %v1654 = vadd.f32 %v1431, %v1606
      %v1655 = vadd.f32 %v1432, %v1609
      %v1656 = vadd.f32 %v1433, %v1611
      %v1657 = vadd.f32 %v1434, %v1614
      %v1658 = vadd.f32 %v1435, %v1616
      %v1659 = vadd.f32 %v1436, %v1619
      %v1660 = vadd.f32 %v1437, %v1621
      %v1661 = vadd.f32 %v1438, %v1624
      %v1662 = vadd.f32 %v1439, %v1626
      %v1663 = vadd.f32 %v1440, %v1629
      %v1664 = vadd.f32 %v1441, %v1631
      %v1665 = vld [vmem:[%s1442 + $0x1] sm:$0xff]
      %v1666 = vld [vmem:[%s1442 + $0x9] sm:$0xff]
      %v1667 = vld [vmem:[%s1442 + $0x19] sm:$0xff]
      %v1668 = vld [vmem:[%s1442 + $0x21] sm:$0xff]
      %v1669 = vld [vmem:[%s1442 + $0x31] sm:$0xff]
      %v1670 = vld [vmem:[%s1442 + $0x39] sm:$0xff]
      %v1671 = vld [vmem:[%s1442 + $0x49] sm:$0xff]
      %v1672 = vld [vmem:[%s1442 + $0x51] sm:$0xff]
      %v1673 = vld [vmem:[%s1442 + $0x61] sm:$0xff]
      %v1674 = vld [vmem:[%s1442 + $0x69] sm:$0xff]
      %v1675 = vld [vmem:[%s1442 + $0x79] sm:$0xff]
      %v1676 = vld [vmem:[%s1442 + $0x81] sm:$0xff]
      %v1677 = vld [vmem:[%s1442 + $0x91] sm:$0xff]
      %v1678 = vld [vmem:[%s1442 + $0x99] sm:$0xff]
      %v1679 = vld [vmem:[%s1442 + $0xa9] sm:$0xff]
      %v1680 = vld [vmem:[%s1442 + $0xb1] sm:$0xff]
      %v1681 = vld [vmem:[%s1442 + $0xc1] sm:$0xff]
      %v1682 = vld [vmem:[%s1442 + $0xc9] sm:$0xff]
      %v1683 = vld [vmem:[%s1442 + $0xd9] sm:$0xff]
      %v1684 = vld [vmem:[%s1442 + $0xe1] sm:$0xff]
      %v1685 = vld [vmem:[%s1442 + $0xf1] sm:$0xff]
      %v1686 = vld [vmem:[%s1442 + $0xf9] sm:$0xff]
      %v1687 = vld [vmem:[%s1442 + $0x109] sm:$0xff]
      %v1688 = vld [vmem:[%s1442 + $0x111] sm:$0xff]
      %v1689 = vld [vmem:[%s1442 + $0x121] sm:$0xff]
      %v1690 = vld [vmem:[%s1442 + $0x129] sm:$0xff]
      %v1691 = vld [vmem:[%s1442 + $0x139] sm:$0xff]
      %v1692 = vld [vmem:[%s1442 + $0x141] sm:$0xff]
      %v1693 = vld [vmem:[%s1442 + $0x151] sm:$0xff]
      %v1694 = vld [vmem:[%s1442 + $0x159] sm:$0xff]
      %v1695 = vld [vmem:[%s1442 + $0x169] sm:$0xff]
      %v1696 = vld [vmem:[%s1442 + $0x171] sm:$0xff]
      %v1697 = vpack.c.bf16 %v1666, %v1665
      %v1698 = vpack.c.bf16 %v1668, %v1667
      %v1699 = vpack.c.bf16 %v1670, %v1669
      %v1700 = vpack.c.bf16 %v1672, %v1671
      %v1701 = vpack.c.bf16 %v1674, %v1673
      %v1702 = vpack.c.bf16 %v1676, %v1675
      %v1703 = vpack.c.bf16 %v1678, %v1677
      %v1704 = vpack.c.bf16 %v1680, %v1679
      %v1705 = vpack.c.bf16 %v1682, %v1681
      %v1706 = vpack.c.bf16 %v1684, %v1683
      %v1707 = vpack.c.bf16 %v1686, %v1685
      %v1708 = vpack.c.bf16 %v1688, %v1687
      %v1709 = vpack.c.bf16 %v1690, %v1689
      %v1710 = vpack.c.bf16 %v1692, %v1691
      %v1711 = vpack.c.bf16 %v1694, %v1693
      %v1712 = vpack.c.bf16 %v1696, %v1695
      %s1713 = scalar_lea.vmem %s1, 14
      %v1714 = vld [vmem:[%s1713] sm:$0x3]
      %v1716 = vsel %vm271, %v1697, 0
      %v1719 = vsel %vm271, %v1698, 0
      %v1722 = vsel %vm271, %v1699, 0
      %v1725 = vsel %vm271, %v1700, 0
      %v1728 = vsel %vm271, %v1701, 0
      %v1731 = vsel %vm271, %v1702, 0
      %v1734 = vsel %vm271, %v1703, 0
      %v1737 = vsel %vm271, %v1704, 0
      %v1740 = vsel %vm271, %v1705, 0
      %v1743 = vsel %vm271, %v1706, 0
      %v1746 = vsel %vm271, %v1707, 0
      %v1749 = vsel %vm271, %v1708, 0
      %v1752 = vsel %vm271, %v1709, 0
      %v1755 = vsel %vm271, %v1710, 0
      %v1758 = vsel %vm271, %v1711, 0
      %v1761 = vsel %vm271, %v1712, 0
      %v1764 = vsel %vm320, %v1714, 0
      %1766 = vmatpush.bf16.msra.mxu0 0
      %1767 = vmatpush.bf16.msra.mxu0 0
      %1768 = vmatpush.bf16.msra.mxu0 0
      %1769 = vmatpush.bf16.msra.mxu0 0
      %1770 = vmatpush.bf16.msra.mxu0 0
      %1771 = vmatpush.bf16.msra.mxu0 0
      %1772 = vmatpush.bf16.msra.mxu0 0
      %1773 = vmatpush.bf16.msra.mxu0 %v1764
      %1774 = vmatmul.bf16.gmra.mxu0 %v1716
      %v1775 = vpop.f32.mrf.mxu0
      %v1776 = vadd.f32 0.0, %v1775
      %v1777 = vpop.f32.mrf.mxu0
      %v1778 = vadd.f32 0.0, %v1777
      %1779 = vmatmul.bf16.gmra.mxu0 %v1719
      %v1780 = vpop.f32.mrf.mxu0
      %v1781 = vadd.f32 0.0, %v1780
      %v1782 = vpop.f32.mrf.mxu0
      %v1783 = vadd.f32 0.0, %v1782
      %1784 = vmatmul.bf16.gmra.mxu0 %v1722
      %v1785 = vpop.f32.mrf.mxu0
      %v1786 = vadd.f32 0.0, %v1785
      %v1787 = vpop.f32.mrf.mxu0
      %v1788 = vadd.f32 0.0, %v1787
      %1789 = vmatmul.bf16.gmra.mxu0 %v1725
      %v1790 = vpop.f32.mrf.mxu0
      %v1791 = vadd.f32 0.0, %v1790
      %v1792 = vpop.f32.mrf.mxu0
      %v1793 = vadd.f32 0.0, %v1792
      %1794 = vmatmul.bf16.gmra.mxu0 %v1728
      %v1795 = vpop.f32.mrf.mxu0
      %v1796 = vadd.f32 0.0, %v1795
      %v1797 = vpop.f32.mrf.mxu0
      %v1798 = vadd.f32 0.0, %v1797
      %1799 = vmatmul.bf16.gmra.mxu0 %v1731
      %v1800 = vpop.f32.mrf.mxu0
      %v1801 = vadd.f32 0.0, %v1800
      %v1802 = vpop.f32.mrf.mxu0
      %v1803 = vadd.f32 0.0, %v1802
      %1804 = vmatmul.bf16.gmra.mxu0 %v1734
      %v1805 = vpop.f32.mrf.mxu0
      %v1806 = vadd.f32 0.0, %v1805
      %v1807 = vpop.f32.mrf.mxu0
      %v1808 = vadd.f32 0.0, %v1807
      %1809 = vmatmul.bf16.gmra.mxu0 %v1737
      %v1810 = vpop.f32.mrf.mxu0
      %v1811 = vadd.f32 0.0, %v1810
      %v1812 = vpop.f32.mrf.mxu0
      %v1813 = vadd.f32 0.0, %v1812
      %1814 = vmatmul.bf16.gmra.mxu0 %v1740
      %v1815 = vpop.f32.mrf.mxu0
      %v1816 = vadd.f32 0.0, %v1815
      %v1817 = vpop.f32.mrf.mxu0
      %v1818 = vadd.f32 0.0, %v1817
      %1819 = vmatmul.bf16.gmra.mxu0 %v1743
      %v1820 = vpop.f32.mrf.mxu0
      %v1821 = vadd.f32 0.0, %v1820
      %v1822 = vpop.f32.mrf.mxu0
      %v1823 = vadd.f32 0.0, %v1822
      %1824 = vmatmul.bf16.gmra.mxu0 %v1746
      %v1825 = vpop.f32.mrf.mxu0
      %v1826 = vadd.f32 0.0, %v1825
      %v1827 = vpop.f32.mrf.mxu0
      %v1828 = vadd.f32 0.0, %v1827
      %1829 = vmatmul.bf16.gmra.mxu0 %v1749
      %v1830 = vpop.f32.mrf.mxu0
      %v1831 = vadd.f32 0.0, %v1830
      %v1832 = vpop.f32.mrf.mxu0
      %v1833 = vadd.f32 0.0, %v1832
      %1834 = vmatmul.bf16.gmra.mxu0 %v1752
      %v1835 = vpop.f32.mrf.mxu0
      %v1836 = vadd.f32 0.0, %v1835
      %v1837 = vpop.f32.mrf.mxu0
      %v1838 = vadd.f32 0.0, %v1837
      %1839 = vmatmul.bf16.gmra.mxu0 %v1755
      %v1840 = vpop.f32.mrf.mxu0
      %v1841 = vadd.f32 0.0, %v1840
      %v1842 = vpop.f32.mrf.mxu0
      %v1843 = vadd.f32 0.0, %v1842
      %1844 = vmatmul.bf16.gmra.mxu0 %v1758
      %v1845 = vpop.f32.mrf.mxu0
      %v1846 = vadd.f32 0.0, %v1845
      %v1847 = vpop.f32.mrf.mxu0
      %v1848 = vadd.f32 0.0, %v1847
      %1849 = vmatmul.bf16.gmra.mxu0 %v1761
      %v1850 = vpop.f32.mrf.mxu0
      %v1851 = vadd.f32 0.0, %v1850
      %v1852 = vpop.f32.mrf.mxu0
      %v1853 = vadd.f32 0.0, %v1852
      %1854 = vdwg.mxu0
      %v1855 = vadd.f32 %v1633, %v1776
      %v1856 = vadd.f32 %v1634, %v1778
      %v1857 = vadd.f32 %v1635, %v1781
      %v1858 = vadd.f32 %v1636, %v1783
      %v1859 = vadd.f32 %v1637, %v1786
      %v1860 = vadd.f32 %v1638, %v1788
      %v1861 = vadd.f32 %v1639, %v1791
      %v1862 = vadd.f32 %v1640, %v1793
      %v1863 = vadd.f32 %v1641, %v1796
      %v1864 = vadd.f32 %v1642, %v1798
      %v1865 = vadd.f32 %v1643, %v1801
      %v1866 = vadd.f32 %v1644, %v1803
      %v1867 = vadd.f32 %v1645, %v1806
      %v1868 = vadd.f32 %v1646, %v1808
      %v1869 = vadd.f32 %v1647, %v1811
      %v1870 = vadd.f32 %v1648, %v1813
      %v1871 = vadd.f32 %v1649, %v1816
      %v1872 = vadd.f32 %v1650, %v1818
      %v1873 = vadd.f32 %v1651, %v1821
      %v1874 = vadd.f32 %v1652, %v1823
      %v1875 = vadd.f32 %v1653, %v1826
      %v1876 = vadd.f32 %v1654, %v1828
      %v1877 = vadd.f32 %v1655, %v1831
      %v1878 = vadd.f32 %v1656, %v1833
      %v1879 = vadd.f32 %v1657, %v1836
      %v1880 = vadd.f32 %v1658, %v1838
      %v1881 = vadd.f32 %v1659, %v1841
      %v1882 = vadd.f32 %v1660, %v1843
      %v1883 = vadd.f32 %v1661, %v1846
      %v1884 = vadd.f32 %v1662, %v1848
      %v1885 = vadd.f32 %v1663, %v1851
      %v1886 = vadd.f32 %v1664, %v1853
      %v1887 = vld [vmem:[%s1442 + $0x2] sm:$0xff]
      %v1888 = vld [vmem:[%s1442 + $0xa] sm:$0xff]
      %v1889 = vld [vmem:[%s1442 + $0x1a] sm:$0xff]
      %v1890 = vld [vmem:[%s1442 + $0x22] sm:$0xff]
      %v1891 = vld [vmem:[%s1442 + $0x32] sm:$0xff]
      %v1892 = vld [vmem:[%s1442 + $0x3a] sm:$0xff]
      %v1893 = vld [vmem:[%s1442 + $0x4a] sm:$0xff]
      %v1894 = vld [vmem:[%s1442 + $0x52] sm:$0xff]
      %v1895 = vld [vmem:[%s1442 + $0x62] sm:$0xff]
      %v1896 = vld [vmem:[%s1442 + $0x6a] sm:$0xff]
      %v1897 = vld [vmem:[%s1442 + $0x7a] sm:$0xff]
      %v1898 = vld [vmem:[%s1442 + $0x82] sm:$0xff]
      %v1899 = vld [vmem:[%s1442 + $0x92] sm:$0xff]
      %v1900 = vld [vmem:[%s1442 + $0x9a] sm:$0xff]
      %v1901 = vld [vmem:[%s1442 + $0xaa] sm:$0xff]
      %v1902 = vld [vmem:[%s1442 + $0xb2] sm:$0xff]
      %v1903 = vld [vmem:[%s1442 + $0xc2] sm:$0xff]
      %v1904 = vld [vmem:[%s1442 + $0xca] sm:$0xff]
      %v1905 = vld [vmem:[%s1442 + $0xda] sm:$0xff]
      %v1906 = vld [vmem:[%s1442 + $0xe2] sm:$0xff]
      %v1907 = vld [vmem:[%s1442 + $0xf2] sm:$0xff]
      %v1908 = vld [vmem:[%s1442 + $0xfa] sm:$0xff]
      %v1909 = vld [vmem:[%s1442 + $0x10a] sm:$0xff]
      %v1910 = vld [vmem:[%s1442 + $0x112] sm:$0xff]
      %v1911 = vld [vmem:[%s1442 + $0x122] sm:$0xff]
      %v1912 = vld [vmem:[%s1442 + $0x12a] sm:$0xff]
      %v1913 = vld [vmem:[%s1442 + $0x13a] sm:$0xff]
      %v1914 = vld [vmem:[%s1442 + $0x142] sm:$0xff]
      %v1915 = vld [vmem:[%s1442 + $0x152] sm:$0xff]
      %v1916 = vld [vmem:[%s1442 + $0x15a] sm:$0xff]
      %v1917 = vld [vmem:[%s1442 + $0x16a] sm:$0xff]
      %v1918 = vld [vmem:[%s1442 + $0x172] sm:$0xff]
      %v1919 = vpack.c.bf16 %v1888, %v1887
      %v1920 = vpack.c.bf16 %v1890, %v1889
      %v1921 = vpack.c.bf16 %v1892, %v1891
      %v1922 = vpack.c.bf16 %v1894, %v1893
      %v1923 = vpack.c.bf16 %v1896, %v1895
      %v1924 = vpack.c.bf16 %v1898, %v1897
      %v1925 = vpack.c.bf16 %v1900, %v1899
      %v1926 = vpack.c.bf16 %v1902, %v1901
      %v1927 = vpack.c.bf16 %v1904, %v1903
      %v1928 = vpack.c.bf16 %v1906, %v1905
      %v1929 = vpack.c.bf16 %v1908, %v1907
      %v1930 = vpack.c.bf16 %v1910, %v1909
      %v1931 = vpack.c.bf16 %v1912, %v1911
      %v1932 = vpack.c.bf16 %v1914, %v1913
      %v1933 = vpack.c.bf16 %v1916, %v1915
      %v1934 = vpack.c.bf16 %v1918, %v1917
      %s1935 = scalar_lea.vmem %s1, 16
      %v1936 = vld [vmem:[%s1935] sm:$0x3]
      %v1938 = vsel %vm271, %v1919, 0
      %v1941 = vsel %vm271, %v1920, 0
      %v1944 = vsel %vm271, %v1921, 0
      %v1947 = vsel %vm271, %v1922, 0
      %v1950 = vsel %vm271, %v1923, 0
      %v1953 = vsel %vm271, %v1924, 0
      %v1956 = vsel %vm271, %v1925, 0
      %v1959 = vsel %vm271, %v1926, 0
      %v1962 = vsel %vm271, %v1927, 0
      %v1965 = vsel %vm271, %v1928, 0
      %v1968 = vsel %vm271, %v1929, 0
      %v1971 = vsel %vm271, %v1930, 0
      %v1974 = vsel %vm271, %v1931, 0
      %v1977 = vsel %vm271, %v1932, 0
      %v1980 = vsel %vm271, %v1933, 0
      %v1983 = vsel %vm271, %v1934, 0
      %v1986 = vsel %vm320, %v1936, 0
      %1988 = vmatpush.bf16.msra.mxu0 0
      %1989 = vmatpush.bf16.msra.mxu0 0
      %1990 = vmatpush.bf16.msra.mxu0 0
      %1991 = vmatpush.bf16.msra.mxu0 0
      %1992 = vmatpush.bf16.msra.mxu0 0
      %1993 = vmatpush.bf16.msra.mxu0 0
      %1994 = vmatpush.bf16.msra.mxu0 0
      %1995 = vmatpush.bf16.msra.mxu0 %v1986
      %1996 = vmatmul.bf16.gmra.mxu0 %v1938
      %v1997 = vpop.f32.mrf.mxu0
      %v1998 = vadd.f32 0.0, %v1997
      %v1999 = vpop.f32.mrf.mxu0
      %v2000 = vadd.f32 0.0, %v1999
      %2001 = vmatmul.bf16.gmra.mxu0 %v1941
      %v2002 = vpop.f32.mrf.mxu0
      %v2003 = vadd.f32 0.0, %v2002
      %v2004 = vpop.f32.mrf.mxu0
      %v2005 = vadd.f32 0.0, %v2004
      %2006 = vmatmul.bf16.gmra.mxu0 %v1944
      %v2007 = vpop.f32.mrf.mxu0
      %v2008 = vadd.f32 0.0, %v2007
      %v2009 = vpop.f32.mrf.mxu0
      %v2010 = vadd.f32 0.0, %v2009
      %2011 = vmatmul.bf16.gmra.mxu0 %v1947
      %v2012 = vpop.f32.mrf.mxu0
      %v2013 = vadd.f32 0.0, %v2012
      %v2014 = vpop.f32.mrf.mxu0
      %v2015 = vadd.f32 0.0, %v2014
      %2016 = vmatmul.bf16.gmra.mxu0 %v1950
      %v2017 = vpop.f32.mrf.mxu0
      %v2018 = vadd.f32 0.0, %v2017
      %v2019 = vpop.f32.mrf.mxu0
      %v2020 = vadd.f32 0.0, %v2019
      %2021 = vmatmul.bf16.gmra.mxu0 %v1953
      %v2022 = vpop.f32.mrf.mxu0
      %v2023 = vadd.f32 0.0, %v2022
      %v2024 = vpop.f32.mrf.mxu0
      %v2025 = vadd.f32 0.0, %v2024
      %2026 = vmatmul.bf16.gmra.mxu0 %v1956
      %v2027 = vpop.f32.mrf.mxu0
      %v2028 = vadd.f32 0.0, %v2027
      %v2029 = vpop.f32.mrf.mxu0
      %v2030 = vadd.f32 0.0, %v2029
      %2031 = vmatmul.bf16.gmra.mxu0 %v1959
      %v2032 = vpop.f32.mrf.mxu0
      %v2033 = vadd.f32 0.0, %v2032
      %v2034 = vpop.f32.mrf.mxu0
      %v2035 = vadd.f32 0.0, %v2034
      %2036 = vmatmul.bf16.gmra.mxu0 %v1962
      %v2037 = vpop.f32.mrf.mxu0
      %v2038 = vadd.f32 0.0, %v2037
      %v2039 = vpop.f32.mrf.mxu0
      %v2040 = vadd.f32 0.0, %v2039
      %2041 = vmatmul.bf16.gmra.mxu0 %v1965
      %v2042 = vpop.f32.mrf.mxu0
      %v2043 = vadd.f32 0.0, %v2042
      %v2044 = vpop.f32.mrf.mxu0
      %v2045 = vadd.f32 0.0, %v2044
      %2046 = vmatmul.bf16.gmra.mxu0 %v1968
      %v2047 = vpop.f32.mrf.mxu0
      %v2048 = vadd.f32 0.0, %v2047
      %v2049 = vpop.f32.mrf.mxu0
      %v2050 = vadd.f32 0.0, %v2049
      %2051 = vmatmul.bf16.gmra.mxu0 %v1971
      %v2052 = vpop.f32.mrf.mxu0
      %v2053 = vadd.f32 0.0, %v2052
      %v2054 = vpop.f32.mrf.mxu0
      %v2055 = vadd.f32 0.0, %v2054
      %2056 = vmatmul.bf16.gmra.mxu0 %v1974
      %v2057 = vpop.f32.mrf.mxu0
      %v2058 = vadd.f32 0.0, %v2057
      %v2059 = vpop.f32.mrf.mxu0
      %v2060 = vadd.f32 0.0, %v2059
      %2061 = vmatmul.bf16.gmra.mxu0 %v1977
      %v2062 = vpop.f32.mrf.mxu0
      %v2063 = vadd.f32 0.0, %v2062
      %v2064 = vpop.f32.mrf.mxu0
      %v2065 = vadd.f32 0.0, %v2064
      %2066 = vmatmul.bf16.gmra.mxu0 %v1980
      %v2067 = vpop.f32.mrf.mxu0
      %v2068 = vadd.f32 0.0, %v2067
      %v2069 = vpop.f32.mrf.mxu0
      %v2070 = vadd.f32 0.0, %v2069
      %2071 = vmatmul.bf16.gmra.mxu0 %v1983
      %v2072 = vpop.f32.mrf.mxu0
      %v2073 = vadd.f32 0.0, %v2072
      %v2074 = vpop.f32.mrf.mxu0
      %v2075 = vadd.f32 0.0, %v2074
      %2076 = vdwg.mxu0
      %v2077 = vadd.f32 %v1855, %v1998
      %v2078 = vadd.f32 %v1856, %v2000
      %v2079 = vadd.f32 %v1857, %v2003
      %v2080 = vadd.f32 %v1858, %v2005
      %v2081 = vadd.f32 %v1859, %v2008
      %v2082 = vadd.f32 %v1860, %v2010
      %v2083 = vadd.f32 %v1861, %v2013
      %v2084 = vadd.f32 %v1862, %v2015
      %v2085 = vadd.f32 %v1863, %v2018
      %v2086 = vadd.f32 %v1864, %v2020
      %v2087 = vadd.f32 %v1865, %v2023
      %v2088 = vadd.f32 %v1866, %v2025
      %v2089 = vadd.f32 %v1867, %v2028
      %v2090 = vadd.f32 %v1868, %v2030
      %v2091 = vadd.f32 %v1869, %v2033
      %v2092 = vadd.f32 %v1870, %v2035
      %v2093 = vadd.f32 %v1871, %v2038
      %v2094 = vadd.f32 %v1872, %v2040
      %v2095 = vadd.f32 %v1873, %v2043
      %v2096 = vadd.f32 %v1874, %v2045
      %v2097 = vadd.f32 %v1875, %v2048
      %v2098 = vadd.f32 %v1876, %v2050
      %v2099 = vadd.f32 %v1877, %v2053
      %v2100 = vadd.f32 %v1878, %v2055
      %v2101 = vadd.f32 %v1879, %v2058
      %v2102 = vadd.f32 %v1880, %v2060
      %v2103 = vadd.f32 %v1881, %v2063
      %v2104 = vadd.f32 %v1882, %v2065
      %v2105 = vadd.f32 %v1883, %v2068
      %v2106 = vadd.f32 %v1884, %v2070
      %v2107 = vadd.f32 %v1885, %v2073
      %v2108 = vadd.f32 %v1886, %v2075
      %v2109 = vld [vmem:[%s2] sm:$0x1]
      %v2111 = vperm.slane %v2109, 0
      %v2113 = vadd.f32 %v2077, %v2111
      %v2114 = vadd.f32 %v2078, %v2111
      %v2115 = vadd.f32 %v2079, %v2111
      %v2116 = vadd.f32 %v2080, %v2111
      %v2117 = vadd.f32 %v2081, %v2111
      %v2118 = vadd.f32 %v2082, %v2111
      %v2119 = vadd.f32 %v2083, %v2111
      %v2120 = vadd.f32 %v2084, %v2111
      %v2121 = vadd.f32 %v2085, %v2111
      %v2122 = vadd.f32 %v2086, %v2111
      %v2123 = vadd.f32 %v2087, %v2111
      %v2124 = vadd.f32 %v2088, %v2111
      %v2125 = vadd.f32 %v2089, %v2111
      %v2126 = vadd.f32 %v2090, %v2111
      %v2127 = vadd.f32 %v2091, %v2111
      %v2128 = vadd.f32 %v2092, %v2111
      %v2129 = vadd.f32 %v2093, %v2111
      %v2130 = vadd.f32 %v2094, %v2111
      %v2131 = vadd.f32 %v2095, %v2111
      %v2132 = vadd.f32 %v2096, %v2111
      %v2133 = vadd.f32 %v2097, %v2111
      %v2134 = vadd.f32 %v2098, %v2111
      %v2135 = vadd.f32 %v2099, %v2111
      %v2136 = vadd.f32 %v2100, %v2111
      %v2137 = vadd.f32 %v2101, %v2111
      %v2138 = vadd.f32 %v2102, %v2111
      %v2139 = vadd.f32 %v2103, %v2111
      %v2140 = vadd.f32 %v2104, %v2111
      %v2141 = vadd.f32 %v2105, %v2111
      %v2142 = vadd.f32 %v2106, %v2111
      %v2143 = vadd.f32 %v2107, %v2111
      %v2144 = vadd.f32 %v2108, %v2111
      %v2145 = vmax.f32 %v2113, 0.0
      %v2146 = vmax.f32 %v2114, 0.0
      %v2147 = vmax.f32 %v2115, 0.0
      %v2148 = vmax.f32 %v2116, 0.0
      %v2149 = vmax.f32 %v2117, 0.0
      %v2150 = vmax.f32 %v2118, 0.0
      %v2151 = vmax.f32 %v2119, 0.0
      %v2152 = vmax.f32 %v2120, 0.0
      %v2153 = vmax.f32 %v2121, 0.0
      %v2154 = vmax.f32 %v2122, 0.0
      %v2155 = vmax.f32 %v2123, 0.0
      %v2156 = vmax.f32 %v2124, 0.0
      %v2157 = vmax.f32 %v2125, 0.0
      %v2158 = vmax.f32 %v2126, 0.0
      %v2159 = vmax.f32 %v2127, 0.0
      %v2160 = vmax.f32 %v2128, 0.0
      %v2161 = vmax.f32 %v2129, 0.0
      %v2162 = vmax.f32 %v2130, 0.0
      %v2163 = vmax.f32 %v2131, 0.0
      %v2164 = vmax.f32 %v2132, 0.0
      %v2165 = vmax.f32 %v2133, 0.0
      %v2166 = vmax.f32 %v2134, 0.0
      %v2167 = vmax.f32 %v2135, 0.0
      %v2168 = vmax.f32 %v2136, 0.0
      %v2169 = vmax.f32 %v2137, 0.0
      %v2170 = vmax.f32 %v2138, 0.0
      %v2171 = vmax.f32 %v2139, 0.0
      %v2172 = vmax.f32 %v2140, 0.0
      %v2173 = vmax.f32 %v2141, 0.0
      %v2174 = vmax.f32 %v2142, 0.0
      %v2175 = vmax.f32 %v2143, 0.0
      %v2176 = vmax.f32 %v2144, 0.0
      %vm2177 = vcmask 64512
      %2178 = vst.msk [vmem:[%s170] sm:$0xff] %vm2177, %v2145
      %2179 = vst.msk [vmem:[%s170 + $0x8] sm:$0xff] %vm2177, %v2146
      %2180 = vst.msk [vmem:[%s170 + $0x10] sm:$0xff] %vm2177, %v2147
      %2181 = vst.msk [vmem:[%s170 + $0x18] sm:$0xff] %vm2177, %v2148
      %2182 = vst.msk [vmem:[%s170 + $0x20] sm:$0xff] %vm2177, %v2149
      %2183 = vst.msk [vmem:[%s170 + $0x28] sm:$0xff] %vm2177, %v2150
      %2184 = vst.msk [vmem:[%s170 + $0x30] sm:$0xff] %vm2177, %v2151
      %2185 = vst.msk [vmem:[%s170 + $0x38] sm:$0xff] %vm2177, %v2152
      %2186 = vst.msk [vmem:[%s170 + $0x40] sm:$0xff] %vm2177, %v2153
      %2187 = vst.msk [vmem:[%s170 + $0x48] sm:$0xff] %vm2177, %v2154
      %2188 = vst.msk [vmem:[%s170 + $0x50] sm:$0xff] %vm2177, %v2155
      %2189 = vst.msk [vmem:[%s170 + $0x58] sm:$0xff] %vm2177, %v2156
      %2190 = vst.msk [vmem:[%s170 + $0x60] sm:$0xff] %vm2177, %v2157
      %2191 = vst.msk [vmem:[%s170 + $0x68] sm:$0xff] %vm2177, %v2158
      %2192 = vst.msk [vmem:[%s170 + $0x70] sm:$0xff] %vm2177, %v2159
      %2193 = vst.msk [vmem:[%s170 + $0x78] sm:$0xff] %vm2177, %v2160
      %2194 = vst.msk [vmem:[%s170 + $0x80] sm:$0xff] %vm2177, %v2161
      %2195 = vst.msk [vmem:[%s170 + $0x88] sm:$0xff] %vm2177, %v2162
      %2196 = vst.msk [vmem:[%s170 + $0x90] sm:$0xff] %vm2177, %v2163
      %2197 = vst.msk [vmem:[%s170 + $0x98] sm:$0xff] %vm2177, %v2164
      %2198 = vst.msk [vmem:[%s170 + $0xa0] sm:$0xff] %vm2177, %v2165
      %2199 = vst.msk [vmem:[%s170 + $0xa8] sm:$0xff] %vm2177, %v2166
      %2200 = vst.msk [vmem:[%s170 + $0xb0] sm:$0xff] %vm2177, %v2167
      %2201 = vst.msk [vmem:[%s170 + $0xb8] sm:$0xff] %vm2177, %v2168
      %2202 = vst.msk [vmem:[%s170 + $0xc0] sm:$0xff] %vm2177, %v2169
      %2203 = vst.msk [vmem:[%s170 + $0xc8] sm:$0xff] %vm2177, %v2170
      %2204 = vst.msk [vmem:[%s170 + $0xd0] sm:$0xff] %vm2177, %v2171
      %2205 = vst.msk [vmem:[%s170 + $0xd8] sm:$0xff] %vm2177, %v2172
      %2206 = vst.msk [vmem:[%s170 + $0xe0] sm:$0xff] %vm2177, %v2173
      %2207 = vst.msk [vmem:[%s170 + $0xe8] sm:$0xff] %vm2177, %v2174
      %2208 = vst.msk [vmem:[%s170 + $0xf0] sm:$0xff] %vm2177, %v2175
      %2209 = vst.msk [vmem:[%s170 + $0xf8] sm:$0xff] %vm2177, %v2176
      %p2210 = scmp.lt.s32.totalorder %s14, 1
      %s2211 = scalar_select %p2210, %s14, 1
      %s2212 = smul.addr %s2211, 32
      %s2213 = smul.addr %s2212, 8
      %s2214 = scalar_lea.vmem %s3, %s2213
      // Predicated region
      $region33: #{sica_dwt_forward.9} parent=31 // pred_check
        %p2215 = pneg %p100
      $region34: #{sica_dwt_forward.9} parent=31 // pred_check_branch
        %2217 = sbr.rel (%p2215) target = $region36
      $region35: #{sica_dwt_forward.9} parent=31 // pred_region
        _
      $region36: #{sica_dwt_forward.9} parent=31 // pred_fallthru
        _
    $region32: #{sica_dwt_forward.9} parent=5 // pred_fallthru
      _
    %p2218 = scmp.le.s32.totalorder 2, %s9
    // Predicated region
    $region37: #{sica_dwt_forward.9} parent=5 // pred_check
      %p2219 = pneg %p2218
    $region38: #{sica_dwt_forward.9} parent=5 // pred_check_branch
      %2221 = sbr.rel (%p2219) target = $region40
    $region39: #{sica_dwt_forward.9} parent=5 // pred_region
      %s2222 = ssub.s32 %s9, 2
      // Predicated region
      $region41: #{sica_dwt_forward.9} parent=39 // pred_check
        %p2223 = pneg %p106
      $region42: #{sica_dwt_forward.9} parent=39 // pred_check_branch
        %2225 = sbr.rel (%p2223) target = $region44
      $region43: #{sica_dwt_forward.9} parent=39 // pred_region
        %p2226 = scmp.lt.s32.totalorder %s15, 1
        %s2227 = scalar_select %p2226, %s15, 1
        %s2228 = smul.addr %s2227, 32
        %s2229 = smul.addr %s2228, 8
        %s2230 = scalar_lea.vmem %s3, %s2229
      $region44: #{sica_dwt_forward.9} parent=39 // pred_fallthru
        _
    $region40: #{sica_dwt_forward.9} parent=5 // pred_fallthru
      _
  $region6: #{sica_dwt_forward.9} parent=0 // loop_footer
    %s13 = sadd.s32 1, %s9
  $region7: #{sica_dwt_forward.9} parent=0 // loop_footer_branch
    %8 = sbr.rel target = $region3
  $region8: #{sica_dwt_forward.9} parent=0 // loop_exit
    _

// kernel: sica_dwt_forward.10
$region0: #{sica_dwt_forward.10}
  #allocation0 [shape = 'u32[]', space=smem, size = 0x4, offset = 0x4, fixed_abs, tag = 'smem constant byte address 0x4 - core index']
  #allocation1 [shape = 'u32[72,128]{1,0:T(1,128)}', space=vmem, size = 0x9000, scoped, tag = 'internal scratch']
  %s0 = inlined_call_operand.vmem [shape: f32[2,18,18,8], index: 0, kind: input, shape index: {}]
  %s1 = inlined_call_operand.vmem [shape: bf16[9,8,8], index: 1, kind: input, shape index: {}]
  %s2 = inlined_call_operand.vmem [shape: f32[1,8], index: 2, kind: input, shape index: {}]
  %s3 = inlined_call_operand.vmem [shape: f32[2,16,16,8], index: 3, kind: output, shape index: {}]
  %s4 = sld [smem:[#allocation0]]
  $region45: #{sica_dwt_forward.10} parent=0
    _
  %s6 = ssub.s32 1, %s4
  %s7 = scalar_select 0, %s6, %s4
  loop: start=0, step=1, limit=4
  $region2: #{sica_dwt_forward.10} parent=0 // loop_pre_header
    _
  $region3: #{sica_dwt_forward.10} parent=0 // loop_header
    %s9 = sphi 0, %s13
    %p10 = scmp.ge.s32.totalorder %s9, 4
    %s19 = sphi 0, %s21
    %s22 = sphi 0, %s19
    %s23 = sphi 0, %s22
    %s39 = sphi 0, %s23
    %s43 = sphi 0, %s43
    %s45 = sphi 0, %s43
    %s46 = sphi 0, %s45
    %s60 = sphi 0, %s46
    %s64 = sphi 0, %s64
    %s66 = sphi 0, %s64
    %s67 = sphi 0, %s66
    %s81 = sphi 0, %s67
    %s87 = sphi 0, %s89
    %s90 = sphi 0, %s87
    %s91 = sphi 0, %s90
    %s107 = sphi 0, %s91
  $region4: #{sica_dwt_forward.10} parent=0 // loop_header_branch
    %12 = sbr.rel (%p10) target = $region8
  $region5: #{sica_dwt_forward.10} parent=0 // loop_body
    %s14 = ssub.s32 %s9, 1
    %s15 = ssub.s32 %s9, 2
    %s16 = sadd.s32 %s9, 1
    %s17 = ssub.s32 %s9, %s16
    %p18 = scmp.eq.s32.totalorder %s17, 0
    %s20 = sadd.s32 %s19, 1
    %s21 = scalar_select %p18, %s19, %s20
    %p24 = pneg %p18
    %p25 = scmp.eq.s32.totalorder %s9, 1
    %p26 = por %p24, %p25
    %p27 = scmp.ne.s32.totalorder %s19, %s22
    %p28 = scmp.eq.s32.totalorder %s9, 0
    %p29 = por %p27, %p28
    %p30 = scmp.ne.s32.totalorder %s19, %s22
    %p31 = scmp.eq.s32.totalorder %s14, 1
    %p32 = por %p30, %p31
    %p33 = scmp.ne.s32.totalorder %s22, %s23
    %p34 = scmp.eq.s32.totalorder %s14, 0
    %p35 = por %p33, %p34
    %p36 = scmp.ne.s32.totalorder %s22, %s23
    %p37 = scmp.eq.s32.totalorder %s15, 1
    %p38 = por %p36, %p37
    %p40 = scmp.ne.s32.totalorder %s23, %s39
    %p41 = scmp.eq.s32.totalorder %s15, 0
    %p42 = por %p40, %p41
    %s44 = sadd.s32 %s43, 1
    %p47 = scmp.eq.s32.totalorder %s9, 1
    %p48 = scmp.ne.s32.totalorder %s43, %s45
    %p49 = scmp.eq.s32.totalorder %s9, 0
    %p50 = por %p48, %p49
    %p51 = scmp.ne.s32.totalorder %s43, %s45
    %p52 = scmp.eq.s32.totalorder %s14, 1
    %p53 = por %p51, %p52
    %p54 = scmp.ne.s32.totalorder %s45, %s46
    %p55 = scmp.eq.s32.totalorder %s14, 0
    %p56 = por %p54, %p55
    %p57 = scmp.ne.s32.totalorder %s45, %s46
    %p58 = scmp.eq.s32.totalorder %s15, 1
    %p59 = por %p57, %p58
    %p61 = scmp.ne.s32.totalorder %s46, %s60
    %p62 = scmp.eq.s32.totalorder %s15, 0
    %p63 = por %p61, %p62
    %s65 = sadd.s32 %s64, 1
    %p68 = scmp.eq.s32.totalorder %s9, 1
    %p69 = scmp.ne.s32.totalorder %s64, %s66
    %p70 = scmp.eq.s32.totalorder %s9, 0
    %p71 = por %p69, %p70
    %p72 = scmp.ne.s32.totalorder %s64, %s66
    %p73 = scmp.eq.s32.totalorder %s14, 1
    %p74 = por %p72, %p73
    %p75 = scmp.ne.s32.totalorder %s66, %s67
    %p76 = scmp.eq.s32.totalorder %s14, 0
    %p77 = por %p75, %p76
    %p78 = scmp.ne.s32.totalorder %s66, %s67
    %p79 = scmp.eq.s32.totalorder %s15, 1
    %p80 = por %p78, %p79
    %p82 = scmp.ne.s32.totalorder %s67, %s81
    %p83 = scmp.eq.s32.totalorder %s15, 0
    %p84 = por %p82, %p83
    %s85 = ssub.s32 %s9, %s16
    %p86 = scmp.eq.s32.totalorder %s85, 0
    %s88 = sadd.s32 %s87, 1
    %s89 = scalar_select %p86, %s87, %s88
    %p92 = pneg %p86
    %p93 = scmp.eq.s32.totalorder %s9, 1
    %p94 = por %p92, %p93
    %p95 = scmp.ne.s32.totalorder %s87, %s90
    %p96 = scmp.eq.s32.totalorder %s9, 0
    %p97 = por %p95, %p96
    %p98 = scmp.ne.s32.totalorder %s87, %s90
    %p99 = scmp.eq.s32.totalorder %s14, 1
    %p100 = por %p98, %p99
    %p101 = scmp.ne.s32.totalorder %s90, %s91
    %p102 = scmp.eq.s32.totalorder %s14, 0
    %p103 = por %p101, %p102
    %p104 = scmp.ne.s32.totalorder %s90, %s91
    %p105 = scmp.eq.s32.totalorder %s15, 1
    %p106 = por %p104, %p105
    %p108 = scmp.ne.s32.totalorder %s91, %s107
    %p109 = scmp.eq.s32.totalorder %s15, 0
    %p110 = por %p108, %p109
    %p111 = scmp.le.s32.totalorder 1, %s9
    %p112 = scmp.lt.s32.totalorder %s9, 3
    %p113 = pnand %p111, %p112
    %p114 = pneg %p113
    // Predicated region
    $region9: #{sica_dwt_forward.10} parent=5 // pred_check
      _
    $region10: #{sica_dwt_forward.10} parent=5 // pred_check_branch
      %116 = sbr.rel (%p113) target = $region12
    $region11: #{sica_dwt_forward.10} parent=5 // pred_region
      %s117 = ssub.s32 %s9, 1
      // Predicated region
      $region13: #{sica_dwt_forward.10} parent=11 // pred_check
        %p118 = pneg %p56
      $region14: #{sica_dwt_forward.10} parent=11 // pred_check_branch
        %120 = sbr.rel (%p118) target = $region16
      $region15: #{sica_dwt_forward.10} parent=11 // pred_region
        _
      $region16: #{sica_dwt_forward.10} parent=11 // pred_fallthru
        _
      // Predicated region
      $region17: #{sica_dwt_forward.10} parent=11 // pred_check
        %p121 = pneg %p77
      $region18: #{sica_dwt_forward.10} parent=11 // pred_check_branch
        %123 = sbr.rel (%p121) target = $region20
      $region19: #{sica_dwt_forward.10} parent=11 // pred_region
        _
      $region20: #{sica_dwt_forward.10} parent=11 // pred_fallthru
        _
    $region12: #{sica_dwt_forward.10} parent=5 // pred_fallthru
      _
    %p124 = scmp.lt.s32.totalorder %s9, 2
    // Predicated region
    $region21: #{sica_dwt_forward.10} parent=5 // pred_check
      %p125 = pneg %p124
    $region22: #{sica_dwt_forward.10} parent=5 // pred_check_branch
      %127 = sbr.rel (%p125) target = $region24
    $region23: #{sica_dwt_forward.10} parent=5 // pred_region
      // Predicated region
      $region25: #{sica_dwt_forward.10} parent=23 // pred_check
        %p128 = pneg %p29
      $region26: #{sica_dwt_forward.10} parent=23 // pred_check_branch
        %130 = sbr.rel (%p128) target = $region28
      $region27: #{sica_dwt_forward.10} parent=23 // pred_region
        %p131 = scmp.lt.s32.totalorder %s9, 1
        %s132 = scalar_select %p131, %s9, 1
        %s133 = smul.addr %s132, 54
        %s134 = smul.addr %s133, 8
        %s135 = scalar_lea.vmem %s0, %s134
      $region28: #{sica_dwt_forward.10} parent=23 // pred_fallthru
        _
    $region24: #{sica_dwt_forward.10} parent=5 // pred_fallthru
      _
    %p136 = scmp.le.s32.totalorder 1, %s9
    %p137 = scmp.lt.s32.totalorder %s9, 3
    %p138 = pnand %p136, %p137
    %p139 = pneg %p138
    // Predicated region
    $region29: #{sica_dwt_forward.10} parent=5 // pred_check
      _
    $region30: #{sica_dwt_forward.10} parent=5 // pred_check_branch
      %141 = sbr.rel (%p138) target = $region32
    $region31: #{sica_dwt_forward.10} parent=5 // pred_region
      %s142 = ssub.s32 %s9, 1
      %p143 = scmp.lt.s32.totalorder %s14, 1
      %s144 = scalar_select %p143, %s14, 1
      %s145 = smul.addr %s144, 54
      %s146 = smul.addr %s145, 8
      %s147 = scalar_lea.vmem %s0, %s146
      %p148 = pneg %p35
      %p149 = pneg %p32
      %p150 = pneg %p56
      %p151 = pneg %p53
      %p152 = pneg %p77
      %p153 = pneg %p74
      %p154 = pneg %p103
      %p155 = pneg %p100
      %p156 = scmp.lt.s32.totalorder %s14, 1
      %s157 = scalar_select %p156, %s14, 1
      %s158 = smul.addr %s157, 32
      %s159 = smul.addr %s158, 8
      %s160 = scalar_lea.vmem %s3, %s159
      %p161 = scmp.lt.s32.totalorder %s14, 1
      %s162 = scalar_select %p161, %s14, 1
      %s163 = smul.addr %s162, 54
      %s164 = smul.addr %s163, 8
      %s165 = scalar_lea.vmem %s0, %s164
      %p166 = scmp.lt.s32.totalorder %s14, 1
      %s167 = scalar_select %p166, %s14, 1
      %s168 = smul.addr %s167, 32
      %s169 = smul.addr %s168, 8
      %s170 = scalar_lea.vmem %s3, %s169
      %v172 = vld [vmem:[%s165] sm:$0xff]
      %v173 = vld [vmem:[%s165 + $0x8] sm:$0xff]
      %v174 = vld [vmem:[%s165 + $0x18] sm:$0xff]
      %v175 = vld [vmem:[%s165 + $0x20] sm:$0xff]
      %v176 = vld [vmem:[%s165 + $0x30] sm:$0xff]
      %v177 = vld [vmem:[%s165 + $0x38] sm:$0xff]
      %v178 = vld [vmem:[%s165 + $0x48] sm:$0xff]
      %v179 = vld [vmem:[%s165 + $0x50] sm:$0xff]
      %v180 = vld [vmem:[%s165 + $0x60] sm:$0xff]
      %v181 = vld [vmem:[%s165 + $0x68] sm:$0xff]
      %v182 = vld [vmem:[%s165 + $0x78] sm:$0xff]
      %v183 = vld [vmem:[%s165 + $0x80] sm:$0xff]
      %v184 = vld [vmem:[%s165 + $0x90] sm:$0xff]
      %v185 = vld [vmem:[%s165 + $0x98] sm:$0xff]
      %v186 = vld [vmem:[%s165 + $0xa8] sm:$0xff]
      %v187 = vld [vmem:[%s165 + $0xb0] sm:$0xff]
      %v188 = vld [vmem:[%s165 + $0xc0] sm:$0xff]
      %v189 = vld [vmem:[%s165 + $0xc8] sm:$0xff]
      %v190 = vld [vmem:[%s165 + $0xd8] sm:$0xff]
      %v191 = vld [vmem:[%s165 + $0xe0] sm:$0xff]
      %v192 = vld [vmem:[%s165 + $0xf0] sm:$0xff]
      %v193 = vld [vmem:[%s165 + $0xf8] sm:$0xff]
      %v194 = vld [vmem:[%s165 + $0x108] sm:$0xff]
      %v195 = vld [vmem:[%s165 + $0x110] sm:$0xff]
      %v196 = vld [vmem:[%s165 + $0x120] sm:$0xff]
      %v197 = vld [vmem:[%s165 + $0x128] sm:$0xff]
      %v198 = vld [vmem:[%s165 + $0x138] sm:$0xff]
      %v199 = vld [vmem:[%s165 + $0x140] sm:$0xff]
      %v200 = vld [vmem:[%s165 + $0x150] sm:$0xff]
      %v201 = vld [vmem:[%s165 + $0x158] sm:$0xff]
      %v202 = vld [vmem:[%s165 + $0x168] sm:$0xff]
      %v203 = vld [vmem:[%s165 + $0x170] sm:$0xff]
      %v204 = vpack.c.bf16 %v173, %v172
      %v205 = vpack.c.bf16 %v175, %v174
      %v206 = vpack.c.bf16 %v177, %v176
      %v207 = vpack.c.bf16 %v179, %v178
      %v208 = vpack.c.bf16 %v181, %v180
      %v209 = vpack.c.bf16 %v183, %v182
      %v210 = vpack.c.bf16 %v185, %v184
      %v211 = vpack.c.bf16 %v187, %v186
      %v212 = vpack.c.bf16 %v189, %v188
      %v213 = vpack.c.bf16 %v191, %v190
      %v214 = vpack.c.bf16 %v193, %v192
      %v215 = vpack.c.bf16 %v195, %v194
      %v216 = vpack.c.bf16 %v197, %v196
      %v217 = vpack.c.bf16 %v199, %v198
      %v218 = vpack.c.bf16 %v201, %v200
      %v219 = vpack.c.bf16 %v203, %v202
      %v220 = vld [vmem:[%s1] sm:$0xf]
      %v221 = vld [vmem:[%s165 + $0x1] sm:$0xff]
      %v222 = vld [vmem:[%s165 + $0x9] sm:$0xff]
      %v223 = vld [vmem:[%s165 + $0x19] sm:$0xff]
      %v224 = vld [vmem:[%s165 + $0x21] sm:$0xff]
      %v225 = vld [vmem:[%s165 + $0x31] sm:$0xff]
      %v226 = vld [vmem:[%s165 + $0x39] sm:$0xff]
      %v227 = vld [vmem:[%s165 + $0x49] sm:$0xff]
      %v228 = vld [vmem:[%s165 + $0x51] sm:$0xff]
      %v229 = vld [vmem:[%s165 + $0x61] sm:$0xff]
      %v230 = vld [vmem:[%s165 + $0x69] sm:$0xff]
      %v231 = vld [vmem:[%s165 + $0x79] sm:$0xff]
      %v232 = vld [vmem:[%s165 + $0x81] sm:$0xff]
      %v233 = vld [vmem:[%s165 + $0x91] sm:$0xff]
      %v234 = vld [vmem:[%s165 + $0x99] sm:$0xff]
      %v235 = vld [vmem:[%s165 + $0xa9] sm:$0xff]
      %v236 = vld [vmem:[%s165 + $0xb1] sm:$0xff]
      %v237 = vld [vmem:[%s165 + $0xc1] sm:$0xff]
      %v238 = vld [vmem:[%s165 + $0xc9] sm:$0xff]
      %v239 = vld [vmem:[%s165 + $0xd9] sm:$0xff]
      %v240 = vld [vmem:[%s165 + $0xe1] sm:$0xff]
      %v241 = vld [vmem:[%s165 + $0xf1] sm:$0xff]
      %v242 = vld [vmem:[%s165 + $0xf9] sm:$0xff]
      %v243 = vld [vmem:[%s165 + $0x109] sm:$0xff]
      %v244 = vld [vmem:[%s165 + $0x111] sm:$0xff]
      %v245 = vld [vmem:[%s165 + $0x121] sm:$0xff]
      %v246 = vld [vmem:[%s165 + $0x129] sm:$0xff]
      %v247 = vld [vmem:[%s165 + $0x139] sm:$0xff]
      %v248 = vld [vmem:[%s165 + $0x141] sm:$0xff]
      %v249 = vld [vmem:[%s165 + $0x151] sm:$0xff]
      %v250 = vld [vmem:[%s165 + $0x159] sm:$0xff]
      %v251 = vld [vmem:[%s165 + $0x169] sm:$0xff]
      %v252 = vld [vmem:[%s165 + $0x171] sm:$0xff]
      %v253 = vpack.c.bf16 %v222, %v221
      %v254 = vpack.c.bf16 %v224, %v223
      %v255 = vpack.c.bf16 %v226, %v225
      %v256 = vpack.c.bf16 %v228, %v227
      %v257 = vpack.c.bf16 %v230, %v229
      %v258 = vpack.c.bf16 %v232, %v231
      %v259 = vpack.c.bf16 %v234, %v233
      %v260 = vpack.c.bf16 %v236, %v235
      %v261 = vpack.c.bf16 %v238, %v237
      %v262 = vpack.c.bf16 %v240, %v239
      %v263 = vpack.c.bf16 %v242, %v241
      %v264 = vpack.c.bf16 %v244, %v243
      %v265 = vpack.c.bf16 %v246, %v245
      %v266 = vpack.c.bf16 %v248, %v247
      %v267 = vpack.c.bf16 %v250, %v249
      %v268 = vpack.c.bf16 %v252, %v251
      %s269 = scalar_lea.vmem %s1, 4
      %v270 = vld [vmem:[%s269] sm:$0xf]
      %vm271 = vcmask 64512
      %v273 = vsel %vm271, %v253, 0
      %v276 = vsel %vm271, %v254, 0
      %v279 = vsel %vm271, %v255, 0
      %v282 = vsel %vm271, %v256, 0
      %v285 = vsel %vm271, %v257, 0
      %v288 = vsel %vm271, %v258, 0
      %v291 = vsel %vm271, %v259, 0
      %v294 = vsel %vm271, %v260, 0
      %v297 = vsel %vm271, %v261, 0
      %v300 = vsel %vm271, %v262, 0
      %v303 = vsel %vm271, %v263, 0
      %v306 = vsel %vm271, %v264, 0
      %v309 = vsel %vm271, %v265, 0
      %v312 = vsel %vm271, %v266, 0
      %v315 = vsel %vm271, %v267, 0
      %v318 = vsel %vm271, %v268, 0
      %vm320 = vcmask 1043456
      %v322 = vsel %vm320, %v270, 0
      %324 = vmatpush.bf16.msra.mxu0 0
      %325 = vmatpush.bf16.msra.mxu0 0
      %326 = vmatpush.bf16.msra.mxu0 0
      %327 = vmatpush.bf16.msra.mxu0 0
      %328 = vmatpush.bf16.msra.mxu0 0
      %329 = vmatpush.bf16.msra.mxu0 0
      %330 = vmatpush.bf16.msra.mxu0 0
      %331 = vmatpush.bf16.msra.mxu0 %v322
      %332 = vmatmul.bf16.gmra.mxu0 %v273
      %v333 = vpop.f32.mrf.mxu0
      %v334 = vadd.f32 0.0, %v333
      %v335 = vpop.f32.mrf.mxu0
      %v336 = vadd.f32 0.0, %v335
      %337 = vmatmul.bf16.gmra.mxu0 %v276
      %v338 = vpop.f32.mrf.mxu0
      %v339 = vadd.f32 0.0, %v338
      %v340 = vpop.f32.mrf.mxu0
      %v341 = vadd.f32 0.0, %v340
      %342 = vmatmul.bf16.gmra.mxu0 %v279
      %v343 = vpop.f32.mrf.mxu0
      %v344 = vadd.f32 0.0, %v343
      %v345 = vpop.f32.mrf.mxu0
      %v346 = vadd.f32 0.0, %v345
      %347 = vmatmul.bf16.gmra.mxu0 %v282
      %v348 = vpop.f32.mrf.mxu0
      %v349 = vadd.f32 0.0, %v348
      %v350 = vpop.f32.mrf.mxu0
      %v351 = vadd.f32 0.0, %v350
      %352 = vmatmul.bf16.gmra.mxu0 %v285
      %v353 = vpop.f32.mrf.mxu0
      %v354 = vadd.f32 0.0, %v353
      %v355 = vpop.f32.mrf.mxu0
      %v356 = vadd.f32 0.0, %v355
      %357 = vmatmul.bf16.gmra.mxu0 %v288
      %v358 = vpop.f32.mrf.mxu0
      %v359 = vadd.f32 0.0, %v358
      %v360 = vpop.f32.mrf.mxu0
      %v361 = vadd.f32 0.0, %v360
      %362 = vmatmul.bf16.gmra.mxu0 %v291
      %v363 = vpop.f32.mrf.mxu0
      %v364 = vadd.f32 0.0, %v363
      %v365 = vpop.f32.mrf.mxu0
      %v366 = vadd.f32 0.0, %v365
      %367 = vmatmul.bf16.gmra.mxu0 %v294
      %v368 = vpop.f32.mrf.mxu0
      %v369 = vadd.f32 0.0, %v368
      %v370 = vpop.f32.mrf.mxu0
      %v371 = vadd.f32 0.0, %v370
      %372 = vmatmul.bf16.gmra.mxu0 %v297
      %v373 = vpop.f32.mrf.mxu0
      %v374 = vadd.f32 0.0, %v373
      %v375 = vpop.f32.mrf.mxu0
      %v376 = vadd.f32 0.0, %v375
      %377 = vmatmul.bf16.gmra.mxu0 %v300
      %v378 = vpop.f32.mrf.mxu0
      %v379 = vadd.f32 0.0, %v378
      %v380 = vpop.f32.mrf.mxu0
      %v381 = vadd.f32 0.0, %v380
      %382 = vmatmul.bf16.gmra.mxu0 %v303
      %v383 = vpop.f32.mrf.mxu0
      %v384 = vadd.f32 0.0, %v383
      %v385 = vpop.f32.mrf.mxu0
      %v386 = vadd.f32 0.0, %v385
      %387 = vmatmul.bf16.gmra.mxu0 %v306
      %v388 = vpop.f32.mrf.mxu0
      %v389 = vadd.f32 0.0, %v388
      %v390 = vpop.f32.mrf.mxu0
      %v391 = vadd.f32 0.0, %v390
      %392 = vmatmul.bf16.gmra.mxu0 %v309
      %v393 = vpop.f32.mrf.mxu0
      %v394 = vadd.f32 0.0, %v393
      %v395 = vpop.f32.mrf.mxu0
      %v396 = vadd.f32 0.0, %v395
      %397 = vmatmul.bf16.gmra.mxu0 %v312
      %v398 = vpop.f32.mrf.mxu0
      %v399 = vadd.f32 0.0, %v398
      %v400 = vpop.f32.mrf.mxu0
      %v401 = vadd.f32 0.0, %v400
      %402 = vmatmul.bf16.gmra.mxu0 %v315
      %v403 = vpop.f32.mrf.mxu0
      %v404 = vadd.f32 0.0, %v403
      %v405 = vpop.f32.mrf.mxu0
      %v406 = vadd.f32 0.0, %v405
      %407 = vmatmul.bf16.gmra.mxu0 %v318
      %v408 = vpop.f32.mrf.mxu0
      %v409 = vadd.f32 0.0, %v408
      %v410 = vpop.f32.mrf.mxu0
      %v411 = vadd.f32 0.0, %v410
      %412 = vdwg.mxu0
      %v414 = vsel %vm271, %v204, 0
      %v417 = vsel %vm271, %v205, 0
      %v420 = vsel %vm271, %v206, 0
      %v423 = vsel %vm271, %v207, 0
      %v426 = vsel %vm271, %v208, 0
      %v429 = vsel %vm271, %v209, 0
      %v432 = vsel %vm271, %v210, 0
      %v435 = vsel %vm271, %v211, 0
      %v438 = vsel %vm271, %v212, 0
      %v441 = vsel %vm271, %v213, 0
      %v444 = vsel %vm271, %v214, 0
      %v447 = vsel %vm271, %v215, 0
      %v450 = vsel %vm271, %v216, 0
      %v453 = vsel %vm271, %v217, 0
      %v456 = vsel %vm271, %v218, 0
      %v459 = vsel %vm271, %v219, 0
      %v462 = vsel %vm320, %v220, 0
      %464 = vmatpush.bf16.msra.mxu0 0
      %465 = vmatpush.bf16.msra.mxu0 0
      %466 = vmatpush.bf16.msra.mxu0 0
      %467 = vmatpush.bf16.msra.mxu0 0
      %468 = vmatpush.bf16.msra.mxu0 0
      %469 = vmatpush.bf16.msra.mxu0 0
      %470 = vmatpush.bf16.msra.mxu0 0
      %471 = vmatpush.bf16.msra.mxu0 %v462
      %472 = vmatmul.bf16.gmra.mxu0 %v414
      %v473 = vpop.f32.mrf.mxu0
      %v474 = vadd.f32 %v334, %v473
      %v475 = vpop.f32.mrf.mxu0
      %v476 = vadd.f32 %v336, %v475
      %477 = vmatmul.bf16.gmra.mxu0 %v417
      %v478 = vpop.f32.mrf.mxu0
      %v479 = vadd.f32 %v339, %v478
      %v480 = vpop.f32.mrf.mxu0
      %v481 = vadd.f32 %v341, %v480
      %482 = vmatmul.bf16.gmra.mxu0 %v420
      %v483 = vpop.f32.mrf.mxu0
      %v484 = vadd.f32 %v344, %v483
      %v485 = vpop.f32.mrf.mxu0
      %v486 = vadd.f32 %v346, %v485
      %487 = vmatmul.bf16.gmra.mxu0 %v423
      %v488 = vpop.f32.mrf.mxu0
      %v489 = vadd.f32 %v349, %v488
      %v490 = vpop.f32.mrf.mxu0
      %v491 = vadd.f32 %v351, %v490
      %492 = vmatmul.bf16.gmra.mxu0 %v426
      %v493 = vpop.f32.mrf.mxu0
      %v494 = vadd.f32 %v354, %v493
      %v495 = vpop.f32.mrf.mxu0
      %v496 = vadd.f32 %v356, %v495
      %497 = vmatmul.bf16.gmra.mxu0 %v429
      %v498 = vpop.f32.mrf.mxu0
      %v499 = vadd.f32 %v359, %v498
      %v500 = vpop.f32.mrf.mxu0
      %v501 = vadd.f32 %v361, %v500
      %502 = vmatmul.bf16.gmra.mxu0 %v432
      %v503 = vpop.f32.mrf.mxu0
      %v504 = vadd.f32 %v364, %v503
      %v505 = vpop.f32.mrf.mxu0
      %v506 = vadd.f32 %v366, %v505
      %507 = vmatmul.bf16.gmra.mxu0 %v435
      %v508 = vpop.f32.mrf.mxu0
      %v509 = vadd.f32 %v369, %v508
      %v510 = vpop.f32.mrf.mxu0
      %v511 = vadd.f32 %v371, %v510
      %512 = vmatmul.bf16.gmra.mxu0 %v438
      %v513 = vpop.f32.mrf.mxu0
      %v514 = vadd.f32 %v374, %v513
      %v515 = vpop.f32.mrf.mxu0
      %v516 = vadd.f32 %v376, %v515
      %517 = vmatmul.bf16.gmra.mxu0 %v441
      %v518 = vpop.f32.mrf.mxu0
      %v519 = vadd.f32 %v379, %v518
      %v520 = vpop.f32.mrf.mxu0
      %v521 = vadd.f32 %v381, %v520
      %522 = vmatmul.bf16.gmra.mxu0 %v444
      %v523 = vpop.f32.mrf.mxu0
      %v524 = vadd.f32 %v384, %v523
      %v525 = vpop.f32.mrf.mxu0
      %v526 = vadd.f32 %v386, %v525
      %527 = vmatmul.bf16.gmra.mxu0 %v447
      %v528 = vpop.f32.mrf.mxu0
      %v529 = vadd.f32 %v389, %v528
      %v530 = vpop.f32.mrf.mxu0
      %v531 = vadd.f32 %v391, %v530
      %532 = vmatmul.bf16.gmra.mxu0 %v450
      %v533 = vpop.f32.mrf.mxu0
      %v534 = vadd.f32 %v394, %v533
      %v535 = vpop.f32.mrf.mxu0
      %v536 = vadd.f32 %v396, %v535
      %537 = vmatmul.bf16.gmra.mxu0 %v453
      %v538 = vpop.f32.mrf.mxu0
      %v539 = vadd.f32 %v399, %v538
      %v540 = vpop.f32.mrf.mxu0
      %v541 = vadd.f32 %v401, %v540
      %542 = vmatmul.bf16.gmra.mxu0 %v456
      %v543 = vpop.f32.mrf.mxu0
      %v544 = vadd.f32 %v404, %v543
      %v545 = vpop.f32.mrf.mxu0
      %v546 = vadd.f32 %v406, %v545
      %547 = vmatmul.bf16.gmra.mxu0 %v459
      %v548 = vpop.f32.mrf.mxu0
      %v549 = vadd.f32 %v409, %v548
      %v550 = vpop.f32.mrf.mxu0
      %v551 = vadd.f32 %v411, %v550
      %552 = vdwg.mxu0
      %v553 = vld [vmem:[%s165 + $0x2] sm:$0xff]
      %v554 = vld [vmem:[%s165 + $0xa] sm:$0xff]
      %v555 = vld [vmem:[%s165 + $0x1a] sm:$0xff]
      %v556 = vld [vmem:[%s165 + $0x22] sm:$0xff]
      %v557 = vld [vmem:[%s165 + $0x32] sm:$0xff]
      %v558 = vld [vmem:[%s165 + $0x3a] sm:$0xff]
      %v559 = vld [vmem:[%s165 + $0x4a] sm:$0xff]
      %v560 = vld [vmem:[%s165 + $0x52] sm:$0xff]
      %v561 = vld [vmem:[%s165 + $0x62] sm:$0xff]
      %v562 = vld [vmem:[%s165 + $0x6a] sm:$0xff]
      %v563 = vld [vmem:[%s165 + $0x7a] sm:$0xff]
      %v564 = vld [vmem:[%s165 + $0x82] sm:$0xff]
      %v565 = vld [vmem:[%s165 + $0x92] sm:$0xff]
      %v566 = vld [vmem:[%s165 + $0x9a] sm:$0xff]
      %v567 = vld [vmem:[%s165 + $0xaa] sm:$0xff]
      %v568 = vld [vmem:[%s165 + $0xb2] sm:$0xff]
      %v569 = vld [vmem:[%s165 + $0xc2] sm:$0xff]
      %v570 = vld [vmem:[%s165 + $0xca] sm:$0xff]
      %v571 = vld [vmem:[%s165 + $0xda] sm:$0xff]
      %v572 = vld [vmem:[%s165 + $0xe2] sm:$0xff]
      %v573 = vld [vmem:[%s165 + $0xf2] sm:$0xff]
      %v574 = vld [vmem:[%s165 + $0xfa] sm:$0xff]
      %v575 = vld [vmem:[%s165 + $0x10a] sm:$0xff]
      %v576 = vld [vmem:[%s165 + $0x112] sm:$0xff]
      %v577 = vld [vmem:[%s165 + $0x122] sm:$0xff]
      %v578 = vld [vmem:[%s165 + $0x12a] sm:$0xff]
      %v579 = vld [vmem:[%s165 + $0x13a] sm:$0xff]
      %v580 = vld [vmem:[%s165 + $0x142] sm:$0xff]
      %v581 = vld [vmem:[%s165 + $0x152] sm:$0xff]
      %v582 = vld [vmem:[%s165 + $0x15a] sm:$0xff]
      %v583 = vld [vmem:[%s165 + $0x16a] sm:$0xff]
      %v584 = vld [vmem:[%s165 + $0x172] sm:$0xff]
      %v585 = vpack.c.bf16 %v554, %v553
      %v586 = vpack.c.bf16 %v556, %v555
      %v587 = vpack.c.bf16 %v558, %v557
      %v588 = vpack.c.bf16 %v560, %v559
      %v589 = vpack.c.bf16 %v562, %v561
      %v590 = vpack.c.bf16 %v564, %v563
      %v591 = vpack.c.bf16 %v566, %v565
      %v592 = vpack.c.bf16 %v568, %v567
      %v593 = vpack.c.bf16 %v570, %v569
      %v594 = vpack.c.bf16 %v572, %v571
      %v595 = vpack.c.bf16 %v574, %v573
      %v596 = vpack.c.bf16 %v576, %v575
      %v597 = vpack.c.bf16 %v578, %v577
      %v598 = vpack.c.bf16 %v580, %v579
      %v599 = vpack.c.bf16 %v582, %v581
      %v600 = vpack.c.bf16 %v584, %v583
      %s601 = scalar_lea.vmem %s1, 8
      %v602 = vld [vmem:[%s601] sm:$0xf]
      %v604 = vsel %vm271, %v585, 0
      %v607 = vsel %vm271, %v586, 0
      %v610 = vsel %vm271, %v587, 0
      %v613 = vsel %vm271, %v588, 0
      %v616 = vsel %vm271, %v589, 0
      %v619 = vsel %vm271, %v590, 0
      %v622 = vsel %vm271, %v591, 0
      %v625 = vsel %vm271, %v592, 0
      %v628 = vsel %vm271, %v593, 0
      %v631 = vsel %vm271, %v594, 0
      %v634 = vsel %vm271, %v595, 0
      %v637 = vsel %vm271, %v596, 0
      %v640 = vsel %vm271, %v597, 0
      %v643 = vsel %vm271, %v598, 0
      %v646 = vsel %vm271, %v599, 0
      %v649 = vsel %vm271, %v600, 0
      %v652 = vsel %vm320, %v602, 0
      %654 = vmatpush.bf16.msra.mxu0 0
      %655 = vmatpush.bf16.msra.mxu0 0
      %656 = vmatpush.bf16.msra.mxu0 0
      %657 = vmatpush.bf16.msra.mxu0 0
      %658 = vmatpush.bf16.msra.mxu0 0
      %659 = vmatpush.bf16.msra.mxu0 0
      %660 = vmatpush.bf16.msra.mxu0 0
      %661 = vmatpush.bf16.msra.mxu0 %v652
      %662 = vmatmul.bf16.gmra.mxu0 %v604
      %v663 = vpop.f32.mrf.mxu0
      %v664 = vadd.f32 0.0, %v663
      %v665 = vpop.f32.mrf.mxu0
      %v666 = vadd.f32 0.0, %v665
      %667 = vmatmul.bf16.gmra.mxu0 %v607
      %v668 = vpop.f32.mrf.mxu0
      %v669 = vadd.f32 0.0, %v668
      %v670 = vpop.f32.mrf.mxu0
      %v671 = vadd.f32 0.0, %v670
      %672 = vmatmul.bf16.gmra.mxu0 %v610
      %v673 = vpop.f32.mrf.mxu0
      %v674 = vadd.f32 0.0, %v673
      %v675 = vpop.f32.mrf.mxu0
      %v676 = vadd.f32 0.0, %v675
      %677 = vmatmul.bf16.gmra.mxu0 %v613
      %v678 = vpop.f32.mrf.mxu0
      %v679 = vadd.f32 0.0, %v678
      %v680 = vpop.f32.mrf.mxu0
      %v681 = vadd.f32 0.0, %v680
      %682 = vmatmul.bf16.gmra.mxu0 %v616
      %v683 = vpop.f32.mrf.mxu0
      %v684 = vadd.f32 0.0, %v683
      %v685 = vpop.f32.mrf.mxu0
      %v686 = vadd.f32 0.0, %v685
      %687 = vmatmul.bf16.gmra.mxu0 %v619
      %v688 = vpop.f32.mrf.mxu0
      %v689 = vadd.f32 0.0, %v688
      %v690 = vpop.f32.mrf.mxu0
      %v691 = vadd.f32 0.0, %v690
      %692 = vmatmul.bf16.gmra.mxu0 %v622
      %v693 = vpop.f32.mrf.mxu0
      %v694 = vadd.f32 0.0, %v693
      %v695 = vpop.f32.mrf.mxu0
      %v696 = vadd.f32 0.0, %v695
      %697 = vmatmul.bf16.gmra.mxu0 %v625
      %v698 = vpop.f32.mrf.mxu0
      %v699 = vadd.f32 0.0, %v698
      %v700 = vpop.f32.mrf.mxu0
      %v701 = vadd.f32 0.0, %v700
      %702 = vmatmul.bf16.gmra.mxu0 %v628
      %v703 = vpop.f32.mrf.mxu0
      %v704 = vadd.f32 0.0, %v703
      %v705 = vpop.f32.mrf.mxu0
      %v706 = vadd.f32 0.0, %v705
      %707 = vmatmul.bf16.gmra.mxu0 %v631
      %v708 = vpop.f32.mrf.mxu0
      %v709 = vadd.f32 0.0, %v708
      %v710 = vpop.f32.mrf.mxu0
      %v711 = vadd.f32 0.0, %v710
      %712 = vmatmul.bf16.gmra.mxu0 %v634
      %v713 = vpop.f32.mrf.mxu0
      %v714 = vadd.f32 0.0, %v713
      %v715 = vpop.f32.mrf.mxu0
      %v716 = vadd.f32 0.0, %v715
      %717 = vmatmul.bf16.gmra.mxu0 %v637
      %v718 = vpop.f32.mrf.mxu0
      %v719 = vadd.f32 0.0, %v718
      %v720 = vpop.f32.mrf.mxu0
      %v721 = vadd.f32 0.0, %v720
      %722 = vmatmul.bf16.gmra.mxu0 %v640
      %v723 = vpop.f32.mrf.mxu0
      %v724 = vadd.f32 0.0, %v723
      %v725 = vpop.f32.mrf.mxu0
      %v726 = vadd.f32 0.0, %v725
      %727 = vmatmul.bf16.gmra.mxu0 %v643
      %v728 = vpop.f32.mrf.mxu0
      %v729 = vadd.f32 0.0, %v728
      %v730 = vpop.f32.mrf.mxu0
      %v731 = vadd.f32 0.0, %v730
      %732 = vmatmul.bf16.gmra.mxu0 %v646
      %v733 = vpop.f32.mrf.mxu0
      %v734 = vadd.f32 0.0, %v733
      %v735 = vpop.f32.mrf.mxu0
      %v736 = vadd.f32 0.0, %v735
      %737 = vmatmul.bf16.gmra.mxu0 %v649
      %v738 = vpop.f32.mrf.mxu0
      %v739 = vadd.f32 0.0, %v738
      %v740 = vpop.f32.mrf.mxu0
      %v741 = vadd.f32 0.0, %v740
      %742 = vdwg.mxu0
      %v743 = vadd.f32 %v474, %v664
      %v744 = vadd.f32 %v476, %v666
      %v745 = vadd.f32 %v479, %v669
      %v746 = vadd.f32 %v481, %v671
      %v747 = vadd.f32 %v484, %v674
      %v748 = vadd.f32 %v486, %v676
      %v749 = vadd.f32 %v489, %v679
      %v750 = vadd.f32 %v491, %v681
      %v751 = vadd.f32 %v494, %v684
      %v752 = vadd.f32 %v496, %v686
      %v753 = vadd.f32 %v499, %v689
      %v754 = vadd.f32 %v501, %v691
      %v755 = vadd.f32 %v504, %v694
      %v756 = vadd.f32 %v506, %v696
      %v757 = vadd.f32 %v509, %v699
      %v758 = vadd.f32 %v511, %v701
      %v759 = vadd.f32 %v514, %v704
      %v760 = vadd.f32 %v516, %v706
      %v761 = vadd.f32 %v519, %v709
      %v762 = vadd.f32 %v521, %v711
      %v763 = vadd.f32 %v524, %v714
      %v764 = vadd.f32 %v526, %v716
      %v765 = vadd.f32 %v529, %v719
      %v766 = vadd.f32 %v531, %v721
      %v767 = vadd.f32 %v534, %v724
      %v768 = vadd.f32 %v536, %v726
      %v769 = vadd.f32 %v539, %v729
      %v770 = vadd.f32 %v541, %v731
      %v771 = vadd.f32 %v544, %v734
      %v772 = vadd.f32 %v546, %v736
      %v773 = vadd.f32 %v549, %v739
      %v774 = vadd.f32 %v551, %v741
      %s775 = scalar_lea.vmem %s165, 24
      %v776 = vld [vmem:[%s775] sm:$0xff]
      %v777 = vld [vmem:[%s775 + $0x8] sm:$0xff]
      %v778 = vld [vmem:[%s775 + $0x18] sm:$0xff]
      %v779 = vld [vmem:[%s775 + $0x20] sm:$0xff]
      %v780 = vld [vmem:[%s775 + $0x30] sm:$0xff]
      %v781 = vld [vmem:[%s775 + $0x38] sm:$0xff]
      %v782 = vld [vmem:[%s775 + $0x48] sm:$0xff]
      %v783 = vld [vmem:[%s775 + $0x50] sm:$0xff]
      %v784 = vld [vmem:[%s775 + $0x60] sm:$0xff]
      %v785 = vld [vmem:[%s775 + $0x68] sm:$0xff]
      %v786 = vld [vmem:[%s775 + $0x78] sm:$0xff]
      %v787 = vld [vmem:[%s775 + $0x80] sm:$0xff]
      %v788 = vld [vmem:[%s775 + $0x90] sm:$0xff]
      %v789 = vld [vmem:[%s775 + $0x98] sm:$0xff]
      %v790 = vld [vmem:[%s775 + $0xa8] sm:$0xff]
      %v791 = vld [vmem:[%s775 + $0xb0] sm:$0xff]
      %v792 = vld [vmem:[%s775 + $0xc0] sm:$0xff]
      %v793 = vld [vmem:[%s775 + $0xc8] sm:$0xff]
      %v794 = vld [vmem:[%s775 + $0xd8] sm:$0xff]
      %v795 = vld [vmem:[%s775 + $0xe0] sm:$0xff]
      %v796 = vld [vmem:[%s775 + $0xf0] sm:$0xff]
      %v797 = vld [vmem:[%s775 + $0xf8] sm:$0xff]
      %v798 = vld [vmem:[%s775 + $0x108] sm:$0xff]
      %v799 = vld [vmem:[%s775 + $0x110] sm:$0xff]
      %v800 = vld [vmem:[%s775 + $0x120] sm:$0xff]
      %v801 = vld [vmem:[%s775 + $0x128] sm:$0xff]
      %v802 = vld [vmem:[%s775 + $0x138] sm:$0xff]
      %v803 = vld [vmem:[%s775 + $0x140] sm:$0xff]
      %v804 = vld [vmem:[%s775 + $0x150] sm:$0xff]
      %v805 = vld [vmem:[%s775 + $0x158] sm:$0xff]
      %v806 = vld [vmem:[%s775 + $0x168] sm:$0xff]
      %v807 = vld [vmem:[%s775 + $0x170] sm:$0xff]
      %v808 = vpack.c.bf16 %v777, %v776
      %v809 = vpack.c.bf16 %v779, %v778
      %v810 = vpack.c.bf16 %v781, %v780
      %v811 = vpack.c.bf16 %v783, %v782
      %v812 = vpack.c.bf16 %v785, %v784
      %v813 = vpack.c.bf16 %v787, %v786
      %v814 = vpack.c.bf16 %v789, %v788
      %v815 = vpack.c.bf16 %v791, %v790
      %v816 = vpack.c.bf16 %v793, %v792
      %v817 = vpack.c.bf16 %v795, %v794
      %v818 = vpack.c.bf16 %v797, %v796
      %v819 = vpack.c.bf16 %v799, %v798
      %v820 = vpack.c.bf16 %v801, %v800
      %v821 = vpack.c.bf16 %v803, %v802
      %v822 = vpack.c.bf16 %v805, %v804
      %v823 = vpack.c.bf16 %v807, %v806
      %s824 = scalar_lea.vmem %s1, 12
      %v825 = vld [vmem:[%s824] sm:$0xf]
      %v827 = vsel %vm271, %v808, 0
      %v830 = vsel %vm271, %v809, 0
      %v833 = vsel %vm271, %v810, 0
      %v836 = vsel %vm271, %v811, 0
      %v839 = vsel %vm271, %v812, 0
      %v842 = vsel %vm271, %v813, 0
      %v845 = vsel %vm271, %v814, 0
      %v848 = vsel %vm271, %v815, 0
      %v851 = vsel %vm271, %v816, 0
      %v854 = vsel %vm271, %v817, 0
      %v857 = vsel %vm271, %v818, 0
      %v860 = vsel %vm271, %v819, 0
      %v863 = vsel %vm271, %v820, 0
      %v866 = vsel %vm271, %v821, 0
      %v869 = vsel %vm271, %v822, 0
      %v872 = vsel %vm271, %v823, 0
      %v875 = vsel %vm320, %v825, 0
      %877 = vmatpush.bf16.msra.mxu0 0
      %878 = vmatpush.bf16.msra.mxu0 0
      %879 = vmatpush.bf16.msra.mxu0 0
      %880 = vmatpush.bf16.msra.mxu0 0
      %881 = vmatpush.bf16.msra.mxu0 0
      %882 = vmatpush.bf16.msra.mxu0 0
      %883 = vmatpush.bf16.msra.mxu0 0
      %884 = vmatpush.bf16.msra.mxu0 %v875
      %885 = vmatmul.bf16.gmra.mxu0 %v827
      %v886 = vpop.f32.mrf.mxu0
      %v887 = vadd.f32 0.0, %v886
      %v888 = vpop.f32.mrf.mxu0
      %v889 = vadd.f32 0.0, %v888
      %890 = vmatmul.bf16.gmra.mxu0 %v830
      %v891 = vpop.f32.mrf.mxu0
      %v892 = vadd.f32 0.0, %v891
      %v893 = vpop.f32.mrf.mxu0
      %v894 = vadd.f32 0.0, %v893
      %895 = vmatmul.bf16.gmra.mxu0 %v833
      %v896 = vpop.f32.mrf.mxu0
      %v897 = vadd.f32 0.0, %v896
      %v898 = vpop.f32.mrf.mxu0
      %v899 = vadd.f32 0.0, %v898
      %900 = vmatmul.bf16.gmra.mxu0 %v836
      %v901 = vpop.f32.mrf.mxu0
      %v902 = vadd.f32 0.0, %v901
      %v903 = vpop.f32.mrf.mxu0
      %v904 = vadd.f32 0.0, %v903
      %905 = vmatmul.bf16.gmra.mxu0 %v839
      %v906 = vpop.f32.mrf.mxu0
      %v907 = vadd.f32 0.0, %v906
      %v908 = vpop.f32.mrf.mxu0
      %v909 = vadd.f32 0.0, %v908
      %910 = vmatmul.bf16.gmra.mxu0 %v842
      %v911 = vpop.f32.mrf.mxu0
      %v912 = vadd.f32 0.0, %v911
      %v913 = vpop.f32.mrf.mxu0
      %v914 = vadd.f32 0.0, %v913
      %915 = vmatmul.bf16.gmra.mxu0 %v845
      %v916 = vpop.f32.mrf.mxu0
      %v917 = vadd.f32 0.0, %v916
      %v918 = vpop.f32.mrf.mxu0
      %v919 = vadd.f32 0.0, %v918
      %920 = vmatmul.bf16.gmra.mxu0 %v848
      %v921 = vpop.f32.mrf.mxu0
      %v922 = vadd.f32 0.0, %v921
      %v923 = vpop.f32.mrf.mxu0
      %v924 = vadd.f32 0.0, %v923
      %925 = vmatmul.bf16.gmra.mxu0 %v851
      %v926 = vpop.f32.mrf.mxu0
      %v927 = vadd.f32 0.0, %v926
      %v928 = vpop.f32.mrf.mxu0
      %v929 = vadd.f32 0.0, %v928
      %930 = vmatmul.bf16.gmra.mxu0 %v854
      %v931 = vpop.f32.mrf.mxu0
      %v932 = vadd.f32 0.0, %v931
      %v933 = vpop.f32.mrf.mxu0
      %v934 = vadd.f32 0.0, %v933
      %935 = vmatmul.bf16.gmra.mxu0 %v857
      %v936 = vpop.f32.mrf.mxu0
      %v937 = vadd.f32 0.0, %v936
      %v938 = vpop.f32.mrf.mxu0
      %v939 = vadd.f32 0.0, %v938
      %940 = vmatmul.bf16.gmra.mxu0 %v860
      %v941 = vpop.f32.mrf.mxu0
      %v942 = vadd.f32 0.0, %v941
      %v943 = vpop.f32.mrf.mxu0
      %v944 = vadd.f32 0.0, %v943
      %945 = vmatmul.bf16.gmra.mxu0 %v863
      %v946 = vpop.f32.mrf.mxu0
      %v947 = vadd.f32 0.0, %v946
      %v948 = vpop.f32.mrf.mxu0
      %v949 = vadd.f32 0.0, %v948
      %950 = vmatmul.bf16.gmra.mxu0 %v866
      %v951 = vpop.f32.mrf.mxu0
      %v952 = vadd.f32 0.0, %v951
      %v953 = vpop.f32.mrf.mxu0
      %v954 = vadd.f32 0.0, %v953
      %955 = vmatmul.bf16.gmra.mxu0 %v869
      %v956 = vpop.f32.mrf.mxu0
      %v957 = vadd.f32 0.0, %v956
      %v958 = vpop.f32.mrf.mxu0
      %v959 = vadd.f32 0.0, %v958
      %960 = vmatmul.bf16.gmra.mxu0 %v872
      %v961 = vpop.f32.mrf.mxu0
      %v962 = vadd.f32 0.0, %v961
      %v963 = vpop.f32.mrf.mxu0
      %v964 = vadd.f32 0.0, %v963
      %965 = vdwg.mxu0
      %v966 = vadd.f32 %v743, %v887
      %v967 = vadd.f32 %v744, %v889
      %v968 = vadd.f32 %v745, %v892
      %v969 = vadd.f32 %v746, %v894
      %v970 = vadd.f32 %v747, %v897
      %v971 = vadd.f32 %v748, %v899
      %v972 = vadd.f32 %v749, %v902
      %v973 = vadd.f32 %v750, %v904
      %v974 = vadd.f32 %v751, %v907
      %v975 = vadd.f32 %v752, %v909
      %v976 = vadd.f32 %v753, %v912
      %v977 = vadd.f32 %v754, %v914
      %v978 = vadd.f32 %v755, %v917
      %v979 = vadd.f32 %v756, %v919
      %v980 = vadd.f32 %v757, %v922
      %v981 = vadd.f32 %v758, %v924
      %v982 = vadd.f32 %v759, %v927
      %v983 = vadd.f32 %v760, %v929
      %v984 = vadd.f32 %v761, %v932
      %v985 = vadd.f32 %v762, %v934
      %v986 = vadd.f32 %v763, %v937
      %v987 = vadd.f32 %v764, %v939
      %v988 = vadd.f32 %v765, %v942
      %v989 = vadd.f32 %v766, %v944
      %v990 = vadd.f32 %v767, %v947
      %v991 = vadd.f32 %v768, %v949
      %v992 = vadd.f32 %v769, %v952
      %v993 = vadd.f32 %v770, %v954
      %v994 = vadd.f32 %v771, %v957
      %v995 = vadd.f32 %v772, %v959
      %v996 = vadd.f32 %v773, %v962
      %v997 = vadd.f32 %v774, %v964
      %v998 = vld [vmem:[%s775 + $0x1] sm:$0xff]
      %v999 = vld [vmem:[%s775 + $0x9] sm:$0xff]
      %v1000 = vld [vmem:[%s775 + $0x19] sm:$0xff]
      %v1001 = vld [vmem:[%s775 + $0x21] sm:$0xff]
      %v1002 = vld [vmem:[%s775 + $0x31] sm:$0xff]
      %v1003 = vld [vmem:[%s775 + $0x39] sm:$0xff]
      %v1004 = vld [vmem:[%s775 + $0x49] sm:$0xff]
      %v1005 = vld [vmem:[%s775 + $0x51] sm:$0xff]
      %v1006 = vld [vmem:[%s775 + $0x61] sm:$0xff]
      %v1007 = vld [vmem:[%s775 + $0x69] sm:$0xff]
      %v1008 = vld [vmem:[%s775 + $0x79] sm:$0xff]
      %v1009 = vld [vmem:[%s775 + $0x81] sm:$0xff]
      %v1010 = vld [vmem:[%s775 + $0x91] sm:$0xff]
      %v1011 = vld [vmem:[%s775 + $0x99] sm:$0xff]
      %v1012 = vld [vmem:[%s775 + $0xa9] sm:$0xff]
      %v1013 = vld [vmem:[%s775 + $0xb1] sm:$0xff]
      %v1014 = vld [vmem:[%s775 + $0xc1] sm:$0xff]
      %v1015 = vld [vmem:[%s775 + $0xc9] sm:$0xff]
      %v1016 = vld [vmem:[%s775 + $0xd9] sm:$0xff]
      %v1017 = vld [vmem:[%s775 + $0xe1] sm:$0xff]
      %v1018 = vld [vmem:[%s775 + $0xf1] sm:$0xff]
      %v1019 = vld [vmem:[%s775 + $0xf9] sm:$0xff]
      %v1020 = vld [vmem:[%s775 + $0x109] sm:$0xff]
      %v1021 = vld [vmem:[%s775 + $0x111] sm:$0xff]
      %v1022 = vld [vmem:[%s775 + $0x121] sm:$0xff]
      %v1023 = vld [vmem:[%s775 + $0x129] sm:$0xff]
      %v1024 = vld [vmem:[%s775 + $0x139] sm:$0xff]
      %v1025 = vld [vmem:[%s775 + $0x141] sm:$0xff]
      %v1026 = vld [vmem:[%s775 + $0x151] sm:$0xff]
      %v1027 = vld [vmem:[%s775 + $0x159] sm:$0xff]
      %v1028 = vld [vmem:[%s775 + $0x169] sm:$0xff]
      %v1029 = vld [vmem:[%s775 + $0x171] sm:$0xff]
      %v1030 = vpack.c.bf16 %v999, %v998
      %v1031 = vpack.c.bf16 %v1001, %v1000
      %v1032 = vpack.c.bf16 %v1003, %v1002
      %v1033 = vpack.c.bf16 %v1005, %v1004
      %v1034 = vpack.c.bf16 %v1007, %v1006
      %v1035 = vpack.c.bf16 %v1009, %v1008
      %v1036 = vpack.c.bf16 %v1011, %v1010
      %v1037 = vpack.c.bf16 %v1013, %v1012
      %v1038 = vpack.c.bf16 %v1015, %v1014
      %v1039 = vpack.c.bf16 %v1017, %v1016
      %v1040 = vpack.c.bf16 %v1019, %v1018
      %v1041 = vpack.c.bf16 %v1021, %v1020
      %v1042 = vpack.c.bf16 %v1023, %v1022
      %v1043 = vpack.c.bf16 %v1025, %v1024
      %v1044 = vpack.c.bf16 %v1027, %v1026
      %v1045 = vpack.c.bf16 %v1029, %v1028
      %s1046 = scalar_lea.vmem %s1, 16
      %v1047 = vld [vmem:[%s1046] sm:$0xf]
      %v1049 = vsel %vm271, %v1030, 0
      %v1052 = vsel %vm271, %v1031, 0
      %v1055 = vsel %vm271, %v1032, 0
      %v1058 = vsel %vm271, %v1033, 0
      %v1061 = vsel %vm271, %v1034, 0
      %v1064 = vsel %vm271, %v1035, 0
      %v1067 = vsel %vm271, %v1036, 0
      %v1070 = vsel %vm271, %v1037, 0
      %v1073 = vsel %vm271, %v1038, 0
      %v1076 = vsel %vm271, %v1039, 0
      %v1079 = vsel %vm271, %v1040, 0
      %v1082 = vsel %vm271, %v1041, 0
      %v1085 = vsel %vm271, %v1042, 0
      %v1088 = vsel %vm271, %v1043, 0
      %v1091 = vsel %vm271, %v1044, 0
      %v1094 = vsel %vm271, %v1045, 0
      %v1097 = vsel %vm320, %v1047, 0
      %1099 = vmatpush.bf16.msra.mxu0 0
      %1100 = vmatpush.bf16.msra.mxu0 0
      %1101 = vmatpush.bf16.msra.mxu0 0
      %1102 = vmatpush.bf16.msra.mxu0 0
      %1103 = vmatpush.bf16.msra.mxu0 0
      %1104 = vmatpush.bf16.msra.mxu0 0
      %1105 = vmatpush.bf16.msra.mxu0 0
      %1106 = vmatpush.bf16.msra.mxu0 %v1097
      %1107 = vmatmul.bf16.gmra.mxu0 %v1049
      %v1108 = vpop.f32.mrf.mxu0
      %v1109 = vadd.f32 0.0, %v1108
      %v1110 = vpop.f32.mrf.mxu0
      %v1111 = vadd.f32 0.0, %v1110
      %1112 = vmatmul.bf16.gmra.mxu0 %v1052
      %v1113 = vpop.f32.mrf.mxu0
      %v1114 = vadd.f32 0.0, %v1113
      %v1115 = vpop.f32.mrf.mxu0
      %v1116 = vadd.f32 0.0, %v1115
      %1117 = vmatmul.bf16.gmra.mxu0 %v1055
      %v1118 = vpop.f32.mrf.mxu0
      %v1119 = vadd.f32 0.0, %v1118
      %v1120 = vpop.f32.mrf.mxu0
      %v1121 = vadd.f32 0.0, %v1120
      %1122 = vmatmul.bf16.gmra.mxu0 %v1058
      %v1123 = vpop.f32.mrf.mxu0
      %v1124 = vadd.f32 0.0, %v1123
      %v1125 = vpop.f32.mrf.mxu0
      %v1126 = vadd.f32 0.0, %v1125
      %1127 = vmatmul.bf16.gmra.mxu0 %v1061
      %v1128 = vpop.f32.mrf.mxu0
      %v1129 = vadd.f32 0.0, %v1128
      %v1130 = vpop.f32.mrf.mxu0
      %v1131 = vadd.f32 0.0, %v1130
      %1132 = vmatmul.bf16.gmra.mxu0 %v1064
      %v1133 = vpop.f32.mrf.mxu0
      %v1134 = vadd.f32 0.0, %v1133
      %v1135 = vpop.f32.mrf.mxu0
      %v1136 = vadd.f32 0.0, %v1135
      %1137 = vmatmul.bf16.gmra.mxu0 %v1067
      %v1138 = vpop.f32.mrf.mxu0
      %v1139 = vadd.f32 0.0, %v1138
      %v1140 = vpop.f32.mrf.mxu0
      %v1141 = vadd.f32 0.0, %v1140
      %1142 = vmatmul.bf16.gmra.mxu0 %v1070
      %v1143 = vpop.f32.mrf.mxu0
      %v1144 = vadd.f32 0.0, %v1143
      %v1145 = vpop.f32.mrf.mxu0
      %v1146 = vadd.f32 0.0, %v1145
      %1147 = vmatmul.bf16.gmra.mxu0 %v1073
      %v1148 = vpop.f32.mrf.mxu0
      %v1149 = vadd.f32 0.0, %v1148
      %v1150 = vpop.f32.mrf.mxu0
      %v1151 = vadd.f32 0.0, %v1150
      %1152 = vmatmul.bf16.gmra.mxu0 %v1076
      %v1153 = vpop.f32.mrf.mxu0
      %v1154 = vadd.f32 0.0, %v1153
      %v1155 = vpop.f32.mrf.mxu0
      %v1156 = vadd.f32 0.0, %v1155
      %1157 = vmatmul.bf16.gmra.mxu0 %v1079
      %v1158 = vpop.f32.mrf.mxu0
      %v1159 = vadd.f32 0.0, %v1158
      %v1160 = vpop.f32.mrf.mxu0
      %v1161 = vadd.f32 0.0, %v1160
      %1162 = vmatmul.bf16.gmra.mxu0 %v1082
      %v1163 = vpop.f32.mrf.mxu0
      %v1164 = vadd.f32 0.0, %v1163
      %v1165 = vpop.f32.mrf.mxu0
      %v1166 = vadd.f32 0.0, %v1165
      %1167 = vmatmul.bf16.gmra.mxu0 %v1085
      %v1168 = vpop.f32.mrf.mxu0
      %v1169 = vadd.f32 0.0, %v1168
      %v1170 = vpop.f32.mrf.mxu0
      %v1171 = vadd.f32 0.0, %v1170
      %1172 = vmatmul.bf16.gmra.mxu0 %v1088
      %v1173 = vpop.f32.mrf.mxu0
      %v1174 = vadd.f32 0.0, %v1173
      %v1175 = vpop.f32.mrf.mxu0
      %v1176 = vadd.f32 0.0, %v1175
      %1177 = vmatmul.bf16.gmra.mxu0 %v1091
      %v1178 = vpop.f32.mrf.mxu0
      %v1179 = vadd.f32 0.0, %v1178
      %v1180 = vpop.f32.mrf.mxu0
      %v1181 = vadd.f32 0.0, %v1180
      %1182 = vmatmul.bf16.gmra.mxu0 %v1094
      %v1183 = vpop.f32.mrf.mxu0
      %v1184 = vadd.f32 0.0, %v1183
      %v1185 = vpop.f32.mrf.mxu0
      %v1186 = vadd.f32 0.0, %v1185
      %1187 = vdwg.mxu0
      %v1188 = vadd.f32 %v966, %v1109
      %v1189 = vadd.f32 %v967, %v1111
      %v1190 = vadd.f32 %v968, %v1114
      %v1191 = vadd.f32 %v969, %v1116
      %v1192 = vadd.f32 %v970, %v1119
      %v1193 = vadd.f32 %v971, %v1121
      %v1194 = vadd.f32 %v972, %v1124
      %v1195 = vadd.f32 %v973, %v1126
      %v1196 = vadd.f32 %v974, %v1129
      %v1197 = vadd.f32 %v975, %v1131
      %v1198 = vadd.f32 %v976, %v1134
      %v1199 = vadd.f32 %v977, %v1136
      %v1200 = vadd.f32 %v978, %v1139
      %v1201 = vadd.f32 %v979, %v1141
      %v1202 = vadd.f32 %v980, %v1144
      %v1203 = vadd.f32 %v981, %v1146
      %v1204 = vadd.f32 %v982, %v1149
      %v1205 = vadd.f32 %v983, %v1151
      %v1206 = vadd.f32 %v984, %v1154
      %v1207 = vadd.f32 %v985, %v1156
      %v1208 = vadd.f32 %v986, %v1159
      %v1209 = vadd.f32 %v987, %v1161
      %v1210 = vadd.f32 %v988, %v1164
      %v1211 = vadd.f32 %v989, %v1166
      %v1212 = vadd.f32 %v990, %v1169
      %v1213 = vadd.f32 %v991, %v1171
      %v1214 = vadd.f32 %v992, %v1174
      %v1215 = vadd.f32 %v993, %v1176
      %v1216 = vadd.f32 %v994, %v1179
      %v1217 = vadd.f32 %v995, %v1181
      %v1218 = vadd.f32 %v996, %v1184
      %v1219 = vadd.f32 %v997, %v1186
      %v1220 = vld [vmem:[%s775 + $0x2] sm:$0xff]
      %v1221 = vld [vmem:[%s775 + $0xa] sm:$0xff]
      %v1222 = vld [vmem:[%s775 + $0x1a] sm:$0xff]
      %v1223 = vld [vmem:[%s775 + $0x22] sm:$0xff]
      %v1224 = vld [vmem:[%s775 + $0x32] sm:$0xff]
      %v1225 = vld [vmem:[%s775 + $0x3a] sm:$0xff]
      %v1226 = vld [vmem:[%s775 + $0x4a] sm:$0xff]
      %v1227 = vld [vmem:[%s775 + $0x52] sm:$0xff]
      %v1228 = vld [vmem:[%s775 + $0x62] sm:$0xff]
      %v1229 = vld [vmem:[%s775 + $0x6a] sm:$0xff]
      %v1230 = vld [vmem:[%s775 + $0x7a] sm:$0xff]
      %v1231 = vld [vmem:[%s775 + $0x82] sm:$0xff]
      %v1232 = vld [vmem:[%s775 + $0x92] sm:$0xff]
      %v1233 = vld [vmem:[%s775 + $0x9a] sm:$0xff]
      %v1234 = vld [vmem:[%s775 + $0xaa] sm:$0xff]
      %v1235 = vld [vmem:[%s775 + $0xb2] sm:$0xff]
      %v1236 = vld [vmem:[%s775 + $0xc2] sm:$0xff]
      %v1237 = vld [vmem:[%s775 + $0xca] sm:$0xff]
      %v1238 = vld [vmem:[%s775 + $0xda] sm:$0xff]
      %v1239 = vld [vmem:[%s775 + $0xe2] sm:$0xff]
      %v1240 = vld [vmem:[%s775 + $0xf2] sm:$0xff]
      %v1241 = vld [vmem:[%s775 + $0xfa] sm:$0xff]
      %v1242 = vld [vmem:[%s775 + $0x10a] sm:$0xff]
      %v1243 = vld [vmem:[%s775 + $0x112] sm:$0xff]
      %v1244 = vld [vmem:[%s775 + $0x122] sm:$0xff]
      %v1245 = vld [vmem:[%s775 + $0x12a] sm:$0xff]
      %v1246 = vld [vmem:[%s775 + $0x13a] sm:$0xff]
      %v1247 = vld [vmem:[%s775 + $0x142] sm:$0xff]
      %v1248 = vld [vmem:[%s775 + $0x152] sm:$0xff]
      %v1249 = vld [vmem:[%s775 + $0x15a] sm:$0xff]
      %v1250 = vld [vmem:[%s775 + $0x16a] sm:$0xff]
      %v1251 = vld [vmem:[%s775 + $0x172] sm:$0xff]
      %v1252 = vpack.c.bf16 %v1221, %v1220
      %v1253 = vpack.c.bf16 %v1223, %v1222
      %v1254 = vpack.c.bf16 %v1225, %v1224
      %v1255 = vpack.c.bf16 %v1227, %v1226
      %v1256 = vpack.c.bf16 %v1229, %v1228
      %v1257 = vpack.c.bf16 %v1231, %v1230
      %v1258 = vpack.c.bf16 %v1233, %v1232
      %v1259 = vpack.c.bf16 %v1235, %v1234
      %v1260 = vpack.c.bf16 %v1237, %v1236
      %v1261 = vpack.c.bf16 %v1239, %v1238
      %v1262 = vpack.c.bf16 %v1241, %v1240
      %v1263 = vpack.c.bf16 %v1243, %v1242
      %v1264 = vpack.c.bf16 %v1245, %v1244
      %v1265 = vpack.c.bf16 %v1247, %v1246
      %v1266 = vpack.c.bf16 %v1249, %v1248
      %v1267 = vpack.c.bf16 %v1251, %v1250
      %s1268 = scalar_lea.vmem %s1, 20
      %v1269 = vld [vmem:[%s1268] sm:$0xf]
      %v1271 = vsel %vm271, %v1252, 0
      %v1274 = vsel %vm271, %v1253, 0
      %v1277 = vsel %vm271, %v1254, 0
      %v1280 = vsel %vm271, %v1255, 0
      %v1283 = vsel %vm271, %v1256, 0
      %v1286 = vsel %vm271, %v1257, 0
      %v1289 = vsel %vm271, %v1258, 0
      %v1292 = vsel %vm271, %v1259, 0
      %v1295 = vsel %vm271, %v1260, 0
      %v1298 = vsel %vm271, %v1261, 0
      %v1301 = vsel %vm271, %v1262, 0
      %v1304 = vsel %vm271, %v1263, 0
      %v1307 = vsel %vm271, %v1264, 0
      %v1310 = vsel %vm271, %v1265, 0
      %v1313 = vsel %vm271, %v1266, 0
      %v1316 = vsel %vm271, %v1267, 0
      %v1319 = vsel %vm320, %v1269, 0
      %1321 = vmatpush.bf16.msra.mxu0 0
      %1322 = vmatpush.bf16.msra.mxu0 0
      %1323 = vmatpush.bf16.msra.mxu0 0
      %1324 = vmatpush.bf16.msra.mxu0 0
      %1325 = vmatpush.bf16.msra.mxu0 0
      %1326 = vmatpush.bf16.msra.mxu0 0
      %1327 = vmatpush.bf16.msra.mxu0 0
      %1328 = vmatpush.bf16.msra.mxu0 %v1319
      %1329 = vmatmul.bf16.gmra.mxu0 %v1271
      %v1330 = vpop.f32.mrf.mxu0
      %v1331 = vadd.f32 0.0, %v1330
      %v1332 = vpop.f32.mrf.mxu0
      %v1333 = vadd.f32 0.0, %v1332
      %1334 = vmatmul.bf16.gmra.mxu0 %v1274
      %v1335 = vpop.f32.mrf.mxu0
      %v1336 = vadd.f32 0.0, %v1335
      %v1337 = vpop.f32.mrf.mxu0
      %v1338 = vadd.f32 0.0, %v1337
      %1339 = vmatmul.bf16.gmra.mxu0 %v1277
      %v1340 = vpop.f32.mrf.mxu0
      %v1341 = vadd.f32 0.0, %v1340
      %v1342 = vpop.f32.mrf.mxu0
      %v1343 = vadd.f32 0.0, %v1342
      %1344 = vmatmul.bf16.gmra.mxu0 %v1280
      %v1345 = vpop.f32.mrf.mxu0
      %v1346 = vadd.f32 0.0, %v1345
      %v1347 = vpop.f32.mrf.mxu0
      %v1348 = vadd.f32 0.0, %v1347
      %1349 = vmatmul.bf16.gmra.mxu0 %v1283
      %v1350 = vpop.f32.mrf.mxu0
      %v1351 = vadd.f32 0.0, %v1350
      %v1352 = vpop.f32.mrf.mxu0
      %v1353 = vadd.f32 0.0, %v1352
      %1354 = vmatmul.bf16.gmra.mxu0 %v1286
      %v1355 = vpop.f32.mrf.mxu0
      %v1356 = vadd.f32 0.0, %v1355
      %v1357 = vpop.f32.mrf.mxu0
      %v1358 = vadd.f32 0.0, %v1357
      %1359 = vmatmul.bf16.gmra.mxu0 %v1289
      %v1360 = vpop.f32.mrf.mxu0
      %v1361 = vadd.f32 0.0, %v1360
      %v1362 = vpop.f32.mrf.mxu0
      %v1363 = vadd.f32 0.0, %v1362
      %1364 = vmatmul.bf16.gmra.mxu0 %v1292
      %v1365 = vpop.f32.mrf.mxu0
      %v1366 = vadd.f32 0.0, %v1365
      %v1367 = vpop.f32.mrf.mxu0
      %v1368 = vadd.f32 0.0, %v1367
      %1369 = vmatmul.bf16.gmra.mxu0 %v1295
      %v1370 = vpop.f32.mrf.mxu0
      %v1371 = vadd.f32 0.0, %v1370
      %v1372 = vpop.f32.mrf.mxu0
      %v1373 = vadd.f32 0.0, %v1372
      %1374 = vmatmul.bf16.gmra.mxu0 %v1298
      %v1375 = vpop.f32.mrf.mxu0
      %v1376 = vadd.f32 0.0, %v1375
      %v1377 = vpop.f32.mrf.mxu0
      %v1378 = vadd.f32 0.0, %v1377
      %1379 = vmatmul.bf16.gmra.mxu0 %v1301
      %v1380 = vpop.f32.mrf.mxu0
      %v1381 = vadd.f32 0.0, %v1380
      %v1382 = vpop.f32.mrf.mxu0
      %v1383 = vadd.f32 0.0, %v1382
      %1384 = vmatmul.bf16.gmra.mxu0 %v1304
      %v1385 = vpop.f32.mrf.mxu0
      %v1386 = vadd.f32 0.0, %v1385
      %v1387 = vpop.f32.mrf.mxu0
      %v1388 = vadd.f32 0.0, %v1387
      %1389 = vmatmul.bf16.gmra.mxu0 %v1307
      %v1390 = vpop.f32.mrf.mxu0
      %v1391 = vadd.f32 0.0, %v1390
      %v1392 = vpop.f32.mrf.mxu0
      %v1393 = vadd.f32 0.0, %v1392
      %1394 = vmatmul.bf16.gmra.mxu0 %v1310
      %v1395 = vpop.f32.mrf.mxu0
      %v1396 = vadd.f32 0.0, %v1395
      %v1397 = vpop.f32.mrf.mxu0
      %v1398 = vadd.f32 0.0, %v1397
      %1399 = vmatmul.bf16.gmra.mxu0 %v1313
      %v1400 = vpop.f32.mrf.mxu0
      %v1401 = vadd.f32 0.0, %v1400
      %v1402 = vpop.f32.mrf.mxu0
      %v1403 = vadd.f32 0.0, %v1402
      %1404 = vmatmul.bf16.gmra.mxu0 %v1316
      %v1405 = vpop.f32.mrf.mxu0
      %v1406 = vadd.f32 0.0, %v1405
      %v1407 = vpop.f32.mrf.mxu0
      %v1408 = vadd.f32 0.0, %v1407
      %1409 = vdwg.mxu0
      %v1410 = vadd.f32 %v1188, %v1331
      %v1411 = vadd.f32 %v1189, %v1333
      %v1412 = vadd.f32 %v1190, %v1336
      %v1413 = vadd.f32 %v1191, %v1338
      %v1414 = vadd.f32 %v1192, %v1341
      %v1415 = vadd.f32 %v1193, %v1343
      %v1416 = vadd.f32 %v1194, %v1346
      %v1417 = vadd.f32 %v1195, %v1348
      %v1418 = vadd.f32 %v1196, %v1351
      %v1419 = vadd.f32 %v1197, %v1353
      %v1420 = vadd.f32 %v1198, %v1356
      %v1421 = vadd.f32 %v1199, %v1358
      %v1422 = vadd.f32 %v1200, %v1361
      %v1423 = vadd.f32 %v1201, %v1363
      %v1424 = vadd.f32 %v1202, %v1366
      %v1425 = vadd.f32 %v1203, %v1368
      %v1426 = vadd.f32 %v1204, %v1371
      %v1427 = vadd.f32 %v1205, %v1373
      %v1428 = vadd.f32 %v1206, %v1376
      %v1429 = vadd.f32 %v1207, %v1378
      %v1430 = vadd.f32 %v1208, %v1381
      %v1431 = vadd.f32 %v1209, %v1383
      %v1432 = vadd.f32 %v1210, %v1386
      %v1433 = vadd.f32 %v1211, %v1388
      %v1434 = vadd.f32 %v1212, %v1391
      %v1435 = vadd.f32 %v1213, %v1393
      %v1436 = vadd.f32 %v1214, %v1396
      %v1437 = vadd.f32 %v1215, %v1398
      %v1438 = vadd.f32 %v1216, %v1401
      %v1439 = vadd.f32 %v1217, %v1403
      %v1440 = vadd.f32 %v1218, %v1406
      %v1441 = vadd.f32 %v1219, %v1408
      %s1442 = scalar_lea.vmem %s165, 48
      %v1443 = vld [vmem:[%s1442] sm:$0xff]
      %v1444 = vld [vmem:[%s1442 + $0x8] sm:$0xff]
      %v1445 = vld [vmem:[%s1442 + $0x18] sm:$0xff]
      %v1446 = vld [vmem:[%s1442 + $0x20] sm:$0xff]
      %v1447 = vld [vmem:[%s1442 + $0x30] sm:$0xff]
      %v1448 = vld [vmem:[%s1442 + $0x38] sm:$0xff]
      %v1449 = vld [vmem:[%s1442 + $0x48] sm:$0xff]
      %v1450 = vld [vmem:[%s1442 + $0x50] sm:$0xff]
      %v1451 = vld [vmem:[%s1442 + $0x60] sm:$0xff]
      %v1452 = vld [vmem:[%s1442 + $0x68] sm:$0xff]
      %v1453 = vld [vmem:[%s1442 + $0x78] sm:$0xff]
      %v1454 = vld [vmem:[%s1442 + $0x80] sm:$0xff]
      %v1455 = vld [vmem:[%s1442 + $0x90] sm:$0xff]
      %v1456 = vld [vmem:[%s1442 + $0x98] sm:$0xff]
      %v1457 = vld [vmem:[%s1442 + $0xa8] sm:$0xff]
      %v1458 = vld [vmem:[%s1442 + $0xb0] sm:$0xff]
      %v1459 = vld [vmem:[%s1442 + $0xc0] sm:$0xff]
      %v1460 = vld [vmem:[%s1442 + $0xc8] sm:$0xff]
      %v1461 = vld [vmem:[%s1442 + $0xd8] sm:$0xff]
      %v1462 = vld [vmem:[%s1442 + $0xe0] sm:$0xff]
      %v1463 = vld [vmem:[%s1442 + $0xf0] sm:$0xff]
      %v1464 = vld [vmem:[%s1442 + $0xf8] sm:$0xff]
      %v1465 = vld [vmem:[%s1442 + $0x108] sm:$0xff]
      %v1466 = vld [vmem:[%s1442 + $0x110] sm:$0xff]
      %v1467 = vld [vmem:[%s1442 + $0x120] sm:$0xff]
      %v1468 = vld [vmem:[%s1442 + $0x128] sm:$0xff]
      %v1469 = vld [vmem:[%s1442 + $0x138] sm:$0xff]
      %v1470 = vld [vmem:[%s1442 + $0x140] sm:$0xff]
      %v1471 = vld [vmem:[%s1442 + $0x150] sm:$0xff]
      %v1472 = vld [vmem:[%s1442 + $0x158] sm:$0xff]
      %v1473 = vld [vmem:[%s1442 + $0x168] sm:$0xff]
      %v1474 = vld [vmem:[%s1442 + $0x170] sm:$0xff]
      %v1475 = vpack.c.bf16 %v1444, %v1443
      %v1476 = vpack.c.bf16 %v1446, %v1445
      %v1477 = vpack.c.bf16 %v1448, %v1447
      %v1478 = vpack.c.bf16 %v1450, %v1449
      %v1479 = vpack.c.bf16 %v1452, %v1451
      %v1480 = vpack.c.bf16 %v1454, %v1453
      %v1481 = vpack.c.bf16 %v1456, %v1455
      %v1482 = vpack.c.bf16 %v1458, %v1457
      %v1483 = vpack.c.bf16 %v1460, %v1459
      %v1484 = vpack.c.bf16 %v1462, %v1461
      %v1485 = vpack.c.bf16 %v1464, %v1463
      %v1486 = vpack.c.bf16 %v1466, %v1465
      %v1487 = vpack.c.bf16 %v1468, %v1467
      %v1488 = vpack.c.bf16 %v1470, %v1469
      %v1489 = vpack.c.bf16 %v1472, %v1471
      %v1490 = vpack.c.bf16 %v1474, %v1473
      %s1491 = scalar_lea.vmem %s1, 24
      %v1492 = vld [vmem:[%s1491] sm:$0xf]
      %v1494 = vsel %vm271, %v1475, 0
      %v1497 = vsel %vm271, %v1476, 0
      %v1500 = vsel %vm271, %v1477, 0
      %v1503 = vsel %vm271, %v1478, 0
      %v1506 = vsel %vm271, %v1479, 0
      %v1509 = vsel %vm271, %v1480, 0
      %v1512 = vsel %vm271, %v1481, 0
      %v1515 = vsel %vm271, %v1482, 0
      %v1518 = vsel %vm271, %v1483, 0
      %v1521 = vsel %vm271, %v1484, 0
      %v1524 = vsel %vm271, %v1485, 0
      %v1527 = vsel %vm271, %v1486, 0
      %v1530 = vsel %vm271, %v1487, 0
      %v1533 = vsel %vm271, %v1488, 0
      %v1536 = vsel %vm271, %v1489, 0
      %v1539 = vsel %vm271, %v1490, 0
      %v1542 = vsel %vm320, %v1492, 0
      %1544 = vmatpush.bf16.msra.mxu0 0
      %1545 = vmatpush.bf16.msra.mxu0 0
      %1546 = vmatpush.bf16.msra.mxu0 0
      %1547 = vmatpush.bf16.msra.mxu0 0
      %1548 = vmatpush.bf16.msra.mxu0 0
      %1549 = vmatpush.bf16.msra.mxu0 0
      %1550 = vmatpush.bf16.msra.mxu0 0
      %1551 = vmatpush.bf16.msra.mxu0 %v1542
      %1552 = vmatmul.bf16.gmra.mxu0 %v1494
      %v1553 = vpop.f32.mrf.mxu0
      %v1554 = vadd.f32 0.0, %v1553
      %v1555 = vpop.f32.mrf.mxu0
      %v1556 = vadd.f32 0.0, %v1555
      %1557 = vmatmul.bf16.gmra.mxu0 %v1497
      %v1558 = vpop.f32.mrf.mxu0
      %v1559 = vadd.f32 0.0, %v1558
      %v1560 = vpop.f32.mrf.mxu0
      %v1561 = vadd.f32 0.0, %v1560
      %1562 = vmatmul.bf16.gmra.mxu0 %v1500
      %v1563 = vpop.f32.mrf.mxu0
      %v1564 = vadd.f32 0.0, %v1563
      %v1565 = vpop.f32.mrf.mxu0
      %v1566 = vadd.f32 0.0, %v1565
      %1567 = vmatmul.bf16.gmra.mxu0 %v1503
      %v1568 = vpop.f32.mrf.mxu0
      %v1569 = vadd.f32 0.0, %v1568
      %v1570 = vpop.f32.mrf.mxu0
      %v1571 = vadd.f32 0.0, %v1570
      %1572 = vmatmul.bf16.gmra.mxu0 %v1506
      %v1573 = vpop.f32.mrf.mxu0
      %v1574 = vadd.f32 0.0, %v1573
      %v1575 = vpop.f32.mrf.mxu0
      %v1576 = vadd.f32 0.0, %v1575
      %1577 = vmatmul.bf16.gmra.mxu0 %v1509
      %v1578 = vpop.f32.mrf.mxu0
      %v1579 = vadd.f32 0.0, %v1578
      %v1580 = vpop.f32.mrf.mxu0
      %v1581 = vadd.f32 0.0, %v1580
      %1582 = vmatmul.bf16.gmra.mxu0 %v1512
      %v1583 = vpop.f32.mrf.mxu0
      %v1584 = vadd.f32 0.0, %v1583
      %v1585 = vpop.f32.mrf.mxu0
      %v1586 = vadd.f32 0.0, %v1585
      %1587 = vmatmul.bf16.gmra.mxu0 %v1515
      %v1588 = vpop.f32.mrf.mxu0
      %v1589 = vadd.f32 0.0, %v1588
      %v1590 = vpop.f32.mrf.mxu0
      %v1591 = vadd.f32 0.0, %v1590
      %1592 = vmatmul.bf16.gmra.mxu0 %v1518
      %v1593 = vpop.f32.mrf.mxu0
      %v1594 = vadd.f32 0.0, %v1593
      %v1595 = vpop.f32.mrf.mxu0
      %v1596 = vadd.f32 0.0, %v1595
      %1597 = vmatmul.bf16.gmra.mxu0 %v1521
      %v1598 = vpop.f32.mrf.mxu0
      %v1599 = vadd.f32 0.0, %v1598
      %v1600 = vpop.f32.mrf.mxu0
      %v1601 = vadd.f32 0.0, %v1600
      %1602 = vmatmul.bf16.gmra.mxu0 %v1524
      %v1603 = vpop.f32.mrf.mxu0
      %v1604 = vadd.f32 0.0, %v1603
      %v1605 = vpop.f32.mrf.mxu0
      %v1606 = vadd.f32 0.0, %v1605
      %1607 = vmatmul.bf16.gmra.mxu0 %v1527
      %v1608 = vpop.f32.mrf.mxu0
      %v1609 = vadd.f32 0.0, %v1608
      %v1610 = vpop.f32.mrf.mxu0
      %v1611 = vadd.f32 0.0, %v1610
      %1612 = vmatmul.bf16.gmra.mxu0 %v1530
      %v1613 = vpop.f32.mrf.mxu0
      %v1614 = vadd.f32 0.0, %v1613
      %v1615 = vpop.f32.mrf.mxu0
      %v1616 = vadd.f32 0.0, %v1615
      %1617 = vmatmul.bf16.gmra.mxu0 %v1533
      %v1618 = vpop.f32.mrf.mxu0
      %v1619 = vadd.f32 0.0, %v1618
      %v1620 = vpop.f32.mrf.mxu0
      %v1621 = vadd.f32 0.0, %v1620
      %1622 = vmatmul.bf16.gmra.mxu0 %v1536
      %v1623 = vpop.f32.mrf.mxu0
      %v1624 = vadd.f32 0.0, %v1623
      %v1625 = vpop.f32.mrf.mxu0
      %v1626 = vadd.f32 0.0, %v1625
      %1627 = vmatmul.bf16.gmra.mxu0 %v1539
      %v1628 = vpop.f32.mrf.mxu0
      %v1629 = vadd.f32 0.0, %v1628
      %v1630 = vpop.f32.mrf.mxu0
      %v1631 = vadd.f32 0.0, %v1630
      %1632 = vdwg.mxu0
      %v1633 = vadd.f32 %v1410, %v1554
      %v1634 = vadd.f32 %v1411, %v1556
      %v1635 = vadd.f32 %v1412, %v1559
      %v1636 = vadd.f32 %v1413, %v1561
      %v1637 = vadd.f32 %v1414, %v1564
      %v1638 = vadd.f32 %v1415, %v1566
      %v1639 = vadd.f32 %v1416, %v1569
      %v1640 = vadd.f32 %v1417, %v1571
      %v1641 = vadd.f32 %v1418, %v1574
      %v1642 = vadd.f32 %v1419, %v1576
      %v1643 = vadd.f32 %v1420, %v1579
      %v1644 = vadd.f32 %v1421, %v1581
      %v1645 = vadd.f32 %v1422, %v1584
      %v1646 = vadd.f32 %v1423, %v1586
      %v1647 = vadd.f32 %v1424, %v1589
      %v1648 = vadd.f32 %v1425, %v1591
      %v1649 = vadd.f32 %v1426, %v1594
      %v1650 = vadd.f32 %v1427, %v1596
      %v1651 = vadd.f32 %v1428, %v1599
      %v1652 = vadd.f32 %v1429, %v1601
      %v1653 = vadd.f32 %v1430, %v1604
      %v1654 = vadd.f32 %v1431, %v1606
      %v1655 = vadd.f32 %v1432, %v1609
      %v1656 = vadd.f32 %v1433, %v1611
      %v1657 = vadd.f32 %v1434, %v1614
      %v1658 = vadd.f32 %v1435, %v1616
      %v1659 = vadd.f32 %v1436, %v1619
      %v1660 = vadd.f32 %v1437, %v1621
      %v1661 = vadd.f32 %v1438, %v1624
      %v1662 = vadd.f32 %v1439, %v1626
      %v1663 = vadd.f32 %v1440, %v1629
      %v1664 = vadd.f32 %v1441, %v1631
      %v1665 = vld [vmem:[%s1442 + $0x1] sm:$0xff]
      %v1666 = vld [vmem:[%s1442 + $0x9] sm:$0xff]
      %v1667 = vld [vmem:[%s1442 + $0x19] sm:$0xff]
      %v1668 = vld [vmem:[%s1442 + $0x21] sm:$0xff]
      %v1669 = vld [vmem:[%s1442 + $0x31] sm:$0xff]
      %v1670 = vld [vmem:[%s1442 + $0x39] sm:$0xff]
      %v1671 = vld [vmem:[%s1442 + $0x49] sm:$0xff]
      %v1672 = vld [vmem:[%s1442 + $0x51] sm:$0xff]
      %v1673 = vld [vmem:[%s1442 + $0x61] sm:$0xff]
      %v1674 = vld [vmem:[%s1442 + $0x69] sm:$0xff]
      %v1675 = vld [vmem:[%s1442 + $0x79] sm:$0xff]
      %v1676 = vld [vmem:[%s1442 + $0x81] sm:$0xff]
      %v1677 = vld [vmem:[%s1442 + $0x91] sm:$0xff]
      %v1678 = vld [vmem:[%s1442 + $0x99] sm:$0xff]
      %v1679 = vld [vmem:[%s1442 + $0xa9] sm:$0xff]
      %v1680 = vld [vmem:[%s1442 + $0xb1] sm:$0xff]
      %v1681 = vld [vmem:[%s1442 + $0xc1] sm:$0xff]
      %v1682 = vld [vmem:[%s1442 + $0xc9] sm:$0xff]
      %v1683 = vld [vmem:[%s1442 + $0xd9] sm:$0xff]
      %v1684 = vld [vmem:[%s1442 + $0xe1] sm:$0xff]
      %v1685 = vld [vmem:[%s1442 + $0xf1] sm:$0xff]
      %v1686 = vld [vmem:[%s1442 + $0xf9] sm:$0xff]
      %v1687 = vld [vmem:[%s1442 + $0x109] sm:$0xff]
      %v1688 = vld [vmem:[%s1442 + $0x111] sm:$0xff]
      %v1689 = vld [vmem:[%s1442 + $0x121] sm:$0xff]
      %v1690 = vld [vmem:[%s1442 + $0x129] sm:$0xff]
      %v1691 = vld [vmem:[%s1442 + $0x139] sm:$0xff]
      %v1692 = vld [vmem:[%s1442 + $0x141] sm:$0xff]
      %v1693 = vld [vmem:[%s1442 + $0x151] sm:$0xff]
      %v1694 = vld [vmem:[%s1442 + $0x159] sm:$0xff]
      %v1695 = vld [vmem:[%s1442 + $0x169] sm:$0xff]
      %v1696 = vld [vmem:[%s1442 + $0x171] sm:$0xff]
      %v1697 = vpack.c.bf16 %v1666, %v1665
      %v1698 = vpack.c.bf16 %v1668, %v1667
      %v1699 = vpack.c.bf16 %v1670, %v1669
      %v1700 = vpack.c.bf16 %v1672, %v1671
      %v1701 = vpack.c.bf16 %v1674, %v1673
      %v1702 = vpack.c.bf16 %v1676, %v1675
      %v1703 = vpack.c.bf16 %v1678, %v1677
      %v1704 = vpack.c.bf16 %v1680, %v1679
      %v1705 = vpack.c.bf16 %v1682, %v1681
      %v1706 = vpack.c.bf16 %v1684, %v1683
      %v1707 = vpack.c.bf16 %v1686, %v1685
      %v1708 = vpack.c.bf16 %v1688, %v1687
      %v1709 = vpack.c.bf16 %v1690, %v1689
      %v1710 = vpack.c.bf16 %v1692, %v1691
      %v1711 = vpack.c.bf16 %v1694, %v1693
      %v1712 = vpack.c.bf16 %v1696, %v1695
      %s1713 = scalar_lea.vmem %s1, 28
      %v1714 = vld [vmem:[%s1713] sm:$0xf]
      %v1716 = vsel %vm271, %v1697, 0
      %v1719 = vsel %vm271, %v1698, 0
      %v1722 = vsel %vm271, %v1699, 0
      %v1725 = vsel %vm271, %v1700, 0
      %v1728 = vsel %vm271, %v1701, 0
      %v1731 = vsel %vm271, %v1702, 0
      %v1734 = vsel %vm271, %v1703, 0
      %v1737 = vsel %vm271, %v1704, 0
      %v1740 = vsel %vm271, %v1705, 0
      %v1743 = vsel %vm271, %v1706, 0
      %v1746 = vsel %vm271, %v1707, 0
      %v1749 = vsel %vm271, %v1708, 0
      %v1752 = vsel %vm271, %v1709, 0
      %v1755 = vsel %vm271, %v1710, 0
      %v1758 = vsel %vm271, %v1711, 0
      %v1761 = vsel %vm271, %v1712, 0
      %v1764 = vsel %vm320, %v1714, 0
      %1766 = vmatpush.bf16.msra.mxu0 0
      %1767 = vmatpush.bf16.msra.mxu0 0
      %1768 = vmatpush.bf16.msra.mxu0 0
      %1769 = vmatpush.bf16.msra.mxu0 0
      %1770 = vmatpush.bf16.msra.mxu0 0
      %1771 = vmatpush.bf16.msra.mxu0 0
      %1772 = vmatpush.bf16.msra.mxu0 0
      %1773 = vmatpush.bf16.msra.mxu0 %v1764
      %1774 = vmatmul.bf16.gmra.mxu0 %v1716
      %v1775 = vpop.f32.mrf.mxu0
      %v1776 = vadd.f32 0.0, %v1775
      %v1777 = vpop.f32.mrf.mxu0
      %v1778 = vadd.f32 0.0, %v1777
      %1779 = vmatmul.bf16.gmra.mxu0 %v1719
      %v1780 = vpop.f32.mrf.mxu0
      %v1781 = vadd.f32 0.0, %v1780
      %v1782 = vpop.f32.mrf.mxu0
      %v1783 = vadd.f32 0.0, %v1782
      %1784 = vmatmul.bf16.gmra.mxu0 %v1722
      %v1785 = vpop.f32.mrf.mxu0
      %v1786 = vadd.f32 0.0, %v1785
      %v1787 = vpop.f32.mrf.mxu0
      %v1788 = vadd.f32 0.0, %v1787
      %1789 = vmatmul.bf16.gmra.mxu0 %v1725
      %v1790 = vpop.f32.mrf.mxu0
      %v1791 = vadd.f32 0.0, %v1790
      %v1792 = vpop.f32.mrf.mxu0
      %v1793 = vadd.f32 0.0, %v1792
      %1794 = vmatmul.bf16.gmra.mxu0 %v1728
      %v1795 = vpop.f32.mrf.mxu0
      %v1796 = vadd.f32 0.0, %v1795
      %v1797 = vpop.f32.mrf.mxu0
      %v1798 = vadd.f32 0.0, %v1797
      %1799 = vmatmul.bf16.gmra.mxu0 %v1731
      %v1800 = vpop.f32.mrf.mxu0
      %v1801 = vadd.f32 0.0, %v1800
      %v1802 = vpop.f32.mrf.mxu0
      %v1803 = vadd.f32 0.0, %v1802
      %1804 = vmatmul.bf16.gmra.mxu0 %v1734
      %v1805 = vpop.f32.mrf.mxu0
      %v1806 = vadd.f32 0.0, %v1805
      %v1807 = vpop.f32.mrf.mxu0
      %v1808 = vadd.f32 0.0, %v1807
      %1809 = vmatmul.bf16.gmra.mxu0 %v1737
      %v1810 = vpop.f32.mrf.mxu0
      %v1811 = vadd.f32 0.0, %v1810
      %v1812 = vpop.f32.mrf.mxu0
      %v1813 = vadd.f32 0.0, %v1812
      %1814 = vmatmul.bf16.gmra.mxu0 %v1740
      %v1815 = vpop.f32.mrf.mxu0
      %v1816 = vadd.f32 0.0, %v1815
      %v1817 = vpop.f32.mrf.mxu0
      %v1818 = vadd.f32 0.0, %v1817
      %1819 = vmatmul.bf16.gmra.mxu0 %v1743
      %v1820 = vpop.f32.mrf.mxu0
      %v1821 = vadd.f32 0.0, %v1820
      %v1822 = vpop.f32.mrf.mxu0
      %v1823 = vadd.f32 0.0, %v1822
      %1824 = vmatmul.bf16.gmra.mxu0 %v1746
      %v1825 = vpop.f32.mrf.mxu0
      %v1826 = vadd.f32 0.0, %v1825
      %v1827 = vpop.f32.mrf.mxu0
      %v1828 = vadd.f32 0.0, %v1827
      %1829 = vmatmul.bf16.gmra.mxu0 %v1749
      %v1830 = vpop.f32.mrf.mxu0
      %v1831 = vadd.f32 0.0, %v1830
      %v1832 = vpop.f32.mrf.mxu0
      %v1833 = vadd.f32 0.0, %v1832
      %1834 = vmatmul.bf16.gmra.mxu0 %v1752
      %v1835 = vpop.f32.mrf.mxu0
      %v1836 = vadd.f32 0.0, %v1835
      %v1837 = vpop.f32.mrf.mxu0
      %v1838 = vadd.f32 0.0, %v1837
      %1839 = vmatmul.bf16.gmra.mxu0 %v1755
      %v1840 = vpop.f32.mrf.mxu0
      %v1841 = vadd.f32 0.0, %v1840
      %v1842 = vpop.f32.mrf.mxu0
      %v1843 = vadd.f32 0.0, %v1842
      %1844 = vmatmul.bf16.gmra.mxu0 %v1758
      %v1845 = vpop.f32.mrf.mxu0
      %v1846 = vadd.f32 0.0, %v1845
      %v1847 = vpop.f32.mrf.mxu0
      %v1848 = vadd.f32 0.0, %v1847
      %1849 = vmatmul.bf16.gmra.mxu0 %v1761
      %v1850 = vpop.f32.mrf.mxu0
      %v1851 = vadd.f32 0.0, %v1850
      %v1852 = vpop.f32.mrf.mxu0
      %v1853 = vadd.f32 0.0, %v1852
      %1854 = vdwg.mxu0
      %v1855 = vadd.f32 %v1633, %v1776
      %v1856 = vadd.f32 %v1634, %v1778
      %v1857 = vadd.f32 %v1635, %v1781
      %v1858 = vadd.f32 %v1636, %v1783
      %v1859 = vadd.f32 %v1637, %v1786
      %v1860 = vadd.f32 %v1638, %v1788
      %v1861 = vadd.f32 %v1639, %v1791
      %v1862 = vadd.f32 %v1640, %v1793
      %v1863 = vadd.f32 %v1641, %v1796
      %v1864 = vadd.f32 %v1642, %v1798
      %v1865 = vadd.f32 %v1643, %v1801
      %v1866 = vadd.f32 %v1644, %v1803
      %v1867 = vadd.f32 %v1645, %v1806
      %v1868 = vadd.f32 %v1646, %v1808
      %v1869 = vadd.f32 %v1647, %v1811
      %v1870 = vadd.f32 %v1648, %v1813
      %v1871 = vadd.f32 %v1649, %v1816
      %v1872 = vadd.f32 %v1650, %v1818
      %v1873 = vadd.f32 %v1651, %v1821
      %v1874 = vadd.f32 %v1652, %v1823
      %v1875 = vadd.f32 %v1653, %v1826
      %v1876 = vadd.f32 %v1654, %v1828
      %v1877 = vadd.f32 %v1655, %v1831
      %v1878 = vadd.f32 %v1656, %v1833
      %v1879 = vadd.f32 %v1657, %v1836
      %v1880 = vadd.f32 %v1658, %v1838
      %v1881 = vadd.f32 %v1659, %v1841
      %v1882 = vadd.f32 %v1660, %v1843
      %v1883 = vadd.f32 %v1661, %v1846
      %v1884 = vadd.f32 %v1662, %v1848
      %v1885 = vadd.f32 %v1663, %v1851
      %v1886 = vadd.f32 %v1664, %v1853
      %v1887 = vld [vmem:[%s1442 + $0x2] sm:$0xff]
      %v1888 = vld [vmem:[%s1442 + $0xa] sm:$0xff]
      %v1889 = vld [vmem:[%s1442 + $0x1a] sm:$0xff]
      %v1890 = vld [vmem:[%s1442 + $0x22] sm:$0xff]
      %v1891 = vld [vmem:[%s1442 + $0x32] sm:$0xff]
      %v1892 = vld [vmem:[%s1442 + $0x3a] sm:$0xff]
      %v1893 = vld [vmem:[%s1442 + $0x4a] sm:$0xff]
      %v1894 = vld [vmem:[%s1442 + $0x52] sm:$0xff]
      %v1895 = vld [vmem:[%s1442 + $0x62] sm:$0xff]
      %v1896 = vld [vmem:[%s1442 + $0x6a] sm:$0xff]
      %v1897 = vld [vmem:[%s1442 + $0x7a] sm:$0xff]
      %v1898 = vld [vmem:[%s1442 + $0x82] sm:$0xff]
      %v1899 = vld [vmem:[%s1442 + $0x92] sm:$0xff]
      %v1900 = vld [vmem:[%s1442 + $0x9a] sm:$0xff]
      %v1901 = vld [vmem:[%s1442 + $0xaa] sm:$0xff]
      %v1902 = vld [vmem:[%s1442 + $0xb2] sm:$0xff]
      %v1903 = vld [vmem:[%s1442 + $0xc2] sm:$0xff]
      %v1904 = vld [vmem:[%s1442 + $0xca] sm:$0xff]
      %v1905 = vld [vmem:[%s1442 + $0xda] sm:$0xff]
      %v1906 = vld [vmem:[%s1442 + $0xe2] sm:$0xff]
      %v1907 = vld [vmem:[%s1442 + $0xf2] sm:$0xff]
      %v1908 = vld [vmem:[%s1442 + $0xfa] sm:$0xff]
      %v1909 = vld [vmem:[%s1442 + $0x10a] sm:$0xff]
      %v1910 = vld [vmem:[%s1442 + $0x112] sm:$0xff]
      %v1911 = vld [vmem:[%s1442 + $0x122] sm:$0xff]
      %v1912 = vld [vmem:[%s1442 + $0x12a] sm:$0xff]
      %v1913 = vld [vmem:[%s1442 + $0x13a] sm:$0xff]
      %v1914 = vld [vmem:[%s1442 + $0x142] sm:$0xff]
      %v1915 = vld [vmem:[%s1442 + $0x152] sm:$0xff]
      %v1916 = vld [vmem:[%s1442 + $0x15a] sm:$0xff]
      %v1917 = vld [vmem:[%s1442 + $0x16a] sm:$0xff]
      %v1918 = vld [vmem:[%s1442 + $0x172] sm:$0xff]
      %v1919 = vpack.c.bf16 %v1888, %v1887
      %v1920 = vpack.c.bf16 %v1890, %v1889
      %v1921 = vpack.c.bf16 %v1892, %v1891
      %v1922 = vpack.c.bf16 %v1894, %v1893
      %v1923 = vpack.c.bf16 %v1896, %v1895
      %v1924 = vpack.c.bf16 %v1898, %v1897
      %v1925 = vpack.c.bf16 %v1900, %v1899
      %v1926 = vpack.c.bf16 %v1902, %v1901
      %v1927 = vpack.c.bf16 %v1904, %v1903
      %v1928 = vpack.c.bf16 %v1906, %v1905
      %v1929 = vpack.c.bf16 %v1908, %v1907
      %v1930 = vpack.c.bf16 %v1910, %v1909
      %v1931 = vpack.c.bf16 %v1912, %v1911
      %v1932 = vpack.c.bf16 %v1914, %v1913
      %v1933 = vpack.c.bf16 %v1916, %v1915
      %v1934 = vpack.c.bf16 %v1918, %v1917
      %s1935 = scalar_lea.vmem %s1, 32
      %v1936 = vld [vmem:[%s1935] sm:$0xf]
      %v1938 = vsel %vm271, %v1919, 0
      %v1941 = vsel %vm271, %v1920, 0
      %v1944 = vsel %vm271, %v1921, 0
      %v1947 = vsel %vm271, %v1922, 0
      %v1950 = vsel %vm271, %v1923, 0
      %v1953 = vsel %vm271, %v1924, 0
      %v1956 = vsel %vm271, %v1925, 0
      %v1959 = vsel %vm271, %v1926, 0
      %v1962 = vsel %vm271, %v1927, 0
      %v1965 = vsel %vm271, %v1928, 0
      %v1968 = vsel %vm271, %v1929, 0
      %v1971 = vsel %vm271, %v1930, 0
      %v1974 = vsel %vm271, %v1931, 0
      %v1977 = vsel %vm271, %v1932, 0
      %v1980 = vsel %vm271, %v1933, 0
      %v1983 = vsel %vm271, %v1934, 0
      %v1986 = vsel %vm320, %v1936, 0
      %1988 = vmatpush.bf16.msra.mxu0 0
      %1989 = vmatpush.bf16.msra.mxu0 0
      %1990 = vmatpush.bf16.msra.mxu0 0
      %1991 = vmatpush.bf16.msra.mxu0 0
      %1992 = vmatpush.bf16.msra.mxu0 0
      %1993 = vmatpush.bf16.msra.mxu0 0
      %1994 = vmatpush.bf16.msra.mxu0 0
      %1995 = vmatpush.bf16.msra.mxu0 %v1986
      %1996 = vmatmul.bf16.gmra.mxu0 %v1938
      %v1997 = vpop.f32.mrf.mxu0
      %v1998 = vadd.f32 0.0, %v1997
      %v1999 = vpop.f32.mrf.mxu0
      %v2000 = vadd.f32 0.0, %v1999
      %2001 = vmatmul.bf16.gmra.mxu0 %v1941
      %v2002 = vpop.f32.mrf.mxu0
      %v2003 = vadd.f32 0.0, %v2002
      %v2004 = vpop.f32.mrf.mxu0
      %v2005 = vadd.f32 0.0, %v2004
      %2006 = vmatmul.bf16.gmra.mxu0 %v1944
      %v2007 = vpop.f32.mrf.mxu0
      %v2008 = vadd.f32 0.0, %v2007
      %v2009 = vpop.f32.mrf.mxu0
      %v2010 = vadd.f32 0.0, %v2009
      %2011 = vmatmul.bf16.gmra.mxu0 %v1947
      %v2012 = vpop.f32.mrf.mxu0
      %v2013 = vadd.f32 0.0, %v2012
      %v2014 = vpop.f32.mrf.mxu0
      %v2015 = vadd.f32 0.0, %v2014
      %2016 = vmatmul.bf16.gmra.mxu0 %v1950
      %v2017 = vpop.f32.mrf.mxu0
      %v2018 = vadd.f32 0.0, %v2017
      %v2019 = vpop.f32.mrf.mxu0
      %v2020 = vadd.f32 0.0, %v2019
      %2021 = vmatmul.bf16.gmra.mxu0 %v1953
      %v2022 = vpop.f32.mrf.mxu0
      %v2023 = vadd.f32 0.0, %v2022
      %v2024 = vpop.f32.mrf.mxu0
      %v2025 = vadd.f32 0.0, %v2024
      %2026 = vmatmul.bf16.gmra.mxu0 %v1956
      %v2027 = vpop.f32.mrf.mxu0
      %v2028 = vadd.f32 0.0, %v2027
      %v2029 = vpop.f32.mrf.mxu0
      %v2030 = vadd.f32 0.0, %v2029
      %2031 = vmatmul.bf16.gmra.mxu0 %v1959
      %v2032 = vpop.f32.mrf.mxu0
      %v2033 = vadd.f32 0.0, %v2032
      %v2034 = vpop.f32.mrf.mxu0
      %v2035 = vadd.f32 0.0, %v2034
      %2036 = vmatmul.bf16.gmra.mxu0 %v1962
      %v2037 = vpop.f32.mrf.mxu0
      %v2038 = vadd.f32 0.0, %v2037
      %v2039 = vpop.f32.mrf.mxu0
      %v2040 = vadd.f32 0.0, %v2039
      %2041 = vmatmul.bf16.gmra.mxu0 %v1965
      %v2042 = vpop.f32.mrf.mxu0
      %v2043 = vadd.f32 0.0, %v2042
      %v2044 = vpop.f32.mrf.mxu0
      %v2045 = vadd.f32 0.0, %v2044
      %2046 = vmatmul.bf16.gmra.mxu0 %v1968
      %v2047 = vpop.f32.mrf.mxu0
      %v2048 = vadd.f32 0.0, %v2047
      %v2049 = vpop.f32.mrf.mxu0
      %v2050 = vadd.f32 0.0, %v2049
      %2051 = vmatmul.bf16.gmra.mxu0 %v1971
      %v2052 = vpop.f32.mrf.mxu0
      %v2053 = vadd.f32 0.0, %v2052
      %v2054 = vpop.f32.mrf.mxu0
      %v2055 = vadd.f32 0.0, %v2054
      %2056 = vmatmul.bf16.gmra.mxu0 %v1974
      %v2057 = vpop.f32.mrf.mxu0
      %v2058 = vadd.f32 0.0, %v2057
      %v2059 = vpop.f32.mrf.mxu0
      %v2060 = vadd.f32 0.0, %v2059
      %2061 = vmatmul.bf16.gmra.mxu0 %v1977
      %v2062 = vpop.f32.mrf.mxu0
      %v2063 = vadd.f32 0.0, %v2062
      %v2064 = vpop.f32.mrf.mxu0
      %v2065 = vadd.f32 0.0, %v2064
      %2066 = vmatmul.bf16.gmra.mxu0 %v1980
      %v2067 = vpop.f32.mrf.mxu0
      %v2068 = vadd.f32 0.0, %v2067
      %v2069 = vpop.f32.mrf.mxu0
      %v2070 = vadd.f32 0.0, %v2069
      %2071 = vmatmul.bf16.gmra.mxu0 %v1983
      %v2072 = vpop.f32.mrf.mxu0
      %v2073 = vadd.f32 0.0, %v2072
      %v2074 = vpop.f32.mrf.mxu0
      %v2075 = vadd.f32 0.0, %v2074
      %2076 = vdwg.mxu0
      %v2077 = vadd.f32 %v1855, %v1998
      %v2078 = vadd.f32 %v1856, %v2000
      %v2079 = vadd.f32 %v1857, %v2003
      %v2080 = vadd.f32 %v1858, %v2005
      %v2081 = vadd.f32 %v1859, %v2008
      %v2082 = vadd.f32 %v1860, %v2010
      %v2083 = vadd.f32 %v1861, %v2013
      %v2084 = vadd.f32 %v1862, %v2015
      %v2085 = vadd.f32 %v1863, %v2018
      %v2086 = vadd.f32 %v1864, %v2020
      %v2087 = vadd.f32 %v1865, %v2023
      %v2088 = vadd.f32 %v1866, %v2025
      %v2089 = vadd.f32 %v1867, %v2028
      %v2090 = vadd.f32 %v1868, %v2030
      %v2091 = vadd.f32 %v1869, %v2033
      %v2092 = vadd.f32 %v1870, %v2035
      %v2093 = vadd.f32 %v1871, %v2038
      %v2094 = vadd.f32 %v1872, %v2040
      %v2095 = vadd.f32 %v1873, %v2043
      %v2096 = vadd.f32 %v1874, %v2045
      %v2097 = vadd.f32 %v1875, %v2048
      %v2098 = vadd.f32 %v1876, %v2050
      %v2099 = vadd.f32 %v1877, %v2053
      %v2100 = vadd.f32 %v1878, %v2055
      %v2101 = vadd.f32 %v1879, %v2058
      %v2102 = vadd.f32 %v1880, %v2060
      %v2103 = vadd.f32 %v1881, %v2063
      %v2104 = vadd.f32 %v1882, %v2065
      %v2105 = vadd.f32 %v1883, %v2068
      %v2106 = vadd.f32 %v1884, %v2070
      %v2107 = vadd.f32 %v1885, %v2073
      %v2108 = vadd.f32 %v1886, %v2075
      %v2109 = vld [vmem:[%s2] sm:$0x1]
      %v2111 = vperm.slane %v2109, 0
      %v2113 = vadd.f32 %v2077, %v2111
      %v2114 = vadd.f32 %v2078, %v2111
      %v2115 = vadd.f32 %v2079, %v2111
      %v2116 = vadd.f32 %v2080, %v2111
      %v2117 = vadd.f32 %v2081, %v2111
      %v2118 = vadd.f32 %v2082, %v2111
      %v2119 = vadd.f32 %v2083, %v2111
      %v2120 = vadd.f32 %v2084, %v2111
      %v2121 = vadd.f32 %v2085, %v2111
      %v2122 = vadd.f32 %v2086, %v2111
      %v2123 = vadd.f32 %v2087, %v2111
      %v2124 = vadd.f32 %v2088, %v2111
      %v2125 = vadd.f32 %v2089, %v2111
      %v2126 = vadd.f32 %v2090, %v2111
      %v2127 = vadd.f32 %v2091, %v2111
      %v2128 = vadd.f32 %v2092, %v2111
      %v2129 = vadd.f32 %v2093, %v2111
      %v2130 = vadd.f32 %v2094, %v2111
      %v2131 = vadd.f32 %v2095, %v2111
      %v2132 = vadd.f32 %v2096, %v2111
      %v2133 = vadd.f32 %v2097, %v2111
      %v2134 = vadd.f32 %v2098, %v2111
      %v2135 = vadd.f32 %v2099, %v2111
      %v2136 = vadd.f32 %v2100, %v2111
      %v2137 = vadd.f32 %v2101, %v2111
      %v2138 = vadd.f32 %v2102, %v2111
      %v2139 = vadd.f32 %v2103, %v2111
      %v2140 = vadd.f32 %v2104, %v2111
      %v2141 = vadd.f32 %v2105, %v2111
      %v2142 = vadd.f32 %v2106, %v2111
      %v2143 = vadd.f32 %v2107, %v2111
      %v2144 = vadd.f32 %v2108, %v2111
      %v2145 = vmax.f32 %v2113, 0.0
      %v2146 = vmax.f32 %v2114, 0.0
      %v2147 = vmax.f32 %v2115, 0.0
      %v2148 = vmax.f32 %v2116, 0.0
      %v2149 = vmax.f32 %v2117, 0.0
      %v2150 = vmax.f32 %v2118, 0.0
      %v2151 = vmax.f32 %v2119, 0.0
      %v2152 = vmax.f32 %v2120, 0.0
      %v2153 = vmax.f32 %v2121, 0.0
      %v2154 = vmax.f32 %v2122, 0.0
      %v2155 = vmax.f32 %v2123, 0.0
      %v2156 = vmax.f32 %v2124, 0.0
      %v2157 = vmax.f32 %v2125, 0.0
      %v2158 = vmax.f32 %v2126, 0.0
      %v2159 = vmax.f32 %v2127, 0.0
      %v2160 = vmax.f32 %v2128, 0.0
      %v2161 = vmax.f32 %v2129, 0.0
      %v2162 = vmax.f32 %v2130, 0.0
      %v2163 = vmax.f32 %v2131, 0.0
      %v2164 = vmax.f32 %v2132, 0.0
      %v2165 = vmax.f32 %v2133, 0.0
      %v2166 = vmax.f32 %v2134, 0.0
      %v2167 = vmax.f32 %v2135, 0.0
      %v2168 = vmax.f32 %v2136, 0.0
      %v2169 = vmax.f32 %v2137, 0.0
      %v2170 = vmax.f32 %v2138, 0.0
      %v2171 = vmax.f32 %v2139, 0.0
      %v2172 = vmax.f32 %v2140, 0.0
      %v2173 = vmax.f32 %v2141, 0.0
      %v2174 = vmax.f32 %v2142, 0.0
      %v2175 = vmax.f32 %v2143, 0.0
      %v2176 = vmax.f32 %v2144, 0.0
      %2177 = vst.msk [vmem:[%s170] sm:$0xff] %vm271, %v2145
      %2178 = vst.msk [vmem:[%s170 + $0x8] sm:$0xff] %vm271, %v2146
      %2179 = vst.msk [vmem:[%s170 + $0x10] sm:$0xff] %vm271, %v2147
      %2180 = vst.msk [vmem:[%s170 + $0x18] sm:$0xff] %vm271, %v2148
      %2181 = vst.msk [vmem:[%s170 + $0x20] sm:$0xff] %vm271, %v2149
      %2182 = vst.msk [vmem:[%s170 + $0x28] sm:$0xff] %vm271, %v2150
      %2183 = vst.msk [vmem:[%s170 + $0x30] sm:$0xff] %vm271, %v2151
      %2184 = vst.msk [vmem:[%s170 + $0x38] sm:$0xff] %vm271, %v2152
      %2185 = vst.msk [vmem:[%s170 + $0x40] sm:$0xff] %vm271, %v2153
      %2186 = vst.msk [vmem:[%s170 + $0x48] sm:$0xff] %vm271, %v2154
      %2187 = vst.msk [vmem:[%s170 + $0x50] sm:$0xff] %vm271, %v2155
      %2188 = vst.msk [vmem:[%s170 + $0x58] sm:$0xff] %vm271, %v2156
      %2189 = vst.msk [vmem:[%s170 + $0x60] sm:$0xff] %vm271, %v2157
      %2190 = vst.msk [vmem:[%s170 + $0x68] sm:$0xff] %vm271, %v2158
      %2191 = vst.msk [vmem:[%s170 + $0x70] sm:$0xff] %vm271, %v2159
      %2192 = vst.msk [vmem:[%s170 + $0x78] sm:$0xff] %vm271, %v2160
      %2193 = vst.msk [vmem:[%s170 + $0x80] sm:$0xff] %vm271, %v2161
      %2194 = vst.msk [vmem:[%s170 + $0x88] sm:$0xff] %vm271, %v2162
      %2195 = vst.msk [vmem:[%s170 + $0x90] sm:$0xff] %vm271, %v2163
      %2196 = vst.msk [vmem:[%s170 + $0x98] sm:$0xff] %vm271, %v2164
      %2197 = vst.msk [vmem:[%s170 + $0xa0] sm:$0xff] %vm271, %v2165
      %2198 = vst.msk [vmem:[%s170 + $0xa8] sm:$0xff] %vm271, %v2166
      %2199 = vst.msk [vmem:[%s170 + $0xb0] sm:$0xff] %vm271, %v2167
      %2200 = vst.msk [vmem:[%s170 + $0xb8] sm:$0xff] %vm271, %v2168
      %2201 = vst.msk [vmem:[%s170 + $0xc0] sm:$0xff] %vm271, %v2169
      %2202 = vst.msk [vmem:[%s170 + $0xc8] sm:$0xff] %vm271, %v2170
      %2203 = vst.msk [vmem:[%s170 + $0xd0] sm:$0xff] %vm271, %v2171
      %2204 = vst.msk [vmem:[%s170 + $0xd8] sm:$0xff] %vm271, %v2172
      %2205 = vst.msk [vmem:[%s170 + $0xe0] sm:$0xff] %vm271, %v2173
      %2206 = vst.msk [vmem:[%s170 + $0xe8] sm:$0xff] %vm271, %v2174
      %2207 = vst.msk [vmem:[%s170 + $0xf0] sm:$0xff] %vm271, %v2175
      %2208 = vst.msk [vmem:[%s170 + $0xf8] sm:$0xff] %vm271, %v2176
      %p2209 = scmp.lt.s32.totalorder %s14, 1
      %s2210 = scalar_select %p2209, %s14, 1
      %s2211 = smul.addr %s2210, 32
      %s2212 = smul.addr %s2211, 8
      %s2213 = scalar_lea.vmem %s3, %s2212
      // Predicated region
      $region33: #{sica_dwt_forward.10} parent=31 // pred_check
        %p2214 = pneg %p100
      $region34: #{sica_dwt_forward.10} parent=31 // pred_check_branch
        %2216 = sbr.rel (%p2214) target = $region36
      $region35: #{sica_dwt_forward.10} parent=31 // pred_region
        _
      $region36: #{sica_dwt_forward.10} parent=31 // pred_fallthru
        _
    $region32: #{sica_dwt_forward.10} parent=5 // pred_fallthru
      _
    %p2217 = scmp.le.s32.totalorder 2, %s9
    // Predicated region
    $region37: #{sica_dwt_forward.10} parent=5 // pred_check
      %p2218 = pneg %p2217
    $region38: #{sica_dwt_forward.10} parent=5 // pred_check_branch
      %2220 = sbr.rel (%p2218) target = $region40
    $region39: #{sica_dwt_forward.10} parent=5 // pred_region
      %s2221 = ssub.s32 %s9, 2
      // Predicated region
      $region41: #{sica_dwt_forward.10} parent=39 // pred_check
        %p2222 = pneg %p106
      $region42: #{sica_dwt_forward.10} parent=39 // pred_check_branch
        %2224 = sbr.rel (%p2222) target = $region44
      $region43: #{sica_dwt_forward.10} parent=39 // pred_region
        %p2225 = scmp.lt.s32.totalorder %s15, 1
        %s2226 = scalar_select %p2225, %s15, 1
        %s2227 = smul.addr %s2226, 32
        %s2228 = smul.addr %s2227, 8
        %s2229 = scalar_lea.vmem %s3, %s2228
      $region44: #{sica_dwt_forward.10} parent=39 // pred_fallthru
        _
    $region40: #{sica_dwt_forward.10} parent=5 // pred_fallthru
      _
  $region6: #{sica_dwt_forward.10} parent=0 // loop_footer
    %s13 = sadd.s32 1, %s9
  $region7: #{sica_dwt_forward.10} parent=0 // loop_footer_branch
    %8 = sbr.rel target = $region3
  $region8: #{sica_dwt_forward.10} parent=0 // loop_exit
    _

// kernel: sica_dwt_forward.11
$region0: #{sica_dwt_forward.11}
  #allocation0 [shape = 'u32[]', space=smem, size = 0x4, offset = 0x4, fixed_abs, tag = 'smem constant byte address 0x4 - core index']
  #allocation1 [shape = 'u32[72,128]{1,0:T(1,128)}', space=vmem, size = 0x9000, scoped, tag = 'internal scratch']
  %s0 = inlined_call_operand.vmem [shape: f32[2,256,8], index: 0, kind: input, shape index: {}]
  %s1 = inlined_call_operand.vmem [shape: f32[2,3,4], index: 1, kind: input, shape index: {}]
  %s2 = inlined_call_operand.vmem [shape: bf16[2,4,8], index: 2, kind: input, shape index: {}]
  %s3 = inlined_call_operand.vmem [shape: f32[2,8], index: 3, kind: input, shape index: {}]
  %s4 = inlined_call_operand.vmem [shape: bf16[2,8,8], index: 4, kind: input, shape index: {}]
  %s5 = inlined_call_operand.vmem [shape: f32[2,8], index: 5, kind: input, shape index: {}]
  %s6 = inlined_call_operand.vmem [shape: f32[2,8,256], index: 6, kind: output, shape index: {}]
  %s7 = sld [smem:[#allocation0]]
  $region57: #{sica_dwt_forward.11} parent=0
    _
  %s9 = ssub.s32 1, %s7
  %s10 = scalar_select 0, %s9, %s7
  loop: start=0, step=1, limit=4
  $region2: #{sica_dwt_forward.11} parent=0 // loop_pre_header
    _
  $region3: #{sica_dwt_forward.11} parent=0 // loop_header
    %s12 = sphi 0, %s16
    %p13 = scmp.ge.s32.totalorder %s12, 4
    %s22 = sphi 0, %s24
    %s25 = sphi 0, %s22
    %s26 = sphi 0, %s25
    %s42 = sphi 0, %s26
    %s48 = sphi 0, %s50
    %s51 = sphi 0, %s48
    %s52 = sphi 0, %s51
    %s68 = sphi 0, %s52
    %s72 = sphi 0, %s72
    %s74 = sphi 0, %s72
    %s75 = sphi 0, %s74
    %s89 = sphi 0, %s75
    %s93 = sphi 0, %s93
    %s95 = sphi 0, %s93
    %s96 = sphi 0, %s95
    %s110 = sphi 0, %s96
    %s114 = sphi 0, %s114
    %s116 = sphi 0, %s114
    %s117 = sphi 0, %s116
    %s131 = sphi 0, %s117
    %s135 = sphi 0, %s135
    %s137 = sphi 0, %s135
    %s138 = sphi 0, %s137
    %s152 = sphi 0, %s138
    %s158 = sphi 0, %s160
    %s161 = sphi 0, %s158
    %s162 = sphi 0, %s161
    %s178 = sphi 0, %s162
  $region4: #{sica_dwt_forward.11} parent=0 // loop_header_branch
    %15 = sbr.rel (%p13) target = $region8
  $region5: #{sica_dwt_forward.11} parent=0 // loop_body
    %s17 = ssub.s32 %s12, 1
    %s18 = ssub.s32 %s12, 2
    %s19 = sadd.s32 %s12, 1
    %s20 = ssub.s32 %s12, %s19
    %p21 = scmp.eq.s32.totalorder %s20, 0
    %s23 = sadd.s32 %s22, 1
    %s24 = scalar_select %p21, %s22, %s23
    %p27 = pneg %p21
    %p28 = scmp.eq.s32.totalorder %s12, 1
    %p29 = por %p27, %p28
    %p30 = scmp.ne.s32.totalorder %s22, %s25
    %p31 = scmp.eq.s32.totalorder %s12, 0
    %p32 = por %p30, %p31
    %p33 = scmp.ne.s32.totalorder %s22, %s25
    %p34 = scmp.eq.s32.totalorder %s17, 1
    %p35 = por %p33, %p34
    %p36 = scmp.ne.s32.totalorder %s25, %s26
    %p37 = scmp.eq.s32.totalorder %s17, 0
    %p38 = por %p36, %p37
    %p39 = scmp.ne.s32.totalorder %s25, %s26
    %p40 = scmp.eq.s32.totalorder %s18, 1
    %p41 = por %p39, %p40
    %p43 = scmp.ne.s32.totalorder %s26, %s42
    %p44 = scmp.eq.s32.totalorder %s18, 0
    %p45 = por %p43, %p44
    %s46 = ssub.s32 %s12, %s19
    %p47 = scmp.eq.s32.totalorder %s46, 0
    %s49 = sadd.s32 %s48, 1
    %s50 = scalar_select %p47, %s48, %s49
    %p53 = pneg %p47
    %p54 = scmp.eq.s32.totalorder %s12, 1
    %p55 = por %p53, %p54
    %p56 = scmp.ne.s32.totalorder %s48, %s51
    %p57 = scmp.eq.s32.totalorder %s12, 0
    %p58 = por %p56, %p57
    %p59 = scmp.ne.s32.totalorder %s48, %s51
    %p60 = scmp.eq.s32.totalorder %s17, 1
    %p61 = por %p59, %p60
    %p62 = scmp.ne.s32.totalorder %s51, %s52
    %p63 = scmp.eq.s32.totalorder %s17, 0
    %p64 = por %p62, %p63
    %p65 = scmp.ne.s32.totalorder %s51, %s52
    %p66 = scmp.eq.s32.totalorder %s18, 1
    %p67 = por %p65, %p66
    %p69 = scmp.ne.s32.totalorder %s52, %s68
    %p70 = scmp.eq.s32.totalorder %s18, 0
    %p71 = por %p69, %p70
    %s73 = sadd.s32 %s72, 1
    %p76 = scmp.eq.s32.totalorder %s12, 1
    %p77 = scmp.ne.s32.totalorder %s72, %s74
    %p78 = scmp.eq.s32.totalorder %s12, 0
    %p79 = por %p77, %p78
    %p80 = scmp.ne.s32.totalorder %s72, %s74
    %p81 = scmp.eq.s32.totalorder %s17, 1
    %p82 = por %p80, %p81
    %p83 = scmp.ne.s32.totalorder %s74, %s75
    %p84 = scmp.eq.s32.totalorder %s17, 0
    %p85 = por %p83, %p84
    %p86 = scmp.ne.s32.totalorder %s74, %s75
    %p87 = scmp.eq.s32.totalorder %s18, 1
    %p88 = por %p86, %p87
    %p90 = scmp.ne.s32.totalorder %s75, %s89
    %p91 = scmp.eq.s32.totalorder %s18, 0
    %p92 = por %p90, %p91
    %s94 = sadd.s32 %s93, 1
    %p97 = scmp.eq.s32.totalorder %s12, 1
    %p98 = scmp.ne.s32.totalorder %s93, %s95
    %p99 = scmp.eq.s32.totalorder %s12, 0
    %p100 = por %p98, %p99
    %p101 = scmp.ne.s32.totalorder %s93, %s95
    %p102 = scmp.eq.s32.totalorder %s17, 1
    %p103 = por %p101, %p102
    %p104 = scmp.ne.s32.totalorder %s95, %s96
    %p105 = scmp.eq.s32.totalorder %s17, 0
    %p106 = por %p104, %p105
    %p107 = scmp.ne.s32.totalorder %s95, %s96
    %p108 = scmp.eq.s32.totalorder %s18, 1
    %p109 = por %p107, %p108
    %p111 = scmp.ne.s32.totalorder %s96, %s110
    %p112 = scmp.eq.s32.totalorder %s18, 0
    %p113 = por %p111, %p112
    %s115 = sadd.s32 %s114, 1
    %p118 = scmp.eq.s32.totalorder %s12, 1
    %p119 = scmp.ne.s32.totalorder %s114, %s116
    %p120 = scmp.eq.s32.totalorder %s12, 0
    %p121 = por %p119, %p120
    %p122 = scmp.ne.s32.totalorder %s114, %s116
    %p123 = scmp.eq.s32.totalorder %s17, 1
    %p124 = por %p122, %p123
    %p125 = scmp.ne.s32.totalorder %s116, %s117
    %p126 = scmp.eq.s32.totalorder %s17, 0
    %p127 = por %p125, %p126
    %p128 = scmp.ne.s32.totalorder %s116, %s117
    %p129 = scmp.eq.s32.totalorder %s18, 1
    %p130 = por %p128, %p129
    %p132 = scmp.ne.s32.totalorder %s117, %s131
    %p133 = scmp.eq.s32.totalorder %s18, 0
    %p134 = por %p132, %p133
    %s136 = sadd.s32 %s135, 1
    %p139 = scmp.eq.s32.totalorder %s12, 1
    %p140 = scmp.ne.s32.totalorder %s135, %s137
    %p141 = scmp.eq.s32.totalorder %s12, 0
    %p142 = por %p140, %p141
    %p143 = scmp.ne.s32.totalorder %s135, %s137
    %p144 = scmp.eq.s32.totalorder %s17, 1
    %p145 = por %p143, %p144
    %p146 = scmp.ne.s32.totalorder %s137, %s138
    %p147 = scmp.eq.s32.totalorder %s17, 0
    %p148 = por %p146, %p147
    %p149 = scmp.ne.s32.totalorder %s137, %s138
    %p150 = scmp.eq.s32.totalorder %s18, 1
    %p151 = por %p149, %p150
    %p153 = scmp.ne.s32.totalorder %s138, %s152
    %p154 = scmp.eq.s32.totalorder %s18, 0
    %p155 = por %p153, %p154
    %s156 = ssub.s32 %s12, %s19
    %p157 = scmp.eq.s32.totalorder %s156, 0
    %s159 = sadd.s32 %s158, 1
    %s160 = scalar_select %p157, %s158, %s159
    %p163 = pneg %p157
    %p164 = scmp.eq.s32.totalorder %s12, 1
    %p165 = por %p163, %p164
    %p166 = scmp.ne.s32.totalorder %s158, %s161
    %p167 = scmp.eq.s32.totalorder %s12, 0
    %p168 = por %p166, %p167
    %p169 = scmp.ne.s32.totalorder %s158, %s161
    %p170 = scmp.eq.s32.totalorder %s17, 1
    %p171 = por %p169, %p170
    %p172 = scmp.ne.s32.totalorder %s161, %s162
    %p173 = scmp.eq.s32.totalorder %s17, 0
    %p174 = por %p172, %p173
    %p175 = scmp.ne.s32.totalorder %s161, %s162
    %p176 = scmp.eq.s32.totalorder %s18, 1
    %p177 = por %p175, %p176
    %p179 = scmp.ne.s32.totalorder %s162, %s178
    %p180 = scmp.eq.s32.totalorder %s18, 0
    %p181 = por %p179, %p180
    %p182 = scmp.le.s32.totalorder 1, %s12
    %p183 = scmp.lt.s32.totalorder %s12, 3
    %p184 = pnand %p182, %p183
    %p185 = pneg %p184
    // Predicated region
    $region9: #{sica_dwt_forward.11} parent=5 // pred_check
      _
    $region10: #{sica_dwt_forward.11} parent=5 // pred_check_branch
      %187 = sbr.rel (%p184) target = $region12
    $region11: #{sica_dwt_forward.11} parent=5 // pred_region
      %s188 = ssub.s32 %s12, 1
      // Predicated region
      $region13: #{sica_dwt_forward.11} parent=11 // pred_check
        %p189 = pneg %p85
      $region14: #{sica_dwt_forward.11} parent=11 // pred_check_branch
        %191 = sbr.rel (%p189) target = $region16
      $region15: #{sica_dwt_forward.11} parent=11 // pred_region
        _
      $region16: #{sica_dwt_forward.11} parent=11 // pred_fallthru
        _
      // Predicated region
      $region17: #{sica_dwt_forward.11} parent=11 // pred_check
        %p192 = pneg %p106
      $region18: #{sica_dwt_forward.11} parent=11 // pred_check_branch
        %194 = sbr.rel (%p192) target = $region20
      $region19: #{sica_dwt_forward.11} parent=11 // pred_region
        _
      $region20: #{sica_dwt_forward.11} parent=11 // pred_fallthru
        _
      // Predicated region
      $region21: #{sica_dwt_forward.11} parent=11 // pred_check
        %p195 = pneg %p127
      $region22: #{sica_dwt_forward.11} parent=11 // pred_check_branch
        %197 = sbr.rel (%p195) target = $region24
      $region23: #{sica_dwt_forward.11} parent=11 // pred_region
        _
      $region24: #{sica_dwt_forward.11} parent=11 // pred_fallthru
        _
      // Predicated region
      $region25: #{sica_dwt_forward.11} parent=11 // pred_check
        %p198 = pneg %p148
      $region26: #{sica_dwt_forward.11} parent=11 // pred_check_branch
        %200 = sbr.rel (%p198) target = $region28
      $region27: #{sica_dwt_forward.11} parent=11 // pred_region
        _
      $region28: #{sica_dwt_forward.11} parent=11 // pred_fallthru
        _
    $region12: #{sica_dwt_forward.11} parent=5 // pred_fallthru
      _
    %p201 = scmp.lt.s32.totalorder %s12, 2
    // Predicated region
    $region29: #{sica_dwt_forward.11} parent=5 // pred_check
      %p202 = pneg %p201
    $region30: #{sica_dwt_forward.11} parent=5 // pred_check_branch
      %204 = sbr.rel (%p202) target = $region32
    $region31: #{sica_dwt_forward.11} parent=5 // pred_region
      // Predicated region
      $region33: #{sica_dwt_forward.11} parent=31 // pred_check
        %p205 = pneg %p32
      $region34: #{sica_dwt_forward.11} parent=31 // pred_check_branch
        %207 = sbr.rel (%p205) target = $region36
      $region35: #{sica_dwt_forward.11} parent=31 // pred_region
        %p208 = scmp.lt.s32.totalorder %s12, 1
        %s209 = scalar_select %p208, %s12, 1
        %s210 = smul.addr %s209, 32
        %s211 = smul.addr %s210, 8
        %s212 = scalar_lea.vmem %s0, %s211
      $region36: #{sica_dwt_forward.11} parent=31 // pred_fallthru
        _
      // Predicated region
      $region37: #{sica_dwt_forward.11} parent=31 // pred_check
        %p213 = pneg %p58
      $region38: #{sica_dwt_forward.11} parent=31 // pred_check_branch
        %215 = sbr.rel (%p213) target = $region40
      $region39: #{sica_dwt_forward.11} parent=31 // pred_region
        %p216 = scmp.lt.s32.totalorder %s12, 1
        %s217 = scalar_select %p216, %s12, 1
        %s218 = smul.addr %s217, 4
        %s219 = scalar_lea.vmem %s1, %s218
      $region40: #{sica_dwt_forward.11} parent=31 // pred_fallthru
        _
    $region32: #{sica_dwt_forward.11} parent=5 // pred_fallthru
      _
    %p220 = scmp.le.s32.totalorder 1, %s12
    %p221 = scmp.lt.s32.totalorder %s12, 3
    %p222 = pnand %p220, %p221
    %p223 = pneg %p222
    // Predicated region
    $region41: #{sica_dwt_forward.11} parent=5 // pred_check
      _
    $region42: #{sica_dwt_forward.11} parent=5 // pred_check_branch
      %225 = sbr.rel (%p222) target = $region44
    $region43: #{sica_dwt_forward.11} parent=5 // pred_region
      %s226 = ssub.s32 %s12, 1
      %p227 = scmp.lt.s32.totalorder %s17, 1
      %s228 = scalar_select %p227, %s17, 1
      %s229 = smul.addr %s228, 32
      %s230 = smul.addr %s229, 8
      %s231 = scalar_lea.vmem %s0, %s230
      %p232 = pneg %p38
      %p233 = pneg %p35
      %p234 = scmp.lt.s32.totalorder %s17, 1
      %s235 = scalar_select %p234, %s17, 1
      %s236 = smul.addr %s235, 4
      %s237 = scalar_lea.vmem %s1, %s236
      %p238 = pneg %p64
      %p239 = pneg %p61
      %p240 = pneg %p85
      %p241 = pneg %p82
      %p242 = pneg %p106
      %p243 = pneg %p103
      %p244 = pneg %p127
      %p245 = pneg %p124
      %p246 = pneg %p148
      %p247 = pneg %p145
      %p248 = pneg %p174
      %p249 = pneg %p171
      %p250 = scmp.lt.s32.totalorder %s17, 1
      %s251 = scalar_select %p250, %s17, 1
      %s252 = smul.addr %s251, 2
      %s253 = smul.addr %s252, 8
      %s254 = scalar_lea.vmem %s6, %s253
      %p255 = scmp.lt.s32.totalorder %s17, 1
      %s256 = scalar_select %p255, %s17, 1
      %s257 = smul.addr %s256, 32
      %s258 = smul.addr %s257, 8
      %s259 = scalar_lea.vmem %s0, %s258
      %p260 = scmp.lt.s32.totalorder %s17, 1
      %s261 = scalar_select %p260, %s17, 1
      %s262 = smul.addr %s261, 4
      %s263 = scalar_lea.vmem %s1, %s262
      %p264 = scmp.lt.s32.totalorder %s17, 1
      %s265 = scalar_select %p264, %s17, 1
      %s266 = smul.addr %s265, 2
      %s267 = smul.addr %s266, 8
      %s268 = scalar_lea.vmem %s6, %s267
      %v270 = vld [vmem:[%s263] sm:$0x7]
      %v271 = vpack.c.bf16 %v270, %v270
      %v272 = vld [vmem:[%s2] sm:$0x3]
      %v273 = vld [vmem:[%s3] sm:$0x1]
      %v274 = vperm.slane %v273, 0
      %vm275 = vcmask 31744
      %v277 = vsel %vm275, %v271, 0
      %vm279 = vcmask 1041408
      %v281 = vsel %vm279, %v272, 0
      %283 = vmatpush.bf16.msra.mxu0 0
      %284 = vmatpush.bf16.msra.mxu0 0
      %285 = vmatpush.bf16.msra.mxu0 0
      %286 = vmatpush.bf16.msra.mxu0 0
      %287 = vmatpush.bf16.msra.mxu0 0
      %288 = vmatpush.bf16.msra.mxu0 0
      %289 = vmatpush.bf16.msra.mxu0 0
      %290 = vmatpush.bf16.msra.mxu0 %v281
      %291 = vmatmul.bf16.gmra.mxu0 %v277
      %v292 = vpop.f32.mrf.mxu0
      %v293 = vadd.f32 %v274, %v292
      %v294 = vpop.f32.mrf.mxu0
      %295 = vdwg.mxu0
      %v296 = vmax.f32 %v293, 0.0
      %v297 = vpack.c.bf16 %v296, %v296
      %v298 = vld [vmem:[%s4] sm:$0xf]
      %v299 = vld [vmem:[%s5] sm:$0x1]
      %v300 = vperm.slane %v299, 0
      %vm301 = vcmask 64512
      %v303 = vsel %vm301, %v297, 0
      %vm305 = vcmask 1043456
      %v307 = vsel %vm305, %v298, 0
      %309 = vmatpush.bf16.msra.mxu0 0
      %310 = vmatpush.bf16.msra.mxu0 0
      %311 = vmatpush.bf16.msra.mxu0 0
      %312 = vmatpush.bf16.msra.mxu0 0
      %313 = vmatpush.bf16.msra.mxu0 0
      %314 = vmatpush.bf16.msra.mxu0 0
      %315 = vmatpush.bf16.msra.mxu0 0
      %316 = vmatpush.bf16.msra.mxu0 %v307
      %317 = vmatmul.bf16.gmra.mxu0 %v303
      %v318 = vpop.f32.mrf.mxu0
      %v319 = vadd.f32 %v300, %v318
      %v320 = vpop.f32.mrf.mxu0
      %321 = vdwg.mxu0
      %v322 = vmax.f32 %v319, 0.0
      %s323 = scalar_lea.vmem %s2, 2
      %v324 = vld [vmem:[%s323] sm:$0x3]
      %v325 = vld [vmem:[%s3 + $0x1] sm:$0x1]
      %v326 = vperm.slane %v325, 0
      %v328 = vsel %vm279, %v324, 0
      %330 = vmatpush.bf16.msra.mxu0 0
      %331 = vmatpush.bf16.msra.mxu0 0
      %332 = vmatpush.bf16.msra.mxu0 0
      %333 = vmatpush.bf16.msra.mxu0 0
      %334 = vmatpush.bf16.msra.mxu0 0
      %335 = vmatpush.bf16.msra.mxu0 0
      %336 = vmatpush.bf16.msra.mxu0 0
      %337 = vmatpush.bf16.msra.mxu0 %v328
      %338 = vmatmul.bf16.gmra.mxu0 %v277
      %v339 = vpop.f32.mrf.mxu0
      %v340 = vadd.f32 %v326, %v339
      %v341 = vpop.f32.mrf.mxu0
      %342 = vdwg.mxu0
      %v343 = vmax.f32 %v340, 0.0
      %v344 = vpack.c.bf16 %v343, %v343
      %s345 = scalar_lea.vmem %s4, 4
      %v346 = vld [vmem:[%s345] sm:$0xf]
      %v347 = vld [vmem:[%s5 + $0x1] sm:$0x1]
      %v348 = vperm.slane %v347, 0
      %v350 = vsel %vm301, %v344, 0
      %v353 = vsel %vm305, %v346, 0
      %355 = vmatpush.bf16.msra.mxu0 0
      %356 = vmatpush.bf16.msra.mxu0 0
      %357 = vmatpush.bf16.msra.mxu0 0
      %358 = vmatpush.bf16.msra.mxu0 0
      %359 = vmatpush.bf16.msra.mxu0 0
      %360 = vmatpush.bf16.msra.mxu0 0
      %361 = vmatpush.bf16.msra.mxu0 0
      %362 = vmatpush.bf16.msra.mxu0 %v353
      %363 = vmatmul.bf16.gmra.mxu0 %v350
      %v364 = vpop.f32.mrf.mxu0
      %v365 = vadd.f32 %v348, %v364
      %v366 = vpop.f32.mrf.mxu0
      %367 = vdwg.mxu0
      %v368 = vmax.f32 %v365, 0.0
      %v369 = vld [vmem:[%s259] sm:$0xff]
      %v370 = vld [vmem:[%s259 + $0x8] sm:$0xff]
      %v371 = vld [vmem:[%s259 + $0x10] sm:$0xff]
      %v372 = vld [vmem:[%s259 + $0x18] sm:$0xff]
      %v373 = vld [vmem:[%s259 + $0x20] sm:$0xff]
      %v374 = vld [vmem:[%s259 + $0x28] sm:$0xff]
      %v375 = vld [vmem:[%s259 + $0x30] sm:$0xff]
      %v376 = vld [vmem:[%s259 + $0x38] sm:$0xff]
      %v377 = vld [vmem:[%s259 + $0x40] sm:$0xff]
      %v378 = vld [vmem:[%s259 + $0x48] sm:$0xff]
      %v379 = vld [vmem:[%s259 + $0x50] sm:$0xff]
      %v380 = vld [vmem:[%s259 + $0x58] sm:$0xff]
      %v381 = vld [vmem:[%s259 + $0x60] sm:$0xff]
      %v382 = vld [vmem:[%s259 + $0x68] sm:$0xff]
      %v383 = vld [vmem:[%s259 + $0x70] sm:$0xff]
      %v384 = vld [vmem:[%s259 + $0x78] sm:$0xff]
      %v385 = vld [vmem:[%s259 + $0x80] sm:$0xff]
      %v386 = vld [vmem:[%s259 + $0x88] sm:$0xff]
      %v387 = vld [vmem:[%s259 + $0x90] sm:$0xff]
      %v388 = vld [vmem:[%s259 + $0x98] sm:$0xff]
      %v389 = vld [vmem:[%s259 + $0xa0] sm:$0xff]
      %v390 = vld [vmem:[%s259 + $0xa8] sm:$0xff]
      %v391 = vld [vmem:[%s259 + $0xb0] sm:$0xff]
      %v392 = vld [vmem:[%s259 + $0xb8] sm:$0xff]
      %v393 = vld [vmem:[%s259 + $0xc0] sm:$0xff]
      %v394 = vld [vmem:[%s259 + $0xc8] sm:$0xff]
      %v395 = vld [vmem:[%s259 + $0xd0] sm:$0xff]
      %v396 = vld [vmem:[%s259 + $0xd8] sm:$0xff]
      %v397 = vld [vmem:[%s259 + $0xe0] sm:$0xff]
      %v398 = vld [vmem:[%s259 + $0xe8] sm:$0xff]
      %v399 = vld [vmem:[%s259 + $0xf0] sm:$0xff]
      %v400 = vld [vmem:[%s259 + $0xf8] sm:$0xff]
      %v401 = vpack.c.bf16 %v370, %v369
      %v402 = vpack.c.bf16 %v372, %v371
      %v403 = vpack.c.bf16 %v374, %v373
      %v404 = vpack.c.bf16 %v376, %v375
      %v405 = vpack.c.bf16 %v378, %v377
      %v406 = vpack.c.bf16 %v380, %v379
      %v407 = vpack.c.bf16 %v382, %v381
      %v408 = vpack.c.bf16 %v384, %v383
      %v409 = vpack.c.bf16 %v386, %v385
      %v410 = vpack.c.bf16 %v388, %v387
      %v411 = vpack.c.bf16 %v390, %v389
      %v412 = vpack.c.bf16 %v392, %v391
      %v413 = vpack.c.bf16 %v394, %v393
      %v414 = vpack.c.bf16 %v396, %v395
      %v415 = vpack.c.bf16 %v398, %v397
      %v416 = vpack.c.bf16 %v400, %v399
      %v417 = vpack.c.bf16 %v322, %v322
      %v419 = vsel %vm301, %v417, 0
      %v422 = vsel %vm301, %v401, 0
      %v425 = vsel %vm301, %v402, 0
      %v428 = vsel %vm301, %v403, 0
      %v431 = vsel %vm301, %v404, 0
      %v434 = vsel %vm301, %v405, 0
      %v437 = vsel %vm301, %v406, 0
      %v440 = vsel %vm301, %v407, 0
      %v443 = vsel %vm301, %v408, 0
      %v446 = vsel %vm301, %v409, 0
      %v449 = vsel %vm301, %v410, 0
      %v452 = vsel %vm301, %v411, 0
      %v455 = vsel %vm301, %v412, 0
      %v458 = vsel %vm301, %v413, 0
      %v461 = vsel %vm301, %v414, 0
      %v464 = vsel %vm301, %v415, 0
      %v467 = vsel %vm301, %v416, 0
      %469 = vmatpush.bf16.xpose.msra.mxu0 %v443
      %470 = vmatpush.bf16.xpose.msra.mxu0 %v440
      %471 = vmatpush.bf16.xpose.msra.mxu0 %v437
      %472 = vmatpush.bf16.xpose.msra.mxu0 %v434
      %473 = vmatpush.bf16.xpose.msra.mxu0 %v431
      %474 = vmatpush.bf16.xpose.msra.mxu0 %v428
      %475 = vmatpush.bf16.xpose.msra.mxu0 %v425
      %476 = vmatpush.bf16.xpose.msra.mxu0 %v422
      %477 = vmatmul.bf16.gmra.mxu0 %v419
      %v478 = vpop.f32.mrf.mxu0
      %v479 = vadd.f32 0.0, %v478
      %v480 = vpop.f32.mrf.mxu0
      %481 = vdwg.mxu0
      %482 = vmatpush.bf16.xpose.msra.mxu0 %v467
      %483 = vmatpush.bf16.xpose.msra.mxu0 %v464
      %484 = vmatpush.bf16.xpose.msra.mxu0 %v461
      %485 = vmatpush.bf16.xpose.msra.mxu0 %v458
      %486 = vmatpush.bf16.xpose.msra.mxu0 %v455
      %487 = vmatpush.bf16.xpose.msra.mxu0 %v452
      %488 = vmatpush.bf16.xpose.msra.mxu0 %v449
      %489 = vmatpush.bf16.xpose.msra.mxu0 %v446
      %490 = vmatmul.bf16.gmra.mxu0 %v419
      %v491 = vpop.f32.mrf.mxu0
      %v492 = vadd.f32 0.0, %v491
      %v493 = vpop.f32.mrf.mxu0
      %494 = vdwg.mxu0
      %v495 = vmul.f32 %v479, 0.35355338
      %v496 = vmul.f32 %v492, 0.35355338
      %v499 = vrot.slane %v495, 1
      %v500 = vrot.slane %v496, 1
      %v503 = vmax.f32 %v495, %v499
      %v504 = vmax.f32 %v496, %v500
      %v505 = vrot.slane %v495, 2
      %v506 = vrot.slane %v496, 2
      %v509 = vmax.f32 %v503, %v505
      %v510 = vmax.f32 %v504, %v506
      %v511 = vsub.f32 %v495, %v509
      %v512 = vsub.f32 %v496, %v510
      %v513 = vmul.f32 %v511, 1.442695
      %v514 = vpow.pop %v513
      %v515 = vmul.f32 %v512, 1.442695
      %v516 = vpow.pop %v515
      %v519 = vrot.slane %v509, 7
      %v520 = vrot.slane %v510, 7
      %v523 = vsub.f32 %v495, %v519
      %v524 = vsub.f32 %v496, %v520
      %v525 = vmul.f32 %v523, 1.442695
      %v526 = vpow.pop %v525
      %v527 = vmul.f32 %v524, 1.442695
      %v528 = vpow.pop %v527
      %v529 = vrot.slane %v509, 6
      %v530 = vrot.slane %v510, 6
      %v533 = vsub.f32 %v495, %v529
      %v534 = vsub.f32 %v496, %v530
      %v535 = vmul.f32 %v533, 1.442695
      %v536 = vpow.pop %v535
      %v537 = vmul.f32 %v534, 1.442695
      %v538 = vpow.pop %v537
      %v541 = vrot.slane %v526, 1
      %v542 = vrot.slane %v528, 1
      %v545 = vadd.f32 %v514, %v541
      %v546 = vadd.f32 %v516, %v542
      %v549 = vrot.slane %v536, 2
      %v550 = vrot.slane %v538, 2
      %v553 = vadd.f32 %v545, %v549
      %v554 = vadd.f32 %v546, %v550
      %v555 = vrcp.pop %v553
      %v556 = vrcp.pop %v554
      %v557 = vmul.f32 %v514, %v555
      %v558 = vmul.f32 %v516, %v556
      %v561 = vrot.slane %v555, 7
      %v562 = vrot.slane %v556, 7
      %v565 = vmul.f32 %v526, %v561
      %v566 = vmul.f32 %v528, %v562
      %v567 = vrot.slane %v555, 6
      %v568 = vrot.slane %v556, 6
      %v571 = vmul.f32 %v536, %v567
      %v572 = vmul.f32 %v538, %v568
      %vm573 = vcmask 1040384
      %v574 = vsel %vm573, %v557, %v565
      %v575 = vsel %vm573, %v558, %v566
      %v576 = vsel %vm279, %v574, %v571
      %v577 = vsel %vm279, %v575, %v572
      %578 = vxpose.xlu0.b32.start [1/16] %v368, 128
      %579 = vxpose.xlu0.b32.cont [2/16] 0.0, 128
      %580 = vxpose.xlu0.b32.cont [3/16] 0.0, 128
      %581 = vxpose.xlu0.b32.cont [4/16] 0.0, 128
      %582 = vxpose.xlu0.b32.cont [5/16] 0.0, 128
      %583 = vxpose.xlu0.b32.cont [6/16] 0.0, 128
      %584 = vxpose.xlu0.b32.cont [7/16] 0.0, 128
      %585 = vxpose.xlu0.b32.cont [8/16] 0.0, 128
      %586 = vxpose.xlu0.b32.cont [9/16] 0.0, 128
      %587 = vxpose.xlu0.b32.cont [10/16] 0.0, 128
      %588 = vxpose.xlu0.b32.cont [11/16] 0.0, 128
      %589 = vxpose.xlu0.b32.cont [12/16] 0.0, 128
      %590 = vxpose.xlu0.b32.cont [13/16] 0.0, 128
      %591 = vxpose.xlu0.b32.cont [14/16] 0.0, 128
      %592 = vxpose.xlu0.b32.cont [15/16] 0.0, 128
      %593 = vxpose.xlu0.b32.end [16/16] 0.0, 128
      %v594 = vpop.trf.xlu0
      %v595 = vpop.trf.xlu0
      %v596 = vpop.trf.xlu0
      %v597 = vpop.trf.xlu0
      %v598 = vpop.trf.xlu0
      %v599 = vpop.trf.xlu0
      %v600 = vpop.trf.xlu0
      %v601 = vpop.trf.xlu0
      %v602 = vpop.trf.xlu0
      %v603 = vpop.trf.xlu0
      %v604 = vpop.trf.xlu0
      %v605 = vpop.trf.xlu0
      %v606 = vpop.trf.xlu0
      %v607 = vpop.trf.xlu0
      %v608 = vpop.trf.xlu0
      %v609 = vpop.trf.xlu0
      %v610 = vpack.c.bf16 %v594, %v594
      %v611 = vpack.c.bf16 %v576, %v576
      %v612 = vpack.c.bf16 %v577, %v577
      %vm613 = vcmask 23552
      %v615 = vsel %vm613, %v610, 0
      %v617 = vsel %vm573, 4294967295, 65535
      %v618 = vsel %vm279, %v617, 0
      %v620 = vand.u32 %v611, %v618
      %v623 = vand.u32 %v612, %v618
      %625 = vmatpush.bf16.msra.mxu0 0
      %626 = vmatpush.bf16.msra.mxu0 0
      %627 = vmatpush.bf16.msra.mxu0 0
      %628 = vmatpush.bf16.msra.mxu0 0
      %629 = vmatpush.bf16.msra.mxu0 0
      %630 = vmatpush.bf16.msra.mxu0 0
      %631 = vmatpush.bf16.msra.mxu0 0
      %632 = vmatpush.bf16.msra.mxu0 %v620
      %633 = vmatmul.bf16.gmra.mxu0 %v615
      %v634 = vpop.f32.mrf.mxu0
      %v635 = vadd.f32 0.0, %v634
      %v636 = vpop.f32.mrf.mxu0
      %637 = vdwg.mxu0
      %638 = vmatpush.bf16.msra.mxu0 0
      %639 = vmatpush.bf16.msra.mxu0 0
      %640 = vmatpush.bf16.msra.mxu0 0
      %641 = vmatpush.bf16.msra.mxu0 0
      %642 = vmatpush.bf16.msra.mxu0 0
      %643 = vmatpush.bf16.msra.mxu0 0
      %644 = vmatpush.bf16.msra.mxu0 0
      %645 = vmatpush.bf16.msra.mxu0 %v623
      %646 = vmatmul.bf16.gmra.mxu0 %v615
      %v647 = vpop.f32.mrf.mxu0
      %v648 = vadd.f32 0.0, %v647
      %v649 = vpop.f32.mrf.mxu0
      %650 = vdwg.mxu0
      %651 = vst [vmem:[%s268] sm:$0xff] %v635
      %652 = vst [vmem:[%s268 + $0x8] sm:$0xff] %v648
      %p653 = scmp.lt.s32.totalorder %s17, 1
      %s654 = scalar_select %p653, %s17, 1
      %s655 = smul.addr %s654, 2
      %s656 = smul.addr %s655, 8
      %s657 = scalar_lea.vmem %s6, %s656
      // Predicated region
      $region45: #{sica_dwt_forward.11} parent=43 // pred_check
        %p658 = pneg %p171
      $region46: #{sica_dwt_forward.11} parent=43 // pred_check_branch
        %660 = sbr.rel (%p658) target = $region48
      $region47: #{sica_dwt_forward.11} parent=43 // pred_region
        _
      $region48: #{sica_dwt_forward.11} parent=43 // pred_fallthru
        _
    $region44: #{sica_dwt_forward.11} parent=5 // pred_fallthru
      _
    %p661 = scmp.le.s32.totalorder 2, %s12
    // Predicated region
    $region49: #{sica_dwt_forward.11} parent=5 // pred_check
      %p662 = pneg %p661
    $region50: #{sica_dwt_forward.11} parent=5 // pred_check_branch
      %664 = sbr.rel (%p662) target = $region52
    $region51: #{sica_dwt_forward.11} parent=5 // pred_region
      %s665 = ssub.s32 %s12, 2
      // Predicated region
      $region53: #{sica_dwt_forward.11} parent=51 // pred_check
        %p666 = pneg %p177
      $region54: #{sica_dwt_forward.11} parent=51 // pred_check_branch
        %668 = sbr.rel (%p666) target = $region56
      $region55: #{sica_dwt_forward.11} parent=51 // pred_region
        %p669 = scmp.lt.s32.totalorder %s18, 1
        %s670 = scalar_select %p669, %s18, 1
        %s671 = smul.addr %s670, 2
        %s672 = smul.addr %s671, 8
        %s673 = scalar_lea.vmem %s6, %s672
      $region56: #{sica_dwt_forward.11} parent=51 // pred_fallthru
        _
    $region52: #{sica_dwt_forward.11} parent=5 // pred_fallthru
      _
  $region6: #{sica_dwt_forward.11} parent=0 // loop_footer
    %s16 = sadd.s32 1, %s12
  $region7: #{sica_dwt_forward.11} parent=0 // loop_footer_branch
    %11 = sbr.rel target = $region3
  $region8: #{sica_dwt_forward.11} parent=0 // loop_exit
    _

// kernel: sica_dwt_forward.15
$region0: #{sica_dwt_forward.15}
  #allocation0 [shape = 'u32[]', space=smem, size = 0x4, offset = 0x4, fixed_abs, tag = 'smem constant byte address 0x4 - core index']
  #allocation1 [shape = 'u32[72,128]{1,0:T(1,128)}', space=vmem, size = 0x9000, scoped, tag = 'internal scratch']
  %s0 = inlined_call_operand.vmem [shape: f32[512,8], index: 0, kind: input, shape index: {}]
  %s1 = inlined_call_operand.vmem [shape: bf16[8,3], index: 1, kind: input, shape index: {}]
  %s2 = inlined_call_operand.vmem [shape: f32[1,3], index: 2, kind: input, shape index: {}]
  %s3 = inlined_call_operand.vmem [shape: f32[512,3], index: 3, kind: output, shape index: {}]
  %s4 = sld [smem:[#allocation0]]
  $region45: #{sica_dwt_forward.15} parent=0
    _
  %s6 = ssub.s32 1, %s4
  %s7 = scalar_select 0, %s6, %s4
  loop: start=0, step=1, limit=4
  $region2: #{sica_dwt_forward.15} parent=0 // loop_pre_header
    _
  $region3: #{sica_dwt_forward.15} parent=0 // loop_header
    %s9 = sphi 0, %s13
    %p10 = scmp.ge.s32.totalorder %s9, 4
    %s19 = sphi 0, %s21
    %s22 = sphi 0, %s19
    %s23 = sphi 0, %s22
    %s39 = sphi 0, %s23
    %s43 = sphi 0, %s43
    %s45 = sphi 0, %s43
    %s46 = sphi 0, %s45
    %s60 = sphi 0, %s46
    %s64 = sphi 0, %s64
    %s66 = sphi 0, %s64
    %s67 = sphi 0, %s66
    %s81 = sphi 0, %s67
    %s87 = sphi 0, %s89
    %s90 = sphi 0, %s87
    %s91 = sphi 0, %s90
    %s107 = sphi 0, %s91
  $region4: #{sica_dwt_forward.15} parent=0 // loop_header_branch
    %12 = sbr.rel (%p10) target = $region8
  $region5: #{sica_dwt_forward.15} parent=0 // loop_body
    %s14 = ssub.s32 %s9, 1
    %s15 = ssub.s32 %s9, 2
    %s16 = sadd.s32 %s9, 1
    %s17 = ssub.s32 %s9, %s16
    %p18 = scmp.eq.s32.totalorder %s17, 0
    %s20 = sadd.s32 %s19, 1
    %s21 = scalar_select %p18, %s19, %s20
    %p24 = pneg %p18
    %p25 = scmp.eq.s32.totalorder %s9, 1
    %p26 = por %p24, %p25
    %p27 = scmp.ne.s32.totalorder %s19, %s22
    %p28 = scmp.eq.s32.totalorder %s9, 0
    %p29 = por %p27, %p28
    %p30 = scmp.ne.s32.totalorder %s19, %s22
    %p31 = scmp.eq.s32.totalorder %s14, 1
    %p32 = por %p30, %p31
    %p33 = scmp.ne.s32.totalorder %s22, %s23
    %p34 = scmp.eq.s32.totalorder %s14, 0
    %p35 = por %p33, %p34
    %p36 = scmp.ne.s32.totalorder %s22, %s23
    %p37 = scmp.eq.s32.totalorder %s15, 1
    %p38 = por %p36, %p37
    %p40 = scmp.ne.s32.totalorder %s23, %s39
    %p41 = scmp.eq.s32.totalorder %s15, 0
    %p42 = por %p40, %p41
    %s44 = sadd.s32 %s43, 1
    %p47 = scmp.eq.s32.totalorder %s9, 1
    %p48 = scmp.ne.s32.totalorder %s43, %s45
    %p49 = scmp.eq.s32.totalorder %s9, 0
    %p50 = por %p48, %p49
    %p51 = scmp.ne.s32.totalorder %s43, %s45
    %p52 = scmp.eq.s32.totalorder %s14, 1
    %p53 = por %p51, %p52
    %p54 = scmp.ne.s32.totalorder %s45, %s46
    %p55 = scmp.eq.s32.totalorder %s14, 0
    %p56 = por %p54, %p55
    %p57 = scmp.ne.s32.totalorder %s45, %s46
    %p58 = scmp.eq.s32.totalorder %s15, 1
    %p59 = por %p57, %p58
    %p61 = scmp.ne.s32.totalorder %s46, %s60
    %p62 = scmp.eq.s32.totalorder %s15, 0
    %p63 = por %p61, %p62
    %s65 = sadd.s32 %s64, 1
    %p68 = scmp.eq.s32.totalorder %s9, 1
    %p69 = scmp.ne.s32.totalorder %s64, %s66
    %p70 = scmp.eq.s32.totalorder %s9, 0
    %p71 = por %p69, %p70
    %p72 = scmp.ne.s32.totalorder %s64, %s66
    %p73 = scmp.eq.s32.totalorder %s14, 1
    %p74 = por %p72, %p73
    %p75 = scmp.ne.s32.totalorder %s66, %s67
    %p76 = scmp.eq.s32.totalorder %s14, 0
    %p77 = por %p75, %p76
    %p78 = scmp.ne.s32.totalorder %s66, %s67
    %p79 = scmp.eq.s32.totalorder %s15, 1
    %p80 = por %p78, %p79
    %p82 = scmp.ne.s32.totalorder %s67, %s81
    %p83 = scmp.eq.s32.totalorder %s15, 0
    %p84 = por %p82, %p83
    %s85 = ssub.s32 %s9, %s16
    %p86 = scmp.eq.s32.totalorder %s85, 0
    %s88 = sadd.s32 %s87, 1
    %s89 = scalar_select %p86, %s87, %s88
    %p92 = pneg %p86
    %p93 = scmp.eq.s32.totalorder %s9, 1
    %p94 = por %p92, %p93
    %p95 = scmp.ne.s32.totalorder %s87, %s90
    %p96 = scmp.eq.s32.totalorder %s9, 0
    %p97 = por %p95, %p96
    %p98 = scmp.ne.s32.totalorder %s87, %s90
    %p99 = scmp.eq.s32.totalorder %s14, 1
    %p100 = por %p98, %p99
    %p101 = scmp.ne.s32.totalorder %s90, %s91
    %p102 = scmp.eq.s32.totalorder %s14, 0
    %p103 = por %p101, %p102
    %p104 = scmp.ne.s32.totalorder %s90, %s91
    %p105 = scmp.eq.s32.totalorder %s15, 1
    %p106 = por %p104, %p105
    %p108 = scmp.ne.s32.totalorder %s91, %s107
    %p109 = scmp.eq.s32.totalorder %s15, 0
    %p110 = por %p108, %p109
    %p111 = scmp.le.s32.totalorder 1, %s9
    %p112 = scmp.lt.s32.totalorder %s9, 3
    %p113 = pnand %p111, %p112
    %p114 = pneg %p113
    // Predicated region
    $region9: #{sica_dwt_forward.15} parent=5 // pred_check
      _
    $region10: #{sica_dwt_forward.15} parent=5 // pred_check_branch
      %116 = sbr.rel (%p113) target = $region12
    $region11: #{sica_dwt_forward.15} parent=5 // pred_region
      %s117 = ssub.s32 %s9, 1
      // Predicated region
      $region13: #{sica_dwt_forward.15} parent=11 // pred_check
        %p118 = pneg %p56
      $region14: #{sica_dwt_forward.15} parent=11 // pred_check_branch
        %120 = sbr.rel (%p118) target = $region16
      $region15: #{sica_dwt_forward.15} parent=11 // pred_region
        _
      $region16: #{sica_dwt_forward.15} parent=11 // pred_fallthru
        _
      // Predicated region
      $region17: #{sica_dwt_forward.15} parent=11 // pred_check
        %p121 = pneg %p77
      $region18: #{sica_dwt_forward.15} parent=11 // pred_check_branch
        %123 = sbr.rel (%p121) target = $region20
      $region19: #{sica_dwt_forward.15} parent=11 // pred_region
        _
      $region20: #{sica_dwt_forward.15} parent=11 // pred_fallthru
        _
    $region12: #{sica_dwt_forward.15} parent=5 // pred_fallthru
      _
    %p124 = scmp.lt.s32.totalorder %s9, 2
    // Predicated region
    $region21: #{sica_dwt_forward.15} parent=5 // pred_check
      %p125 = pneg %p124
    $region22: #{sica_dwt_forward.15} parent=5 // pred_check_branch
      %127 = sbr.rel (%p125) target = $region24
    $region23: #{sica_dwt_forward.15} parent=5 // pred_region
      // Predicated region
      $region25: #{sica_dwt_forward.15} parent=23 // pred_check
        %p128 = pneg %p29
      $region26: #{sica_dwt_forward.15} parent=23 // pred_check_branch
        %130 = sbr.rel (%p128) target = $region28
      $region27: #{sica_dwt_forward.15} parent=23 // pred_region
        %s131 = smul.u32 32, %s9
        %p132 = scmp.lt.s32.totalorder %s131, 63
        %s133 = scalar_select %p132, %s131, 63
        %s134 = smul.addr %s133, 8
        %s135 = scalar_lea.vmem %s0, %s134
        %s136 = smul.u32 32, %s9
      $region28: #{sica_dwt_forward.15} parent=23 // pred_fallthru
        _
    $region24: #{sica_dwt_forward.15} parent=5 // pred_fallthru
      _
    %p137 = scmp.le.s32.totalorder 1, %s9
    %p138 = scmp.lt.s32.totalorder %s9, 3
    %p139 = pnand %p137, %p138
    %p140 = pneg %p139
    // Predicated region
    $region29: #{sica_dwt_forward.15} parent=5 // pred_check
      _
    $region30: #{sica_dwt_forward.15} parent=5 // pred_check_branch
      %142 = sbr.rel (%p139) target = $region32
    $region31: #{sica_dwt_forward.15} parent=5 // pred_region
      %s143 = ssub.s32 %s9, 1
      %s144 = smul.u32 32, %s14
      %p145 = scmp.lt.s32.totalorder %s144, 63
      %s146 = scalar_select %p145, %s144, 63
      %s147 = smul.addr %s146, 8
      %s148 = scalar_lea.vmem %s0, %s147
      %p149 = pneg %p35
      %p150 = pneg %p32
      %p151 = pneg %p56
      %p152 = pneg %p53
      %p153 = pneg %p77
      %p154 = pneg %p74
      %p155 = pneg %p103
      %p156 = pneg %p100
      %s157 = smul.u32 32, %s14
      %p158 = scmp.lt.s32.totalorder %s157, 63
      %s159 = scalar_select %p158, %s157, 63
      %s160 = smul.addr %s159, 8
      %s161 = scalar_lea.vmem %s3, %s160
      %s162 = smul.u32 32, %s14
      %p163 = scmp.lt.s32.totalorder %s162, 63
      %s164 = scalar_select %p163, %s162, 63
      %s165 = smul.addr %s164, 8
      %s166 = scalar_lea.vmem %s0, %s165
      %s167 = smul.u32 32, %s14
      %s168 = smul.u32 32, %s14
      %p169 = scmp.lt.s32.totalorder %s168, 63
      %s170 = scalar_select %p169, %s168, 63
      %s171 = smul.addr %s170, 8
      %s172 = scalar_lea.vmem %s3, %s171
      %s173 = smul.u32 32, %s14
      %v175 = vld [vmem:[%s166] sm:$0xff]
      %v176 = vld [vmem:[%s166 + $0x8] sm:$0xff]
      %v177 = vld [vmem:[%s166 + $0x10] sm:$0xff]
      %v178 = vld [vmem:[%s166 + $0x18] sm:$0xff]
      %v179 = vld [vmem:[%s166 + $0x20] sm:$0xff]
      %v180 = vld [vmem:[%s166 + $0x28] sm:$0xff]
      %v181 = vld [vmem:[%s166 + $0x30] sm:$0xff]
      %v182 = vld [vmem:[%s166 + $0x38] sm:$0xff]
      %v183 = vld [vmem:[%s166 + $0x40] sm:$0xff]
      %v184 = vld [vmem:[%s166 + $0x48] sm:$0xff]
      %v185 = vld [vmem:[%s166 + $0x50] sm:$0xff]
      %v186 = vld [vmem:[%s166 + $0x58] sm:$0xff]
      %v187 = vld [vmem:[%s166 + $0x60] sm:$0xff]
      %v188 = vld [vmem:[%s166 + $0x68] sm:$0xff]
      %v189 = vld [vmem:[%s166 + $0x70] sm:$0xff]
      %v190 = vld [vmem:[%s166 + $0x78] sm:$0xff]
      %v191 = vld [vmem:[%s166 + $0x80] sm:$0xff]
      %v192 = vld [vmem:[%s166 + $0x88] sm:$0xff]
      %v193 = vld [vmem:[%s166 + $0x90] sm:$0xff]
      %v194 = vld [vmem:[%s166 + $0x98] sm:$0xff]
      %v195 = vld [vmem:[%s166 + $0xa0] sm:$0xff]
      %v196 = vld [vmem:[%s166 + $0xa8] sm:$0xff]
      %v197 = vld [vmem:[%s166 + $0xb0] sm:$0xff]
      %v198 = vld [vmem:[%s166 + $0xb8] sm:$0xff]
      %v199 = vld [vmem:[%s166 + $0xc0] sm:$0xff]
      %v200 = vld [vmem:[%s166 + $0xc8] sm:$0xff]
      %v201 = vld [vmem:[%s166 + $0xd0] sm:$0xff]
      %v202 = vld [vmem:[%s166 + $0xd8] sm:$0xff]
      %v203 = vld [vmem:[%s166 + $0xe0] sm:$0xff]
      %v204 = vld [vmem:[%s166 + $0xe8] sm:$0xff]
      %v205 = vld [vmem:[%s166 + $0xf0] sm:$0xff]
      %v206 = vld [vmem:[%s166 + $0xf8] sm:$0xff]
      %v207 = vpack.c.bf16 %v176, %v175
      %v208 = vpack.c.bf16 %v178, %v177
      %v209 = vpack.c.bf16 %v180, %v179
      %v210 = vpack.c.bf16 %v182, %v181
      %v211 = vpack.c.bf16 %v184, %v183
      %v212 = vpack.c.bf16 %v186, %v185
      %v213 = vpack.c.bf16 %v188, %v187
      %v214 = vpack.c.bf16 %v190, %v189
      %v215 = vpack.c.bf16 %v192, %v191
      %v216 = vpack.c.bf16 %v194, %v193
      %v217 = vpack.c.bf16 %v196, %v195
      %v218 = vpack.c.bf16 %v198, %v197
      %v219 = vpack.c.bf16 %v200, %v199
      %v220 = vpack.c.bf16 %v202, %v201
      %v221 = vpack.c.bf16 %v204, %v203
      %v222 = vpack.c.bf16 %v206, %v205
      %v223 = vld [vmem:[%s1] sm:$0xf]
      %v224 = vld [vmem:[%s2] sm:$0x1]
      %v226 = vperm.slane %v224, 0
      %vm228 = vcmask 64512
      %v230 = vsel %vm228, %v207, 0
      %v233 = vsel %vm228, %v208, 0
      %v236 = vsel %vm228, %v209, 0
      %v239 = vsel %vm228, %v210, 0
      %v242 = vsel %vm228, %v211, 0
      %v245 = vsel %vm228, %v212, 0
      %v248 = vsel %vm228, %v213, 0
      %v251 = vsel %vm228, %v214, 0
      %v254 = vsel %vm228, %v215, 0
      %v257 = vsel %vm228, %v216, 0
      %v260 = vsel %vm228, %v217, 0
      %v263 = vsel %vm228, %v218, 0
      %v266 = vsel %vm228, %v219, 0
      %v269 = vsel %vm228, %v220, 0
      %v272 = vsel %vm228, %v221, 0
      %v275 = vsel %vm228, %v222, 0
      %vm277 = vcmask 1043456
      %v279 = vsel %vm277, %v223, 0
      %281 = vmatpush.bf16.msra.mxu0 0
      %282 = vmatpush.bf16.msra.mxu0 0
      %283 = vmatpush.bf16.msra.mxu0 0
      %284 = vmatpush.bf16.msra.mxu0 0
      %285 = vmatpush.bf16.msra.mxu0 0
      %286 = vmatpush.bf16.msra.mxu0 0
      %287 = vmatpush.bf16.msra.mxu0 0
      %288 = vmatpush.bf16.msra.mxu0 %v279
      %289 = vmatmul.bf16.gmra.mxu0 %v230
      %v290 = vpop.f32.mrf.mxu0
      %v291 = vadd.f32 %v226, %v290
      %v292 = vpop.f32.mrf.mxu0
      %v293 = vadd.f32 %v226, %v292
      %294 = vmatmul.bf16.gmra.mxu0 %v233
      %v295 = vpop.f32.mrf.mxu0
      %v296 = vadd.f32 %v226, %v295
      %v297 = vpop.f32.mrf.mxu0
      %v298 = vadd.f32 %v226, %v297
      %299 = vmatmul.bf16.gmra.mxu0 %v236
      %v300 = vpop.f32.mrf.mxu0
      %v301 = vadd.f32 %v226, %v300
      %v302 = vpop.f32.mrf.mxu0
      %v303 = vadd.f32 %v226, %v302
      %304 = vmatmul.bf16.gmra.mxu0 %v239
      %v305 = vpop.f32.mrf.mxu0
      %v306 = vadd.f32 %v226, %v305
      %v307 = vpop.f32.mrf.mxu0
      %v308 = vadd.f32 %v226, %v307
      %309 = vmatmul.bf16.gmra.mxu0 %v242
      %v310 = vpop.f32.mrf.mxu0
      %v311 = vadd.f32 %v226, %v310
      %v312 = vpop.f32.mrf.mxu0
      %v313 = vadd.f32 %v226, %v312
      %314 = vmatmul.bf16.gmra.mxu0 %v245
      %v315 = vpop.f32.mrf.mxu0
      %v316 = vadd.f32 %v226, %v315
      %v317 = vpop.f32.mrf.mxu0
      %v318 = vadd.f32 %v226, %v317
      %319 = vmatmul.bf16.gmra.mxu0 %v248
      %v320 = vpop.f32.mrf.mxu0
      %v321 = vadd.f32 %v226, %v320
      %v322 = vpop.f32.mrf.mxu0
      %v323 = vadd.f32 %v226, %v322
      %324 = vmatmul.bf16.gmra.mxu0 %v251
      %v325 = vpop.f32.mrf.mxu0
      %v326 = vadd.f32 %v226, %v325
      %v327 = vpop.f32.mrf.mxu0
      %v328 = vadd.f32 %v226, %v327
      %329 = vmatmul.bf16.gmra.mxu0 %v254
      %v330 = vpop.f32.mrf.mxu0
      %v331 = vadd.f32 %v226, %v330
      %v332 = vpop.f32.mrf.mxu0
      %v333 = vadd.f32 %v226, %v332
      %334 = vmatmul.bf16.gmra.mxu0 %v257
      %v335 = vpop.f32.mrf.mxu0
      %v336 = vadd.f32 %v226, %v335
      %v337 = vpop.f32.mrf.mxu0
      %v338 = vadd.f32 %v226, %v337
      %339 = vmatmul.bf16.gmra.mxu0 %v260
      %v340 = vpop.f32.mrf.mxu0
      %v341 = vadd.f32 %v226, %v340
      %v342 = vpop.f32.mrf.mxu0
      %v343 = vadd.f32 %v226, %v342
      %344 = vmatmul.bf16.gmra.mxu0 %v263
      %v345 = vpop.f32.mrf.mxu0
      %v346 = vadd.f32 %v226, %v345
      %v347 = vpop.f32.mrf.mxu0
      %v348 = vadd.f32 %v226, %v347
      %349 = vmatmul.bf16.gmra.mxu0 %v266
      %v350 = vpop.f32.mrf.mxu0
      %v351 = vadd.f32 %v226, %v350
      %v352 = vpop.f32.mrf.mxu0
      %v353 = vadd.f32 %v226, %v352
      %354 = vmatmul.bf16.gmra.mxu0 %v269
      %v355 = vpop.f32.mrf.mxu0
      %v356 = vadd.f32 %v226, %v355
      %v357 = vpop.f32.mrf.mxu0
      %v358 = vadd.f32 %v226, %v357
      %359 = vmatmul.bf16.gmra.mxu0 %v272
      %v360 = vpop.f32.mrf.mxu0
      %v361 = vadd.f32 %v226, %v360
      %v362 = vpop.f32.mrf.mxu0
      %v363 = vadd.f32 %v226, %v362
      %364 = vmatmul.bf16.gmra.mxu0 %v275
      %v365 = vpop.f32.mrf.mxu0
      %v366 = vadd.f32 %v226, %v365
      %v367 = vpop.f32.mrf.mxu0
      %v368 = vadd.f32 %v226, %v367
      %369 = vdwg.mxu0
      %vm370 = vcmask 23552
      %371 = vst.msk [vmem:[%s172] sm:$0xff] %vm370, %v291
      %372 = vst.msk [vmem:[%s172 + $0x8] sm:$0xff] %vm370, %v293
      %373 = vst.msk [vmem:[%s172 + $0x10] sm:$0xff] %vm370, %v296
      %374 = vst.msk [vmem:[%s172 + $0x18] sm:$0xff] %vm370, %v298
      %375 = vst.msk [vmem:[%s172 + $0x20] sm:$0xff] %vm370, %v301
      %376 = vst.msk [vmem:[%s172 + $0x28] sm:$0xff] %vm370, %v303
      %377 = vst.msk [vmem:[%s172 + $0x30] sm:$0xff] %vm370, %v306
      %378 = vst.msk [vmem:[%s172 + $0x38] sm:$0xff] %vm370, %v308
      %379 = vst.msk [vmem:[%s172 + $0x40] sm:$0xff] %vm370, %v311
      %380 = vst.msk [vmem:[%s172 + $0x48] sm:$0xff] %vm370, %v313
      %381 = vst.msk [vmem:[%s172 + $0x50] sm:$0xff] %vm370, %v316
      %382 = vst.msk [vmem:[%s172 + $0x58] sm:$0xff] %vm370, %v318
      %383 = vst.msk [vmem:[%s172 + $0x60] sm:$0xff] %vm370, %v321
      %384 = vst.msk [vmem:[%s172 + $0x68] sm:$0xff] %vm370, %v323
      %385 = vst.msk [vmem:[%s172 + $0x70] sm:$0xff] %vm370, %v326
      %386 = vst.msk [vmem:[%s172 + $0x78] sm:$0xff] %vm370, %v328
      %387 = vst.msk [vmem:[%s172 + $0x80] sm:$0xff] %vm370, %v331
      %388 = vst.msk [vmem:[%s172 + $0x88] sm:$0xff] %vm370, %v333
      %389 = vst.msk [vmem:[%s172 + $0x90] sm:$0xff] %vm370, %v336
      %390 = vst.msk [vmem:[%s172 + $0x98] sm:$0xff] %vm370, %v338
      %391 = vst.msk [vmem:[%s172 + $0xa0] sm:$0xff] %vm370, %v341
      %392 = vst.msk [vmem:[%s172 + $0xa8] sm:$0xff] %vm370, %v343
      %393 = vst.msk [vmem:[%s172 + $0xb0] sm:$0xff] %vm370, %v346
      %394 = vst.msk [vmem:[%s172 + $0xb8] sm:$0xff] %vm370, %v348
      %395 = vst.msk [vmem:[%s172 + $0xc0] sm:$0xff] %vm370, %v351
      %396 = vst.msk [vmem:[%s172 + $0xc8] sm:$0xff] %vm370, %v353
      %397 = vst.msk [vmem:[%s172 + $0xd0] sm:$0xff] %vm370, %v356
      %398 = vst.msk [vmem:[%s172 + $0xd8] sm:$0xff] %vm370, %v358
      %399 = vst.msk [vmem:[%s172 + $0xe0] sm:$0xff] %vm370, %v361
      %400 = vst.msk [vmem:[%s172 + $0xe8] sm:$0xff] %vm370, %v363
      %401 = vst.msk [vmem:[%s172 + $0xf0] sm:$0xff] %vm370, %v366
      %402 = vst.msk [vmem:[%s172 + $0xf8] sm:$0xff] %vm370, %v368
      %s403 = smul.u32 32, %s14
      %p404 = scmp.lt.s32.totalorder %s403, 63
      %s405 = scalar_select %p404, %s403, 63
      %s406 = smul.addr %s405, 8
      %s407 = scalar_lea.vmem %s3, %s406
      // Predicated region
      $region33: #{sica_dwt_forward.15} parent=31 // pred_check
        %p408 = pneg %p100
      $region34: #{sica_dwt_forward.15} parent=31 // pred_check_branch
        %410 = sbr.rel (%p408) target = $region36
      $region35: #{sica_dwt_forward.15} parent=31 // pred_region
        %s411 = smul.u32 32, %s14
      $region36: #{sica_dwt_forward.15} parent=31 // pred_fallthru
        _
    $region32: #{sica_dwt_forward.15} parent=5 // pred_fallthru
      _
    %p412 = scmp.le.s32.totalorder 2, %s9
    // Predicated region
    $region37: #{sica_dwt_forward.15} parent=5 // pred_check
      %p413 = pneg %p412
    $region38: #{sica_dwt_forward.15} parent=5 // pred_check_branch
      %415 = sbr.rel (%p413) target = $region40
    $region39: #{sica_dwt_forward.15} parent=5 // pred_region
      %s416 = ssub.s32 %s9, 2
      // Predicated region
      $region41: #{sica_dwt_forward.15} parent=39 // pred_check
        %p417 = pneg %p106
      $region42: #{sica_dwt_forward.15} parent=39 // pred_check_branch
        %419 = sbr.rel (%p417) target = $region44
      $region43: #{sica_dwt_forward.15} parent=39 // pred_region
        %s420 = smul.u32 32, %s15
        %p421 = scmp.lt.s32.totalorder %s420, 63
        %s422 = scalar_select %p421, %s420, 63
        %s423 = smul.addr %s422, 8
        %s424 = scalar_lea.vmem %s3, %s423
      $region44: #{sica_dwt_forward.15} parent=39 // pred_fallthru
        _
    $region40: #{sica_dwt_forward.15} parent=5 // pred_fallthru
      _
  $region6: #{sica_dwt_forward.15} parent=0 // loop_footer
    %s13 = sadd.s32 1, %s9
  $region7: #{sica_dwt_forward.15} parent=0 // loop_footer_branch
    %8 = sbr.rel target = $region3
  $region8: #{sica_dwt_forward.15} parent=0 // loop_exit
    _

// kernel: sica_dwt_forward.13
$region0: #{sica_dwt_forward.13}
  #allocation0 [shape = 'u32[]', space=smem, size = 0x4, offset = 0x4, fixed_abs, tag = 'smem constant byte address 0x4 - core index']
  #allocation1 [shape = 'u32[72,128]{1,0:T(1,128)}', space=vmem, size = 0x9000, scoped, tag = 'internal scratch']
  %s0 = inlined_call_operand.vmem [shape: f32[2,18,18,12], index: 0, kind: input, shape index: {}]
  %s1 = inlined_call_operand.vmem [shape: bf16[9,12,8], index: 1, kind: input, shape index: {}]
  %s2 = inlined_call_operand.vmem [shape: f32[1,8], index: 2, kind: input, shape index: {}]
  %s3 = inlined_call_operand.vmem [shape: f32[2,16,16,8], index: 3, kind: output, shape index: {}]
  %s4 = sld [smem:[#allocation0]]
  $region45: #{sica_dwt_forward.13} parent=0
    _
  %s6 = ssub.s32 1, %s4
  %s7 = scalar_select 0, %s6, %s4
  loop: start=0, step=1, limit=4
  $region2: #{sica_dwt_forward.13} parent=0 // loop_pre_header
    _
  $region3: #{sica_dwt_forward.13} parent=0 // loop_header
    %s9 = sphi 0, %s13
    %p10 = scmp.ge.s32.totalorder %s9, 4
    %s19 = sphi 0, %s21
    %s22 = sphi 0, %s19
    %s23 = sphi 0, %s22
    %s39 = sphi 0, %s23
    %s43 = sphi 0, %s43
    %s45 = sphi 0, %s43
    %s46 = sphi 0, %s45
    %s60 = sphi 0, %s46
    %s64 = sphi 0, %s64
    %s66 = sphi 0, %s64
    %s67 = sphi 0, %s66
    %s81 = sphi 0, %s67
    %s87 = sphi 0, %s89
    %s90 = sphi 0, %s87
    %s91 = sphi 0, %s90
    %s107 = sphi 0, %s91
  $region4: #{sica_dwt_forward.13} parent=0 // loop_header_branch
    %12 = sbr.rel (%p10) target = $region8
  $region5: #{sica_dwt_forward.13} parent=0 // loop_body
    %s14 = ssub.s32 %s9, 1
    %s15 = ssub.s32 %s9, 2
    %s16 = sadd.s32 %s9, 1
    %s17 = ssub.s32 %s9, %s16
    %p18 = scmp.eq.s32.totalorder %s17, 0
    %s20 = sadd.s32 %s19, 1
    %s21 = scalar_select %p18, %s19, %s20
    %p24 = pneg %p18
    %p25 = scmp.eq.s32.totalorder %s9, 1
    %p26 = por %p24, %p25
    %p27 = scmp.ne.s32.totalorder %s19, %s22
    %p28 = scmp.eq.s32.totalorder %s9, 0
    %p29 = por %p27, %p28
    %p30 = scmp.ne.s32.totalorder %s19, %s22
    %p31 = scmp.eq.s32.totalorder %s14, 1
    %p32 = por %p30, %p31
    %p33 = scmp.ne.s32.totalorder %s22, %s23
    %p34 = scmp.eq.s32.totalorder %s14, 0
    %p35 = por %p33, %p34
    %p36 = scmp.ne.s32.totalorder %s22, %s23
    %p37 = scmp.eq.s32.totalorder %s15, 1
    %p38 = por %p36, %p37
    %p40 = scmp.ne.s32.totalorder %s23, %s39
    %p41 = scmp.eq.s32.totalorder %s15, 0
    %p42 = por %p40, %p41
    %s44 = sadd.s32 %s43, 1
    %p47 = scmp.eq.s32.totalorder %s9, 1
    %p48 = scmp.ne.s32.totalorder %s43, %s45
    %p49 = scmp.eq.s32.totalorder %s9, 0
    %p50 = por %p48, %p49
    %p51 = scmp.ne.s32.totalorder %s43, %s45
    %p52 = scmp.eq.s32.totalorder %s14, 1
    %p53 = por %p51, %p52
    %p54 = scmp.ne.s32.totalorder %s45, %s46
    %p55 = scmp.eq.s32.totalorder %s14, 0
    %p56 = por %p54, %p55
    %p57 = scmp.ne.s32.totalorder %s45, %s46
    %p58 = scmp.eq.s32.totalorder %s15, 1
    %p59 = por %p57, %p58
    %p61 = scmp.ne.s32.totalorder %s46, %s60
    %p62 = scmp.eq.s32.totalorder %s15, 0
    %p63 = por %p61, %p62
    %s65 = sadd.s32 %s64, 1
    %p68 = scmp.eq.s32.totalorder %s9, 1
    %p69 = scmp.ne.s32.totalorder %s64, %s66
    %p70 = scmp.eq.s32.totalorder %s9, 0
    %p71 = por %p69, %p70
    %p72 = scmp.ne.s32.totalorder %s64, %s66
    %p73 = scmp.eq.s32.totalorder %s14, 1
    %p74 = por %p72, %p73
    %p75 = scmp.ne.s32.totalorder %s66, %s67
    %p76 = scmp.eq.s32.totalorder %s14, 0
    %p77 = por %p75, %p76
    %p78 = scmp.ne.s32.totalorder %s66, %s67
    %p79 = scmp.eq.s32.totalorder %s15, 1
    %p80 = por %p78, %p79
    %p82 = scmp.ne.s32.totalorder %s67, %s81
    %p83 = scmp.eq.s32.totalorder %s15, 0
    %p84 = por %p82, %p83
    %s85 = ssub.s32 %s9, %s16
    %p86 = scmp.eq.s32.totalorder %s85, 0
    %s88 = sadd.s32 %s87, 1
    %s89 = scalar_select %p86, %s87, %s88
    %p92 = pneg %p86
    %p93 = scmp.eq.s32.totalorder %s9, 1
    %p94 = por %p92, %p93
    %p95 = scmp.ne.s32.totalorder %s87, %s90
    %p96 = scmp.eq.s32.totalorder %s9, 0
    %p97 = por %p95, %p96
    %p98 = scmp.ne.s32.totalorder %s87, %s90
    %p99 = scmp.eq.s32.totalorder %s14, 1
    %p100 = por %p98, %p99
    %p101 = scmp.ne.s32.totalorder %s90, %s91
    %p102 = scmp.eq.s32.totalorder %s14, 0
    %p103 = por %p101, %p102
    %p104 = scmp.ne.s32.totalorder %s90, %s91
    %p105 = scmp.eq.s32.totalorder %s15, 1
    %p106 = por %p104, %p105
    %p108 = scmp.ne.s32.totalorder %s91, %s107
    %p109 = scmp.eq.s32.totalorder %s15, 0
    %p110 = por %p108, %p109
    %p111 = scmp.le.s32.totalorder 1, %s9
    %p112 = scmp.lt.s32.totalorder %s9, 3
    %p113 = pnand %p111, %p112
    %p114 = pneg %p113
    // Predicated region
    $region9: #{sica_dwt_forward.13} parent=5 // pred_check
      _
    $region10: #{sica_dwt_forward.13} parent=5 // pred_check_branch
      %116 = sbr.rel (%p113) target = $region12
    $region11: #{sica_dwt_forward.13} parent=5 // pred_region
      %s117 = ssub.s32 %s9, 1
      // Predicated region
      $region13: #{sica_dwt_forward.13} parent=11 // pred_check
        %p118 = pneg %p56
      $region14: #{sica_dwt_forward.13} parent=11 // pred_check_branch
        %120 = sbr.rel (%p118) target = $region16
      $region15: #{sica_dwt_forward.13} parent=11 // pred_region
        _
      $region16: #{sica_dwt_forward.13} parent=11 // pred_fallthru
        _
      // Predicated region
      $region17: #{sica_dwt_forward.13} parent=11 // pred_check
        %p121 = pneg %p77
      $region18: #{sica_dwt_forward.13} parent=11 // pred_check_branch
        %123 = sbr.rel (%p121) target = $region20
      $region19: #{sica_dwt_forward.13} parent=11 // pred_region
        _
      $region20: #{sica_dwt_forward.13} parent=11 // pred_fallthru
        _
    $region12: #{sica_dwt_forward.13} parent=5 // pred_fallthru
      _
    %p124 = scmp.lt.s32.totalorder %s9, 2
    // Predicated region
    $region21: #{sica_dwt_forward.13} parent=5 // pred_check
      %p125 = pneg %p124
    $region22: #{sica_dwt_forward.13} parent=5 // pred_check_branch
      %127 = sbr.rel (%p125) target = $region24
    $region23: #{sica_dwt_forward.13} parent=5 // pred_region
      // Predicated region
      $region25: #{sica_dwt_forward.13} parent=23 // pred_check
        %p128 = pneg %p29
      $region26: #{sica_dwt_forward.13} parent=23 // pred_check_branch
        %130 = sbr.rel (%p128) target = $region28
      $region27: #{sica_dwt_forward.13} parent=23 // pred_region
        %p131 = scmp.lt.s32.totalorder %s9, 1
        %s132 = scalar_select %p131, %s9, 1
        %s133 = smul.addr %s132, 54
        %s134 = smul.addr %s133, 8
        %s135 = scalar_lea.vmem %s0, %s134
      $region28: #{sica_dwt_forward.13} parent=23 // pred_fallthru
        _
    $region24: #{sica_dwt_forward.13} parent=5 // pred_fallthru
      _
    %p136 = scmp.le.s32.totalorder 1, %s9
    %p137 = scmp.lt.s32.totalorder %s9, 3
    %p138 = pnand %p136, %p137
    %p139 = pneg %p138
    // Predicated region
    $region29: #{sica_dwt_forward.13} parent=5 // pred_check
      _
    $region30: #{sica_dwt_forward.13} parent=5 // pred_check_branch
      %141 = sbr.rel (%p138) target = $region32
    $region31: #{sica_dwt_forward.13} parent=5 // pred_region
      %s142 = ssub.s32 %s9, 1
      %p143 = scmp.lt.s32.totalorder %s14, 1
      %s144 = scalar_select %p143, %s14, 1
      %s145 = smul.addr %s144, 54
      %s146 = smul.addr %s145, 8
      %s147 = scalar_lea.vmem %s0, %s146
      %p148 = pneg %p35
      %p149 = pneg %p32
      %p150 = pneg %p56
      %p151 = pneg %p53
      %p152 = pneg %p77
      %p153 = pneg %p74
      %p154 = pneg %p103
      %p155 = pneg %p100
      %p156 = scmp.lt.s32.totalorder %s14, 1
      %s157 = scalar_select %p156, %s14, 1
      %s158 = smul.addr %s157, 32
      %s159 = smul.addr %s158, 8
      %s160 = scalar_lea.vmem %s3, %s159
      %p161 = scmp.lt.s32.totalorder %s14, 1
      %s162 = scalar_select %p161, %s14, 1
      %s163 = smul.addr %s162, 54
      %s164 = smul.addr %s163, 8
      %s165 = scalar_lea.vmem %s0, %s164
      %p166 = scmp.lt.s32.totalorder %s14, 1
      %s167 = scalar_select %p166, %s14, 1
      %s168 = smul.addr %s167, 32
      %s169 = smul.addr %s168, 8
      %s170 = scalar_lea.vmem %s3, %s169
      %v172 = vld [vmem:[%s165] sm:$0xff]
      %v173 = vld [vmem:[%s165 + $0x8] sm:$0xff]
      %v174 = vld [vmem:[%s165 + $0x18] sm:$0xff]
      %v175 = vld [vmem:[%s165 + $0x20] sm:$0xff]
      %v176 = vld [vmem:[%s165 + $0x30] sm:$0xff]
      %v177 = vld [vmem:[%s165 + $0x38] sm:$0xff]
      %v178 = vld [vmem:[%s165 + $0x48] sm:$0xff]
      %v179 = vld [vmem:[%s165 + $0x50] sm:$0xff]
      %v180 = vld [vmem:[%s165 + $0x60] sm:$0xff]
      %v181 = vld [vmem:[%s165 + $0x68] sm:$0xff]
      %v182 = vld [vmem:[%s165 + $0x78] sm:$0xff]
      %v183 = vld [vmem:[%s165 + $0x80] sm:$0xff]
      %v184 = vld [vmem:[%s165 + $0x90] sm:$0xff]
      %v185 = vld [vmem:[%s165 + $0x98] sm:$0xff]
      %v186 = vld [vmem:[%s165 + $0xa8] sm:$0xff]
      %v187 = vld [vmem:[%s165 + $0xb0] sm:$0xff]
      %v188 = vld [vmem:[%s165 + $0xc0] sm:$0xff]
      %v189 = vld [vmem:[%s165 + $0xc8] sm:$0xff]
      %v190 = vld [vmem:[%s165 + $0xd8] sm:$0xff]
      %v191 = vld [vmem:[%s165 + $0xe0] sm:$0xff]
      %v192 = vld [vmem:[%s165 + $0xf0] sm:$0xff]
      %v193 = vld [vmem:[%s165 + $0xf8] sm:$0xff]
      %v194 = vld [vmem:[%s165 + $0x108] sm:$0xff]
      %v195 = vld [vmem:[%s165 + $0x110] sm:$0xff]
      %v196 = vld [vmem:[%s165 + $0x120] sm:$0xff]
      %v197 = vld [vmem:[%s165 + $0x128] sm:$0xff]
      %v198 = vld [vmem:[%s165 + $0x138] sm:$0xff]
      %v199 = vld [vmem:[%s165 + $0x140] sm:$0xff]
      %v200 = vld [vmem:[%s165 + $0x150] sm:$0xff]
      %v201 = vld [vmem:[%s165 + $0x158] sm:$0xff]
      %v202 = vld [vmem:[%s165 + $0x168] sm:$0xff]
      %v203 = vld [vmem:[%s165 + $0x170] sm:$0xff]
      %v204 = vpack.c.bf16 %v173, %v172
      %v205 = vpack.c.bf16 %v175, %v174
      %v206 = vpack.c.bf16 %v177, %v176
      %v207 = vpack.c.bf16 %v179, %v178
      %v208 = vpack.c.bf16 %v181, %v180
      %v209 = vpack.c.bf16 %v183, %v182
      %v210 = vpack.c.bf16 %v185, %v184
      %v211 = vpack.c.bf16 %v187, %v186
      %v212 = vpack.c.bf16 %v189, %v188
      %v213 = vpack.c.bf16 %v191, %v190
      %v214 = vpack.c.bf16 %v193, %v192
      %v215 = vpack.c.bf16 %v195, %v194
      %v216 = vpack.c.bf16 %v197, %v196
      %v217 = vpack.c.bf16 %v199, %v198
      %v218 = vpack.c.bf16 %v201, %v200
      %v219 = vpack.c.bf16 %v203, %v202
      %v220 = vld [vmem:[%s1] sm:$0xf]
      %v221 = vld [vmem:[%s1 + $0x4] sm:$0x3]
      %v222 = vld [vmem:[%s165 + $0x1] sm:$0xff]
      %v223 = vld [vmem:[%s165 + $0x9] sm:$0xff]
      %v224 = vld [vmem:[%s165 + $0x19] sm:$0xff]
      %v225 = vld [vmem:[%s165 + $0x21] sm:$0xff]
      %v226 = vld [vmem:[%s165 + $0x31] sm:$0xff]
      %v227 = vld [vmem:[%s165 + $0x39] sm:$0xff]
      %v228 = vld [vmem:[%s165 + $0x49] sm:$0xff]
      %v229 = vld [vmem:[%s165 + $0x51] sm:$0xff]
      %v230 = vld [vmem:[%s165 + $0x61] sm:$0xff]
      %v231 = vld [vmem:[%s165 + $0x69] sm:$0xff]
      %v232 = vld [vmem:[%s165 + $0x79] sm:$0xff]
      %v233 = vld [vmem:[%s165 + $0x81] sm:$0xff]
      %v234 = vld [vmem:[%s165 + $0x91] sm:$0xff]
      %v235 = vld [vmem:[%s165 + $0x99] sm:$0xff]
      %v236 = vld [vmem:[%s165 + $0xa9] sm:$0xff]
      %v237 = vld [vmem:[%s165 + $0xb1] sm:$0xff]
      %v238 = vld [vmem:[%s165 + $0xc1] sm:$0xff]
      %v239 = vld [vmem:[%s165 + $0xc9] sm:$0xff]
      %v240 = vld [vmem:[%s165 + $0xd9] sm:$0xff]
      %v241 = vld [vmem:[%s165 + $0xe1] sm:$0xff]
      %v242 = vld [vmem:[%s165 + $0xf1] sm:$0xff]
      %v243 = vld [vmem:[%s165 + $0xf9] sm:$0xff]
      %v244 = vld [vmem:[%s165 + $0x109] sm:$0xff]
      %v245 = vld [vmem:[%s165 + $0x111] sm:$0xff]
      %v246 = vld [vmem:[%s165 + $0x121] sm:$0xff]
      %v247 = vld [vmem:[%s165 + $0x129] sm:$0xff]
      %v248 = vld [vmem:[%s165 + $0x139] sm:$0xff]
      %v249 = vld [vmem:[%s165 + $0x141] sm:$0xff]
      %v250 = vld [vmem:[%s165 + $0x151] sm:$0xff]
      %v251 = vld [vmem:[%s165 + $0x159] sm:$0xff]
      %v252 = vld [vmem:[%s165 + $0x169] sm:$0xff]
      %v253 = vld [vmem:[%s165 + $0x171] sm:$0xff]
      %v254 = vpack.c.bf16 %v223, %v222
      %v255 = vpack.c.bf16 %v225, %v224
      %v256 = vpack.c.bf16 %v227, %v226
      %v257 = vpack.c.bf16 %v229, %v228
      %v258 = vpack.c.bf16 %v231, %v230
      %v259 = vpack.c.bf16 %v233, %v232
      %v260 = vpack.c.bf16 %v235, %v234
      %v261 = vpack.c.bf16 %v237, %v236
      %v262 = vpack.c.bf16 %v239, %v238
      %v263 = vpack.c.bf16 %v241, %v240
      %v264 = vpack.c.bf16 %v243, %v242
      %v265 = vpack.c.bf16 %v245, %v244
      %v266 = vpack.c.bf16 %v247, %v246
      %v267 = vpack.c.bf16 %v249, %v248
      %v268 = vpack.c.bf16 %v251, %v250
      %v269 = vpack.c.bf16 %v253, %v252
      %s270 = scalar_lea.vmem %s1, 8
      %v271 = vld [vmem:[%s270] sm:$0xf]
      %v272 = vld [vmem:[%s270 + $0x4] sm:$0x3]
      %v275 = vunpack.c.l.b16 %v271
      %v276 = vunpack.c.l.b16 %v272
      %v277 = vpack.c.b16 %v276, %v275
      %vm278 = vcmask 97280
      %v280 = vsel %vm278, %v254, 0
      %v283 = vsel %vm278, %v255, 0
      %v286 = vsel %vm278, %v256, 0
      %v289 = vsel %vm278, %v257, 0
      %v292 = vsel %vm278, %v258, 0
      %v295 = vsel %vm278, %v259, 0
      %v298 = vsel %vm278, %v260, 0
      %v301 = vsel %vm278, %v261, 0
      %v304 = vsel %vm278, %v262, 0
      %v307 = vsel %vm278, %v263, 0
      %v310 = vsel %vm278, %v264, 0
      %v313 = vsel %vm278, %v265, 0
      %v316 = vsel %vm278, %v266, 0
      %v319 = vsel %vm278, %v267, 0
      %v322 = vsel %vm278, %v268, 0
      %v325 = vsel %vm278, %v269, 0
      %vm327 = vcmask 1045504
      %v329 = vsel %vm327, %v277, 0
      %331 = vmatpush.bf16.msra.mxu0 0
      %332 = vmatpush.bf16.msra.mxu0 0
      %333 = vmatpush.bf16.msra.mxu0 0
      %334 = vmatpush.bf16.msra.mxu0 0
      %335 = vmatpush.bf16.msra.mxu0 0
      %336 = vmatpush.bf16.msra.mxu0 0
      %337 = vmatpush.bf16.msra.mxu0 0
      %338 = vmatpush.bf16.msra.mxu0 %v329
      %339 = vmatmul.bf16.gmra.mxu0 %v280
      %v340 = vpop.f32.mrf.mxu0
      %v341 = vadd.f32 0.0, %v340
      %v342 = vpop.f32.mrf.mxu0
      %v343 = vadd.f32 0.0, %v342
      %344 = vmatmul.bf16.gmra.mxu0 %v283
      %v345 = vpop.f32.mrf.mxu0
      %v346 = vadd.f32 0.0, %v345
      %v347 = vpop.f32.mrf.mxu0
      %v348 = vadd.f32 0.0, %v347
      %349 = vmatmul.bf16.gmra.mxu0 %v286
      %v350 = vpop.f32.mrf.mxu0
      %v351 = vadd.f32 0.0, %v350
      %v352 = vpop.f32.mrf.mxu0
      %v353 = vadd.f32 0.0, %v352
      %354 = vmatmul.bf16.gmra.mxu0 %v289
      %v355 = vpop.f32.mrf.mxu0
      %v356 = vadd.f32 0.0, %v355
      %v357 = vpop.f32.mrf.mxu0
      %v358 = vadd.f32 0.0, %v357
      %359 = vmatmul.bf16.gmra.mxu0 %v292
      %v360 = vpop.f32.mrf.mxu0
      %v361 = vadd.f32 0.0, %v360
      %v362 = vpop.f32.mrf.mxu0
      %v363 = vadd.f32 0.0, %v362
      %364 = vmatmul.bf16.gmra.mxu0 %v295
      %v365 = vpop.f32.mrf.mxu0
      %v366 = vadd.f32 0.0, %v365
      %v367 = vpop.f32.mrf.mxu0
      %v368 = vadd.f32 0.0, %v367
      %369 = vmatmul.bf16.gmra.mxu0 %v298
      %v370 = vpop.f32.mrf.mxu0
      %v371 = vadd.f32 0.0, %v370
      %v372 = vpop.f32.mrf.mxu0
      %v373 = vadd.f32 0.0, %v372
      %374 = vmatmul.bf16.gmra.mxu0 %v301
      %v375 = vpop.f32.mrf.mxu0
      %v376 = vadd.f32 0.0, %v375
      %v377 = vpop.f32.mrf.mxu0
      %v378 = vadd.f32 0.0, %v377
      %379 = vmatmul.bf16.gmra.mxu0 %v304
      %v380 = vpop.f32.mrf.mxu0
      %v381 = vadd.f32 0.0, %v380
      %v382 = vpop.f32.mrf.mxu0
      %v383 = vadd.f32 0.0, %v382
      %384 = vmatmul.bf16.gmra.mxu0 %v307
      %v385 = vpop.f32.mrf.mxu0
      %v386 = vadd.f32 0.0, %v385
      %v387 = vpop.f32.mrf.mxu0
      %v388 = vadd.f32 0.0, %v387
      %389 = vmatmul.bf16.gmra.mxu0 %v310
      %v390 = vpop.f32.mrf.mxu0
      %v391 = vadd.f32 0.0, %v390
      %v392 = vpop.f32.mrf.mxu0
      %v393 = vadd.f32 0.0, %v392
      %394 = vmatmul.bf16.gmra.mxu0 %v313
      %v395 = vpop.f32.mrf.mxu0
      %v396 = vadd.f32 0.0, %v395
      %v397 = vpop.f32.mrf.mxu0
      %v398 = vadd.f32 0.0, %v397
      %399 = vmatmul.bf16.gmra.mxu0 %v316
      %v400 = vpop.f32.mrf.mxu0
      %v401 = vadd.f32 0.0, %v400
      %v402 = vpop.f32.mrf.mxu0
      %v403 = vadd.f32 0.0, %v402
      %404 = vmatmul.bf16.gmra.mxu0 %v319
      %v405 = vpop.f32.mrf.mxu0
      %v406 = vadd.f32 0.0, %v405
      %v407 = vpop.f32.mrf.mxu0
      %v408 = vadd.f32 0.0, %v407
      %409 = vmatmul.bf16.gmra.mxu0 %v322
      %v410 = vpop.f32.mrf.mxu0
      %v411 = vadd.f32 0.0, %v410
      %v412 = vpop.f32.mrf.mxu0
      %v413 = vadd.f32 0.0, %v412
      %414 = vmatmul.bf16.gmra.mxu0 %v325
      %v415 = vpop.f32.mrf.mxu0
      %v416 = vadd.f32 0.0, %v415
      %v417 = vpop.f32.mrf.mxu0
      %v418 = vadd.f32 0.0, %v417
      %419 = vdwg.mxu0
      %v422 = vunpack.c.l.b16 %v220
      %v423 = vunpack.c.l.b16 %v221
      %v424 = vpack.c.b16 %v423, %v422
      %v426 = vsel %vm278, %v204, 0
      %v429 = vsel %vm278, %v205, 0
      %v432 = vsel %vm278, %v206, 0
      %v435 = vsel %vm278, %v207, 0
      %v438 = vsel %vm278, %v208, 0
      %v441 = vsel %vm278, %v209, 0
      %v444 = vsel %vm278, %v210, 0
      %v447 = vsel %vm278, %v211, 0
      %v450 = vsel %vm278, %v212, 0
      %v453 = vsel %vm278, %v213, 0
      %v456 = vsel %vm278, %v214, 0
      %v459 = vsel %vm278, %v215, 0
      %v462 = vsel %vm278, %v216, 0
      %v465 = vsel %vm278, %v217, 0
      %v468 = vsel %vm278, %v218, 0
      %v471 = vsel %vm278, %v219, 0
      %v474 = vsel %vm327, %v424, 0
      %476 = vmatpush.bf16.msra.mxu0 0
      %477 = vmatpush.bf16.msra.mxu0 0
      %478 = vmatpush.bf16.msra.mxu0 0
      %479 = vmatpush.bf16.msra.mxu0 0
      %480 = vmatpush.bf16.msra.mxu0 0
      %481 = vmatpush.bf16.msra.mxu0 0
      %482 = vmatpush.bf16.msra.mxu0 0
      %483 = vmatpush.bf16.msra.mxu0 %v474
      %484 = vmatmul.bf16.gmra.mxu0 %v426
      %v485 = vpop.f32.mrf.mxu0
      %v486 = vadd.f32 %v341, %v485
      %v487 = vpop.f32.mrf.mxu0
      %v488 = vadd.f32 %v343, %v487
      %489 = vmatmul.bf16.gmra.mxu0 %v429
      %v490 = vpop.f32.mrf.mxu0
      %v491 = vadd.f32 %v346, %v490
      %v492 = vpop.f32.mrf.mxu0
      %v493 = vadd.f32 %v348, %v492
      %494 = vmatmul.bf16.gmra.mxu0 %v432
      %v495 = vpop.f32.mrf.mxu0
      %v496 = vadd.f32 %v351, %v495
      %v497 = vpop.f32.mrf.mxu0
      %v498 = vadd.f32 %v353, %v497
      %499 = vmatmul.bf16.gmra.mxu0 %v435
      %v500 = vpop.f32.mrf.mxu0
      %v501 = vadd.f32 %v356, %v500
      %v502 = vpop.f32.mrf.mxu0
      %v503 = vadd.f32 %v358, %v502
      %504 = vmatmul.bf16.gmra.mxu0 %v438
      %v505 = vpop.f32.mrf.mxu0
      %v506 = vadd.f32 %v361, %v505
      %v507 = vpop.f32.mrf.mxu0
      %v508 = vadd.f32 %v363, %v507
      %509 = vmatmul.bf16.gmra.mxu0 %v441
      %v510 = vpop.f32.mrf.mxu0
      %v511 = vadd.f32 %v366, %v510
      %v512 = vpop.f32.mrf.mxu0
      %v513 = vadd.f32 %v368, %v512
      %514 = vmatmul.bf16.gmra.mxu0 %v444
      %v515 = vpop.f32.mrf.mxu0
      %v516 = vadd.f32 %v371, %v515
      %v517 = vpop.f32.mrf.mxu0
      %v518 = vadd.f32 %v373, %v517
      %519 = vmatmul.bf16.gmra.mxu0 %v447
      %v520 = vpop.f32.mrf.mxu0
      %v521 = vadd.f32 %v376, %v520
      %v522 = vpop.f32.mrf.mxu0
      %v523 = vadd.f32 %v378, %v522
      %524 = vmatmul.bf16.gmra.mxu0 %v450
      %v525 = vpop.f32.mrf.mxu0
      %v526 = vadd.f32 %v381, %v525
      %v527 = vpop.f32.mrf.mxu0
      %v528 = vadd.f32 %v383, %v527
      %529 = vmatmul.bf16.gmra.mxu0 %v453
      %v530 = vpop.f32.mrf.mxu0
      %v531 = vadd.f32 %v386, %v530
      %v532 = vpop.f32.mrf.mxu0
      %v533 = vadd.f32 %v388, %v532
      %534 = vmatmul.bf16.gmra.mxu0 %v456
      %v535 = vpop.f32.mrf.mxu0
      %v536 = vadd.f32 %v391, %v535
      %v537 = vpop.f32.mrf.mxu0
      %v538 = vadd.f32 %v393, %v537
      %539 = vmatmul.bf16.gmra.mxu0 %v459
      %v540 = vpop.f32.mrf.mxu0
      %v541 = vadd.f32 %v396, %v540
      %v542 = vpop.f32.mrf.mxu0
      %v543 = vadd.f32 %v398, %v542
      %544 = vmatmul.bf16.gmra.mxu0 %v462
      %v545 = vpop.f32.mrf.mxu0
      %v546 = vadd.f32 %v401, %v545
      %v547 = vpop.f32.mrf.mxu0
      %v548 = vadd.f32 %v403, %v547
      %549 = vmatmul.bf16.gmra.mxu0 %v465
      %v550 = vpop.f32.mrf.mxu0
      %v551 = vadd.f32 %v406, %v550
      %v552 = vpop.f32.mrf.mxu0
      %v553 = vadd.f32 %v408, %v552
      %554 = vmatmul.bf16.gmra.mxu0 %v468
      %v555 = vpop.f32.mrf.mxu0
      %v556 = vadd.f32 %v411, %v555
      %v557 = vpop.f32.mrf.mxu0
      %v558 = vadd.f32 %v413, %v557
      %559 = vmatmul.bf16.gmra.mxu0 %v471
      %v560 = vpop.f32.mrf.mxu0
      %v561 = vadd.f32 %v416, %v560
      %v562 = vpop.f32.mrf.mxu0
      %v563 = vadd.f32 %v418, %v562
      %564 = vdwg.mxu0
      %v565 = vld [vmem:[%s165 + $0x2] sm:$0xff]
      %v566 = vld [vmem:[%s165 + $0xa] sm:$0xff]
      %v567 = vld [vmem:[%s165 + $0x1a] sm:$0xff]
      %v568 = vld [vmem:[%s165 + $0x22] sm:$0xff]
      %v569 = vld [vmem:[%s165 + $0x32] sm:$0xff]
      %v570 = vld [vmem:[%s165 + $0x3a] sm:$0xff]
      %v571 = vld [vmem:[%s165 + $0x4a] sm:$0xff]
      %v572 = vld [vmem:[%s165 + $0x52] sm:$0xff]
      %v573 = vld [vmem:[%s165 + $0x62] sm:$0xff]
      %v574 = vld [vmem:[%s165 + $0x6a] sm:$0xff]
      %v575 = vld [vmem:[%s165 + $0x7a] sm:$0xff]
      %v576 = vld [vmem:[%s165 + $0x82] sm:$0xff]
      %v577 = vld [vmem:[%s165 + $0x92] sm:$0xff]
      %v578 = vld [vmem:[%s165 + $0x9a] sm:$0xff]
      %v579 = vld [vmem:[%s165 + $0xaa] sm:$0xff]
      %v580 = vld [vmem:[%s165 + $0xb2] sm:$0xff]
      %v581 = vld [vmem:[%s165 + $0xc2] sm:$0xff]
      %v582 = vld [vmem:[%s165 + $0xca] sm:$0xff]
      %v583 = vld [vmem:[%s165 + $0xda] sm:$0xff]
      %v584 = vld [vmem:[%s165 + $0xe2] sm:$0xff]
      %v585 = vld [vmem:[%s165 + $0xf2] sm:$0xff]
      %v586 = vld [vmem:[%s165 + $0xfa] sm:$0xff]
      %v587 = vld [vmem:[%s165 + $0x10a] sm:$0xff]
      %v588 = vld [vmem:[%s165 + $0x112] sm:$0xff]
      %v589 = vld [vmem:[%s165 + $0x122] sm:$0xff]
      %v590 = vld [vmem:[%s165 + $0x12a] sm:$0xff]
      %v591 = vld [vmem:[%s165 + $0x13a] sm:$0xff]
      %v592 = vld [vmem:[%s165 + $0x142] sm:$0xff]
      %v593 = vld [vmem:[%s165 + $0x152] sm:$0xff]
      %v594 = vld [vmem:[%s165 + $0x15a] sm:$0xff]
      %v595 = vld [vmem:[%s165 + $0x16a] sm:$0xff]
      %v596 = vld [vmem:[%s165 + $0x172] sm:$0xff]
      %v597 = vpack.c.bf16 %v566, %v565
      %v598 = vpack.c.bf16 %v568, %v567
      %v599 = vpack.c.bf16 %v570, %v569
      %v600 = vpack.c.bf16 %v572, %v571
      %v601 = vpack.c.bf16 %v574, %v573
      %v602 = vpack.c.bf16 %v576, %v575
      %v603 = vpack.c.bf16 %v578, %v577
      %v604 = vpack.c.bf16 %v580, %v579
      %v605 = vpack.c.bf16 %v582, %v581
      %v606 = vpack.c.bf16 %v584, %v583
      %v607 = vpack.c.bf16 %v586, %v585
      %v608 = vpack.c.bf16 %v588, %v587
      %v609 = vpack.c.bf16 %v590, %v589
      %v610 = vpack.c.bf16 %v592, %v591
      %v611 = vpack.c.bf16 %v594, %v593
      %v612 = vpack.c.bf16 %v596, %v595
      %s613 = scalar_lea.vmem %s1, 16
      %v614 = vld [vmem:[%s613] sm:$0xf]
      %v615 = vld [vmem:[%s613 + $0x4] sm:$0x3]
      %v618 = vunpack.c.l.b16 %v614
      %v619 = vunpack.c.l.b16 %v615
      %v620 = vpack.c.b16 %v619, %v618
      %v622 = vsel %vm278, %v597, 0
      %v625 = vsel %vm278, %v598, 0
      %v628 = vsel %vm278, %v599, 0
      %v631 = vsel %vm278, %v600, 0
      %v634 = vsel %vm278, %v601, 0
      %v637 = vsel %vm278, %v602, 0
      %v640 = vsel %vm278, %v603, 0
      %v643 = vsel %vm278, %v604, 0
      %v646 = vsel %vm278, %v605, 0
      %v649 = vsel %vm278, %v606, 0
      %v652 = vsel %vm278, %v607, 0
      %v655 = vsel %vm278, %v608, 0
      %v658 = vsel %vm278, %v609, 0
      %v661 = vsel %vm278, %v610, 0
      %v664 = vsel %vm278, %v611, 0
      %v667 = vsel %vm278, %v612, 0
      %v670 = vsel %vm327, %v620, 0
      %672 = vmatpush.bf16.msra.mxu0 0
      %673 = vmatpush.bf16.msra.mxu0 0
      %674 = vmatpush.bf16.msra.mxu0 0
      %675 = vmatpush.bf16.msra.mxu0 0
      %676 = vmatpush.bf16.msra.mxu0 0
      %677 = vmatpush.bf16.msra.mxu0 0
      %678 = vmatpush.bf16.msra.mxu0 0
      %679 = vmatpush.bf16.msra.mxu0 %v670
      %680 = vmatmul.bf16.gmra.mxu0 %v622
      %v681 = vpop.f32.mrf.mxu0
      %v682 = vadd.f32 0.0, %v681
      %v683 = vpop.f32.mrf.mxu0
      %v684 = vadd.f32 0.0, %v683
      %685 = vmatmul.bf16.gmra.mxu0 %v625
      %v686 = vpop.f32.mrf.mxu0
      %v687 = vadd.f32 0.0, %v686
      %v688 = vpop.f32.mrf.mxu0
      %v689 = vadd.f32 0.0, %v688
      %690 = vmatmul.bf16.gmra.mxu0 %v628
      %v691 = vpop.f32.mrf.mxu0
      %v692 = vadd.f32 0.0, %v691
      %v693 = vpop.f32.mrf.mxu0
      %v694 = vadd.f32 0.0, %v693
      %695 = vmatmul.bf16.gmra.mxu0 %v631
      %v696 = vpop.f32.mrf.mxu0
      %v697 = vadd.f32 0.0, %v696
      %v698 = vpop.f32.mrf.mxu0
      %v699 = vadd.f32 0.0, %v698
      %700 = vmatmul.bf16.gmra.mxu0 %v634
      %v701 = vpop.f32.mrf.mxu0
      %v702 = vadd.f32 0.0, %v701
      %v703 = vpop.f32.mrf.mxu0
      %v704 = vadd.f32 0.0, %v703
      %705 = vmatmul.bf16.gmra.mxu0 %v637
      %v706 = vpop.f32.mrf.mxu0
      %v707 = vadd.f32 0.0, %v706
      %v708 = vpop.f32.mrf.mxu0
      %v709 = vadd.f32 0.0, %v708
      %710 = vmatmul.bf16.gmra.mxu0 %v640
      %v711 = vpop.f32.mrf.mxu0
      %v712 = vadd.f32 0.0, %v711
      %v713 = vpop.f32.mrf.mxu0
      %v714 = vadd.f32 0.0, %v713
      %715 = vmatmul.bf16.gmra.mxu0 %v643
      %v716 = vpop.f32.mrf.mxu0
      %v717 = vadd.f32 0.0, %v716
      %v718 = vpop.f32.mrf.mxu0
      %v719 = vadd.f32 0.0, %v718
      %720 = vmatmul.bf16.gmra.mxu0 %v646
      %v721 = vpop.f32.mrf.mxu0
      %v722 = vadd.f32 0.0, %v721
      %v723 = vpop.f32.mrf.mxu0
      %v724 = vadd.f32 0.0, %v723
      %725 = vmatmul.bf16.gmra.mxu0 %v649
      %v726 = vpop.f32.mrf.mxu0
      %v727 = vadd.f32 0.0, %v726
      %v728 = vpop.f32.mrf.mxu0
      %v729 = vadd.f32 0.0, %v728
      %730 = vmatmul.bf16.gmra.mxu0 %v652
      %v731 = vpop.f32.mrf.mxu0
      %v732 = vadd.f32 0.0, %v731
      %v733 = vpop.f32.mrf.mxu0
      %v734 = vadd.f32 0.0, %v733
      %735 = vmatmul.bf16.gmra.mxu0 %v655
      %v736 = vpop.f32.mrf.mxu0
      %v737 = vadd.f32 0.0, %v736
      %v738 = vpop.f32.mrf.mxu0
      %v739 = vadd.f32 0.0, %v738
      %740 = vmatmul.bf16.gmra.mxu0 %v658
      %v741 = vpop.f32.mrf.mxu0
      %v742 = vadd.f32 0.0, %v741
      %v743 = vpop.f32.mrf.mxu0
      %v744 = vadd.f32 0.0, %v743
      %745 = vmatmul.bf16.gmra.mxu0 %v661
      %v746 = vpop.f32.mrf.mxu0
      %v747 = vadd.f32 0.0, %v746
      %v748 = vpop.f32.mrf.mxu0
      %v749 = vadd.f32 0.0, %v748
      %750 = vmatmul.bf16.gmra.mxu0 %v664
      %v751 = vpop.f32.mrf.mxu0
      %v752 = vadd.f32 0.0, %v751
      %v753 = vpop.f32.mrf.mxu0
      %v754 = vadd.f32 0.0, %v753
      %755 = vmatmul.bf16.gmra.mxu0 %v667
      %v756 = vpop.f32.mrf.mxu0
      %v757 = vadd.f32 0.0, %v756
      %v758 = vpop.f32.mrf.mxu0
      %v759 = vadd.f32 0.0, %v758
      %760 = vdwg.mxu0
      %v761 = vadd.f32 %v486, %v682
      %v762 = vadd.f32 %v488, %v684
      %v763 = vadd.f32 %v491, %v687
      %v764 = vadd.f32 %v493, %v689
      %v765 = vadd.f32 %v496, %v692
      %v766 = vadd.f32 %v498, %v694
      %v767 = vadd.f32 %v501, %v697
      %v768 = vadd.f32 %v503, %v699
      %v769 = vadd.f32 %v506, %v702
      %v770 = vadd.f32 %v508, %v704
      %v771 = vadd.f32 %v511, %v707
      %v772 = vadd.f32 %v513, %v709
      %v773 = vadd.f32 %v516, %v712
      %v774 = vadd.f32 %v518, %v714
      %v775 = vadd.f32 %v521, %v717
      %v776 = vadd.f32 %v523, %v719
      %v777 = vadd.f32 %v526, %v722
      %v778 = vadd.f32 %v528, %v724
      %v779 = vadd.f32 %v531, %v727
      %v780 = vadd.f32 %v533, %v729
      %v781 = vadd.f32 %v536, %v732
      %v782 = vadd.f32 %v538, %v734
      %v783 = vadd.f32 %v541, %v737
      %v784 = vadd.f32 %v543, %v739
      %v785 = vadd.f32 %v546, %v742
      %v786 = vadd.f32 %v548, %v744
      %v787 = vadd.f32 %v551, %v747
      %v788 = vadd.f32 %v553, %v749
      %v789 = vadd.f32 %v556, %v752
      %v790 = vadd.f32 %v558, %v754
      %v791 = vadd.f32 %v561, %v757
      %v792 = vadd.f32 %v563, %v759
      %s793 = scalar_lea.vmem %s165, 24
      %v794 = vld [vmem:[%s793] sm:$0xff]
      %v795 = vld [vmem:[%s793 + $0x8] sm:$0xff]
      %v796 = vld [vmem:[%s793 + $0x18] sm:$0xff]
      %v797 = vld [vmem:[%s793 + $0x20] sm:$0xff]
      %v798 = vld [vmem:[%s793 + $0x30] sm:$0xff]
      %v799 = vld [vmem:[%s793 + $0x38] sm:$0xff]
      %v800 = vld [vmem:[%s793 + $0x48] sm:$0xff]
      %v801 = vld [vmem:[%s793 + $0x50] sm:$0xff]
      %v802 = vld [vmem:[%s793 + $0x60] sm:$0xff]
      %v803 = vld [vmem:[%s793 + $0x68] sm:$0xff]
      %v804 = vld [vmem:[%s793 + $0x78] sm:$0xff]
      %v805 = vld [vmem:[%s793 + $0x80] sm:$0xff]
      %v806 = vld [vmem:[%s793 + $0x90] sm:$0xff]
      %v807 = vld [vmem:[%s793 + $0x98] sm:$0xff]
      %v808 = vld [vmem:[%s793 + $0xa8] sm:$0xff]
      %v809 = vld [vmem:[%s793 + $0xb0] sm:$0xff]
      %v810 = vld [vmem:[%s793 + $0xc0] sm:$0xff]
      %v811 = vld [vmem:[%s793 + $0xc8] sm:$0xff]
      %v812 = vld [vmem:[%s793 + $0xd8] sm:$0xff]
      %v813 = vld [vmem:[%s793 + $0xe0] sm:$0xff]
      %v814 = vld [vmem:[%s793 + $0xf0] sm:$0xff]
      %v815 = vld [vmem:[%s793 + $0xf8] sm:$0xff]
      %v816 = vld [vmem:[%s793 + $0x108] sm:$0xff]
      %v817 = vld [vmem:[%s793 + $0x110] sm:$0xff]
      %v818 = vld [vmem:[%s793 + $0x120] sm:$0xff]
      %v819 = vld [vmem:[%s793 + $0x128] sm:$0xff]
      %v820 = vld [vmem:[%s793 + $0x138] sm:$0xff]
      %v821 = vld [vmem:[%s793 + $0x140] sm:$0xff]
      %v822 = vld [vmem:[%s793 + $0x150] sm:$0xff]
      %v823 = vld [vmem:[%s793 + $0x158] sm:$0xff]
      %v824 = vld [vmem:[%s793 + $0x168] sm:$0xff]
      %v825 = vld [vmem:[%s793 + $0x170] sm:$0xff]
      %v826 = vpack.c.bf16 %v795, %v794
      %v827 = vpack.c.bf16 %v797, %v796
      %v828 = vpack.c.bf16 %v799, %v798
      %v829 = vpack.c.bf16 %v801, %v800
      %v830 = vpack.c.bf16 %v803, %v802
      %v831 = vpack.c.bf16 %v805, %v804
      %v832 = vpack.c.bf16 %v807, %v806
      %v833 = vpack.c.bf16 %v809, %v808
      %v834 = vpack.c.bf16 %v811, %v810
      %v835 = vpack.c.bf16 %v813, %v812
      %v836 = vpack.c.bf16 %v815, %v814
      %v837 = vpack.c.bf16 %v817, %v816
      %v838 = vpack.c.bf16 %v819, %v818
      %v839 = vpack.c.bf16 %v821, %v820
      %v840 = vpack.c.bf16 %v823, %v822
      %v841 = vpack.c.bf16 %v825, %v824
      %s842 = scalar_lea.vmem %s1, 24
      %v843 = vld [vmem:[%s842] sm:$0xf]
      %v844 = vld [vmem:[%s842 + $0x4] sm:$0x3]
      %v847 = vunpack.c.l.b16 %v843
      %v848 = vunpack.c.l.b16 %v844
      %v849 = vpack.c.b16 %v848, %v847
      %v851 = vsel %vm278, %v826, 0
      %v854 = vsel %vm278, %v827, 0
      %v857 = vsel %vm278, %v828, 0
      %v860 = vsel %vm278, %v829, 0
      %v863 = vsel %vm278, %v830, 0
      %v866 = vsel %vm278, %v831, 0
      %v869 = vsel %vm278, %v832, 0
      %v872 = vsel %vm278, %v833, 0
      %v875 = vsel %vm278, %v834, 0
      %v878 = vsel %vm278, %v835, 0
      %v881 = vsel %vm278, %v836, 0
      %v884 = vsel %vm278, %v837, 0
      %v887 = vsel %vm278, %v838, 0
      %v890 = vsel %vm278, %v839, 0
      %v893 = vsel %vm278, %v840, 0
      %v896 = vsel %vm278, %v841, 0
      %v899 = vsel %vm327, %v849, 0
      %901 = vmatpush.bf16.msra.mxu0 0
      %902 = vmatpush.bf16.msra.mxu0 0
      %903 = vmatpush.bf16.msra.mxu0 0
      %904 = vmatpush.bf16.msra.mxu0 0
      %905 = vmatpush.bf16.msra.mxu0 0
      %906 = vmatpush.bf16.msra.mxu0 0
      %907 = vmatpush.bf16.msra.mxu0 0
      %908 = vmatpush.bf16.msra.mxu0 %v899
      %909 = vmatmul.bf16.gmra.mxu0 %v851
      %v910 = vpop.f32.mrf.mxu0
      %v911 = vadd.f32 0.0, %v910
      %v912 = vpop.f32.mrf.mxu0
      %v913 = vadd.f32 0.0, %v912
      %914 = vmatmul.bf16.gmra.mxu0 %v854
      %v915 = vpop.f32.mrf.mxu0
      %v916 = vadd.f32 0.0, %v915
      %v917 = vpop.f32.mrf.mxu0
      %v918 = vadd.f32 0.0, %v917
      %919 = vmatmul.bf16.gmra.mxu0 %v857
      %v920 = vpop.f32.mrf.mxu0
      %v921 = vadd.f32 0.0, %v920
      %v922 = vpop.f32.mrf.mxu0
      %v923 = vadd.f32 0.0, %v922
      %924 = vmatmul.bf16.gmra.mxu0 %v860
      %v925 = vpop.f32.mrf.mxu0
      %v926 = vadd.f32 0.0, %v925
      %v927 = vpop.f32.mrf.mxu0
      %v928 = vadd.f32 0.0, %v927
      %929 = vmatmul.bf16.gmra.mxu0 %v863
      %v930 = vpop.f32.mrf.mxu0
      %v931 = vadd.f32 0.0, %v930
      %v932 = vpop.f32.mrf.mxu0
      %v933 = vadd.f32 0.0, %v932
      %934 = vmatmul.bf16.gmra.mxu0 %v866
      %v935 = vpop.f32.mrf.mxu0
      %v936 = vadd.f32 0.0, %v935
      %v937 = vpop.f32.mrf.mxu0
      %v938 = vadd.f32 0.0, %v937
      %939 = vmatmul.bf16.gmra.mxu0 %v869
      %v940 = vpop.f32.mrf.mxu0
      %v941 = vadd.f32 0.0, %v940
      %v942 = vpop.f32.mrf.mxu0
      %v943 = vadd.f32 0.0, %v942
      %944 = vmatmul.bf16.gmra.mxu0 %v872
      %v945 = vpop.f32.mrf.mxu0
      %v946 = vadd.f32 0.0, %v945
      %v947 = vpop.f32.mrf.mxu0
      %v948 = vadd.f32 0.0, %v947
      %949 = vmatmul.bf16.gmra.mxu0 %v875
      %v950 = vpop.f32.mrf.mxu0
      %v951 = vadd.f32 0.0, %v950
      %v952 = vpop.f32.mrf.mxu0
      %v953 = vadd.f32 0.0, %v952
      %954 = vmatmul.bf16.gmra.mxu0 %v878
      %v955 = vpop.f32.mrf.mxu0
      %v956 = vadd.f32 0.0, %v955
      %v957 = vpop.f32.mrf.mxu0
      %v958 = vadd.f32 0.0, %v957
      %959 = vmatmul.bf16.gmra.mxu0 %v881
      %v960 = vpop.f32.mrf.mxu0
      %v961 = vadd.f32 0.0, %v960
      %v962 = vpop.f32.mrf.mxu0
      %v963 = vadd.f32 0.0, %v962
      %964 = vmatmul.bf16.gmra.mxu0 %v884
      %v965 = vpop.f32.mrf.mxu0
      %v966 = vadd.f32 0.0, %v965
      %v967 = vpop.f32.mrf.mxu0
      %v968 = vadd.f32 0.0, %v967
      %969 = vmatmul.bf16.gmra.mxu0 %v887
      %v970 = vpop.f32.mrf.mxu0
      %v971 = vadd.f32 0.0, %v970
      %v972 = vpop.f32.mrf.mxu0
      %v973 = vadd.f32 0.0, %v972
      %974 = vmatmul.bf16.gmra.mxu0 %v890
      %v975 = vpop.f32.mrf.mxu0
      %v976 = vadd.f32 0.0, %v975
      %v977 = vpop.f32.mrf.mxu0
      %v978 = vadd.f32 0.0, %v977
      %979 = vmatmul.bf16.gmra.mxu0 %v893
      %v980 = vpop.f32.mrf.mxu0
      %v981 = vadd.f32 0.0, %v980
      %v982 = vpop.f32.mrf.mxu0
      %v983 = vadd.f32 0.0, %v982
      %984 = vmatmul.bf16.gmra.mxu0 %v896
      %v985 = vpop.f32.mrf.mxu0
      %v986 = vadd.f32 0.0, %v985
      %v987 = vpop.f32.mrf.mxu0
      %v988 = vadd.f32 0.0, %v987
      %989 = vdwg.mxu0
      %v990 = vadd.f32 %v761, %v911
      %v991 = vadd.f32 %v762, %v913
      %v992 = vadd.f32 %v763, %v916
      %v993 = vadd.f32 %v764, %v918
      %v994 = vadd.f32 %v765, %v921
      %v995 = vadd.f32 %v766, %v923
      %v996 = vadd.f32 %v767, %v926
      %v997 = vadd.f32 %v768, %v928
      %v998 = vadd.f32 %v769, %v931
      %v999 = vadd.f32 %v770, %v933
      %v1000 = vadd.f32 %v771, %v936
      %v1001 = vadd.f32 %v772, %v938
      %v1002 = vadd.f32 %v773, %v941
      %v1003 = vadd.f32 %v774, %v943
      %v1004 = vadd.f32 %v775, %v946
      %v1005 = vadd.f32 %v776, %v948
      %v1006 = vadd.f32 %v777, %v951
      %v1007 = vadd.f32 %v778, %v953
      %v1008 = vadd.f32 %v779, %v956
      %v1009 = vadd.f32 %v780, %v958
      %v1010 = vadd.f32 %v781, %v961
      %v1011 = vadd.f32 %v782, %v963
      %v1012 = vadd.f32 %v783, %v966
      %v1013 = vadd.f32 %v784, %v968
      %v1014 = vadd.f32 %v785, %v971
      %v1015 = vadd.f32 %v786, %v973
      %v1016 = vadd.f32 %v787, %v976
      %v1017 = vadd.f32 %v788, %v978
      %v1018 = vadd.f32 %v789, %v981
      %v1019 = vadd.f32 %v790, %v983
      %v1020 = vadd.f32 %v791, %v986
      %v1021 = vadd.f32 %v792, %v988
      %v1022 = vld [vmem:[%s793 + $0x1] sm:$0xff]
      %v1023 = vld [vmem:[%s793 + $0x9] sm:$0xff]
      %v1024 = vld [vmem:[%s793 + $0x19] sm:$0xff]
      %v1025 = vld [vmem:[%s793 + $0x21] sm:$0xff]
      %v1026 = vld [vmem:[%s793 + $0x31] sm:$0xff]
      %v1027 = vld [vmem:[%s793 + $0x39] sm:$0xff]
      %v1028 = vld [vmem:[%s793 + $0x49] sm:$0xff]
      %v1029 = vld [vmem:[%s793 + $0x51] sm:$0xff]
      %v1030 = vld [vmem:[%s793 + $0x61] sm:$0xff]
      %v1031 = vld [vmem:[%s793 + $0x69] sm:$0xff]
      %v1032 = vld [vmem:[%s793 + $0x79] sm:$0xff]
      %v1033 = vld [vmem:[%s793 + $0x81] sm:$0xff]
      %v1034 = vld [vmem:[%s793 + $0x91] sm:$0xff]
      %v1035 = vld [vmem:[%s793 + $0x99] sm:$0xff]
      %v1036 = vld [vmem:[%s793 + $0xa9] sm:$0xff]
      %v1037 = vld [vmem:[%s793 + $0xb1] sm:$0xff]
      %v1038 = vld [vmem:[%s793 + $0xc1] sm:$0xff]
      %v1039 = vld [vmem:[%s793 + $0xc9] sm:$0xff]
      %v1040 = vld [vmem:[%s793 + $0xd9] sm:$0xff]
      %v1041 = vld [vmem:[%s793 + $0xe1] sm:$0xff]
      %v1042 = vld [vmem:[%s793 + $0xf1] sm:$0xff]
      %v1043 = vld [vmem:[%s793 + $0xf9] sm:$0xff]
      %v1044 = vld [vmem:[%s793 + $0x109] sm:$0xff]
      %v1045 = vld [vmem:[%s793 + $0x111] sm:$0xff]
      %v1046 = vld [vmem:[%s793 + $0x121] sm:$0xff]
      %v1047 = vld [vmem:[%s793 + $0x129] sm:$0xff]
      %v1048 = vld [vmem:[%s793 + $0x139] sm:$0xff]
      %v1049 = vld [vmem:[%s793 + $0x141] sm:$0xff]
      %v1050 = vld [vmem:[%s793 + $0x151] sm:$0xff]
      %v1051 = vld [vmem:[%s793 + $0x159] sm:$0xff]
      %v1052 = vld [vmem:[%s793 + $0x169] sm:$0xff]
      %v1053 = vld [vmem:[%s793 + $0x171] sm:$0xff]
      %v1054 = vpack.c.bf16 %v1023, %v1022
      %v1055 = vpack.c.bf16 %v1025, %v1024
      %v1056 = vpack.c.bf16 %v1027, %v1026
      %v1057 = vpack.c.bf16 %v1029, %v1028
      %v1058 = vpack.c.bf16 %v1031, %v1030
      %v1059 = vpack.c.bf16 %v1033, %v1032
      %v1060 = vpack.c.bf16 %v1035, %v1034
      %v1061 = vpack.c.bf16 %v1037, %v1036
      %v1062 = vpack.c.bf16 %v1039, %v1038
      %v1063 = vpack.c.bf16 %v1041, %v1040
      %v1064 = vpack.c.bf16 %v1043, %v1042
      %v1065 = vpack.c.bf16 %v1045, %v1044
      %v1066 = vpack.c.bf16 %v1047, %v1046
      %v1067 = vpack.c.bf16 %v1049, %v1048
      %v1068 = vpack.c.bf16 %v1051, %v1050
      %v1069 = vpack.c.bf16 %v1053, %v1052
      %s1070 = scalar_lea.vmem %s1, 32
      %v1071 = vld [vmem:[%s1070] sm:$0xf]
      %v1072 = vld [vmem:[%s1070 + $0x4] sm:$0x3]
      %v1075 = vunpack.c.l.b16 %v1071
      %v1076 = vunpack.c.l.b16 %v1072
      %v1077 = vpack.c.b16 %v1076, %v1075
      %v1079 = vsel %vm278, %v1054, 0
      %v1082 = vsel %vm278, %v1055, 0
      %v1085 = vsel %vm278, %v1056, 0
      %v1088 = vsel %vm278, %v1057, 0
      %v1091 = vsel %vm278, %v1058, 0
      %v1094 = vsel %vm278, %v1059, 0
      %v1097 = vsel %vm278, %v1060, 0
      %v1100 = vsel %vm278, %v1061, 0
      %v1103 = vsel %vm278, %v1062, 0
      %v1106 = vsel %vm278, %v1063, 0
      %v1109 = vsel %vm278, %v1064, 0
      %v1112 = vsel %vm278, %v1065, 0
      %v1115 = vsel %vm278, %v1066, 0
      %v1118 = vsel %vm278, %v1067, 0
      %v1121 = vsel %vm278, %v1068, 0
      %v1124 = vsel %vm278, %v1069, 0
      %v1127 = vsel %vm327, %v1077, 0
      %1129 = vmatpush.bf16.msra.mxu0 0
      %1130 = vmatpush.bf16.msra.mxu0 0
      %1131 = vmatpush.bf16.msra.mxu0 0
      %1132 = vmatpush.bf16.msra.mxu0 0
      %1133 = vmatpush.bf16.msra.mxu0 0
      %1134 = vmatpush.bf16.msra.mxu0 0
      %1135 = vmatpush.bf16.msra.mxu0 0
      %1136 = vmatpush.bf16.msra.mxu0 %v1127
      %1137 = vmatmul.bf16.gmra.mxu0 %v1079
      %v1138 = vpop.f32.mrf.mxu0
      %v1139 = vadd.f32 0.0, %v1138
      %v1140 = vpop.f32.mrf.mxu0
      %v1141 = vadd.f32 0.0, %v1140
      %1142 = vmatmul.bf16.gmra.mxu0 %v1082
      %v1143 = vpop.f32.mrf.mxu0
      %v1144 = vadd.f32 0.0, %v1143
      %v1145 = vpop.f32.mrf.mxu0
      %v1146 = vadd.f32 0.0, %v1145
      %1147 = vmatmul.bf16.gmra.mxu0 %v1085
      %v1148 = vpop.f32.mrf.mxu0
      %v1149 = vadd.f32 0.0, %v1148
      %v1150 = vpop.f32.mrf.mxu0
      %v1151 = vadd.f32 0.0, %v1150
      %1152 = vmatmul.bf16.gmra.mxu0 %v1088
      %v1153 = vpop.f32.mrf.mxu0
      %v1154 = vadd.f32 0.0, %v1153
      %v1155 = vpop.f32.mrf.mxu0
      %v1156 = vadd.f32 0.0, %v1155
      %1157 = vmatmul.bf16.gmra.mxu0 %v1091
      %v1158 = vpop.f32.mrf.mxu0
      %v1159 = vadd.f32 0.0, %v1158
      %v1160 = vpop.f32.mrf.mxu0
      %v1161 = vadd.f32 0.0, %v1160
      %1162 = vmatmul.bf16.gmra.mxu0 %v1094
      %v1163 = vpop.f32.mrf.mxu0
      %v1164 = vadd.f32 0.0, %v1163
      %v1165 = vpop.f32.mrf.mxu0
      %v1166 = vadd.f32 0.0, %v1165
      %1167 = vmatmul.bf16.gmra.mxu0 %v1097
      %v1168 = vpop.f32.mrf.mxu0
      %v1169 = vadd.f32 0.0, %v1168
      %v1170 = vpop.f32.mrf.mxu0
      %v1171 = vadd.f32 0.0, %v1170
      %1172 = vmatmul.bf16.gmra.mxu0 %v1100
      %v1173 = vpop.f32.mrf.mxu0
      %v1174 = vadd.f32 0.0, %v1173
      %v1175 = vpop.f32.mrf.mxu0
      %v1176 = vadd.f32 0.0, %v1175
      %1177 = vmatmul.bf16.gmra.mxu0 %v1103
      %v1178 = vpop.f32.mrf.mxu0
      %v1179 = vadd.f32 0.0, %v1178
      %v1180 = vpop.f32.mrf.mxu0
      %v1181 = vadd.f32 0.0, %v1180
      %1182 = vmatmul.bf16.gmra.mxu0 %v1106
      %v1183 = vpop.f32.mrf.mxu0
      %v1184 = vadd.f32 0.0, %v1183
      %v1185 = vpop.f32.mrf.mxu0
      %v1186 = vadd.f32 0.0, %v1185
      %1187 = vmatmul.bf16.gmra.mxu0 %v1109
      %v1188 = vpop.f32.mrf.mxu0
      %v1189 = vadd.f32 0.0, %v1188
      %v1190 = vpop.f32.mrf.mxu0
      %v1191 = vadd.f32 0.0, %v1190
      %1192 = vmatmul.bf16.gmra.mxu0 %v1112
      %v1193 = vpop.f32.mrf.mxu0
      %v1194 = vadd.f32 0.0, %v1193
      %v1195 = vpop.f32.mrf.mxu0
      %v1196 = vadd.f32 0.0, %v1195
      %1197 = vmatmul.bf16.gmra.mxu0 %v1115
      %v1198 = vpop.f32.mrf.mxu0
      %v1199 = vadd.f32 0.0, %v1198
      %v1200 = vpop.f32.mrf.mxu0
      %v1201 = vadd.f32 0.0, %v1200
      %1202 = vmatmul.bf16.gmra.mxu0 %v1118
      %v1203 = vpop.f32.mrf.mxu0
      %v1204 = vadd.f32 0.0, %v1203
      %v1205 = vpop.f32.mrf.mxu0
      %v1206 = vadd.f32 0.0, %v1205
      %1207 = vmatmul.bf16.gmra.mxu0 %v1121
      %v1208 = vpop.f32.mrf.mxu0
      %v1209 = vadd.f32 0.0, %v1208
      %v1210 = vpop.f32.mrf.mxu0
      %v1211 = vadd.f32 0.0, %v1210
      %1212 = vmatmul.bf16.gmra.mxu0 %v1124
      %v1213 = vpop.f32.mrf.mxu0
      %v1214 = vadd.f32 0.0, %v1213
      %v1215 = vpop.f32.mrf.mxu0
      %v1216 = vadd.f32 0.0, %v1215
      %1217 = vdwg.mxu0
      %v1218 = vadd.f32 %v990, %v1139
      %v1219 = vadd.f32 %v991, %v1141
      %v1220 = vadd.f32 %v992, %v1144
      %v1221 = vadd.f32 %v993, %v1146
      %v1222 = vadd.f32 %v994, %v1149
      %v1223 = vadd.f32 %v995, %v1151
      %v1224 = vadd.f32 %v996, %v1154
      %v1225 = vadd.f32 %v997, %v1156
      %v1226 = vadd.f32 %v998, %v1159
      %v1227 = vadd.f32 %v999, %v1161
      %v1228 = vadd.f32 %v1000, %v1164
      %v1229 = vadd.f32 %v1001, %v1166
      %v1230 = vadd.f32 %v1002, %v1169
      %v1231 = vadd.f32 %v1003, %v1171
      %v1232 = vadd.f32 %v1004, %v1174
      %v1233 = vadd.f32 %v1005, %v1176
      %v1234 = vadd.f32 %v1006, %v1179
      %v1235 = vadd.f32 %v1007, %v1181
      %v1236 = vadd.f32 %v1008, %v1184
      %v1237 = vadd.f32 %v1009, %v1186
      %v1238 = vadd.f32 %v1010, %v1189
      %v1239 = vadd.f32 %v1011, %v1191
      %v1240 = vadd.f32 %v1012, %v1194
      %v1241 = vadd.f32 %v1013, %v1196
      %v1242 = vadd.f32 %v1014, %v1199
      %v1243 = vadd.f32 %v1015, %v1201
      %v1244 = vadd.f32 %v1016, %v1204
      %v1245 = vadd.f32 %v1017, %v1206
      %v1246 = vadd.f32 %v1018, %v1209
      %v1247 = vadd.f32 %v1019, %v1211
      %v1248 = vadd.f32 %v1020, %v1214
      %v1249 = vadd.f32 %v1021, %v1216
      %v1250 = vld [vmem:[%s793 + $0x2] sm:$0xff]
      %v1251 = vld [vmem:[%s793 + $0xa] sm:$0xff]
      %v1252 = vld [vmem:[%s793 + $0x1a] sm:$0xff]
      %v1253 = vld [vmem:[%s793 + $0x22] sm:$0xff]
      %v1254 = vld [vmem:[%s793 + $0x32] sm:$0xff]
      %v1255 = vld [vmem:[%s793 + $0x3a] sm:$0xff]
      %v1256 = vld [vmem:[%s793 + $0x4a] sm:$0xff]
      %v1257 = vld [vmem:[%s793 + $0x52] sm:$0xff]
      %v1258 = vld [vmem:[%s793 + $0x62] sm:$0xff]
      %v1259 = vld [vmem:[%s793 + $0x6a] sm:$0xff]
      %v1260 = vld [vmem:[%s793 + $0x7a] sm:$0xff]
      %v1261 = vld [vmem:[%s793 + $0x82] sm:$0xff]
      %v1262 = vld [vmem:[%s793 + $0x92] sm:$0xff]
      %v1263 = vld [vmem:[%s793 + $0x9a] sm:$0xff]
      %v1264 = vld [vmem:[%s793 + $0xaa] sm:$0xff]
      %v1265 = vld [vmem:[%s793 + $0xb2] sm:$0xff]
      %v1266 = vld [vmem:[%s793 + $0xc2] sm:$0xff]
      %v1267 = vld [vmem:[%s793 + $0xca] sm:$0xff]
      %v1268 = vld [vmem:[%s793 + $0xda] sm:$0xff]
      %v1269 = vld [vmem:[%s793 + $0xe2] sm:$0xff]
      %v1270 = vld [vmem:[%s793 + $0xf2] sm:$0xff]
      %v1271 = vld [vmem:[%s793 + $0xfa] sm:$0xff]
      %v1272 = vld [vmem:[%s793 + $0x10a] sm:$0xff]
      %v1273 = vld [vmem:[%s793 + $0x112] sm:$0xff]
      %v1274 = vld [vmem:[%s793 + $0x122] sm:$0xff]
      %v1275 = vld [vmem:[%s793 + $0x12a] sm:$0xff]
      %v1276 = vld [vmem:[%s793 + $0x13a] sm:$0xff]
      %v1277 = vld [vmem:[%s793 + $0x142] sm:$0xff]
      %v1278 = vld [vmem:[%s793 + $0x152] sm:$0xff]
      %v1279 = vld [vmem:[%s793 + $0x15a] sm:$0xff]
      %v1280 = vld [vmem:[%s793 + $0x16a] sm:$0xff]
      %v1281 = vld [vmem:[%s793 + $0x172] sm:$0xff]
      %v1282 = vpack.c.bf16 %v1251, %v1250
      %v1283 = vpack.c.bf16 %v1253, %v1252
      %v1284 = vpack.c.bf16 %v1255, %v1254
      %v1285 = vpack.c.bf16 %v1257, %v1256
      %v1286 = vpack.c.bf16 %v1259, %v1258
      %v1287 = vpack.c.bf16 %v1261, %v1260
      %v1288 = vpack.c.bf16 %v1263, %v1262
      %v1289 = vpack.c.bf16 %v1265, %v1264
      %v1290 = vpack.c.bf16 %v1267, %v1266
      %v1291 = vpack.c.bf16 %v1269, %v1268
      %v1292 = vpack.c.bf16 %v1271, %v1270
      %v1293 = vpack.c.bf16 %v1273, %v1272
      %v1294 = vpack.c.bf16 %v1275, %v1274
      %v1295 = vpack.c.bf16 %v1277, %v1276
      %v1296 = vpack.c.bf16 %v1279, %v1278
      %v1297 = vpack.c.bf16 %v1281, %v1280
      %s1298 = scalar_lea.vmem %s1, 40
      %v1299 = vld [vmem:[%s1298] sm:$0xf]
      %v1300 = vld [vmem:[%s1298 + $0x4] sm:$0x3]
      %v1303 = vunpack.c.l.b16 %v1299
      %v1304 = vunpack.c.l.b16 %v1300
      %v1305 = vpack.c.b16 %v1304, %v1303
      %v1307 = vsel %vm278, %v1282, 0
      %v1310 = vsel %vm278, %v1283, 0
      %v1313 = vsel %vm278, %v1284, 0
      %v1316 = vsel %vm278, %v1285, 0
      %v1319 = vsel %vm278, %v1286, 0
      %v1322 = vsel %vm278, %v1287, 0
      %v1325 = vsel %vm278, %v1288, 0
      %v1328 = vsel %vm278, %v1289, 0
      %v1331 = vsel %vm278, %v1290, 0
      %v1334 = vsel %vm278, %v1291, 0
      %v1337 = vsel %vm278, %v1292, 0
      %v1340 = vsel %vm278, %v1293, 0
      %v1343 = vsel %vm278, %v1294, 0
      %v1346 = vsel %vm278, %v1295, 0
      %v1349 = vsel %vm278, %v1296, 0
      %v1352 = vsel %vm278, %v1297, 0
      %v1355 = vsel %vm327, %v1305, 0
      %1357 = vmatpush.bf16.msra.mxu0 0
      %1358 = vmatpush.bf16.msra.mxu0 0
      %1359 = vmatpush.bf16.msra.mxu0 0
      %1360 = vmatpush.bf16.msra.mxu0 0
      %1361 = vmatpush.bf16.msra.mxu0 0
      %1362 = vmatpush.bf16.msra.mxu0 0
      %1363 = vmatpush.bf16.msra.mxu0 0
      %1364 = vmatpush.bf16.msra.mxu0 %v1355
      %1365 = vmatmul.bf16.gmra.mxu0 %v1307
      %v1366 = vpop.f32.mrf.mxu0
      %v1367 = vadd.f32 0.0, %v1366
      %v1368 = vpop.f32.mrf.mxu0
      %v1369 = vadd.f32 0.0, %v1368
      %1370 = vmatmul.bf16.gmra.mxu0 %v1310
      %v1371 = vpop.f32.mrf.mxu0
      %v1372 = vadd.f32 0.0, %v1371
      %v1373 = vpop.f32.mrf.mxu0
      %v1374 = vadd.f32 0.0, %v1373
      %1375 = vmatmul.bf16.gmra.mxu0 %v1313
      %v1376 = vpop.f32.mrf.mxu0
      %v1377 = vadd.f32 0.0, %v1376
      %v1378 = vpop.f32.mrf.mxu0
      %v1379 = vadd.f32 0.0, %v1378
      %1380 = vmatmul.bf16.gmra.mxu0 %v1316
      %v1381 = vpop.f32.mrf.mxu0
      %v1382 = vadd.f32 0.0, %v1381
      %v1383 = vpop.f32.mrf.mxu0
      %v1384 = vadd.f32 0.0, %v1383
      %1385 = vmatmul.bf16.gmra.mxu0 %v1319
      %v1386 = vpop.f32.mrf.mxu0
      %v1387 = vadd.f32 0.0, %v1386
      %v1388 = vpop.f32.mrf.mxu0
      %v1389 = vadd.f32 0.0, %v1388
      %1390 = vmatmul.bf16.gmra.mxu0 %v1322
      %v1391 = vpop.f32.mrf.mxu0
      %v1392 = vadd.f32 0.0, %v1391
      %v1393 = vpop.f32.mrf.mxu0
      %v1394 = vadd.f32 0.0, %v1393
      %1395 = vmatmul.bf16.gmra.mxu0 %v1325
      %v1396 = vpop.f32.mrf.mxu0
      %v1397 = vadd.f32 0.0, %v1396
      %v1398 = vpop.f32.mrf.mxu0
      %v1399 = vadd.f32 0.0, %v1398
      %1400 = vmatmul.bf16.gmra.mxu0 %v1328
      %v1401 = vpop.f32.mrf.mxu0
      %v1402 = vadd.f32 0.0, %v1401
      %v1403 = vpop.f32.mrf.mxu0
      %v1404 = vadd.f32 0.0, %v1403
      %1405 = vmatmul.bf16.gmra.mxu0 %v1331
      %v1406 = vpop.f32.mrf.mxu0
      %v1407 = vadd.f32 0.0, %v1406
      %v1408 = vpop.f32.mrf.mxu0
      %v1409 = vadd.f32 0.0, %v1408
      %1410 = vmatmul.bf16.gmra.mxu0 %v1334
      %v1411 = vpop.f32.mrf.mxu0
      %v1412 = vadd.f32 0.0, %v1411
      %v1413 = vpop.f32.mrf.mxu0
      %v1414 = vadd.f32 0.0, %v1413
      %1415 = vmatmul.bf16.gmra.mxu0 %v1337
      %v1416 = vpop.f32.mrf.mxu0
      %v1417 = vadd.f32 0.0, %v1416
      %v1418 = vpop.f32.mrf.mxu0
      %v1419 = vadd.f32 0.0, %v1418
      %1420 = vmatmul.bf16.gmra.mxu0 %v1340
      %v1421 = vpop.f32.mrf.mxu0
      %v1422 = vadd.f32 0.0, %v1421
      %v1423 = vpop.f32.mrf.mxu0
      %v1424 = vadd.f32 0.0, %v1423
      %1425 = vmatmul.bf16.gmra.mxu0 %v1343
      %v1426 = vpop.f32.mrf.mxu0
      %v1427 = vadd.f32 0.0, %v1426
      %v1428 = vpop.f32.mrf.mxu0
      %v1429 = vadd.f32 0.0, %v1428
      %1430 = vmatmul.bf16.gmra.mxu0 %v1346
      %v1431 = vpop.f32.mrf.mxu0
      %v1432 = vadd.f32 0.0, %v1431
      %v1433 = vpop.f32.mrf.mxu0
      %v1434 = vadd.f32 0.0, %v1433
      %1435 = vmatmul.bf16.gmra.mxu0 %v1349
      %v1436 = vpop.f32.mrf.mxu0
      %v1437 = vadd.f32 0.0, %v1436
      %v1438 = vpop.f32.mrf.mxu0
      %v1439 = vadd.f32 0.0, %v1438
      %1440 = vmatmul.bf16.gmra.mxu0 %v1352
      %v1441 = vpop.f32.mrf.mxu0
      %v1442 = vadd.f32 0.0, %v1441
      %v1443 = vpop.f32.mrf.mxu0
      %v1444 = vadd.f32 0.0, %v1443
      %1445 = vdwg.mxu0
      %v1446 = vadd.f32 %v1218, %v1367
      %v1447 = vadd.f32 %v1219, %v1369
      %v1448 = vadd.f32 %v1220, %v1372
      %v1449 = vadd.f32 %v1221, %v1374
      %v1450 = vadd.f32 %v1222, %v1377
      %v1451 = vadd.f32 %v1223, %v1379
      %v1452 = vadd.f32 %v1224, %v1382
      %v1453 = vadd.f32 %v1225, %v1384
      %v1454 = vadd.f32 %v1226, %v1387
      %v1455 = vadd.f32 %v1227, %v1389
      %v1456 = vadd.f32 %v1228, %v1392
      %v1457 = vadd.f32 %v1229, %v1394
      %v1458 = vadd.f32 %v1230, %v1397
      %v1459 = vadd.f32 %v1231, %v1399
      %v1460 = vadd.f32 %v1232, %v1402
      %v1461 = vadd.f32 %v1233, %v1404
      %v1462 = vadd.f32 %v1234, %v1407
      %v1463 = vadd.f32 %v1235, %v1409
      %v1464 = vadd.f32 %v1236, %v1412
      %v1465 = vadd.f32 %v1237, %v1414
      %v1466 = vadd.f32 %v1238, %v1417
      %v1467 = vadd.f32 %v1239, %v1419
      %v1468 = vadd.f32 %v1240, %v1422
      %v1469 = vadd.f32 %v1241, %v1424
      %v1470 = vadd.f32 %v1242, %v1427
      %v1471 = vadd.f32 %v1243, %v1429
      %v1472 = vadd.f32 %v1244, %v1432
      %v1473 = vadd.f32 %v1245, %v1434
      %v1474 = vadd.f32 %v1246, %v1437
      %v1475 = vadd.f32 %v1247, %v1439
      %v1476 = vadd.f32 %v1248, %v1442
      %v1477 = vadd.f32 %v1249, %v1444
      %s1478 = scalar_lea.vmem %s165, 48
      %v1479 = vld [vmem:[%s1478] sm:$0xff]
      %v1480 = vld [vmem:[%s1478 + $0x8] sm:$0xff]
      %v1481 = vld [vmem:[%s1478 + $0x18] sm:$0xff]
      %v1482 = vld [vmem:[%s1478 + $0x20] sm:$0xff]
      %v1483 = vld [vmem:[%s1478 + $0x30] sm:$0xff]
      %v1484 = vld [vmem:[%s1478 + $0x38] sm:$0xff]
      %v1485 = vld [vmem:[%s1478 + $0x48] sm:$0xff]
      %v1486 = vld [vmem:[%s1478 + $0x50] sm:$0xff]
      %v1487 = vld [vmem:[%s1478 + $0x60] sm:$0xff]
      %v1488 = vld [vmem:[%s1478 + $0x68] sm:$0xff]
      %v1489 = vld [vmem:[%s1478 + $0x78] sm:$0xff]
      %v1490 = vld [vmem:[%s1478 + $0x80] sm:$0xff]
      %v1491 = vld [vmem:[%s1478 + $0x90] sm:$0xff]
      %v1492 = vld [vmem:[%s1478 + $0x98] sm:$0xff]
      %v1493 = vld [vmem:[%s1478 + $0xa8] sm:$0xff]
      %v1494 = vld [vmem:[%s1478 + $0xb0] sm:$0xff]
      %v1495 = vld [vmem:[%s1478 + $0xc0] sm:$0xff]
      %v1496 = vld [vmem:[%s1478 + $0xc8] sm:$0xff]
      %v1497 = vld [vmem:[%s1478 + $0xd8] sm:$0xff]
      %v1498 = vld [vmem:[%s1478 + $0xe0] sm:$0xff]
      %v1499 = vld [vmem:[%s1478 + $0xf0] sm:$0xff]
      %v1500 = vld [vmem:[%s1478 + $0xf8] sm:$0xff]
      %v1501 = vld [vmem:[%s1478 + $0x108] sm:$0xff]
      %v1502 = vld [vmem:[%s1478 + $0x110] sm:$0xff]
      %v1503 = vld [vmem:[%s1478 + $0x120] sm:$0xff]
      %v1504 = vld [vmem:[%s1478 + $0x128] sm:$0xff]
      %v1505 = vld [vmem:[%s1478 + $0x138] sm:$0xff]
      %v1506 = vld [vmem:[%s1478 + $0x140] sm:$0xff]
      %v1507 = vld [vmem:[%s1478 + $0x150] sm:$0xff]
      %v1508 = vld [vmem:[%s1478 + $0x158] sm:$0xff]
      %v1509 = vld [vmem:[%s1478 + $0x168] sm:$0xff]
      %v1510 = vld [vmem:[%s1478 + $0x170] sm:$0xff]
      %v1511 = vpack.c.bf16 %v1480, %v1479
      %v1512 = vpack.c.bf16 %v1482, %v1481
      %v1513 = vpack.c.bf16 %v1484, %v1483
      %v1514 = vpack.c.bf16 %v1486, %v1485
      %v1515 = vpack.c.bf16 %v1488, %v1487
      %v1516 = vpack.c.bf16 %v1490, %v1489
      %v1517 = vpack.c.bf16 %v1492, %v1491
      %v1518 = vpack.c.bf16 %v1494, %v1493
      %v1519 = vpack.c.bf16 %v1496, %v1495
      %v1520 = vpack.c.bf16 %v1498, %v1497
      %v1521 = vpack.c.bf16 %v1500, %v1499
      %v1522 = vpack.c.bf16 %v1502, %v1501
      %v1523 = vpack.c.bf16 %v1504, %v1503
      %v1524 = vpack.c.bf16 %v1506, %v1505
      %v1525 = vpack.c.bf16 %v1508, %v1507
      %v1526 = vpack.c.bf16 %v1510, %v1509
      %s1527 = scalar_lea.vmem %s1, 48
      %v1528 = vld [vmem:[%s1527] sm:$0xf]
      %v1529 = vld [vmem:[%s1527 + $0x4] sm:$0x3]
      %v1532 = vunpack.c.l.b16 %v1528
      %v1533 = vunpack.c.l.b16 %v1529
      %v1534 = vpack.c.b16 %v1533, %v1532
      %v1536 = vsel %vm278, %v1511, 0
      %v1539 = vsel %vm278, %v1512, 0
      %v1542 = vsel %vm278, %v1513, 0
      %v1545 = vsel %vm278, %v1514, 0
      %v1548 = vsel %vm278, %v1515, 0
      %v1551 = vsel %vm278, %v1516, 0
      %v1554 = vsel %vm278, %v1517, 0
      %v1557 = vsel %vm278, %v1518, 0
      %v1560 = vsel %vm278, %v1519, 0
      %v1563 = vsel %vm278, %v1520, 0
      %v1566 = vsel %vm278, %v1521, 0
      %v1569 = vsel %vm278, %v1522, 0
      %v1572 = vsel %vm278, %v1523, 0
      %v1575 = vsel %vm278, %v1524, 0
      %v1578 = vsel %vm278, %v1525, 0
      %v1581 = vsel %vm278, %v1526, 0
      %v1584 = vsel %vm327, %v1534, 0
      %1586 = vmatpush.bf16.msra.mxu0 0
      %1587 = vmatpush.bf16.msra.mxu0 0
      %1588 = vmatpush.bf16.msra.mxu0 0
      %1589 = vmatpush.bf16.msra.mxu0 0
      %1590 = vmatpush.bf16.msra.mxu0 0
      %1591 = vmatpush.bf16.msra.mxu0 0
      %1592 = vmatpush.bf16.msra.mxu0 0
      %1593 = vmatpush.bf16.msra.mxu0 %v1584
      %1594 = vmatmul.bf16.gmra.mxu0 %v1536
      %v1595 = vpop.f32.mrf.mxu0
      %v1596 = vadd.f32 0.0, %v1595
      %v1597 = vpop.f32.mrf.mxu0
      %v1598 = vadd.f32 0.0, %v1597
      %1599 = vmatmul.bf16.gmra.mxu0 %v1539
      %v1600 = vpop.f32.mrf.mxu0
      %v1601 = vadd.f32 0.0, %v1600
      %v1602 = vpop.f32.mrf.mxu0
      %v1603 = vadd.f32 0.0, %v1602
      %1604 = vmatmul.bf16.gmra.mxu0 %v1542
      %v1605 = vpop.f32.mrf.mxu0
      %v1606 = vadd.f32 0.0, %v1605
      %v1607 = vpop.f32.mrf.mxu0
      %v1608 = vadd.f32 0.0, %v1607
      %1609 = vmatmul.bf16.gmra.mxu0 %v1545
      %v1610 = vpop.f32.mrf.mxu0
      %v1611 = vadd.f32 0.0, %v1610
      %v1612 = vpop.f32.mrf.mxu0
      %v1613 = vadd.f32 0.0, %v1612
      %1614 = vmatmul.bf16.gmra.mxu0 %v1548
      %v1615 = vpop.f32.mrf.mxu0
      %v1616 = vadd.f32 0.0, %v1615
      %v1617 = vpop.f32.mrf.mxu0
      %v1618 = vadd.f32 0.0, %v1617
      %1619 = vmatmul.bf16.gmra.mxu0 %v1551
      %v1620 = vpop.f32.mrf.mxu0
      %v1621 = vadd.f32 0.0, %v1620
      %v1622 = vpop.f32.mrf.mxu0
      %v1623 = vadd.f32 0.0, %v1622
      %1624 = vmatmul.bf16.gmra.mxu0 %v1554
      %v1625 = vpop.f32.mrf.mxu0
      %v1626 = vadd.f32 0.0, %v1625
      %v1627 = vpop.f32.mrf.mxu0
      %v1628 = vadd.f32 0.0, %v1627
      %1629 = vmatmul.bf16.gmra.mxu0 %v1557
      %v1630 = vpop.f32.mrf.mxu0
      %v1631 = vadd.f32 0.0, %v1630
      %v1632 = vpop.f32.mrf.mxu0
      %v1633 = vadd.f32 0.0, %v1632
      %1634 = vmatmul.bf16.gmra.mxu0 %v1560
      %v1635 = vpop.f32.mrf.mxu0
      %v1636 = vadd.f32 0.0, %v1635
      %v1637 = vpop.f32.mrf.mxu0
      %v1638 = vadd.f32 0.0, %v1637
      %1639 = vmatmul.bf16.gmra.mxu0 %v1563
      %v1640 = vpop.f32.mrf.mxu0
      %v1641 = vadd.f32 0.0, %v1640
      %v1642 = vpop.f32.mrf.mxu0
      %v1643 = vadd.f32 0.0, %v1642
      %1644 = vmatmul.bf16.gmra.mxu0 %v1566
      %v1645 = vpop.f32.mrf.mxu0
      %v1646 = vadd.f32 0.0, %v1645
      %v1647 = vpop.f32.mrf.mxu0
      %v1648 = vadd.f32 0.0, %v1647
      %1649 = vmatmul.bf16.gmra.mxu0 %v1569
      %v1650 = vpop.f32.mrf.mxu0
      %v1651 = vadd.f32 0.0, %v1650
      %v1652 = vpop.f32.mrf.mxu0
      %v1653 = vadd.f32 0.0, %v1652
      %1654 = vmatmul.bf16.gmra.mxu0 %v1572
      %v1655 = vpop.f32.mrf.mxu0
      %v1656 = vadd.f32 0.0, %v1655
      %v1657 = vpop.f32.mrf.mxu0
      %v1658 = vadd.f32 0.0, %v1657
      %1659 = vmatmul.bf16.gmra.mxu0 %v1575
      %v1660 = vpop.f32.mrf.mxu0
      %v1661 = vadd.f32 0.0, %v1660
      %v1662 = vpop.f32.mrf.mxu0
      %v1663 = vadd.f32 0.0, %v1662
      %1664 = vmatmul.bf16.gmra.mxu0 %v1578
      %v1665 = vpop.f32.mrf.mxu0
      %v1666 = vadd.f32 0.0, %v1665
      %v1667 = vpop.f32.mrf.mxu0
      %v1668 = vadd.f32 0.0, %v1667
      %1669 = vmatmul.bf16.gmra.mxu0 %v1581
      %v1670 = vpop.f32.mrf.mxu0
      %v1671 = vadd.f32 0.0, %v1670
      %v1672 = vpop.f32.mrf.mxu0
      %v1673 = vadd.f32 0.0, %v1672
      %1674 = vdwg.mxu0
      %v1675 = vadd.f32 %v1446, %v1596
      %v1676 = vadd.f32 %v1447, %v1598
      %v1677 = vadd.f32 %v1448, %v1601
      %v1678 = vadd.f32 %v1449, %v1603
      %v1679 = vadd.f32 %v1450, %v1606
      %v1680 = vadd.f32 %v1451, %v1608
      %v1681 = vadd.f32 %v1452, %v1611
      %v1682 = vadd.f32 %v1453, %v1613
      %v1683 = vadd.f32 %v1454, %v1616
      %v1684 = vadd.f32 %v1455, %v1618
      %v1685 = vadd.f32 %v1456, %v1621
      %v1686 = vadd.f32 %v1457, %v1623
      %v1687 = vadd.f32 %v1458, %v1626
      %v1688 = vadd.f32 %v1459, %v1628
      %v1689 = vadd.f32 %v1460, %v1631
      %v1690 = vadd.f32 %v1461, %v1633
      %v1691 = vadd.f32 %v1462, %v1636
      %v1692 = vadd.f32 %v1463, %v1638
      %v1693 = vadd.f32 %v1464, %v1641
      %v1694 = vadd.f32 %v1465, %v1643
      %v1695 = vadd.f32 %v1466, %v1646
      %v1696 = vadd.f32 %v1467, %v1648
      %v1697 = vadd.f32 %v1468, %v1651
      %v1698 = vadd.f32 %v1469, %v1653
      %v1699 = vadd.f32 %v1470, %v1656
      %v1700 = vadd.f32 %v1471, %v1658
      %v1701 = vadd.f32 %v1472, %v1661
      %v1702 = vadd.f32 %v1473, %v1663
      %v1703 = vadd.f32 %v1474, %v1666
      %v1704 = vadd.f32 %v1475, %v1668
      %v1705 = vadd.f32 %v1476, %v1671
      %v1706 = vadd.f32 %v1477, %v1673
      %v1707 = vld [vmem:[%s1478 + $0x1] sm:$0xff]
      %v1708 = vld [vmem:[%s1478 + $0x9] sm:$0xff]
      %v1709 = vld [vmem:[%s1478 + $0x19] sm:$0xff]
      %v1710 = vld [vmem:[%s1478 + $0x21] sm:$0xff]
      %v1711 = vld [vmem:[%s1478 + $0x31] sm:$0xff]
      %v1712 = vld [vmem:[%s1478 + $0x39] sm:$0xff]
      %v1713 = vld [vmem:[%s1478 + $0x49] sm:$0xff]
      %v1714 = vld [vmem:[%s1478 + $0x51] sm:$0xff]
      %v1715 = vld [vmem:[%s1478 + $0x61] sm:$0xff]
      %v1716 = vld [vmem:[%s1478 + $0x69] sm:$0xff]
      %v1717 = vld [vmem:[%s1478 + $0x79] sm:$0xff]
      %v1718 = vld [vmem:[%s1478 + $0x81] sm:$0xff]
      %v1719 = vld [vmem:[%s1478 + $0x91] sm:$0xff]
      %v1720 = vld [vmem:[%s1478 + $0x99] sm:$0xff]
      %v1721 = vld [vmem:[%s1478 + $0xa9] sm:$0xff]
      %v1722 = vld [vmem:[%s1478 + $0xb1] sm:$0xff]
      %v1723 = vld [vmem:[%s1478 + $0xc1] sm:$0xff]
      %v1724 = vld [vmem:[%s1478 + $0xc9] sm:$0xff]
      %v1725 = vld [vmem:[%s1478 + $0xd9] sm:$0xff]
      %v1726 = vld [vmem:[%s1478 + $0xe1] sm:$0xff]
      %v1727 = vld [vmem:[%s1478 + $0xf1] sm:$0xff]
      %v1728 = vld [vmem:[%s1478 + $0xf9] sm:$0xff]
      %v1729 = vld [vmem:[%s1478 + $0x109] sm:$0xff]
      %v1730 = vld [vmem:[%s1478 + $0x111] sm:$0xff]
      %v1731 = vld [vmem:[%s1478 + $0x121] sm:$0xff]
      %v1732 = vld [vmem:[%s1478 + $0x129] sm:$0xff]
      %v1733 = vld [vmem:[%s1478 + $0x139] sm:$0xff]
      %v1734 = vld [vmem:[%s1478 + $0x141] sm:$0xff]
      %v1735 = vld [vmem:[%s1478 + $0x151] sm:$0xff]
      %v1736 = vld [vmem:[%s1478 + $0x159] sm:$0xff]
      %v1737 = vld [vmem:[%s1478 + $0x169] sm:$0xff]
      %v1738 = vld [vmem:[%s1478 + $0x171] sm:$0xff]
      %v1739 = vpack.c.bf16 %v1708, %v1707
      %v1740 = vpack.c.bf16 %v1710, %v1709
      %v1741 = vpack.c.bf16 %v1712, %v1711
      %v1742 = vpack.c.bf16 %v1714, %v1713
      %v1743 = vpack.c.bf16 %v1716, %v1715
      %v1744 = vpack.c.bf16 %v1718, %v1717
      %v1745 = vpack.c.bf16 %v1720, %v1719
      %v1746 = vpack.c.bf16 %v1722, %v1721
      %v1747 = vpack.c.bf16 %v1724, %v1723
      %v1748 = vpack.c.bf16 %v1726, %v1725
      %v1749 = vpack.c.bf16 %v1728, %v1727
      %v1750 = vpack.c.bf16 %v1730, %v1729
      %v1751 = vpack.c.bf16 %v1732, %v1731
      %v1752 = vpack.c.bf16 %v1734, %v1733
      %v1753 = vpack.c.bf16 %v1736, %v1735
      %v1754 = vpack.c.bf16 %v1738, %v1737
      %s1755 = scalar_lea.vmem %s1, 56
      %v1756 = vld [vmem:[%s1755] sm:$0xf]
      %v1757 = vld [vmem:[%s1755 + $0x4] sm:$0x3]
      %v1760 = vunpack.c.l.b16 %v1756
      %v1761 = vunpack.c.l.b16 %v1757
      %v1762 = vpack.c.b16 %v1761, %v1760
      %v1764 = vsel %vm278, %v1739, 0
      %v1767 = vsel %vm278, %v1740, 0
      %v1770 = vsel %vm278, %v1741, 0
      %v1773 = vsel %vm278, %v1742, 0
      %v1776 = vsel %vm278, %v1743, 0
      %v1779 = vsel %vm278, %v1744, 0
      %v1782 = vsel %vm278, %v1745, 0
      %v1785 = vsel %vm278, %v1746, 0
      %v1788 = vsel %vm278, %v1747, 0
      %v1791 = vsel %vm278, %v1748, 0
      %v1794 = vsel %vm278, %v1749, 0
      %v1797 = vsel %vm278, %v1750, 0
      %v1800 = vsel %vm278, %v1751, 0
      %v1803 = vsel %vm278, %v1752, 0
      %v1806 = vsel %vm278, %v1753, 0
      %v1809 = vsel %vm278, %v1754, 0
      %v1812 = vsel %vm327, %v1762, 0
      %1814 = vmatpush.bf16.msra.mxu0 0
      %1815 = vmatpush.bf16.msra.mxu0 0
      %1816 = vmatpush.bf16.msra.mxu0 0
      %1817 = vmatpush.bf16.msra.mxu0 0
      %1818 = vmatpush.bf16.msra.mxu0 0
      %1819 = vmatpush.bf16.msra.mxu0 0
      %1820 = vmatpush.bf16.msra.mxu0 0
      %1821 = vmatpush.bf16.msra.mxu0 %v1812
      %1822 = vmatmul.bf16.gmra.mxu0 %v1764
      %v1823 = vpop.f32.mrf.mxu0
      %v1824 = vadd.f32 0.0, %v1823
      %v1825 = vpop.f32.mrf.mxu0
      %v1826 = vadd.f32 0.0, %v1825
      %1827 = vmatmul.bf16.gmra.mxu0 %v1767
      %v1828 = vpop.f32.mrf.mxu0
      %v1829 = vadd.f32 0.0, %v1828
      %v1830 = vpop.f32.mrf.mxu0
      %v1831 = vadd.f32 0.0, %v1830
      %1832 = vmatmul.bf16.gmra.mxu0 %v1770
      %v1833 = vpop.f32.mrf.mxu0
      %v1834 = vadd.f32 0.0, %v1833
      %v1835 = vpop.f32.mrf.mxu0
      %v1836 = vadd.f32 0.0, %v1835
      %1837 = vmatmul.bf16.gmra.mxu0 %v1773
      %v1838 = vpop.f32.mrf.mxu0
      %v1839 = vadd.f32 0.0, %v1838
      %v1840 = vpop.f32.mrf.mxu0
      %v1841 = vadd.f32 0.0, %v1840
      %1842 = vmatmul.bf16.gmra.mxu0 %v1776
      %v1843 = vpop.f32.mrf.mxu0
      %v1844 = vadd.f32 0.0, %v1843
      %v1845 = vpop.f32.mrf.mxu0
      %v1846 = vadd.f32 0.0, %v1845
      %1847 = vmatmul.bf16.gmra.mxu0 %v1779
      %v1848 = vpop.f32.mrf.mxu0
      %v1849 = vadd.f32 0.0, %v1848
      %v1850 = vpop.f32.mrf.mxu0
      %v1851 = vadd.f32 0.0, %v1850
      %1852 = vmatmul.bf16.gmra.mxu0 %v1782
      %v1853 = vpop.f32.mrf.mxu0
      %v1854 = vadd.f32 0.0, %v1853
      %v1855 = vpop.f32.mrf.mxu0
      %v1856 = vadd.f32 0.0, %v1855
      %1857 = vmatmul.bf16.gmra.mxu0 %v1785
      %v1858 = vpop.f32.mrf.mxu0
      %v1859 = vadd.f32 0.0, %v1858
      %v1860 = vpop.f32.mrf.mxu0
      %v1861 = vadd.f32 0.0, %v1860
      %1862 = vmatmul.bf16.gmra.mxu0 %v1788
      %v1863 = vpop.f32.mrf.mxu0
      %v1864 = vadd.f32 0.0, %v1863
      %v1865 = vpop.f32.mrf.mxu0
      %v1866 = vadd.f32 0.0, %v1865
      %1867 = vmatmul.bf16.gmra.mxu0 %v1791
      %v1868 = vpop.f32.mrf.mxu0
      %v1869 = vadd.f32 0.0, %v1868
      %v1870 = vpop.f32.mrf.mxu0
      %v1871 = vadd.f32 0.0, %v1870
      %1872 = vmatmul.bf16.gmra.mxu0 %v1794
      %v1873 = vpop.f32.mrf.mxu0
      %v1874 = vadd.f32 0.0, %v1873
      %v1875 = vpop.f32.mrf.mxu0
      %v1876 = vadd.f32 0.0, %v1875
      %1877 = vmatmul.bf16.gmra.mxu0 %v1797
      %v1878 = vpop.f32.mrf.mxu0
      %v1879 = vadd.f32 0.0, %v1878
      %v1880 = vpop.f32.mrf.mxu0
      %v1881 = vadd.f32 0.0, %v1880
      %1882 = vmatmul.bf16.gmra.mxu0 %v1800
      %v1883 = vpop.f32.mrf.mxu0
      %v1884 = vadd.f32 0.0, %v1883
      %v1885 = vpop.f32.mrf.mxu0
      %v1886 = vadd.f32 0.0, %v1885
      %1887 = vmatmul.bf16.gmra.mxu0 %v1803
      %v1888 = vpop.f32.mrf.mxu0
      %v1889 = vadd.f32 0.0, %v1888
      %v1890 = vpop.f32.mrf.mxu0
      %v1891 = vadd.f32 0.0, %v1890
      %1892 = vmatmul.bf16.gmra.mxu0 %v1806
      %v1893 = vpop.f32.mrf.mxu0
      %v1894 = vadd.f32 0.0, %v1893
      %v1895 = vpop.f32.mrf.mxu0
      %v1896 = vadd.f32 0.0, %v1895
      %1897 = vmatmul.bf16.gmra.mxu0 %v1809
      %v1898 = vpop.f32.mrf.mxu0
      %v1899 = vadd.f32 0.0, %v1898
      %v1900 = vpop.f32.mrf.mxu0
      %v1901 = vadd.f32 0.0, %v1900
      %1902 = vdwg.mxu0
      %v1903 = vadd.f32 %v1675, %v1824
      %v1904 = vadd.f32 %v1676, %v1826
      %v1905 = vadd.f32 %v1677, %v1829
      %v1906 = vadd.f32 %v1678, %v1831
      %v1907 = vadd.f32 %v1679, %v1834
      %v1908 = vadd.f32 %v1680, %v1836
      %v1909 = vadd.f32 %v1681, %v1839
      %v1910 = vadd.f32 %v1682, %v1841
      %v1911 = vadd.f32 %v1683, %v1844
      %v1912 = vadd.f32 %v1684, %v1846
      %v1913 = vadd.f32 %v1685, %v1849
      %v1914 = vadd.f32 %v1686, %v1851
      %v1915 = vadd.f32 %v1687, %v1854
      %v1916 = vadd.f32 %v1688, %v1856
      %v1917 = vadd.f32 %v1689, %v1859
      %v1918 = vadd.f32 %v1690, %v1861
      %v1919 = vadd.f32 %v1691, %v1864
      %v1920 = vadd.f32 %v1692, %v1866
      %v1921 = vadd.f32 %v1693, %v1869
      %v1922 = vadd.f32 %v1694, %v1871
      %v1923 = vadd.f32 %v1695, %v1874
      %v1924 = vadd.f32 %v1696, %v1876
      %v1925 = vadd.f32 %v1697, %v1879
      %v1926 = vadd.f32 %v1698, %v1881
      %v1927 = vadd.f32 %v1699, %v1884
      %v1928 = vadd.f32 %v1700, %v1886
      %v1929 = vadd.f32 %v1701, %v1889
      %v1930 = vadd.f32 %v1702, %v1891
      %v1931 = vadd.f32 %v1703, %v1894
      %v1932 = vadd.f32 %v1704, %v1896
      %v1933 = vadd.f32 %v1705, %v1899
      %v1934 = vadd.f32 %v1706, %v1901
      %v1935 = vld [vmem:[%s1478 + $0x2] sm:$0xff]
      %v1936 = vld [vmem:[%s1478 + $0xa] sm:$0xff]
      %v1937 = vld [vmem:[%s1478 + $0x1a] sm:$0xff]
      %v1938 = vld [vmem:[%s1478 + $0x22] sm:$0xff]
      %v1939 = vld [vmem:[%s1478 + $0x32] sm:$0xff]
      %v1940 = vld [vmem:[%s1478 + $0x3a] sm:$0xff]
      %v1941 = vld [vmem:[%s1478 + $0x4a] sm:$0xff]
      %v1942 = vld [vmem:[%s1478 + $0x52] sm:$0xff]
      %v1943 = vld [vmem:[%s1478 + $0x62] sm:$0xff]
      %v1944 = vld [vmem:[%s1478 + $0x6a] sm:$0xff]
      %v1945 = vld [vmem:[%s1478 + $0x7a] sm:$0xff]
      %v1946 = vld [vmem:[%s1478 + $0x82] sm:$0xff]
      %v1947 = vld [vmem:[%s1478 + $0x92] sm:$0xff]
      %v1948 = vld [vmem:[%s1478 + $0x9a] sm:$0xff]
      %v1949 = vld [vmem:[%s1478 + $0xaa] sm:$0xff]
      %v1950 = vld [vmem:[%s1478 + $0xb2] sm:$0xff]
      %v1951 = vld [vmem:[%s1478 + $0xc2] sm:$0xff]
      %v1952 = vld [vmem:[%s1478 + $0xca] sm:$0xff]
      %v1953 = vld [vmem:[%s1478 + $0xda] sm:$0xff]
      %v1954 = vld [vmem:[%s1478 + $0xe2] sm:$0xff]
      %v1955 = vld [vmem:[%s1478 + $0xf2] sm:$0xff]
      %v1956 = vld [vmem:[%s1478 + $0xfa] sm:$0xff]
      %v1957 = vld [vmem:[%s1478 + $0x10a] sm:$0xff]
      %v1958 = vld [vmem:[%s1478 + $0x112] sm:$0xff]
      %v1959 = vld [vmem:[%s1478 + $0x122] sm:$0xff]
      %v1960 = vld [vmem:[%s1478 + $0x12a] sm:$0xff]
      %v1961 = vld [vmem:[%s1478 + $0x13a] sm:$0xff]
      %v1962 = vld [vmem:[%s1478 + $0x142] sm:$0xff]
      %v1963 = vld [vmem:[%s1478 + $0x152] sm:$0xff]
      %v1964 = vld [vmem:[%s1478 + $0x15a] sm:$0xff]
      %v1965 = vld [vmem:[%s1478 + $0x16a] sm:$0xff]
      %v1966 = vld [vmem:[%s1478 + $0x172] sm:$0xff]
      %v1967 = vpack.c.bf16 %v1936, %v1935
      %v1968 = vpack.c.bf16 %v1938, %v1937
      %v1969 = vpack.c.bf16 %v1940, %v1939
      %v1970 = vpack.c.bf16 %v1942, %v1941
      %v1971 = vpack.c.bf16 %v1944, %v1943
      %v1972 = vpack.c.bf16 %v1946, %v1945
      %v1973 = vpack.c.bf16 %v1948, %v1947
      %v1974 = vpack.c.bf16 %v1950, %v1949
      %v1975 = vpack.c.bf16 %v1952, %v1951
      %v1976 = vpack.c.bf16 %v1954, %v1953
      %v1977 = vpack.c.bf16 %v1956, %v1955
      %v1978 = vpack.c.bf16 %v1958, %v1957
      %v1979 = vpack.c.bf16 %v1960, %v1959
      %v1980 = vpack.c.bf16 %v1962, %v1961
      %v1981 = vpack.c.bf16 %v1964, %v1963
      %v1982 = vpack.c.bf16 %v1966, %v1965
      %s1983 = scalar_lea.vmem %s1, 64
      %v1984 = vld [vmem:[%s1983] sm:$0xf]
      %v1985 = vld [vmem:[%s1983 + $0x4] sm:$0x3]
      %v1988 = vunpack.c.l.b16 %v1984
      %v1989 = vunpack.c.l.b16 %v1985
      %v1990 = vpack.c.b16 %v1989, %v1988
      %v1992 = vsel %vm278, %v1967, 0
      %v1995 = vsel %vm278, %v1968, 0
      %v1998 = vsel %vm278, %v1969, 0
      %v2001 = vsel %vm278, %v1970, 0
      %v2004 = vsel %vm278, %v1971, 0
      %v2007 = vsel %vm278, %v1972, 0
      %v2010 = vsel %vm278, %v1973, 0
      %v2013 = vsel %vm278, %v1974, 0
      %v2016 = vsel %vm278, %v1975, 0
      %v2019 = vsel %vm278, %v1976, 0
      %v2022 = vsel %vm278, %v1977, 0
      %v2025 = vsel %vm278, %v1978, 0
      %v2028 = vsel %vm278, %v1979, 0
      %v2031 = vsel %vm278, %v1980, 0
      %v2034 = vsel %vm278, %v1981, 0
      %v2037 = vsel %vm278, %v1982, 0
      %v2040 = vsel %vm327, %v1990, 0
      %2042 = vmatpush.bf16.msra.mxu0 0
      %2043 = vmatpush.bf16.msra.mxu0 0
      %2044 = vmatpush.bf16.msra.mxu0 0
      %2045 = vmatpush.bf16.msra.mxu0 0
      %2046 = vmatpush.bf16.msra.mxu0 0
      %2047 = vmatpush.bf16.msra.mxu0 0
      %2048 = vmatpush.bf16.msra.mxu0 0
      %2049 = vmatpush.bf16.msra.mxu0 %v2040
      %2050 = vmatmul.bf16.gmra.mxu0 %v1992
      %v2051 = vpop.f32.mrf.mxu0
      %v2052 = vadd.f32 0.0, %v2051
      %v2053 = vpop.f32.mrf.mxu0
      %v2054 = vadd.f32 0.0, %v2053
      %2055 = vmatmul.bf16.gmra.mxu0 %v1995
      %v2056 = vpop.f32.mrf.mxu0
      %v2057 = vadd.f32 0.0, %v2056
      %v2058 = vpop.f32.mrf.mxu0
      %v2059 = vadd.f32 0.0, %v2058
      %2060 = vmatmul.bf16.gmra.mxu0 %v1998
      %v2061 = vpop.f32.mrf.mxu0
      %v2062 = vadd.f32 0.0, %v2061
      %v2063 = vpop.f32.mrf.mxu0
      %v2064 = vadd.f32 0.0, %v2063
      %2065 = vmatmul.bf16.gmra.mxu0 %v2001
      %v2066 = vpop.f32.mrf.mxu0
      %v2067 = vadd.f32 0.0, %v2066
      %v2068 = vpop.f32.mrf.mxu0
      %v2069 = vadd.f32 0.0, %v2068
      %2070 = vmatmul.bf16.gmra.mxu0 %v2004
      %v2071 = vpop.f32.mrf.mxu0
      %v2072 = vadd.f32 0.0, %v2071
      %v2073 = vpop.f32.mrf.mxu0
      %v2074 = vadd.f32 0.0, %v2073
      %2075 = vmatmul.bf16.gmra.mxu0 %v2007
      %v2076 = vpop.f32.mrf.mxu0
      %v2077 = vadd.f32 0.0, %v2076
      %v2078 = vpop.f32.mrf.mxu0
      %v2079 = vadd.f32 0.0, %v2078
      %2080 = vmatmul.bf16.gmra.mxu0 %v2010
      %v2081 = vpop.f32.mrf.mxu0
      %v2082 = vadd.f32 0.0, %v2081
      %v2083 = vpop.f32.mrf.mxu0
      %v2084 = vadd.f32 0.0, %v2083
      %2085 = vmatmul.bf16.gmra.mxu0 %v2013
      %v2086 = vpop.f32.mrf.mxu0
      %v2087 = vadd.f32 0.0, %v2086
      %v2088 = vpop.f32.mrf.mxu0
      %v2089 = vadd.f32 0.0, %v2088
      %2090 = vmatmul.bf16.gmra.mxu0 %v2016
      %v2091 = vpop.f32.mrf.mxu0
      %v2092 = vadd.f32 0.0, %v2091
      %v2093 = vpop.f32.mrf.mxu0
      %v2094 = vadd.f32 0.0, %v2093
      %2095 = vmatmul.bf16.gmra.mxu0 %v2019
      %v2096 = vpop.f32.mrf.mxu0
      %v2097 = vadd.f32 0.0, %v2096
      %v2098 = vpop.f32.mrf.mxu0
      %v2099 = vadd.f32 0.0, %v2098
      %2100 = vmatmul.bf16.gmra.mxu0 %v2022
      %v2101 = vpop.f32.mrf.mxu0
      %v2102 = vadd.f32 0.0, %v2101
      %v2103 = vpop.f32.mrf.mxu0
      %v2104 = vadd.f32 0.0, %v2103
      %2105 = vmatmul.bf16.gmra.mxu0 %v2025
      %v2106 = vpop.f32.mrf.mxu0
      %v2107 = vadd.f32 0.0, %v2106
      %v2108 = vpop.f32.mrf.mxu0
      %v2109 = vadd.f32 0.0, %v2108
      %2110 = vmatmul.bf16.gmra.mxu0 %v2028
      %v2111 = vpop.f32.mrf.mxu0
      %v2112 = vadd.f32 0.0, %v2111
      %v2113 = vpop.f32.mrf.mxu0
      %v2114 = vadd.f32 0.0, %v2113
      %2115 = vmatmul.bf16.gmra.mxu0 %v2031
      %v2116 = vpop.f32.mrf.mxu0
      %v2117 = vadd.f32 0.0, %v2116
      %v2118 = vpop.f32.mrf.mxu0
      %v2119 = vadd.f32 0.0, %v2118
      %2120 = vmatmul.bf16.gmra.mxu0 %v2034
      %v2121 = vpop.f32.mrf.mxu0
      %v2122 = vadd.f32 0.0, %v2121
      %v2123 = vpop.f32.mrf.mxu0
      %v2124 = vadd.f32 0.0, %v2123
      %2125 = vmatmul.bf16.gmra.mxu0 %v2037
      %v2126 = vpop.f32.mrf.mxu0
      %v2127 = vadd.f32 0.0, %v2126
      %v2128 = vpop.f32.mrf.mxu0
      %v2129 = vadd.f32 0.0, %v2128
      %2130 = vdwg.mxu0
      %v2131 = vadd.f32 %v1903, %v2052
      %v2132 = vadd.f32 %v1904, %v2054
      %v2133 = vadd.f32 %v1905, %v2057
      %v2134 = vadd.f32 %v1906, %v2059
      %v2135 = vadd.f32 %v1907, %v2062
      %v2136 = vadd.f32 %v1908, %v2064
      %v2137 = vadd.f32 %v1909, %v2067
      %v2138 = vadd.f32 %v1910, %v2069
      %v2139 = vadd.f32 %v1911, %v2072
      %v2140 = vadd.f32 %v1912, %v2074
      %v2141 = vadd.f32 %v1913, %v2077
      %v2142 = vadd.f32 %v1914, %v2079
      %v2143 = vadd.f32 %v1915, %v2082
      %v2144 = vadd.f32 %v1916, %v2084
      %v2145 = vadd.f32 %v1917, %v2087
      %v2146 = vadd.f32 %v1918, %v2089
      %v2147 = vadd.f32 %v1919, %v2092
      %v2148 = vadd.f32 %v1920, %v2094
      %v2149 = vadd.f32 %v1921, %v2097
      %v2150 = vadd.f32 %v1922, %v2099
      %v2151 = vadd.f32 %v1923, %v2102
      %v2152 = vadd.f32 %v1924, %v2104
      %v2153 = vadd.f32 %v1925, %v2107
      %v2154 = vadd.f32 %v1926, %v2109
      %v2155 = vadd.f32 %v1927, %v2112
      %v2156 = vadd.f32 %v1928, %v2114
      %v2157 = vadd.f32 %v1929, %v2117
      %v2158 = vadd.f32 %v1930, %v2119
      %v2159 = vadd.f32 %v1931, %v2122
      %v2160 = vadd.f32 %v1932, %v2124
      %v2161 = vadd.f32 %v1933, %v2127
      %v2162 = vadd.f32 %v1934, %v2129
      %v2163 = vld [vmem:[%s2] sm:$0x1]
      %v2165 = vperm.slane %v2163, 0
      %v2167 = vadd.f32 %v2131, %v2165
      %v2168 = vadd.f32 %v2132, %v2165
      %v2169 = vadd.f32 %v2133, %v2165
      %v2170 = vadd.f32 %v2134, %v2165
      %v2171 = vadd.f32 %v2135, %v2165
      %v2172 = vadd.f32 %v2136, %v2165
      %v2173 = vadd.f32 %v2137, %v2165
      %v2174 = vadd.f32 %v2138, %v2165
      %v2175 = vadd.f32 %v2139, %v2165
      %v2176 = vadd.f32 %v2140, %v2165
      %v2177 = vadd.f32 %v2141, %v2165
      %v2178 = vadd.f32 %v2142, %v2165
      %v2179 = vadd.f32 %v2143, %v2165
      %v2180 = vadd.f32 %v2144, %v2165
      %v2181 = vadd.f32 %v2145, %v2165
      %v2182 = vadd.f32 %v2146, %v2165
      %v2183 = vadd.f32 %v2147, %v2165
      %v2184 = vadd.f32 %v2148, %v2165
      %v2185 = vadd.f32 %v2149, %v2165
      %v2186 = vadd.f32 %v2150, %v2165
      %v2187 = vadd.f32 %v2151, %v2165
      %v2188 = vadd.f32 %v2152, %v2165
      %v2189 = vadd.f32 %v2153, %v2165
      %v2190 = vadd.f32 %v2154, %v2165
      %v2191 = vadd.f32 %v2155, %v2165
      %v2192 = vadd.f32 %v2156, %v2165
      %v2193 = vadd.f32 %v2157, %v2165
      %v2194 = vadd.f32 %v2158, %v2165
      %v2195 = vadd.f32 %v2159, %v2165
      %v2196 = vadd.f32 %v2160, %v2165
      %v2197 = vadd.f32 %v2161, %v2165
      %v2198 = vadd.f32 %v2162, %v2165
      %v2199 = vmax.f32 %v2167, 0.0
      %v2200 = vmax.f32 %v2168, 0.0
      %v2201 = vmax.f32 %v2169, 0.0
      %v2202 = vmax.f32 %v2170, 0.0
      %v2203 = vmax.f32 %v2171, 0.0
      %v2204 = vmax.f32 %v2172, 0.0
      %v2205 = vmax.f32 %v2173, 0.0
      %v2206 = vmax.f32 %v2174, 0.0
      %v2207 = vmax.f32 %v2175, 0.0
      %v2208 = vmax.f32 %v2176, 0.0
      %v2209 = vmax.f32 %v2177, 0.0
      %v2210 = vmax.f32 %v2178, 0.0
      %v2211 = vmax.f32 %v2179, 0.0
      %v2212 = vmax.f32 %v2180, 0.0
      %v2213 = vmax.f32 %v2181, 0.0
      %v2214 = vmax.f32 %v2182, 0.0
      %v2215 = vmax.f32 %v2183, 0.0
      %v2216 = vmax.f32 %v2184, 0.0
      %v2217 = vmax.f32 %v2185, 0.0
      %v2218 = vmax.f32 %v2186, 0.0
      %v2219 = vmax.f32 %v2187, 0.0
      %v2220 = vmax.f32 %v2188, 0.0
      %v2221 = vmax.f32 %v2189, 0.0
      %v2222 = vmax.f32 %v2190, 0.0
      %v2223 = vmax.f32 %v2191, 0.0
      %v2224 = vmax.f32 %v2192, 0.0
      %v2225 = vmax.f32 %v2193, 0.0
      %v2226 = vmax.f32 %v2194, 0.0
      %v2227 = vmax.f32 %v2195, 0.0
      %v2228 = vmax.f32 %v2196, 0.0
      %v2229 = vmax.f32 %v2197, 0.0
      %v2230 = vmax.f32 %v2198, 0.0
      %vm2231 = vcmask 64512
      %2232 = vst.msk [vmem:[%s170] sm:$0xff] %vm2231, %v2199
      %2233 = vst.msk [vmem:[%s170 + $0x8] sm:$0xff] %vm2231, %v2200
      %2234 = vst.msk [vmem:[%s170 + $0x10] sm:$0xff] %vm2231, %v2201
      %2235 = vst.msk [vmem:[%s170 + $0x18] sm:$0xff] %vm2231, %v2202
      %2236 = vst.msk [vmem:[%s170 + $0x20] sm:$0xff] %vm2231, %v2203
      %2237 = vst.msk [vmem:[%s170 + $0x28] sm:$0xff] %vm2231, %v2204
      %2238 = vst.msk [vmem:[%s170 + $0x30] sm:$0xff] %vm2231, %v2205
      %2239 = vst.msk [vmem:[%s170 + $0x38] sm:$0xff] %vm2231, %v2206
      %2240 = vst.msk [vmem:[%s170 + $0x40] sm:$0xff] %vm2231, %v2207
      %2241 = vst.msk [vmem:[%s170 + $0x48] sm:$0xff] %vm2231, %v2208
      %2242 = vst.msk [vmem:[%s170 + $0x50] sm:$0xff] %vm2231, %v2209
      %2243 = vst.msk [vmem:[%s170 + $0x58] sm:$0xff] %vm2231, %v2210
      %2244 = vst.msk [vmem:[%s170 + $0x60] sm:$0xff] %vm2231, %v2211
      %2245 = vst.msk [vmem:[%s170 + $0x68] sm:$0xff] %vm2231, %v2212
      %2246 = vst.msk [vmem:[%s170 + $0x70] sm:$0xff] %vm2231, %v2213
      %2247 = vst.msk [vmem:[%s170 + $0x78] sm:$0xff] %vm2231, %v2214
      %2248 = vst.msk [vmem:[%s170 + $0x80] sm:$0xff] %vm2231, %v2215
      %2249 = vst.msk [vmem:[%s170 + $0x88] sm:$0xff] %vm2231, %v2216
      %2250 = vst.msk [vmem:[%s170 + $0x90] sm:$0xff] %vm2231, %v2217
      %2251 = vst.msk [vmem:[%s170 + $0x98] sm:$0xff] %vm2231, %v2218
      %2252 = vst.msk [vmem:[%s170 + $0xa0] sm:$0xff] %vm2231, %v2219
      %2253 = vst.msk [vmem:[%s170 + $0xa8] sm:$0xff] %vm2231, %v2220
      %2254 = vst.msk [vmem:[%s170 + $0xb0] sm:$0xff] %vm2231, %v2221
      %2255 = vst.msk [vmem:[%s170 + $0xb8] sm:$0xff] %vm2231, %v2222
      %2256 = vst.msk [vmem:[%s170 + $0xc0] sm:$0xff] %vm2231, %v2223
      %2257 = vst.msk [vmem:[%s170 + $0xc8] sm:$0xff] %vm2231, %v2224
      %2258 = vst.msk [vmem:[%s170 + $0xd0] sm:$0xff] %vm2231, %v2225
      %2259 = vst.msk [vmem:[%s170 + $0xd8] sm:$0xff] %vm2231, %v2226
      %2260 = vst.msk [vmem:[%s170 + $0xe0] sm:$0xff] %vm2231, %v2227
      %2261 = vst.msk [vmem:[%s170 + $0xe8] sm:$0xff] %vm2231, %v2228
      %2262 = vst.msk [vmem:[%s170 + $0xf0] sm:$0xff] %vm2231, %v2229
      %2263 = vst.msk [vmem:[%s170 + $0xf8] sm:$0xff] %vm2231, %v2230
      %p2264 = scmp.lt.s32.totalorder %s14, 1
      %s2265 = scalar_select %p2264, %s14, 1
      %s2266 = smul.addr %s2265, 32
      %s2267 = smul.addr %s2266, 8
      %s2268 = scalar_lea.vmem %s3, %s2267
      // Predicated region
      $region33: #{sica_dwt_forward.13} parent=31 // pred_check
        %p2269 = pneg %p100
      $region34: #{sica_dwt_forward.13} parent=31 // pred_check_branch
        %2271 = sbr.rel (%p2269) target = $region36
      $region35: #{sica_dwt_forward.13} parent=31 // pred_region
        _
      $region36: #{sica_dwt_forward.13} parent=31 // pred_fallthru
        _
    $region32: #{sica_dwt_forward.13} parent=5 // pred_fallthru
      _
    %p2272 = scmp.le.s32.totalorder 2, %s9
    // Predicated region
    $region37: #{sica_dwt_forward.13} parent=5 // pred_check
      %p2273 = pneg %p2272
    $region38: #{sica_dwt_forward.13} parent=5 // pred_check_branch
      %2275 = sbr.rel (%p2273) target = $region40
    $region39: #{sica_dwt_forward.13} parent=5 // pred_region
      %s2276 = ssub.s32 %s9, 2
      // Predicated region
      $region41: #{sica_dwt_forward.13} parent=39 // pred_check
        %p2277 = pneg %p106
      $region42: #{sica_dwt_forward.13} parent=39 // pred_check_branch
        %2279 = sbr.rel (%p2277) target = $region44
      $region43: #{sica_dwt_forward.13} parent=39 // pred_region
        %p2280 = scmp.lt.s32.totalorder %s15, 1
        %s2281 = scalar_select %p2280, %s15, 1
        %s2282 = smul.addr %s2281, 32
        %s2283 = smul.addr %s2282, 8
        %s2284 = scalar_lea.vmem %s3, %s2283
      $region44: #{sica_dwt_forward.13} parent=39 // pred_fallthru
        _
    $region40: #{sica_dwt_forward.13} parent=5 // pred_fallthru
      _
  $region6: #{sica_dwt_forward.13} parent=0 // loop_footer
    %s13 = sadd.s32 1, %s9
  $region7: #{sica_dwt_forward.13} parent=0 // loop_footer_branch
    %8 = sbr.rel target = $region3
  $region8: #{sica_dwt_forward.13} parent=0 // loop_exit
    _

</llo_original>
